<compile_context>
chip_gen: v5e
topology: v5e:2x2
jax: 0.10.0
libtpu: 0.0.40
codegen_flags: <defaults>
</compile_context>

<pallas_src>
import functools

import jax
import jax.numpy as jnp
from jax.experimental import pallas as pl
from jax.experimental.pallas import tpu as pltpu

# ----------------------------- synthetic config ------------------------------
C0 = 64                          # backbone_cfg.input_block_in_channels
CHANNEL_NUMS = [64, 64, 64, 64]  # backbone_cfg.channelNums (equal -> consistent IDA)
BLOCK_NUMS = [1, 1, 1, 1]        # backbone_cfg.blockNums
SHRINKAGE = 0.5
GROUP = 32                       # c_mid = 32 -> grouped 3x3 conv == depthwise
CLASS_NUM = 5
BN_EPS = 1e-5
MERGE_TYPE = 1                   # adaptive channel merge (plain addition)

TILE_M = 512                     # M tile for the large im2col matmul
ACT_DTYPE = jnp.bfloat16         # activations / weights in HBM
LOGITS_PAD = 128                 # lane-dense logits width (sliced to CLASS_NUM)


# ------------------------------ Pallas kernels --------------------------------
def _mma_kernel(a_ref, b_ref, s_ref, t_ref, o_ref, *, relu):
    """relu?((A @ B) * scale + shift) -- BN/bias epilogue fused into the matmul."""
    acc = jnp.dot(a_ref[...], b_ref[...], preferred_element_type=jnp.float32)
    y = acc * s_ref[...] + t_ref[...]
    if relu:
        y = jnp.maximum(y, 0.0)
    o_ref[...] = y.astype(o_ref.dtype)


def matmul_affine(a, b, scale, shift, relu=False, out_dtype=ACT_DTYPE):
    """(M,K)@(K,N) with fused affine epilogue.  Whole-array block when small,
    M-tiled parallel grid (megacore-friendly) when M is a multiple of TILE_M."""
    M, K = a.shape
    N = b.shape[1]
    s = scale.reshape(1, N).astype(jnp.float32)
    t = shift.reshape(1, N).astype(jnp.float32)
    kern = functools.partial(_mma_kernel, relu=relu)
    if M > TILE_M and M % TILE_M == 0:
        return pl.pallas_call(
            kern,
            out_shape=jax.ShapeDtypeStruct((M, N), out_dtype),
            grid=(M // TILE_M,),
            in_specs=[
                pl.BlockSpec((TILE_M, K), lambda i: (i, 0)),
                pl.BlockSpec((K, N), lambda i: (0, 0)),
                pl.BlockSpec((1, N), lambda i: (0, 0)),
                pl.BlockSpec((1, N), lambda i: (0, 0)),
            ],
            out_specs=pl.BlockSpec((TILE_M, N), lambda i: (i, 0)),
            compiler_params=pltpu.CompilerParams(
                dimension_semantics=("parallel",)),
        )(a, b, s, t)
    # everything fits VMEM -> single block, no padding / slicing
    return pl.pallas_call(
        kern, out_shape=jax.ShapeDtypeStruct((M, N), out_dtype))(a, b, s, t)


def _block_tail_kernel(*refs, has_proj):
    """Fused bottleneck tail: grouped3x3(as matmul)+BN+ReLU -> 1x1 expand+BN
    -> (projection shortcut+BN) -> add -> ReLU.  All intermediates in VMEM."""
    if has_proj:
        (p_ref, xs_ref, wdw_ref, w3_ref, ws_ref,
         s2_ref, t2_ref, s3_ref, t3_ref, ss_ref, ts_ref, o_ref) = refs
    else:
        (p_ref, xs_ref, wdw_ref, w3_ref,
         s2_ref, t2_ref, s3_ref, t3_ref, o_ref) = refs
    # grouped/depthwise 3x3 lowered as block-diagonal dense matmul on the MXU
    h2 = jnp.dot(p_ref[...], wdw_ref[...], preferred_element_type=jnp.float32)
    h2 = jnp.maximum(h2 * s2_ref[...] + t2_ref[...], 0.0)
    # 1x1 expand + BN3
    h3 = jnp.dot(h2.astype(w3_ref.dtype), w3_ref[...],
                 preferred_element_type=jnp.float32)
    h3 = h3 * s3_ref[...] + t3_ref[...]
    # shortcut
    if has_proj:
        sc = jnp.dot(xs_ref[...], ws_ref[...], preferred_element_type=jnp.float32)
        sc = sc * ss_ref[...] + ts_ref[...]
    else:
        sc = xs_ref[...].astype(jnp.float32)
    o_ref[...] = jnp.maximum(h3 + sc, 0.0).astype(o_ref.dtype)


def _maxpool_kernel(p_ref, o_ref):
    m = p_ref[0]
    for t in range(1, 9):
        m = jnp.maximum(m, p_ref[t])
    o_ref[...] = m.astype(o_ref.dtype)


def _merge_kernel(a_ref, b_ref, s_ref, t_ref, o_ref, *, relu):
    y = (a_ref[...].astype(jnp.float32) + b_ref[...].astype(jnp.float32))
    y = y * s_ref[...] + t_ref[...]
    if relu:
        y = jnp.maximum(y, 0.0)
    o_ref[...] = y.astype(o_ref.dtype)


def _merge_logits_kernel(a_ref, b_ref, s_ref, t_ref, w_ref, bias_ref, o_ref):
    y = (a_ref[...].astype(jnp.float32) + b_ref[...].astype(jnp.float32))
    y = y * s_ref[...] + t_ref[...]                     # BN (no relu on last merge)
    o_ref[...] = (jnp.dot(y.astype(w_ref.dtype), w_ref[...],
                          preferred_element_type=jnp.float32) + bias_ref[...])


# ------------------------------ glue (im2col etc.) ----------------------------
def extract_patches_lastaxis(x, ksize, stride, pad, pad_value=0.0):
    """x: (N,H,W,C) NHWC -> contiguous im2col matrix (N*OH*OW, k*k*C)."""
    N, H, W, C = x.shape
    xp = jnp.pad(x, ((0, 0), (pad, pad), (pad, pad), (0, 0)),
                 constant_values=pad_value)
    OH = (H + 2 * pad - ksize) // stride + 1
    OW = (W + 2 * pad - ksize) // stride + 1
    taps = []
    for dy in range(ksize):
        for dx in range(ksize):
            sl = xp[:, dy:dy + stride * (OH - 1) + 1:stride,
                       dx:dx + stride * (OW - 1) + 1:stride, :]
            taps.append(sl.reshape(N * OH * OW, C))
    return jnp.concatenate(taps, axis=1), (N, OH, OW)


def maxpool3x3s2(x):
    """3x3/stride-2 max pool; taps gathered in XLA, max reduced in one kernel."""
    N, H, W, C = x.shape
    xp = jnp.pad(x, ((0, 0), (1, 1), (1, 1), (0, 0)),
                 constant_values=float('-inf'))
    OH = (H + 2 - 3) // 2 + 1
    OW = (W + 2 - 3) // 2 + 1
    taps = []
    for dy in range(3):
        for dx in range(3):
            sl = xp[:, dy:dy + 2 * (OH - 1) + 1:2, dx:dx + 2 * (OW - 1) + 1:2, :]
            taps.append(sl.reshape(N * OH * OW, C))
    p = jnp.stack(taps, axis=0)                       # (9, M, C)
    out = pl.pallas_call(
        _maxpool_kernel,
        out_shape=jax.ShapeDtypeStruct((N * OH * OW, C), x.dtype))(p)
    return out.reshape(N, OH, OW, C)


# ------------------------------ model pieces ----------------------------------
def input_layer(x, p):
    # 7x7 stride-2 conv via contiguous im2col + matmul with fused BN+ReLU
    patches, (N, OH, OW) = extract_patches_lastaxis(x, 7, 2, 3, 0.0)
    h = matmul_affine(patches, p['w'], p['bn_s'], p['bn_t'], relu=True)
    h = h.reshape(N, OH, OW, -1)
    return maxpool3x3s2(h)                            # 3x3 maxpool / stride 2


def residual_block(x, p, stride):
    N, H, W, Cin = x.shape
    c_mid = p['w1'].shape[1]
    c_out = p['w3'].shape[1]
    # fused 1x1 reduce + BN1 + ReLU (one pallas_call)
    h1 = matmul_affine(x.reshape(-1, Cin), p['w1'], p['bn1_s'], p['bn1_t'],
                       relu=True).reshape(N, H, W, c_mid)
    # contiguous im2col for the grouped 3x3
    patches, (_, OH, OW) = extract_patches_lastaxis(h1, 3, stride, 1, 0.0)
    M = N * OH * OW
    has_proj = (stride != 1) or (Cin != c_out)
    if has_proj:
        xs = x[:, ::stride, ::stride, :].reshape(M, Cin)
        args = (patches, xs, p['w2_dense'], p['w3'], p['ws'],
                p['bn2_s'].reshape(1, c_mid), p['bn2_t'].reshape(1, c_mid),
                p['bn3_s'].reshape(1, c_out), p['bn3_t'].reshape(1, c_out),
                p['bns_s'].reshape(1, c_out), p['bns_t'].reshape(1, c_out))
    else:
        xs = x.reshape(M, Cin)
        args = (patches, xs, p['w2_dense'], p['w3'],
                p['bn2_s'].reshape(1, c_mid), p['bn2_t'].reshape(1, c_mid),
                p['bn3_s'].reshape(1, c_out), p['bn3_t'].reshape(1, c_out))
    out = pl.pallas_call(
        functools.partial(_block_tail_kernel, has_proj=has_proj),
        out_shape=jax.ShapeDtypeStruct((M, c_out), ACT_DTYPE))(*args)
    return out.reshape(N, OH, OW, c_out)


def stage(x, blocks_params):
    for i, bp in enumerate(blocks_params):
        x = residual_block(x, bp, stride=2 if i == 0 else 1)
    return x


def upsampler(x, p):
    """conv1x1 + ConvTranspose2d(k=2,s=2) folded into ONE (M,Cin)@(Cin,4*Cout)
    matmul (weights pre-fused at init), followed by a sub-pixel shuffle."""
    # TODO(synk): h.deconv_upsample is undefined in the source; k=2/s=2 assumed.
    N, H, W, Cin = x.shape
    wf, bf = p['wf'], p['bf']
    Cout = wf.shape[1] // 4
    y = matmul_affine(x.reshape(-1, Cin), wf,
                      jnp.ones((4 * Cout,), jnp.float32), bf, relu=False)
    y = y.reshape(N, H, W, 2, 2, Cout).transpose(0, 1, 3, 2, 4, 5)
    return y.reshape(N, 2 * H, 2 * W, Cout)


def ida_merge(x_low, x_up, scale, shift, relu=True):
    """relu?(BN(x_low + up(x_high))), stored lane-dense ((…,128) view of C=64)."""
    N, H, W, C = x_low.shape
    M = N * H * W
    fold = 1
    if 128 % C == 0:
        f = 128 // C
        if f > 1 and M % f == 0:
            fold = f
    a = x_up.reshape(M // fold, C * fold)
    b = x_low.reshape(M // fold, C * fold)
    s = jnp.tile(scale.astype(jnp.float32), fold).reshape(1, C * fold)
    t = jnp.tile(shift.astype(jnp.float32), fold).reshape(1, C * fold)
    out = pl.pallas_call(
        functools.partial(_merge_kernel, relu=relu),
        out_shape=jax.ShapeDtypeStruct((M // fold, C * fold), ACT_DTYPE))(a, b, s, t)
    return out.reshape(N, H, W, C)


def merge_logits(x_low, x_up, scale, shift, w_pad, b_pad, n_cls):
    """Final IDA merge (BN, no relu) fused with the logits 1x1 conv.
    Logits weight is padded to 128 lanes; sliced back outside the kernel."""
    N, H, W, C = x_low.shape
    M = N * H * W
    Np = w_pad.shape[1]
    out = pl.pallas_call(
        _merge_logits_kernel,
        out_shape=jax.ShapeDtypeStruct((M, Np), jnp.float32),
    )(x_up.reshape(M, C), x_low.reshape(M, C),
      scale.reshape(1, C).astype(jnp.float32),
      shift.reshape(1, C).astype(jnp.float32),
      w_pad, b_pad.reshape(1, Np).astype(jnp.float32))
    return out[:, :n_cls].reshape(N, H, W, n_cls)


def resnext_ida_forward(params, x_nchw):
    x = x_nchw.transpose(0, 2, 3, 1).astype(ACT_DTYPE)       # NCHW -> NHWC bf16
    out_input = input_layer(x, params['input'])
    s1 = stage(out_input, params['stage1'])
    s2 = stage(s1, params['stage2'])
    s3 = stage(s2, params['stage3'])
    s4 = stage(s3, params['stage4'])

    bn1, bn2, bn3 = params['stage_bn1'], params['stage_bn2'], params['stage_bn3']
    up2, up3, up4 = params['up2'], params['up3'], params['up4']

    o2_l1 = ida_merge(s1, upsampler(s2, up2), bn1[0], bn1[1], relu=True)
    o3_l1 = ida_merge(s2, upsampler(s3, up3), bn2[0], bn2[1], relu=True)
    o4_l1 = ida_merge(s3, upsampler(s4, up4), bn3[0], bn3[1], relu=True)
    o3_l2 = ida_merge(o2_l1, upsampler(o3_l1, up3), bn2[0], bn2[1], relu=True)
    o4_l2 = ida_merge(o3_l1, upsampler(o4_l1, up4), bn3[0], bn3[1], relu=True)
    # reference forward: BN but NO relu on the final merge; logits fused in
    logits = merge_logits(o3_l2, upsampler(o4_l2, up4), bn3[0], bn3[1],
                          params['logits_w_pad'], params['logits_b_pad'],
                          CLASS_NUM)
    # TODO(synk): reference forward() has no return statement (returns None);
    # we return the logits (NCHW) to make the kernel useful.
    return logits.transpose(0, 3, 1, 2)


# ------------------------------ parameter init --------------------------------
def make_bn(key, C):
    k1, k2, k3, k4 = jax.random.split(key, 4)
    gamma = 1.0 + 0.1 * jax.random.normal(k1, (C,), jnp.float32)
    beta = 0.1 * jax.random.normal(k2, (C,), jnp.float32)
    mean = 0.1 * jax.random.normal(k3, (C,), jnp.float32)
    var = jax.random.uniform(k4, (C,), jnp.float32, 0.5, 1.5)
    scale = gamma * jax.lax.rsqrt(var + BN_EPS)
    shift = beta - mean * scale
    return scale, shift


def init_params(key):
    keys = iter(jax.random.split(key, 256))

    def nrm(shape, s=0.1):
        return s * jax.random.normal(next(keys), shape, jnp.float32)

    params = {}
    bn_s, bn_t = make_bn(next(keys), C0)
    params['input'] = {
        'w': nrm((7, 7, 3, C0)).reshape(49 * 3, C0).astype(ACT_DTYPE),
        'bn_s': bn_s, 'bn_t': bn_t,
    }

    c = [C0] + CHANNEL_NUMS
    for stg in range(1, 5):
        c_in, c_out = c[stg - 1], c[stg]
        c_mid = int(c_out * SHRINKAGE)
        assert c_mid == GROUP, "grouped 3x3 is lowered as depthwise (1 ch/group)"
        blocks = []
        for b in range(BLOCK_NUMS[stg - 1]):
            bc_in = c_in if b == 0 else c_out
            w_taps = nrm((9, c_mid))               # depthwise 3x3 taps
            # block-diagonal dense form so the grouped conv runs on the MXU
            w2_dense = (w_taps[:, :, None] *
                        jnp.eye(c_mid, dtype=jnp.float32)[None]
                        ).reshape(9 * c_mid, c_mid)
            p = {
                'w1': nrm((bc_in, c_mid)).astype(ACT_DTYPE),
                'w2_dense': w2_dense.astype(ACT_DTYPE),
                'w3': nrm((c_mid, c_out)).astype(ACT_DTYPE),
                'ws': nrm((bc_in, c_out)).astype(ACT_DTYPE),  # projection shortcut
            }
            p['bn1_s'], p['bn1_t'] = make_bn(next(keys), c_mid)
            p['bn2_s'], p['bn2_t'] = make_bn(next(keys), c_mid)
            p['bn3_s'], p['bn3_t'] = make_bn(next(keys), c_out)
            p['bns_s'], p['bns_t'] = make_bn(next(keys), c_out)
            blocks.append(p)
        params[f'stage{stg}'] = blocks

    for i in (2, 3, 4):
        c_hi, c_lo = c[i], c[i - 1]
        wc, bc = nrm((c_hi, c_lo)), nrm((c_lo,))
        wd, bd = nrm((2, 2, c_lo, c_lo)), nrm((c_lo,))
        # conv1x1 + deconv(k=2,s=2) are both linear -> fold into one matmul
        wd2 = wd.reshape(4, c_lo, c_lo)                         # (dy*2+dx, Cin, Cout)
        wf = jnp.einsum('hc,tcd->htd', wc, wd2).reshape(c_hi, 4 * c_lo)
        bf = (jnp.einsum('c,tcd->td', bc, wd2) + bd[None, :]).reshape(4 * c_lo)
        params[f'up{i}'] = {'wf': wf.astype(ACT_DTYPE), 'bf': bf}

    for i in (1, 2, 3, 4):
        params[f'stage_bn{i}'] = make_bn(next(keys), c[i])

    wl, bl = nrm((c[4], CLASS_NUM)), nrm((CLASS_NUM,))
    params['logits_w_pad'] = jnp.pad(
        wl, ((0, 0), (0, LOGITS_PAD - CLASS_NUM))).astype(ACT_DTYPE)
    params['logits_b_pad'] = jnp.pad(bl, (0, LOGITS_PAD - CLASS_NUM))
    return params


# ------------------------------ main ------------------------------------------
if __name__ == "__main__":
    key = jax.random.PRNGKey(0)
    pkey, xkey = jax.random.split(key)
    params = init_params(pkey)
    x = jax.random.normal(xkey, (2, 3, 64, 64), jnp.float32)   # NCHW, like PyTorch
    fwd = jax.jit(resnext_ida_forward)
    out = fwd(params, x)
    jax.block_until_ready(out)
    assert out.shape == (2, CLASS_NUM, 8, 8), out.shape
    assert bool(jnp.all(jnp.isfinite(out)))
    print("KERNEL_OK")
</pallas_src>

<mosaic_0001>
module attributes {stable_mosaic.version = 11 : i64} {
  func.func @_mma_kernel(%arg0: i32, %arg1: memref<512x147xbf16, #tpu.memory_space<vmem>>, %arg2: memref<147x64xbf16, #tpu.memory_space<vmem>>, %arg3: memref<1x64xf32, #tpu.memory_space<vmem>>, %arg4: memref<1x64xf32, #tpu.memory_space<vmem>>, %arg5: memref<512x64xbf16, #tpu.memory_space<vmem>>) attributes {dimension_semantics = [#tpu.dimension_semantics<parallel>], iteration_bounds = array<i64: 4>, scalar_prefetch = 0 : i64, scratch_operands = 0 : i64, tpu.core_type = #tpu.core_type<tc>, window_params = [{transform_indices = @transform_0, window_bounds = array<i64: 512, 147>}, {pipeline_mode = #tpu.pipeline_mode<synchronous>, transform_indices = @transform_1, window_bounds = array<i64: 147, 64>}, {pipeline_mode = #tpu.pipeline_mode<synchronous>, transform_indices = @transform_2, window_bounds = array<i64: 1, 64>}, {pipeline_mode = #tpu.pipeline_mode<synchronous>, transform_indices = @transform_3, window_bounds = array<i64: 1, 64>}, {transform_indices = @transform_4, window_bounds = array<i64: 512, 64>}]} {
    %c0 = arith.constant 0 : index
    %c0_0 = arith.constant 0 : index
    %0 = vector.load %arg1[%c0, %c0_0] : memref<512x147xbf16, #tpu.memory_space<vmem>>, vector<512x147xbf16>
    %c0_1 = arith.constant 0 : index
    %c0_2 = arith.constant 0 : index
    %1 = vector.load %arg2[%c0_1, %c0_2] : memref<147x64xbf16, #tpu.memory_space<vmem>>, vector<147x64xbf16>
    %cst = arith.constant dense<0.000000e+00> : vector<512x64xf32>
    %2 = tpu.matmul %0, %1, %cst {dimension_numbers = #tpu.dot_dimension_numbers<[1], [0], [0], [1], [0, 0, 1, 1], [], []>} : vector<512x147xbf16>, vector<147x64xbf16>, vector<512x64xf32> -> vector<512x64xf32>
    %c0_3 = arith.constant 0 : index
    %c0_4 = arith.constant 0 : index
    %3 = vector.load %arg3[%c0_3, %c0_4] : memref<1x64xf32, #tpu.memory_space<vmem>>, vector<1x64xf32>
    %4 = vector.broadcast %3 : vector<1x64xf32> to vector<512x64xf32>
    %5 = arith.mulf %2, %4 : vector<512x64xf32>
    %c0_5 = arith.constant 0 : index
    %c0_6 = arith.constant 0 : index
    %6 = vector.load %arg4[%c0_5, %c0_6] : memref<1x64xf32, #tpu.memory_space<vmem>>, vector<1x64xf32>
    %7 = vector.broadcast %6 : vector<1x64xf32> to vector<512x64xf32>
    %8 = arith.addf %5, %7 : vector<512x64xf32>
    %cst_7 = arith.constant 0.000000e+00 : f32
    %9 = vector.broadcast %cst_7 : f32 to vector<512x64xf32>
    %10 = arith.maximumf %8, %9 : vector<512x64xf32>
    %11 = arith.truncf %10 : vector<512x64xf32> to vector<512x64xbf16>
    %c0_8 = arith.constant 0 : index
    %c0_9 = arith.constant 0 : index
    %12 = vector.load %arg5[%c0_8, %c0_9] : memref<512x64xbf16, #tpu.memory_space<vmem>>, vector<512x64xbf16>
    tpu.vector_store %arg5[%c0_8, %c0_9], %11 {strides = array<i32>} : memref<512x64xbf16, #tpu.memory_space<vmem>>, vector<512x64xbf16>,
    return
  }
  func.func @transform_0(%arg0: i32) -> (i32, i32) {
    %c0_i32 = arith.constant 0 : i32
    %c0_i32_0 = arith.constant 0 : i32
    return %arg0, %c0_i32 : i32, i32
  }
  func.func @transform_1(%arg0: i32) -> (i32, i32) {
    %c0_i32 = arith.constant 0 : i32
    %c0_i32_0 = arith.constant 0 : i32
    %c0_i32_1 = arith.constant 0 : i32
    return %c0_i32, %c0_i32_0 : i32, i32
  }
  func.func @transform_2(%arg0: i32) -> (i32, i32) {
    %c0_i32 = arith.constant 0 : i32
    %c0_i32_0 = arith.constant 0 : i32
    %c0_i32_1 = arith.constant 0 : i32
    return %c0_i32, %c0_i32_0 : i32, i32
  }
  func.func @transform_3(%arg0: i32) -> (i32, i32) {
    %c0_i32 = arith.constant 0 : i32
    %c0_i32_0 = arith.constant 0 : i32
    %c0_i32_1 = arith.constant 0 : i32
    return %c0_i32, %c0_i32_0 : i32, i32
  }
  func.func @transform_4(%arg0: i32) -> (i32, i32) {
    %c0_i32 = arith.constant 0 : i32
    %c0_i32_0 = arith.constant 0 : i32
    return %arg0, %c0_i32 : i32, i32
  }
}

module attributes {stable_mosaic.version = 11 : i64} {
  func.func @_maxpool_kernel(%arg0: memref<9x512x64xbf16, #tpu.memory_space<vmem>>, %arg1: memref<512x64xbf16, #tpu.memory_space<vmem>>) attributes {dimension_semantics = [], scalar_prefetch = 0 : i64, scratch_operands = 0 : i64, tpu.core_type = #tpu.core_type<tc>} {
    %c0 = arith.constant 0 : index
    %c0_0 = arith.constant 0 : index
    %c0_1 = arith.constant 0 : index
    %0 = vector.load %arg0[%c0, %c0_0, %c0_1] : memref<9x512x64xbf16, #tpu.memory_space<vmem>>, vector<1x512x64xbf16>
    %1 = vector.shape_cast %0 : vector<1x512x64xbf16> to vector<512x64xbf16>
    %c1 = arith.constant 1 : index
    %c0_2 = arith.constant 0 : index
    %c0_3 = arith.constant 0 : index
    %2 = vector.load %arg0[%c1, %c0_2, %c0_3] : memref<9x512x64xbf16, #tpu.memory_space<vmem>>, vector<1x512x64xbf16>
    %3 = vector.shape_cast %2 : vector<1x512x64xbf16> to vector<512x64xbf16>
    %4 = arith.maximumf %1, %3 : vector<512x64xbf16>
    %c2 = arith.constant 2 : index
    %c0_4 = arith.constant 0 : index
    %c0_5 = arith.constant 0 : index
    %5 = vector.load %arg0[%c2, %c0_4, %c0_5] : memref<9x512x64xbf16, #tpu.memory_space<vmem>>, vector<1x512x64xbf16>
    %6 = vector.shape_cast %5 : vector<1x512x64xbf16> to vector<512x64xbf16>
    %7 = arith.maximumf %4, %6 : vector<512x64xbf16>
    %c3 = arith.constant 3 : index
    %c0_6 = arith.constant 0 : index
    %c0_7 = arith.constant 0 : index
    %8 = vector.load %arg0[%c3, %c0_6, %c0_7] : memref<9x512x64xbf16, #tpu.memory_space<vmem>>, vector<1x512x64xbf16>
    %9 = vector.shape_cast %8 : vector<1x512x64xbf16> to vector<512x64xbf16>
    %10 = arith.maximumf %7, %9 : vector<512x64xbf16>
    %c4 = arith.constant 4 : index
    %c0_8 = arith.constant 0 : index
    %c0_9 = arith.constant 0 : index
    %11 = vector.load %arg0[%c4, %c0_8, %c0_9] : memref<9x512x64xbf16, #tpu.memory_space<vmem>>, vector<1x512x64xbf16>
    %12 = vector.shape_cast %11 : vector<1x512x64xbf16> to vector<512x64xbf16>
    %13 = arith.maximumf %10, %12 : vector<512x64xbf16>
    %c5 = arith.constant 5 : index
    %c0_10 = arith.constant 0 : index
    %c0_11 = arith.constant 0 : index
    %14 = vector.load %arg0[%c5, %c0_10, %c0_11] : memref<9x512x64xbf16, #tpu.memory_space<vmem>>, vector<1x512x64xbf16>
    %15 = vector.shape_cast %14 : vector<1x512x64xbf16> to vector<512x64xbf16>
    %16 = arith.maximumf %13, %15 : vector<512x64xbf16>
    %c6 = arith.constant 6 : index
    %c0_12 = arith.constant 0 : index
    %c0_13 = arith.constant 0 : index
    %17 = vector.load %arg0[%c6, %c0_12, %c0_13] : memref<9x512x64xbf16, #tpu.memory_space<vmem>>, vector<1x512x64xbf16>
    %18 = vector.shape_cast %17 : vector<1x512x64xbf16> to vector<512x64xbf16>
    %19 = arith.maximumf %16, %18 : vector<512x64xbf16>
    %c7 = arith.constant 7 : index
    %c0_14 = arith.constant 0 : index
    %c0_15 = arith.constant 0 : index
    %20 = vector.load %arg0[%c7, %c0_14, %c0_15] : memref<9x512x64xbf16, #tpu.memory_space<vmem>>, vector<1x512x64xbf16>
    %21 = vector.shape_cast %20 : vector<1x512x64xbf16> to vector<512x64xbf16>
    %22 = arith.maximumf %19, %21 : vector<512x64xbf16>
    %c8 = arith.constant 8 : index
    %c0_16 = arith.constant 0 : index
    %c0_17 = arith.constant 0 : index
    %23 = vector.load %arg0[%c8, %c0_16, %c0_17] : memref<9x512x64xbf16, #tpu.memory_space<vmem>>, vector<1x512x64xbf16>
    %24 = vector.shape_cast %23 : vector<1x512x64xbf16> to vector<512x64xbf16>
    %25 = arith.maximumf %22, %24 : vector<512x64xbf16>
    %c0_18 = arith.constant 0 : index
    %c0_19 = arith.constant 0 : index
    %26 = vector.load %arg1[%c0_18, %c0_19] : memref<512x64xbf16, #tpu.memory_space<vmem>>, vector<512x64xbf16>
    tpu.vector_store %arg1[%c0_18, %c0_19], %25 {strides = array<i32>} : memref<512x64xbf16, #tpu.memory_space<vmem>>, vector<512x64xbf16>,
    return
  }
}

module attributes {stable_mosaic.version = 11 : i64} {
  func.func @_mma_kernel(%arg0: memref<512x64xbf16, #tpu.memory_space<vmem>>, %arg1: memref<64x32xbf16, #tpu.memory_space<vmem>>, %arg2: memref<1x32xf32, #tpu.memory_space<vmem>>, %arg3: memref<1x32xf32, #tpu.memory_space<vmem>>, %arg4: memref<512x32xbf16, #tpu.memory_space<vmem>>) attributes {dimension_semantics = [], scalar_prefetch = 0 : i64, scratch_operands = 0 : i64, tpu.core_type = #tpu.core_type<tc>} {
    %c0 = arith.constant 0 : index
    %c0_0 = arith.constant 0 : index
    %0 = vector.load %arg0[%c0, %c0_0] : memref<512x64xbf16, #tpu.memory_space<vmem>>, vector<512x64xbf16>
    %c0_1 = arith.constant 0 : index
    %c0_2 = arith.constant 0 : index
    %1 = vector.load %arg1[%c0_1, %c0_2] : memref<64x32xbf16, #tpu.memory_space<vmem>>, vector<64x32xbf16>
    %cst = arith.constant dense<0.000000e+00> : vector<512x32xf32>
    %2 = tpu.matmul %0, %1, %cst {dimension_numbers = #tpu.dot_dimension_numbers<[1], [0], [0], [1], [0, 0, 1, 1], [], []>} : vector<512x64xbf16>, vector<64x32xbf16>, vector<512x32xf32> -> vector<512x32xf32>
    %c0_3 = arith.constant 0 : index
    %c0_4 = arith.constant 0 : index
    %3 = vector.load %arg2[%c0_3, %c0_4] : memref<1x32xf32, #tpu.memory_space<vmem>>, vector<1x32xf32>
    %4 = vector.broadcast %3 : vector<1x32xf32> to vector<512x32xf32>
    %5 = arith.mulf %2, %4 : vector<512x32xf32>
    %c0_5 = arith.constant 0 : index
    %c0_6 = arith.constant 0 : index
    %6 = vector.load %arg3[%c0_5, %c0_6] : memref<1x32xf32, #tpu.memory_space<vmem>>, vector<1x32xf32>
    %7 = vector.broadcast %6 : vector<1x32xf32> to vector<512x32xf32>
    %8 = arith.addf %5, %7 : vector<512x32xf32>
    %cst_7 = arith.constant 0.000000e+00 : f32
    %9 = vector.broadcast %cst_7 : f32 to vector<512x32xf32>
    %10 = arith.maximumf %8, %9 : vector<512x32xf32>
    %11 = arith.truncf %10 : vector<512x32xf32> to vector<512x32xbf16>
    %c0_8 = arith.constant 0 : index
    %c0_9 = arith.constant 0 : index
    %12 = vector.load %arg4[%c0_8, %c0_9] : memref<512x32xbf16, #tpu.memory_space<vmem>>, vector<512x32xbf16>
    tpu.vector_store %arg4[%c0_8, %c0_9], %11 {strides = array<i32>} : memref<512x32xbf16, #tpu.memory_space<vmem>>, vector<512x32xbf16>,
    return
  }
}

module attributes {stable_mosaic.version = 11 : i64} {
  func.func @_block_tail_kernel(%arg0: memref<128x288xbf16, #tpu.memory_space<vmem>>, %arg1: memref<128x64xbf16, #tpu.memory_space<vmem>>, %arg2: memref<288x32xbf16, #tpu.memory_space<vmem>>, %arg3: memref<32x64xbf16, #tpu.memory_space<vmem>>, %arg4: memref<64x64xbf16, #tpu.memory_space<vmem>>, %arg5: memref<1x32xf32, #tpu.memory_space<vmem>>, %arg6: memref<1x32xf32, #tpu.memory_space<vmem>>, %arg7: memref<1x64xf32, #tpu.memory_space<vmem>>, %arg8: memref<1x64xf32, #tpu.memory_space<vmem>>, %arg9: memref<1x64xf32, #tpu.memory_space<vmem>>, %arg10: memref<1x64xf32, #tpu.memory_space<vmem>>, %arg11: memref<128x64xbf16, #tpu.memory_space<vmem>>) attributes {dimension_semantics = [], scalar_prefetch = 0 : i64, scratch_operands = 0 : i64, tpu.core_type = #tpu.core_type<tc>} {
    %c0 = arith.constant 0 : index
    %c0_0 = arith.constant 0 : index
    %0 = vector.load %arg0[%c0, %c0_0] : memref<128x288xbf16, #tpu.memory_space<vmem>>, vector<128x288xbf16>
    %c0_1 = arith.constant 0 : index
    %c0_2 = arith.constant 0 : index
    %1 = vector.load %arg2[%c0_1, %c0_2] : memref<288x32xbf16, #tpu.memory_space<vmem>>, vector<288x32xbf16>
    %cst = arith.constant dense<0.000000e+00> : vector<128x32xf32>
    %2 = tpu.matmul %0, %1, %cst {dimension_numbers = #tpu.dot_dimension_numbers<[1], [0], [0], [1], [0, 0, 1, 1], [], []>} : vector<128x288xbf16>, vector<288x32xbf16>, vector<128x32xf32> -> vector<128x32xf32>
    %c0_3 = arith.constant 0 : index
    %c0_4 = arith.constant 0 : index
    %3 = vector.load %arg5[%c0_3, %c0_4] : memref<1x32xf32, #tpu.memory_space<vmem>>, vector<1x32xf32>
    %4 = vector.broadcast %3 : vector<1x32xf32> to vector<128x32xf32>
    %5 = arith.mulf %2, %4 : vector<128x32xf32>
    %c0_5 = arith.constant 0 : index
    %c0_6 = arith.constant 0 : index
    %6 = vector.load %arg6[%c0_5, %c0_6] : memref<1x32xf32, #tpu.memory_space<vmem>>, vector<1x32xf32>
    %7 = vector.broadcast %6 : vector<1x32xf32> to vector<128x32xf32>
    %8 = arith.addf %5, %7 : vector<128x32xf32>
    %cst_7 = arith.constant 0.000000e+00 : f32
    %9 = vector.broadcast %cst_7 : f32 to vector<128x32xf32>
    %10 = arith.maximumf %8, %9 : vector<128x32xf32>
    %11 = arith.truncf %10 : vector<128x32xf32> to vector<128x32xbf16>
    %c0_8 = arith.constant 0 : index
    %c0_9 = arith.constant 0 : index
    %12 = vector.load %arg3[%c0_8, %c0_9] : memref<32x64xbf16, #tpu.memory_space<vmem>>, vector<32x64xbf16>
    %cst_10 = arith.constant dense<0.000000e+00> : vector<128x64xf32>
    %13 = tpu.matmul %11, %12, %cst_10 {dimension_numbers = #tpu.dot_dimension_numbers<[1], [0], [0], [1], [0, 0, 1, 1], [], []>} : vector<128x32xbf16>, vector<32x64xbf16>, vector<128x64xf32> -> vector<128x64xf32>
    %c0_11 = arith.constant 0 : index
    %c0_12 = arith.constant 0 : index
    %14 = vector.load %arg7[%c0_11, %c0_12] : memref<1x64xf32, #tpu.memory_space<vmem>>, vector<1x64xf32>
    %15 = vector.broadcast %14 : vector<1x64xf32> to vector<128x64xf32>
    %16 = arith.mulf %13, %15 : vector<128x64xf32>
    %c0_13 = arith.constant 0 : index
    %c0_14 = arith.constant 0 : index
    %17 = vector.load %arg8[%c0_13, %c0_14] : memref<1x64xf32, #tpu.memory_space<vmem>>, vector<1x64xf32>
    %18 = vector.broadcast %17 : vector<1x64xf32> to vector<128x64xf32>
    %19 = arith.addf %16, %18 : vector<128x64xf32>
    %c0_15 = arith.constant 0 : index
    %c0_16 = arith.constant 0 : index
    %20 = vector.load %arg1[%c0_15, %c0_16] : memref<128x64xbf16, #tpu.memory_space<vmem>>, vector<128x64xbf16>
    %c0_17 = arith.constant 0 : index
    %c0_18 = arith.constant 0 : index
    %21 = vector.load %arg4[%c0_17, %c0_18] : memref<64x64xbf16, #tpu.memory_space<vmem>>, vector<64x64xbf16>
    %cst_19 = arith.constant dense<0.000000e+00> : vector<128x64xf32>
    %22 = tpu.matmul %20, %21, %cst_19 {dimension_numbers = #tpu.dot_dimension_numbers<[1], [0], [0], [1], [0, 0, 1, 1], [], []>} : vector<128x64xbf16>, vector<64x64xbf16>, vector<128x64xf32> -> vector<128x64xf32>
    %c0_20 = arith.constant 0 : index
    %c0_21 = arith.constant 0 : index
    %23 = vector.load %arg9[%c0_20, %c0_21] : memref<1x64xf32, #tpu.memory_space<vmem>>, vector<1x64xf32>
    %24 = vector.broadcast %23 : vector<1x64xf32> to vector<128x64xf32>
    %25 = arith.mulf %22, %24 : vector<128x64xf32>
    %c0_22 = arith.constant 0 : index
    %c0_23 = arith.constant 0 : index
    %26 = vector.load %arg10[%c0_22, %c0_23] : memref<1x64xf32, #tpu.memory_space<vmem>>, vector<1x64xf32>
    %27 = vector.broadcast %26 : vector<1x64xf32> to vector<128x64xf32>
    %28 = arith.addf %25, %27 : vector<128x64xf32>
    %29 = arith.addf %19, %28 : vector<128x64xf32>
    %cst_24 = arith.constant 0.000000e+00 : f32
    %30 = vector.broadcast %cst_24 : f32 to vector<128x64xf32>
    %31 = arith.maximumf %29, %30 : vector<128x64xf32>
    %32 = arith.truncf %31 : vector<128x64xf32> to vector<128x64xbf16>
    %c0_25 = arith.constant 0 : index
    %c0_26 = arith.constant 0 : index
    %33 = vector.load %arg11[%c0_25, %c0_26] : memref<128x64xbf16, #tpu.memory_space<vmem>>, vector<128x64xbf16>
    tpu.vector_store %arg11[%c0_25, %c0_26], %32 {strides = array<i32>} : memref<128x64xbf16, #tpu.memory_space<vmem>>, vector<128x64xbf16>,
    return
  }
}

module attributes {stable_mosaic.version = 11 : i64} {
  func.func @_mma_kernel(%arg0: memref<128x64xbf16, #tpu.memory_space<vmem>>, %arg1: memref<64x32xbf16, #tpu.memory_space<vmem>>, %arg2: memref<1x32xf32, #tpu.memory_space<vmem>>, %arg3: memref<1x32xf32, #tpu.memory_space<vmem>>, %arg4: memref<128x32xbf16, #tpu.memory_space<vmem>>) attributes {dimension_semantics = [], scalar_prefetch = 0 : i64, scratch_operands = 0 : i64, tpu.core_type = #tpu.core_type<tc>} {
    %c0 = arith.constant 0 : index
    %c0_0 = arith.constant 0 : index
    %0 = vector.load %arg0[%c0, %c0_0] : memref<128x64xbf16, #tpu.memory_space<vmem>>, vector<128x64xbf16>
    %c0_1 = arith.constant 0 : index
    %c0_2 = arith.constant 0 : index
    %1 = vector.load %arg1[%c0_1, %c0_2] : memref<64x32xbf16, #tpu.memory_space<vmem>>, vector<64x32xbf16>
    %cst = arith.constant dense<0.000000e+00> : vector<128x32xf32>
    %2 = tpu.matmul %0, %1, %cst {dimension_numbers = #tpu.dot_dimension_numbers<[1], [0], [0], [1], [0, 0, 1, 1], [], []>} : vector<128x64xbf16>, vector<64x32xbf16>, vector<128x32xf32> -> vector<128x32xf32>
    %c0_3 = arith.constant 0 : index
    %c0_4 = arith.constant 0 : index
    %3 = vector.load %arg2[%c0_3, %c0_4] : memref<1x32xf32, #tpu.memory_space<vmem>>, vector<1x32xf32>
    %4 = vector.broadcast %3 : vector<1x32xf32> to vector<128x32xf32>
    %5 = arith.mulf %2, %4 : vector<128x32xf32>
    %c0_5 = arith.constant 0 : index
    %c0_6 = arith.constant 0 : index
    %6 = vector.load %arg3[%c0_5, %c0_6] : memref<1x32xf32, #tpu.memory_space<vmem>>, vector<1x32xf32>
    %7 = vector.broadcast %6 : vector<1x32xf32> to vector<128x32xf32>
    %8 = arith.addf %5, %7 : vector<128x32xf32>
    %cst_7 = arith.constant 0.000000e+00 : f32
    %9 = vector.broadcast %cst_7 : f32 to vector<128x32xf32>
    %10 = arith.maximumf %8, %9 : vector<128x32xf32>
    %11 = arith.truncf %10 : vector<128x32xf32> to vector<128x32xbf16>
    %c0_8 = arith.constant 0 : index
    %c0_9 = arith.constant 0 : index
    %12 = vector.load %arg4[%c0_8, %c0_9] : memref<128x32xbf16, #tpu.memory_space<vmem>>, vector<128x32xbf16>
    tpu.vector_store %arg4[%c0_8, %c0_9], %11 {strides = array<i32>} : memref<128x32xbf16, #tpu.memory_space<vmem>>, vector<128x32xbf16>,
    return
  }
}

module attributes {stable_mosaic.version = 11 : i64} {
  func.func @_block_tail_kernel(%arg0: memref<32x288xbf16, #tpu.memory_space<vmem>>, %arg1: memref<32x64xbf16, #tpu.memory_space<vmem>>, %arg2: memref<288x32xbf16, #tpu.memory_space<vmem>>, %arg3: memref<32x64xbf16, #tpu.memory_space<vmem>>, %arg4: memref<64x64xbf16, #tpu.memory_space<vmem>>, %arg5: memref<1x32xf32, #tpu.memory_space<vmem>>, %arg6: memref<1x32xf32, #tpu.memory_space<vmem>>, %arg7: memref<1x64xf32, #tpu.memory_space<vmem>>, %arg8: memref<1x64xf32, #tpu.memory_space<vmem>>, %arg9: memref<1x64xf32, #tpu.memory_space<vmem>>, %arg10: memref<1x64xf32, #tpu.memory_space<vmem>>, %arg11: memref<32x64xbf16, #tpu.memory_space<vmem>>) attributes {dimension_semantics = [], scalar_prefetch = 0 : i64, scratch_operands = 0 : i64, tpu.core_type = #tpu.core_type<tc>} {
    %c0 = arith.constant 0 : index
    %c0_0 = arith.constant 0 : index
    %0 = vector.load %arg0[%c0, %c0_0] : memref<32x288xbf16, #tpu.memory_space<vmem>>, vector<32x288xbf16>
    %c0_1 = arith.constant 0 : index
    %c0_2 = arith.constant 0 : index
    %1 = vector.load %arg2[%c0_1, %c0_2] : memref<288x32xbf16, #tpu.memory_space<vmem>>, vector<288x32xbf16>
    %cst = arith.constant dense<0.000000e+00> : vector<32x32xf32>
    %2 = tpu.matmul %0, %1, %cst {dimension_numbers = #tpu.dot_dimension_numbers<[1], [0], [0], [1], [0, 0, 1, 1], [], []>} : vector<32x288xbf16>, vector<288x32xbf16>, vector<32x32xf32> -> vector<32x32xf32>
    %c0_3 = arith.constant 0 : index
    %c0_4 = arith.constant 0 : index
    %3 = vector.load %arg5[%c0_3, %c0_4] : memref<1x32xf32, #tpu.memory_space<vmem>>, vector<1x32xf32>
    %4 = vector.broadcast %3 : vector<1x32xf32> to vector<32x32xf32>
    %5 = arith.mulf %2, %4 : vector<32x32xf32>
    %c0_5 = arith.constant 0 : index
    %c0_6 = arith.constant 0 : index
    %6 = vector.load %arg6[%c0_5, %c0_6] : memref<1x32xf32, #tpu.memory_space<vmem>>, vector<1x32xf32>
    %7 = vector.broadcast %6 : vector<1x32xf32> to vector<32x32xf32>
    %8 = arith.addf %5, %7 : vector<32x32xf32>
    %cst_7 = arith.constant 0.000000e+00 : f32
    %9 = vector.broadcast %cst_7 : f32 to vector<32x32xf32>
    %10 = arith.maximumf %8, %9 : vector<32x32xf32>
    %11 = arith.truncf %10 : vector<32x32xf32> to vector<32x32xbf16>
    %c0_8 = arith.constant 0 : index
    %c0_9 = arith.constant 0 : index
    %12 = vector.load %arg3[%c0_8, %c0_9] : memref<32x64xbf16, #tpu.memory_space<vmem>>, vector<32x64xbf16>
    %cst_10 = arith.constant dense<0.000000e+00> : vector<32x64xf32>
    %13 = tpu.matmul %11, %12, %cst_10 {dimension_numbers = #tpu.dot_dimension_numbers<[1], [0], [0], [1], [0, 0, 1, 1], [], []>} : vector<32x32xbf16>, vector<32x64xbf16>, vector<32x64xf32> -> vector<32x64xf32>
    %c0_11 = arith.constant 0 : index
    %c0_12 = arith.constant 0 : index
    %14 = vector.load %arg7[%c0_11, %c0_12] : memref<1x64xf32, #tpu.memory_space<vmem>>, vector<1x64xf32>
    %15 = vector.broadcast %14 : vector<1x64xf32> to vector<32x64xf32>
    %16 = arith.mulf %13, %15 : vector<32x64xf32>
    %c0_13 = arith.constant 0 : index
    %c0_14 = arith.constant 0 : index
    %17 = vector.load %arg8[%c0_13, %c0_14] : memref<1x64xf32, #tpu.memory_space<vmem>>, vector<1x64xf32>
    %18 = vector.broadcast %17 : vector<1x64xf32> to vector<32x64xf32>
    %19 = arith.addf %16, %18 : vector<32x64xf32>
    %c0_15 = arith.constant 0 : index
    %c0_16 = arith.constant 0 : index
    %20 = vector.load %arg1[%c0_15, %c0_16] : memref<32x64xbf16, #tpu.memory_space<vmem>>, vector<32x64xbf16>
    %c0_17 = arith.constant 0 : index
    %c0_18 = arith.constant 0 : index
    %21 = vector.load %arg4[%c0_17, %c0_18] : memref<64x64xbf16, #tpu.memory_space<vmem>>, vector<64x64xbf16>
    %cst_19 = arith.constant dense<0.000000e+00> : vector<32x64xf32>
    %22 = tpu.matmul %20, %21, %cst_19 {dimension_numbers = #tpu.dot_dimension_numbers<[1], [0], [0], [1], [0, 0, 1, 1], [], []>} : vector<32x64xbf16>, vector<64x64xbf16>, vector<32x64xf32> -> vector<32x64xf32>
    %c0_20 = arith.constant 0 : index
    %c0_21 = arith.constant 0 : index
    %23 = vector.load %arg9[%c0_20, %c0_21] : memref<1x64xf32, #tpu.memory_space<vmem>>, vector<1x64xf32>
    %24 = vector.broadcast %23 : vector<1x64xf32> to vector<32x64xf32>
    %25 = arith.mulf %22, %24 : vector<32x64xf32>
    %c0_22 = arith.constant 0 : index
    %c0_23 = arith.constant 0 : index
    %26 = vector.load %arg10[%c0_22, %c0_23] : memref<1x64xf32, #tpu.memory_space<vmem>>, vector<1x64xf32>
    %27 = vector.broadcast %26 : vector<1x64xf32> to vector<32x64xf32>
    %28 = arith.addf %25, %27 : vector<32x64xf32>
    %29 = arith.addf %19, %28 : vector<32x64xf32>
    %cst_24 = arith.constant 0.000000e+00 : f32
    %30 = vector.broadcast %cst_24 : f32 to vector<32x64xf32>
    %31 = arith.maximumf %29, %30 : vector<32x64xf32>
    %32 = arith.truncf %31 : vector<32x64xf32> to vector<32x64xbf16>
    %c0_25 = arith.constant 0 : index
    %c0_26 = arith.constant 0 : index
    %33 = vector.load %arg11[%c0_25, %c0_26] : memref<32x64xbf16, #tpu.memory_space<vmem>>, vector<32x64xbf16>
    tpu.vector_store %arg11[%c0_25, %c0_26], %32 {strides = array<i32>} : memref<32x64xbf16, #tpu.memory_space<vmem>>, vector<32x64xbf16>,
    return
  }
}

module attributes {stable_mosaic.version = 11 : i64} {
  func.func @_mma_kernel(%arg0: memref<32x64xbf16, #tpu.memory_space<vmem>>, %arg1: memref<64x256xbf16, #tpu.memory_space<vmem>>, %arg2: memref<1x256xf32, #tpu.memory_space<vmem>>, %arg3: memref<1x256xf32, #tpu.memory_space<vmem>>, %arg4: memref<32x256xbf16, #tpu.memory_space<vmem>>) attributes {dimension_semantics = [], scalar_prefetch = 0 : i64, scratch_operands = 0 : i64, tpu.core_type = #tpu.core_type<tc>} {
    %c0 = arith.constant 0 : index
    %c0_0 = arith.constant 0 : index
    %0 = vector.load %arg0[%c0, %c0_0] : memref<32x64xbf16, #tpu.memory_space<vmem>>, vector<32x64xbf16>
    %c0_1 = arith.constant 0 : index
    %c0_2 = arith.constant 0 : index
    %1 = vector.load %arg1[%c0_1, %c0_2] : memref<64x256xbf16, #tpu.memory_space<vmem>>, vector<64x256xbf16>
    %cst = arith.constant dense<0.000000e+00> : vector<32x256xf32>
    %2 = tpu.matmul %0, %1, %cst {dimension_numbers = #tpu.dot_dimension_numbers<[1], [0], [0], [1], [0, 0, 1, 1], [], []>} : vector<32x64xbf16>, vector<64x256xbf16>, vector<32x256xf32> -> vector<32x256xf32>
    %c0_3 = arith.constant 0 : index
    %c0_4 = arith.constant 0 : index
    %3 = vector.load %arg2[%c0_3, %c0_4] : memref<1x256xf32, #tpu.memory_space<vmem>>, vector<1x256xf32>
    %4 = vector.broadcast %3 : vector<1x256xf32> to vector<32x256xf32>
    %5 = arith.mulf %2, %4 : vector<32x256xf32>
    %c0_5 = arith.constant 0 : index
    %c0_6 = arith.constant 0 : index
    %6 = vector.load %arg3[%c0_5, %c0_6] : memref<1x256xf32, #tpu.memory_space<vmem>>, vector<1x256xf32>
    %7 = vector.broadcast %6 : vector<1x256xf32> to vector<32x256xf32>
    %8 = arith.addf %5, %7 : vector<32x256xf32>
    %9 = arith.truncf %8 : vector<32x256xf32> to vector<32x256xbf16>
    %c0_7 = arith.constant 0 : index
    %c0_8 = arith.constant 0 : index
    %10 = vector.load %arg4[%c0_7, %c0_8] : memref<32x256xbf16, #tpu.memory_space<vmem>>, vector<32x256xbf16>
    tpu.vector_store %arg4[%c0_7, %c0_8], %9 {strides = array<i32>} : memref<32x256xbf16, #tpu.memory_space<vmem>>, vector<32x256xbf16>,
    return
  }
}

module attributes {stable_mosaic.version = 11 : i64} {
  func.func @_merge_kernel(%arg0: memref<64x128xbf16, #tpu.memory_space<vmem>>, %arg1: memref<64x128xbf16, #tpu.memory_space<vmem>>, %arg2: memref<1x128xf32, #tpu.memory_space<vmem>>, %arg3: memref<1x128xf32, #tpu.memory_space<vmem>>, %arg4: memref<64x128xbf16, #tpu.memory_space<vmem>>) attributes {dimension_semantics = [], scalar_prefetch = 0 : i64, scratch_operands = 0 : i64, tpu.core_type = #tpu.core_type<tc>} {
    %c0 = arith.constant 0 : index
    %c0_0 = arith.constant 0 : index
    %0 = vector.load %arg0[%c0, %c0_0] : memref<64x128xbf16, #tpu.memory_space<vmem>>, vector<64x128xbf16>
    %1 = arith.extf %0 : vector<64x128xbf16> to vector<64x128xf32>
    %c0_1 = arith.constant 0 : index
    %c0_2 = arith.constant 0 : index
    %2 = vector.load %arg1[%c0_1, %c0_2] : memref<64x128xbf16, #tpu.memory_space<vmem>>, vector<64x128xbf16>
    %3 = arith.extf %2 : vector<64x128xbf16> to vector<64x128xf32>
    %4 = arith.addf %1, %3 : vector<64x128xf32>
    %c0_3 = arith.constant 0 : index
    %c0_4 = arith.constant 0 : index
    %5 = vector.load %arg2[%c0_3, %c0_4] : memref<1x128xf32, #tpu.memory_space<vmem>>, vector<1x128xf32>
    %6 = vector.broadcast %5 : vector<1x128xf32> to vector<64x128xf32>
    %7 = arith.mulf %4, %6 : vector<64x128xf32>
    %c0_5 = arith.constant 0 : index
    %c0_6 = arith.constant 0 : index
    %8 = vector.load %arg3[%c0_5, %c0_6] : memref<1x128xf32, #tpu.memory_space<vmem>>, vector<1x128xf32>
    %9 = vector.broadcast %8 : vector<1x128xf32> to vector<64x128xf32>
    %10 = arith.addf %7, %9 : vector<64x128xf32>
    %cst = arith.constant 0.000000e+00 : f32
    %11 = vector.broadcast %cst : f32 to vector<64x128xf32>
    %12 = arith.maximumf %10, %11 : vector<64x128xf32>
    %13 = arith.truncf %12 : vector<64x128xf32> to vector<64x128xbf16>
    %c0_7 = arith.constant 0 : index
    %c0_8 = arith.constant 0 : index
    %14 = vector.load %arg4[%c0_7, %c0_8] : memref<64x128xbf16, #tpu.memory_space<vmem>>, vector<64x128xbf16>
    tpu.vector_store %arg4[%c0_7, %c0_8], %13 {strides = array<i32>} : memref<64x128xbf16, #tpu.memory_space<vmem>>, vector<64x128xbf16>,
    return
  }
}

module attributes {stable_mosaic.version = 11 : i64} {
  func.func @_mma_kernel(%arg0: memref<32x64xbf16, #tpu.memory_space<vmem>>, %arg1: memref<64x32xbf16, #tpu.memory_space<vmem>>, %arg2: memref<1x32xf32, #tpu.memory_space<vmem>>, %arg3: memref<1x32xf32, #tpu.memory_space<vmem>>, %arg4: memref<32x32xbf16, #tpu.memory_space<vmem>>) attributes {dimension_semantics = [], scalar_prefetch = 0 : i64, scratch_operands = 0 : i64, tpu.core_type = #tpu.core_type<tc>} {
    %c0 = arith.constant 0 : index
    %c0_0 = arith.constant 0 : index
    %0 = vector.load %arg0[%c0, %c0_0] : memref<32x64xbf16, #tpu.memory_space<vmem>>, vector<32x64xbf16>
    %c0_1 = arith.constant 0 : index
    %c0_2 = arith.constant 0 : index
    %1 = vector.load %arg1[%c0_1, %c0_2] : memref<64x32xbf16, #tpu.memory_space<vmem>>, vector<64x32xbf16>
    %cst = arith.constant dense<0.000000e+00> : vector<32x32xf32>
    %2 = tpu.matmul %0, %1, %cst {dimension_numbers = #tpu.dot_dimension_numbers<[1], [0], [0], [1], [0, 0, 1, 1], [], []>} : vector<32x64xbf16>, vector<64x32xbf16>, vector<32x32xf32> -> vector<32x32xf32>
    %c0_3 = arith.constant 0 : index
    %c0_4 = arith.constant 0 : index
    %3 = vector.load %arg2[%c0_3, %c0_4] : memref<1x32xf32, #tpu.memory_space<vmem>>, vector<1x32xf32>
    %4 = vector.broadcast %3 : vector<1x32xf32> to vector<32x32xf32>
    %5 = arith.mulf %2, %4 : vector<32x32xf32>
    %c0_5 = arith.constant 0 : index
    %c0_6 = arith.constant 0 : index
    %6 = vector.load %arg3[%c0_5, %c0_6] : memref<1x32xf32, #tpu.memory_space<vmem>>, vector<1x32xf32>
    %7 = vector.broadcast %6 : vector<1x32xf32> to vector<32x32xf32>
    %8 = arith.addf %5, %7 : vector<32x32xf32>
    %cst_7 = arith.constant 0.000000e+00 : f32
    %9 = vector.broadcast %cst_7 : f32 to vector<32x32xf32>
    %10 = arith.maximumf %8, %9 : vector<32x32xf32>
    %11 = arith.truncf %10 : vector<32x32xf32> to vector<32x32xbf16>
    %c0_8 = arith.constant 0 : index
    %c0_9 = arith.constant 0 : index
    %12 = vector.load %arg4[%c0_8, %c0_9] : memref<32x32xbf16, #tpu.memory_space<vmem>>, vector<32x32xbf16>
    tpu.vector_store %arg4[%c0_8, %c0_9], %11 {strides = array<i32>} : memref<32x32xbf16, #tpu.memory_space<vmem>>, vector<32x32xbf16>,
    return
  }
}

module attributes {stable_mosaic.version = 11 : i64} {
  func.func @_block_tail_kernel(%arg0: memref<8x288xbf16, #tpu.memory_space<vmem>>, %arg1: memref<8x64xbf16, #tpu.memory_space<vmem>>, %arg2: memref<288x32xbf16, #tpu.memory_space<vmem>>, %arg3: memref<32x64xbf16, #tpu.memory_space<vmem>>, %arg4: memref<64x64xbf16, #tpu.memory_space<vmem>>, %arg5: memref<1x32xf32, #tpu.memory_space<vmem>>, %arg6: memref<1x32xf32, #tpu.memory_space<vmem>>, %arg7: memref<1x64xf32, #tpu.memory_space<vmem>>, %arg8: memref<1x64xf32, #tpu.memory_space<vmem>>, %arg9: memref<1x64xf32, #tpu.memory_space<vmem>>, %arg10: memref<1x64xf32, #tpu.memory_space<vmem>>, %arg11: memref<8x64xbf16, #tpu.memory_space<vmem>>) attributes {dimension_semantics = [], scalar_prefetch = 0 : i64, scratch_operands = 0 : i64, tpu.core_type = #tpu.core_type<tc>} {
    %c0 = arith.constant 0 : index
    %c0_0 = arith.constant 0 : index
    %0 = vector.load %arg0[%c0, %c0_0] : memref<8x288xbf16, #tpu.memory_space<vmem>>, vector<8x288xbf16>
    %c0_1 = arith.constant 0 : index
    %c0_2 = arith.constant 0 : index
    %1 = vector.load %arg2[%c0_1, %c0_2] : memref<288x32xbf16, #tpu.memory_space<vmem>>, vector<288x32xbf16>
    %cst = arith.constant dense<0.000000e+00> : vector<8x32xf32>
    %2 = tpu.matmul %0, %1, %cst {dimension_numbers = #tpu.dot_dimension_numbers<[1], [0], [0], [1], [0, 0, 1, 1], [], []>} : vector<8x288xbf16>, vector<288x32xbf16>, vector<8x32xf32> -> vector<8x32xf32>
    %c0_3 = arith.constant 0 : index
    %c0_4 = arith.constant 0 : index
    %3 = vector.load %arg5[%c0_3, %c0_4] : memref<1x32xf32, #tpu.memory_space<vmem>>, vector<1x32xf32>
    %4 = vector.broadcast %3 : vector<1x32xf32> to vector<8x32xf32>
    %5 = arith.mulf %2, %4 : vector<8x32xf32>
    %c0_5 = arith.constant 0 : index
    %c0_6 = arith.constant 0 : index
    %6 = vector.load %arg6[%c0_5, %c0_6] : memref<1x32xf32, #tpu.memory_space<vmem>>, vector<1x32xf32>
    %7 = vector.broadcast %6 : vector<1x32xf32> to vector<8x32xf32>
    %8 = arith.addf %5, %7 : vector<8x32xf32>
    %cst_7 = arith.constant 0.000000e+00 : f32
    %9 = vector.broadcast %cst_7 : f32 to vector<8x32xf32>
    %10 = arith.maximumf %8, %9 : vector<8x32xf32>
    %11 = arith.truncf %10 : vector<8x32xf32> to vector<8x32xbf16>
    %c0_8 = arith.constant 0 : index
    %c0_9 = arith.constant 0 : index
    %12 = vector.load %arg3[%c0_8, %c0_9] : memref<32x64xbf16, #tpu.memory_space<vmem>>, vector<32x64xbf16>
    %cst_10 = arith.constant dense<0.000000e+00> : vector<8x64xf32>
    %13 = tpu.matmul %11, %12, %cst_10 {dimension_numbers = #tpu.dot_dimension_numbers<[1], [0], [0], [1], [0, 0, 1, 1], [], []>} : vector<8x32xbf16>, vector<32x64xbf16>, vector<8x64xf32> -> vector<8x64xf32>
    %c0_11 = arith.constant 0 : index
    %c0_12 = arith.constant 0 : index
    %14 = vector.load %arg7[%c0_11, %c0_12] : memref<1x64xf32, #tpu.memory_space<vmem>>, vector<1x64xf32>
    %15 = vector.broadcast %14 : vector<1x64xf32> to vector<8x64xf32>
    %16 = arith.mulf %13, %15 : vector<8x64xf32>
    %c0_13 = arith.constant 0 : index
    %c0_14 = arith.constant 0 : index
    %17 = vector.load %arg8[%c0_13, %c0_14] : memref<1x64xf32, #tpu.memory_space<vmem>>, vector<1x64xf32>
    %18 = vector.broadcast %17 : vector<1x64xf32> to vector<8x64xf32>
    %19 = arith.addf %16, %18 : vector<8x64xf32>
    %c0_15 = arith.constant 0 : index
    %c0_16 = arith.constant 0 : index
    %20 = vector.load %arg1[%c0_15, %c0_16] : memref<8x64xbf16, #tpu.memory_space<vmem>>, vector<8x64xbf16>
    %c0_17 = arith.constant 0 : index
    %c0_18 = arith.constant 0 : index
    %21 = vector.load %arg4[%c0_17, %c0_18] : memref<64x64xbf16, #tpu.memory_space<vmem>>, vector<64x64xbf16>
    %cst_19 = arith.constant dense<0.000000e+00> : vector<8x64xf32>
    %22 = tpu.matmul %20, %21, %cst_19 {dimension_numbers = #tpu.dot_dimension_numbers<[1], [0], [0], [1], [0, 0, 1, 1], [], []>} : vector<8x64xbf16>, vector<64x64xbf16>, vector<8x64xf32> -> vector<8x64xf32>
    %c0_20 = arith.constant 0 : index
    %c0_21 = arith.constant 0 : index
    %23 = vector.load %arg9[%c0_20, %c0_21] : memref<1x64xf32, #tpu.memory_space<vmem>>, vector<1x64xf32>
    %24 = vector.broadcast %23 : vector<1x64xf32> to vector<8x64xf32>
    %25 = arith.mulf %22, %24 : vector<8x64xf32>
    %c0_22 = arith.constant 0 : index
    %c0_23 = arith.constant 0 : index
    %26 = vector.load %arg10[%c0_22, %c0_23] : memref<1x64xf32, #tpu.memory_space<vmem>>, vector<1x64xf32>
    %27 = vector.broadcast %26 : vector<1x64xf32> to vector<8x64xf32>
    %28 = arith.addf %25, %27 : vector<8x64xf32>
    %29 = arith.addf %19, %28 : vector<8x64xf32>
    %cst_24 = arith.constant 0.000000e+00 : f32
    %30 = vector.broadcast %cst_24 : f32 to vector<8x64xf32>
    %31 = arith.maximumf %29, %30 : vector<8x64xf32>
    %32 = arith.truncf %31 : vector<8x64xf32> to vector<8x64xbf16>
    %c0_25 = arith.constant 0 : index
    %c0_26 = arith.constant 0 : index
    %33 = vector.load %arg11[%c0_25, %c0_26] : memref<8x64xbf16, #tpu.memory_space<vmem>>, vector<8x64xbf16>
    tpu.vector_store %arg11[%c0_25, %c0_26], %32 {strides = array<i32>} : memref<8x64xbf16, #tpu.memory_space<vmem>>, vector<8x64xbf16>,
    return
  }
}

module attributes {stable_mosaic.version = 11 : i64} {
  func.func @_mma_kernel(%arg0: memref<8x64xbf16, #tpu.memory_space<vmem>>, %arg1: memref<64x256xbf16, #tpu.memory_space<vmem>>, %arg2: memref<1x256xf32, #tpu.memory_space<vmem>>, %arg3: memref<1x256xf32, #tpu.memory_space<vmem>>, %arg4: memref<8x256xbf16, #tpu.memory_space<vmem>>) attributes {dimension_semantics = [], scalar_prefetch = 0 : i64, scratch_operands = 0 : i64, tpu.core_type = #tpu.core_type<tc>} {
    %c0 = arith.constant 0 : index
    %c0_0 = arith.constant 0 : index
    %0 = vector.load %arg0[%c0, %c0_0] : memref<8x64xbf16, #tpu.memory_space<vmem>>, vector<8x64xbf16>
    %c0_1 = arith.constant 0 : index
    %c0_2 = arith.constant 0 : index
    %1 = vector.load %arg1[%c0_1, %c0_2] : memref<64x256xbf16, #tpu.memory_space<vmem>>, vector<64x256xbf16>
    %cst = arith.constant dense<0.000000e+00> : vector<8x256xf32>
    %2 = tpu.matmul %0, %1, %cst {dimension_numbers = #tpu.dot_dimension_numbers<[1], [0], [0], [1], [0, 0, 1, 1], [], []>} : vector<8x64xbf16>, vector<64x256xbf16>, vector<8x256xf32> -> vector<8x256xf32>
    %c0_3 = arith.constant 0 : index
    %c0_4 = arith.constant 0 : index
    %3 = vector.load %arg2[%c0_3, %c0_4] : memref<1x256xf32, #tpu.memory_space<vmem>>, vector<1x256xf32>
    %4 = vector.broadcast %3 : vector<1x256xf32> to vector<8x256xf32>
    %5 = arith.mulf %2, %4 : vector<8x256xf32>
    %c0_5 = arith.constant 0 : index
    %c0_6 = arith.constant 0 : index
    %6 = vector.load %arg3[%c0_5, %c0_6] : memref<1x256xf32, #tpu.memory_space<vmem>>, vector<1x256xf32>
    %7 = vector.broadcast %6 : vector<1x256xf32> to vector<8x256xf32>
    %8 = arith.addf %5, %7 : vector<8x256xf32>
    %9 = arith.truncf %8 : vector<8x256xf32> to vector<8x256xbf16>
    %c0_7 = arith.constant 0 : index
    %c0_8 = arith.constant 0 : index
    %10 = vector.load %arg4[%c0_7, %c0_8] : memref<8x256xbf16, #tpu.memory_space<vmem>>, vector<8x256xbf16>
    tpu.vector_store %arg4[%c0_7, %c0_8], %9 {strides = array<i32>} : memref<8x256xbf16, #tpu.memory_space<vmem>>, vector<8x256xbf16>,
    return
  }
}

module attributes {stable_mosaic.version = 11 : i64} {
  func.func @_merge_kernel(%arg0: memref<16x128xbf16, #tpu.memory_space<vmem>>, %arg1: memref<16x128xbf16, #tpu.memory_space<vmem>>, %arg2: memref<1x128xf32, #tpu.memory_space<vmem>>, %arg3: memref<1x128xf32, #tpu.memory_space<vmem>>, %arg4: memref<16x128xbf16, #tpu.memory_space<vmem>>) attributes {dimension_semantics = [], scalar_prefetch = 0 : i64, scratch_operands = 0 : i64, tpu.core_type = #tpu.core_type<tc>} {
    %c0 = arith.constant 0 : index
    %c0_0 = arith.constant 0 : index
    %0 = vector.load %arg0[%c0, %c0_0] : memref<16x128xbf16, #tpu.memory_space<vmem>>, vector<16x128xbf16>
    %1 = arith.extf %0 : vector<16x128xbf16> to vector<16x128xf32>
    %c0_1 = arith.constant 0 : index
    %c0_2 = arith.constant 0 : index
    %2 = vector.load %arg1[%c0_1, %c0_2] : memref<16x128xbf16, #tpu.memory_space<vmem>>, vector<16x128xbf16>
    %3 = arith.extf %2 : vector<16x128xbf16> to vector<16x128xf32>
    %4 = arith.addf %1, %3 : vector<16x128xf32>
    %c0_3 = arith.constant 0 : index
    %c0_4 = arith.constant 0 : index
    %5 = vector.load %arg2[%c0_3, %c0_4] : memref<1x128xf32, #tpu.memory_space<vmem>>, vector<1x128xf32>
    %6 = vector.broadcast %5 : vector<1x128xf32> to vector<16x128xf32>
    %7 = arith.mulf %4, %6 : vector<16x128xf32>
    %c0_5 = arith.constant 0 : index
    %c0_6 = arith.constant 0 : index
    %8 = vector.load %arg3[%c0_5, %c0_6] : memref<1x128xf32, #tpu.memory_space<vmem>>, vector<1x128xf32>
    %9 = vector.broadcast %8 : vector<1x128xf32> to vector<16x128xf32>
    %10 = arith.addf %7, %9 : vector<16x128xf32>
    %cst = arith.constant 0.000000e+00 : f32
    %11 = vector.broadcast %cst : f32 to vector<16x128xf32>
    %12 = arith.maximumf %10, %11 : vector<16x128xf32>
    %13 = arith.truncf %12 : vector<16x128xf32> to vector<16x128xbf16>
    %c0_7 = arith.constant 0 : index
    %c0_8 = arith.constant 0 : index
    %14 = vector.load %arg4[%c0_7, %c0_8] : memref<16x128xbf16, #tpu.memory_space<vmem>>, vector<16x128xbf16>
    tpu.vector_store %arg4[%c0_7, %c0_8], %13 {strides = array<i32>} : memref<16x128xbf16, #tpu.memory_space<vmem>>, vector<16x128xbf16>,
    return
  }
}

module attributes {stable_mosaic.version = 11 : i64} {
  func.func @_mma_kernel(%arg0: memref<8x64xbf16, #tpu.memory_space<vmem>>, %arg1: memref<64x32xbf16, #tpu.memory_space<vmem>>, %arg2: memref<1x32xf32, #tpu.memory_space<vmem>>, %arg3: memref<1x32xf32, #tpu.memory_space<vmem>>, %arg4: memref<8x32xbf16, #tpu.memory_space<vmem>>) attributes {dimension_semantics = [], scalar_prefetch = 0 : i64, scratch_operands = 0 : i64, tpu.core_type = #tpu.core_type<tc>} {
    %c0 = arith.constant 0 : index
    %c0_0 = arith.constant 0 : index
    %0 = vector.load %arg0[%c0, %c0_0] : memref<8x64xbf16, #tpu.memory_space<vmem>>, vector<8x64xbf16>
    %c0_1 = arith.constant 0 : index
    %c0_2 = arith.constant 0 : index
    %1 = vector.load %arg1[%c0_1, %c0_2] : memref<64x32xbf16, #tpu.memory_space<vmem>>, vector<64x32xbf16>
    %cst = arith.constant dense<0.000000e+00> : vector<8x32xf32>
    %2 = tpu.matmul %0, %1, %cst {dimension_numbers = #tpu.dot_dimension_numbers<[1], [0], [0], [1], [0, 0, 1, 1], [], []>} : vector<8x64xbf16>, vector<64x32xbf16>, vector<8x32xf32> -> vector<8x32xf32>
    %c0_3 = arith.constant 0 : index
    %c0_4 = arith.constant 0 : index
    %3 = vector.load %arg2[%c0_3, %c0_4] : memref<1x32xf32, #tpu.memory_space<vmem>>, vector<1x32xf32>
    %4 = vector.broadcast %3 : vector<1x32xf32> to vector<8x32xf32>
    %5 = arith.mulf %2, %4 : vector<8x32xf32>
    %c0_5 = arith.constant 0 : index
    %c0_6 = arith.constant 0 : index
    %6 = vector.load %arg3[%c0_5, %c0_6] : memref<1x32xf32, #tpu.memory_space<vmem>>, vector<1x32xf32>
    %7 = vector.broadcast %6 : vector<1x32xf32> to vector<8x32xf32>
    %8 = arith.addf %5, %7 : vector<8x32xf32>
    %cst_7 = arith.constant 0.000000e+00 : f32
    %9 = vector.broadcast %cst_7 : f32 to vector<8x32xf32>
    %10 = arith.maximumf %8, %9 : vector<8x32xf32>
    %11 = arith.truncf %10 : vector<8x32xf32> to vector<8x32xbf16>
    %c0_8 = arith.constant 0 : index
    %c0_9 = arith.constant 0 : index
    %12 = vector.load %arg4[%c0_8, %c0_9] : memref<8x32xbf16, #tpu.memory_space<vmem>>, vector<8x32xbf16>
    tpu.vector_store %arg4[%c0_8, %c0_9], %11 {strides = array<i32>} : memref<8x32xbf16, #tpu.memory_space<vmem>>, vector<8x32xbf16>,
    return
  }
}

module attributes {stable_mosaic.version = 11 : i64} {
  func.func @_mma_kernel(%arg0: memref<2x64xbf16, #tpu.memory_space<vmem>>, %arg1: memref<64x256xbf16, #tpu.memory_space<vmem>>, %arg2: memref<1x256xf32, #tpu.memory_space<vmem>>, %arg3: memref<1x256xf32, #tpu.memory_space<vmem>>, %arg4: memref<2x256xbf16, #tpu.memory_space<vmem>>) attributes {dimension_semantics = [], scalar_prefetch = 0 : i64, scratch_operands = 0 : i64, tpu.core_type = #tpu.core_type<tc>} {
    %c0 = arith.constant 0 : index
    %c0_0 = arith.constant 0 : index
    %0 = vector.load %arg0[%c0, %c0_0] : memref<2x64xbf16, #tpu.memory_space<vmem>>, vector<2x64xbf16>
    %c0_1 = arith.constant 0 : index
    %c0_2 = arith.constant 0 : index
    %1 = vector.load %arg1[%c0_1, %c0_2] : memref<64x256xbf16, #tpu.memory_space<vmem>>, vector<64x256xbf16>
    %cst = arith.constant dense<0.000000e+00> : vector<2x256xf32>
    %2 = tpu.matmul %0, %1, %cst {dimension_numbers = #tpu.dot_dimension_numbers<[1], [0], [0], [1], [0, 0, 1, 1], [], []>} : vector<2x64xbf16>, vector<64x256xbf16>, vector<2x256xf32> -> vector<2x256xf32>
    %c0_3 = arith.constant 0 : index
    %c0_4 = arith.constant 0 : index
    %3 = vector.load %arg2[%c0_3, %c0_4] : memref<1x256xf32, #tpu.memory_space<vmem>>, vector<1x256xf32>
    %4 = vector.broadcast %3 : vector<1x256xf32> to vector<2x256xf32>
    %5 = arith.mulf %2, %4 : vector<2x256xf32>
    %c0_5 = arith.constant 0 : index
    %c0_6 = arith.constant 0 : index
    %6 = vector.load %arg3[%c0_5, %c0_6] : memref<1x256xf32, #tpu.memory_space<vmem>>, vector<1x256xf32>
    %7 = vector.broadcast %6 : vector<1x256xf32> to vector<2x256xf32>
    %8 = arith.addf %5, %7 : vector<2x256xf32>
    %9 = arith.truncf %8 : vector<2x256xf32> to vector<2x256xbf16>
    %c0_7 = arith.constant 0 : index
    %c0_8 = arith.constant 0 : index
    %10 = vector.load %arg4[%c0_7, %c0_8] : memref<2x256xbf16, #tpu.memory_space<vmem>>, vector<2x256xbf16>
    tpu.vector_store %arg4[%c0_7, %c0_8], %9 {strides = array<i32>} : memref<2x256xbf16, #tpu.memory_space<vmem>>, vector<2x256xbf16>,
    return
  }
}

module attributes {stable_mosaic.version = 11 : i64} {
  func.func @_block_tail_kernel(%arg0: memref<2x288xbf16, #tpu.memory_space<vmem>>, %arg1: memref<2x64xbf16, #tpu.memory_space<vmem>>, %arg2: memref<288x32xbf16, #tpu.memory_space<vmem>>, %arg3: memref<32x64xbf16, #tpu.memory_space<vmem>>, %arg4: memref<64x64xbf16, #tpu.memory_space<vmem>>, %arg5: memref<1x32xf32, #tpu.memory_space<vmem>>, %arg6: memref<1x32xf32, #tpu.memory_space<vmem>>, %arg7: memref<1x64xf32, #tpu.memory_space<vmem>>, %arg8: memref<1x64xf32, #tpu.memory_space<vmem>>, %arg9: memref<1x64xf32, #tpu.memory_space<vmem>>, %arg10: memref<1x64xf32, #tpu.memory_space<vmem>>, %arg11: memref<2x64xbf16, #tpu.memory_space<vmem>>) attributes {dimension_semantics = [], scalar_prefetch = 0 : i64, scratch_operands = 0 : i64, tpu.core_type = #tpu.core_type<tc>} {
    %c0 = arith.constant 0 : index
    %c0_0 = arith.constant 0 : index
    %0 = vector.load %arg0[%c0, %c0_0] : memref<2x288xbf16, #tpu.memory_space<vmem>>, vector<2x288xbf16>
    %c0_1 = arith.constant 0 : index
    %c0_2 = arith.constant 0 : index
    %1 = vector.load %arg2[%c0_1, %c0_2] : memref<288x32xbf16, #tpu.memory_space<vmem>>, vector<288x32xbf16>
    %cst = arith.constant dense<0.000000e+00> : vector<2x32xf32>
    %2 = tpu.matmul %0, %1, %cst {dimension_numbers = #tpu.dot_dimension_numbers<[1], [0], [0], [1], [0, 0, 1, 1], [], []>} : vector<2x288xbf16>, vector<288x32xbf16>, vector<2x32xf32> -> vector<2x32xf32>
    %c0_3 = arith.constant 0 : index
    %c0_4 = arith.constant 0 : index
    %3 = vector.load %arg5[%c0_3, %c0_4] : memref<1x32xf32, #tpu.memory_space<vmem>>, vector<1x32xf32>
    %4 = vector.broadcast %3 : vector<1x32xf32> to vector<2x32xf32>
    %5 = arith.mulf %2, %4 : vector<2x32xf32>
    %c0_5 = arith.constant 0 : index
    %c0_6 = arith.constant 0 : index
    %6 = vector.load %arg6[%c0_5, %c0_6] : memref<1x32xf32, #tpu.memory_space<vmem>>, vector<1x32xf32>
    %7 = vector.broadcast %6 : vector<1x32xf32> to vector<2x32xf32>
    %8 = arith.addf %5, %7 : vector<2x32xf32>
    %cst_7 = arith.constant 0.000000e+00 : f32
    %9 = vector.broadcast %cst_7 : f32 to vector<2x32xf32>
    %10 = arith.maximumf %8, %9 : vector<2x32xf32>
    %11 = arith.truncf %10 : vector<2x32xf32> to vector<2x32xbf16>
    %c0_8 = arith.constant 0 : index
    %c0_9 = arith.constant 0 : index
    %12 = vector.load %arg3[%c0_8, %c0_9] : memref<32x64xbf16, #tpu.memory_space<vmem>>, vector<32x64xbf16>
    %cst_10 = arith.constant dense<0.000000e+00> : vector<2x64xf32>
    %13 = tpu.matmul %11, %12, %cst_10 {dimension_numbers = #tpu.dot_dimension_numbers<[1], [0], [0], [1], [0, 0, 1, 1], [], []>} : vector<2x32xbf16>, vector<32x64xbf16>, vector<2x64xf32> -> vector<2x64xf32>
    %c0_11 = arith.constant 0 : index
    %c0_12 = arith.constant 0 : index
    %14 = vector.load %arg7[%c0_11, %c0_12] : memref<1x64xf32, #tpu.memory_space<vmem>>, vector<1x64xf32>
    %15 = vector.broadcast %14 : vector<1x64xf32> to vector<2x64xf32>
    %16 = arith.mulf %13, %15 : vector<2x64xf32>
    %c0_13 = arith.constant 0 : index
    %c0_14 = arith.constant 0 : index
    %17 = vector.load %arg8[%c0_13, %c0_14] : memref<1x64xf32, #tpu.memory_space<vmem>>, vector<1x64xf32>
    %18 = vector.broadcast %17 : vector<1x64xf32> to vector<2x64xf32>
    %19 = arith.addf %16, %18 : vector<2x64xf32>
    %c0_15 = arith.constant 0 : index
    %c0_16 = arith.constant 0 : index
    %20 = vector.load %arg1[%c0_15, %c0_16] : memref<2x64xbf16, #tpu.memory_space<vmem>>, vector<2x64xbf16>
    %c0_17 = arith.constant 0 : index
    %c0_18 = arith.constant 0 : index
    %21 = vector.load %arg4[%c0_17, %c0_18] : memref<64x64xbf16, #tpu.memory_space<vmem>>, vector<64x64xbf16>
    %cst_19 = arith.constant dense<0.000000e+00> : vector<2x64xf32>
    %22 = tpu.matmul %20, %21, %cst_19 {dimension_numbers = #tpu.dot_dimension_numbers<[1], [0], [0], [1], [0, 0, 1, 1], [], []>} : vector<2x64xbf16>, vector<64x64xbf16>, vector<2x64xf32> -> vector<2x64xf32>
    %c0_20 = arith.constant 0 : index
    %c0_21 = arith.constant 0 : index
    %23 = vector.load %arg9[%c0_20, %c0_21] : memref<1x64xf32, #tpu.memory_space<vmem>>, vector<1x64xf32>
    %24 = vector.broadcast %23 : vector<1x64xf32> to vector<2x64xf32>
    %25 = arith.mulf %22, %24 : vector<2x64xf32>
    %c0_22 = arith.constant 0 : index
    %c0_23 = arith.constant 0 : index
    %26 = vector.load %arg10[%c0_22, %c0_23] : memref<1x64xf32, #tpu.memory_space<vmem>>, vector<1x64xf32>
    %27 = vector.broadcast %26 : vector<1x64xf32> to vector<2x64xf32>
    %28 = arith.addf %25, %27 : vector<2x64xf32>
    %29 = arith.addf %19, %28 : vector<2x64xf32>
    %cst_24 = arith.constant 0.000000e+00 : f32
    %30 = vector.broadcast %cst_24 : f32 to vector<2x64xf32>
    %31 = arith.maximumf %29, %30 : vector<2x64xf32>
    %32 = arith.truncf %31 : vector<2x64xf32> to vector<2x64xbf16>
    %c0_25 = arith.constant 0 : index
    %c0_26 = arith.constant 0 : index
    %33 = vector.load %arg11[%c0_25, %c0_26] : memref<2x64xbf16, #tpu.memory_space<vmem>>, vector<2x64xbf16>
    tpu.vector_store %arg11[%c0_25, %c0_26], %32 {strides = array<i32>} : memref<2x64xbf16, #tpu.memory_space<vmem>>, vector<2x64xbf16>,
    return
  }
}

module attributes {stable_mosaic.version = 11 : i64} {
  func.func @_merge_kernel(%arg0: memref<4x128xbf16, #tpu.memory_space<vmem>>, %arg1: memref<4x128xbf16, #tpu.memory_space<vmem>>, %arg2: memref<1x128xf32, #tpu.memory_space<vmem>>, %arg3: memref<1x128xf32, #tpu.memory_space<vmem>>, %arg4: memref<4x128xbf16, #tpu.memory_space<vmem>>) attributes {dimension_semantics = [], scalar_prefetch = 0 : i64, scratch_operands = 0 : i64, tpu.core_type = #tpu.core_type<tc>} {
    %c0 = arith.constant 0 : index
    %c0_0 = arith.constant 0 : index
    %0 = vector.load %arg0[%c0, %c0_0] : memref<4x128xbf16, #tpu.memory_space<vmem>>, vector<4x128xbf16>
    %1 = arith.extf %0 : vector<4x128xbf16> to vector<4x128xf32>
    %c0_1 = arith.constant 0 : index
    %c0_2 = arith.constant 0 : index
    %2 = vector.load %arg1[%c0_1, %c0_2] : memref<4x128xbf16, #tpu.memory_space<vmem>>, vector<4x128xbf16>
    %3 = arith.extf %2 : vector<4x128xbf16> to vector<4x128xf32>
    %4 = arith.addf %1, %3 : vector<4x128xf32>
    %c0_3 = arith.constant 0 : index
    %c0_4 = arith.constant 0 : index
    %5 = vector.load %arg2[%c0_3, %c0_4] : memref<1x128xf32, #tpu.memory_space<vmem>>, vector<1x128xf32>
    %6 = vector.broadcast %5 : vector<1x128xf32> to vector<4x128xf32>
    %7 = arith.mulf %4, %6 : vector<4x128xf32>
    %c0_5 = arith.constant 0 : index
    %c0_6 = arith.constant 0 : index
    %8 = vector.load %arg3[%c0_5, %c0_6] : memref<1x128xf32, #tpu.memory_space<vmem>>, vector<1x128xf32>
    %9 = vector.broadcast %8 : vector<1x128xf32> to vector<4x128xf32>
    %10 = arith.addf %7, %9 : vector<4x128xf32>
    %cst = arith.constant 0.000000e+00 : f32
    %11 = vector.broadcast %cst : f32 to vector<4x128xf32>
    %12 = arith.maximumf %10, %11 : vector<4x128xf32>
    %13 = arith.truncf %12 : vector<4x128xf32> to vector<4x128xbf16>
    %c0_7 = arith.constant 0 : index
    %c0_8 = arith.constant 0 : index
    %14 = vector.load %arg4[%c0_7, %c0_8] : memref<4x128xbf16, #tpu.memory_space<vmem>>, vector<4x128xbf16>
    tpu.vector_store %arg4[%c0_7, %c0_8], %13 {strides = array<i32>} : memref<4x128xbf16, #tpu.memory_space<vmem>>, vector<4x128xbf16>,
    return
  }
}

module attributes {stable_mosaic.version = 11 : i64} {
  func.func @_merge_logits_kernel(%arg0: memref<128x64xbf16, #tpu.memory_space<vmem>>, %arg1: memref<128x64xbf16, #tpu.memory_space<vmem>>, %arg2: memref<1x64xf32, #tpu.memory_space<vmem>>, %arg3: memref<1x64xf32, #tpu.memory_space<vmem>>, %arg4: memref<64x128xbf16, #tpu.memory_space<vmem>>, %arg5: memref<1x128xf32, #tpu.memory_space<vmem>>, %arg6: memref<128x128xf32, #tpu.memory_space<vmem>>) attributes {dimension_semantics = [], scalar_prefetch = 0 : i64, scratch_operands = 0 : i64, tpu.core_type = #tpu.core_type<tc>} {
    %c0 = arith.constant 0 : index
    %c0_0 = arith.constant 0 : index
    %0 = vector.load %arg0[%c0, %c0_0] : memref<128x64xbf16, #tpu.memory_space<vmem>>, vector<128x64xbf16>
    %1 = arith.extf %0 : vector<128x64xbf16> to vector<128x64xf32>
    %c0_1 = arith.constant 0 : index
    %c0_2 = arith.constant 0 : index
    %2 = vector.load %arg1[%c0_1, %c0_2] : memref<128x64xbf16, #tpu.memory_space<vmem>>, vector<128x64xbf16>
    %3 = arith.extf %2 : vector<128x64xbf16> to vector<128x64xf32>
    %4 = arith.addf %1, %3 : vector<128x64xf32>
    %c0_3 = arith.constant 0 : index
    %c0_4 = arith.constant 0 : index
    %5 = vector.load %arg2[%c0_3, %c0_4] : memref<1x64xf32, #tpu.memory_space<vmem>>, vector<1x64xf32>
    %6 = vector.broadcast %5 : vector<1x64xf32> to vector<128x64xf32>
    %7 = arith.mulf %4, %6 : vector<128x64xf32>
    %c0_5 = arith.constant 0 : index
    %c0_6 = arith.constant 0 : index
    %8 = vector.load %arg3[%c0_5, %c0_6] : memref<1x64xf32, #tpu.memory_space<vmem>>, vector<1x64xf32>
    %9 = vector.broadcast %8 : vector<1x64xf32> to vector<128x64xf32>
    %10 = arith.addf %7, %9 : vector<128x64xf32>
    %11 = arith.truncf %10 : vector<128x64xf32> to vector<128x64xbf16>
    %c0_7 = arith.constant 0 : index
    %c0_8 = arith.constant 0 : index
    %12 = vector.load %arg4[%c0_7, %c0_8] : memref<64x128xbf16, #tpu.memory_space<vmem>>, vector<64x128xbf16>
    %cst = arith.constant dense<0.000000e+00> : vector<128x128xf32>
    %13 = tpu.matmul %11, %12, %cst {dimension_numbers = #tpu.dot_dimension_numbers<[1], [0], [0], [1], [0, 0, 1, 1], [], []>} : vector<128x64xbf16>, vector<64x128xbf16>, vector<128x128xf32> -> vector<128x128xf32>
    %c0_9 = arith.constant 0 : index
    %c0_10 = arith.constant 0 : index
    %14 = vector.load %arg5[%c0_9, %c0_10] : memref<1x128xf32, #tpu.memory_space<vmem>>, vector<1x128xf32>
    %15 = vector.broadcast %14 : vector<1x128xf32> to vector<128x128xf32>
    %16 = arith.addf %13, %15 : vector<128x128xf32>
    %c0_11 = arith.constant 0 : index
    %c0_12 = arith.constant 0 : index
    %17 = vector.load %arg6[%c0_11, %c0_12] : memref<128x128xf32, #tpu.memory_space<vmem>>, vector<128x128xf32>
    tpu.vector_store %arg6[%c0_11, %c0_12], %16 {strides = array<i32>} : memref<128x128xf32, #tpu.memory_space<vmem>>, vector<128x128xf32>,
    return
  }
}

</mosaic_0001>

<llo_original>
// kernel: resnext_ida_forward.22
$region0: #{resnext_ida_forward.22}
  #allocation0 [shape = 'u32[]', space=smem, size = 0x4, offset = 0x4, fixed_abs, tag = 'smem constant byte address 0x4 - core index']
  #allocation1 [shape = 'u32[72,128]{1,0:T(1,128)}', space=vmem, size = 0x9000, scoped, tag = 'internal scratch']
  %s0 = inlined_call_operand.vmem [shape: bf16[2048,147], index: 0, kind: input, shape index: {}]
  %s1 = inlined_call_operand.vmem [shape: bf16[147,64], index: 1, kind: input, shape index: {}]
  %s2 = inlined_call_operand.vmem [shape: f32[1,64], index: 2, kind: input, shape index: {}]
  %s3 = inlined_call_operand.vmem [shape: f32[1,64], index: 3, kind: input, shape index: {}]
  %s4 = inlined_call_operand.vmem [shape: bf16[2048,64], index: 4, kind: output, shape index: {}]
  %s5 = sld [smem:[#allocation0]]
  $region49: #{resnext_ida_forward.22} parent=0
    _
  %s7 = ssub.s32 1, %s5
  %s8 = scalar_select 0, %s7, %s5
  loop: start=0, step=1, limit=6
  $region2: #{resnext_ida_forward.22} parent=0 // loop_pre_header
    _
  $region3: #{resnext_ida_forward.22} parent=0 // loop_header
    %s10 = sphi 0, %s14
    %p11 = scmp.ge.s32.totalorder %s10, 6
    %s20 = sphi 0, %s22
    %s23 = sphi 0, %s20
    %s24 = sphi 0, %s23
    %s40 = sphi 0, %s24
    %s44 = sphi 0, %s44
    %s46 = sphi 0, %s44
    %s47 = sphi 0, %s46
    %s61 = sphi 0, %s47
    %s65 = sphi 0, %s65
    %s67 = sphi 0, %s65
    %s68 = sphi 0, %s67
    %s82 = sphi 0, %s68
    %s86 = sphi 0, %s86
    %s88 = sphi 0, %s86
    %s89 = sphi 0, %s88
    %s103 = sphi 0, %s89
    %s109 = sphi 0, %s111
    %s112 = sphi 0, %s109
    %s113 = sphi 0, %s112
    %s129 = sphi 0, %s113
  $region4: #{resnext_ida_forward.22} parent=0 // loop_header_branch
    %13 = sbr.rel (%p11) target = $region8
  $region5: #{resnext_ida_forward.22} parent=0 // loop_body
    %s15 = ssub.s32 %s10, 1
    %s16 = ssub.s32 %s10, 2
    %s17 = sadd.s32 %s10, 1
    %s18 = ssub.s32 %s10, %s17
    %p19 = scmp.eq.s32.totalorder %s18, 0
    %s21 = sadd.s32 %s20, 1
    %s22 = scalar_select %p19, %s20, %s21
    %p25 = pneg %p19
    %p26 = scmp.eq.s32.totalorder %s10, 3
    %p27 = por %p25, %p26
    %p28 = scmp.ne.s32.totalorder %s20, %s23
    %p29 = scmp.eq.s32.totalorder %s10, 0
    %p30 = por %p28, %p29
    %p31 = scmp.ne.s32.totalorder %s20, %s23
    %p32 = scmp.eq.s32.totalorder %s15, 3
    %p33 = por %p31, %p32
    %p34 = scmp.ne.s32.totalorder %s23, %s24
    %p35 = scmp.eq.s32.totalorder %s15, 0
    %p36 = por %p34, %p35
    %p37 = scmp.ne.s32.totalorder %s23, %s24
    %p38 = scmp.eq.s32.totalorder %s16, 3
    %p39 = por %p37, %p38
    %p41 = scmp.ne.s32.totalorder %s24, %s40
    %p42 = scmp.eq.s32.totalorder %s16, 0
    %p43 = por %p41, %p42
    %s45 = sadd.s32 %s44, 1
    %p48 = scmp.eq.s32.totalorder %s10, 3
    %p49 = scmp.ne.s32.totalorder %s44, %s46
    %p50 = scmp.eq.s32.totalorder %s10, 0
    %p51 = por %p49, %p50
    %p52 = scmp.ne.s32.totalorder %s44, %s46
    %p53 = scmp.eq.s32.totalorder %s15, 3
    %p54 = por %p52, %p53
    %p55 = scmp.ne.s32.totalorder %s46, %s47
    %p56 = scmp.eq.s32.totalorder %s15, 0
    %p57 = por %p55, %p56
    %p58 = scmp.ne.s32.totalorder %s46, %s47
    %p59 = scmp.eq.s32.totalorder %s16, 3
    %p60 = por %p58, %p59
    %p62 = scmp.ne.s32.totalorder %s47, %s61
    %p63 = scmp.eq.s32.totalorder %s16, 0
    %p64 = por %p62, %p63
    %s66 = sadd.s32 %s65, 1
    %p69 = scmp.eq.s32.totalorder %s10, 3
    %p70 = scmp.ne.s32.totalorder %s65, %s67
    %p71 = scmp.eq.s32.totalorder %s10, 0
    %p72 = por %p70, %p71
    %p73 = scmp.ne.s32.totalorder %s65, %s67
    %p74 = scmp.eq.s32.totalorder %s15, 3
    %p75 = por %p73, %p74
    %p76 = scmp.ne.s32.totalorder %s67, %s68
    %p77 = scmp.eq.s32.totalorder %s15, 0
    %p78 = por %p76, %p77
    %p79 = scmp.ne.s32.totalorder %s67, %s68
    %p80 = scmp.eq.s32.totalorder %s16, 3
    %p81 = por %p79, %p80
    %p83 = scmp.ne.s32.totalorder %s68, %s82
    %p84 = scmp.eq.s32.totalorder %s16, 0
    %p85 = por %p83, %p84
    %s87 = sadd.s32 %s86, 1
    %p90 = scmp.eq.s32.totalorder %s10, 3
    %p91 = scmp.ne.s32.totalorder %s86, %s88
    %p92 = scmp.eq.s32.totalorder %s10, 0
    %p93 = por %p91, %p92
    %p94 = scmp.ne.s32.totalorder %s86, %s88
    %p95 = scmp.eq.s32.totalorder %s15, 3
    %p96 = por %p94, %p95
    %p97 = scmp.ne.s32.totalorder %s88, %s89
    %p98 = scmp.eq.s32.totalorder %s15, 0
    %p99 = por %p97, %p98
    %p100 = scmp.ne.s32.totalorder %s88, %s89
    %p101 = scmp.eq.s32.totalorder %s16, 3
    %p102 = por %p100, %p101
    %p104 = scmp.ne.s32.totalorder %s89, %s103
    %p105 = scmp.eq.s32.totalorder %s16, 0
    %p106 = por %p104, %p105
    %s107 = ssub.s32 %s10, %s17
    %p108 = scmp.eq.s32.totalorder %s107, 0
    %s110 = sadd.s32 %s109, 1
    %s111 = scalar_select %p108, %s109, %s110
    %p114 = pneg %p108
    %p115 = scmp.eq.s32.totalorder %s10, 3
    %p116 = por %p114, %p115
    %p117 = scmp.ne.s32.totalorder %s109, %s112
    %p118 = scmp.eq.s32.totalorder %s10, 0
    %p119 = por %p117, %p118
    %p120 = scmp.ne.s32.totalorder %s109, %s112
    %p121 = scmp.eq.s32.totalorder %s15, 3
    %p122 = por %p120, %p121
    %p123 = scmp.ne.s32.totalorder %s112, %s113
    %p124 = scmp.eq.s32.totalorder %s15, 0
    %p125 = por %p123, %p124
    %p126 = scmp.ne.s32.totalorder %s112, %s113
    %p127 = scmp.eq.s32.totalorder %s16, 3
    %p128 = por %p126, %p127
    %p130 = scmp.ne.s32.totalorder %s113, %s129
    %p131 = scmp.eq.s32.totalorder %s16, 0
    %p132 = por %p130, %p131
    %p133 = scmp.le.s32.totalorder 1, %s10
    %p134 = scmp.lt.s32.totalorder %s10, 5
    %p135 = pnand %p133, %p134
    %p136 = pneg %p135
    // Predicated region
    $region9: #{resnext_ida_forward.22} parent=5 // pred_check
      _
    $region10: #{resnext_ida_forward.22} parent=5 // pred_check_branch
      %138 = sbr.rel (%p135) target = $region12
    $region11: #{resnext_ida_forward.22} parent=5 // pred_region
      %s139 = ssub.s32 %s10, 1
      // Predicated region
      $region13: #{resnext_ida_forward.22} parent=11 // pred_check
        %p140 = pneg %p57
      $region14: #{resnext_ida_forward.22} parent=11 // pred_check_branch
        %142 = sbr.rel (%p140) target = $region16
      $region15: #{resnext_ida_forward.22} parent=11 // pred_region
        _
      $region16: #{resnext_ida_forward.22} parent=11 // pred_fallthru
        _
      // Predicated region
      $region17: #{resnext_ida_forward.22} parent=11 // pred_check
        %p143 = pneg %p78
      $region18: #{resnext_ida_forward.22} parent=11 // pred_check_branch
        %145 = sbr.rel (%p143) target = $region20
      $region19: #{resnext_ida_forward.22} parent=11 // pred_region
        _
      $region20: #{resnext_ida_forward.22} parent=11 // pred_fallthru
        _
      // Predicated region
      $region21: #{resnext_ida_forward.22} parent=11 // pred_check
        %p146 = pneg %p99
      $region22: #{resnext_ida_forward.22} parent=11 // pred_check_branch
        %148 = sbr.rel (%p146) target = $region24
      $region23: #{resnext_ida_forward.22} parent=11 // pred_region
        _
      $region24: #{resnext_ida_forward.22} parent=11 // pred_fallthru
        _
    $region12: #{resnext_ida_forward.22} parent=5 // pred_fallthru
      _
    %p149 = scmp.lt.s32.totalorder %s10, 4
    // Predicated region
    $region25: #{resnext_ida_forward.22} parent=5 // pred_check
      %p150 = pneg %p149
    $region26: #{resnext_ida_forward.22} parent=5 // pred_check_branch
      %152 = sbr.rel (%p150) target = $region28
    $region27: #{resnext_ida_forward.22} parent=5 // pred_region
      // Predicated region
      $region29: #{resnext_ida_forward.22} parent=27 // pred_check
        %p153 = pneg %p30
      $region30: #{resnext_ida_forward.22} parent=27 // pred_check_branch
        %155 = sbr.rel (%p153) target = $region32
      $region31: #{resnext_ida_forward.22} parent=27 // pred_region
        %s156 = smul.u32 64, %s10
        %p157 = scmp.lt.s32.totalorder %s156, 255
        %s158 = scalar_select %p157, %s156, 255
        %s159 = smul.addr %s158, 2
        %s160 = smul.addr %s159, 4
        %s161 = scalar_lea.vmem %s0, %s160
        %s162 = smul.u32 64, %s10
      $region32: #{resnext_ida_forward.22} parent=27 // pred_fallthru
        _
    $region28: #{resnext_ida_forward.22} parent=5 // pred_fallthru
      _
    %p163 = scmp.le.s32.totalorder 1, %s10
    %p164 = scmp.lt.s32.totalorder %s10, 5
    %p165 = pnand %p163, %p164
    %p166 = pneg %p165
    // Predicated region
    $region33: #{resnext_ida_forward.22} parent=5 // pred_check
      _
    $region34: #{resnext_ida_forward.22} parent=5 // pred_check_branch
      %168 = sbr.rel (%p165) target = $region36
    $region35: #{resnext_ida_forward.22} parent=5 // pred_region
      %s169 = ssub.s32 %s10, 1
      %s170 = smul.u32 64, %s15
      %p171 = scmp.lt.s32.totalorder %s170, 255
      %s172 = scalar_select %p171, %s170, 255
      %s173 = smul.addr %s172, 2
      %s174 = smul.addr %s173, 4
      %s175 = scalar_lea.vmem %s0, %s174
      %p176 = pneg %p36
      %p177 = pneg %p33
      %p178 = pneg %p57
      %p179 = pneg %p54
      %p180 = pneg %p78
      %p181 = pneg %p75
      %p182 = pneg %p99
      %p183 = pneg %p96
      %p184 = pneg %p125
      %p185 = pneg %p122
      %s186 = smul.u32 64, %s15
      %p187 = scmp.lt.s32.totalorder %s186, 255
      %s188 = scalar_select %p187, %s186, 255
      %s189 = smul.addr %s188, 4
      %s190 = scalar_lea.vmem %s4, %s189
      %s191 = smul.u32 64, %s15
      %p192 = scmp.lt.s32.totalorder %s191, 255
      %s193 = scalar_select %p192, %s191, 255
      %s194 = smul.addr %s193, 2
      %s195 = smul.addr %s194, 4
      %s196 = scalar_lea.vmem %s0, %s195
      %s197 = smul.u32 64, %s15
      %s198 = smul.u32 64, %s15
      %p199 = scmp.lt.s32.totalorder %s198, 255
      %s200 = scalar_select %p199, %s198, 255
      %s201 = smul.addr %s200, 4
      %s202 = scalar_lea.vmem %s4, %s201
      %s203 = smul.u32 64, %s15
      %v205 = vld [vmem:[%s196] sm:$0xff]
      %v206 = vld [vmem:[%s196 + $0x8] sm:$0xff]
      %v207 = vld [vmem:[%s196 + $0x10] sm:$0xff]
      %v208 = vld [vmem:[%s196 + $0x18] sm:$0xff]
      %v209 = vld [vmem:[%s196 + $0x20] sm:$0xff]
      %v210 = vld [vmem:[%s196 + $0x28] sm:$0xff]
      %v211 = vld [vmem:[%s196 + $0x30] sm:$0xff]
      %v212 = vld [vmem:[%s196 + $0x38] sm:$0xff]
      %v213 = vld [vmem:[%s196 + $0x40] sm:$0xff]
      %v214 = vld [vmem:[%s196 + $0x48] sm:$0xff]
      %v215 = vld [vmem:[%s196 + $0x50] sm:$0xff]
      %v216 = vld [vmem:[%s196 + $0x58] sm:$0xff]
      %v217 = vld [vmem:[%s196 + $0x60] sm:$0xff]
      %v218 = vld [vmem:[%s196 + $0x68] sm:$0xff]
      %v219 = vld [vmem:[%s196 + $0x70] sm:$0xff]
      %v220 = vld [vmem:[%s196 + $0x78] sm:$0xff]
      %v221 = vld [vmem:[%s196 + $0x80] sm:$0xff]
      %v222 = vld [vmem:[%s196 + $0x88] sm:$0xff]
      %v223 = vld [vmem:[%s196 + $0x90] sm:$0xff]
      %v224 = vld [vmem:[%s196 + $0x98] sm:$0xff]
      %v225 = vld [vmem:[%s196 + $0xa0] sm:$0xff]
      %v226 = vld [vmem:[%s196 + $0xa8] sm:$0xff]
      %v227 = vld [vmem:[%s196 + $0xb0] sm:$0xff]
      %v228 = vld [vmem:[%s196 + $0xb8] sm:$0xff]
      %v229 = vld [vmem:[%s196 + $0xc0] sm:$0xff]
      %v230 = vld [vmem:[%s196 + $0xc8] sm:$0xff]
      %v231 = vld [vmem:[%s196 + $0xd0] sm:$0xff]
      %v232 = vld [vmem:[%s196 + $0xd8] sm:$0xff]
      %v233 = vld [vmem:[%s196 + $0xe0] sm:$0xff]
      %v234 = vld [vmem:[%s196 + $0xe8] sm:$0xff]
      %v235 = vld [vmem:[%s196 + $0xf0] sm:$0xff]
      %v236 = vld [vmem:[%s196 + $0xf8] sm:$0xff]
      %v237 = vld [vmem:[%s196 + $0x100] sm:$0xff]
      %v238 = vld [vmem:[%s196 + $0x108] sm:$0xff]
      %v239 = vld [vmem:[%s196 + $0x110] sm:$0xff]
      %v240 = vld [vmem:[%s196 + $0x118] sm:$0xff]
      %v241 = vld [vmem:[%s196 + $0x120] sm:$0xff]
      %v242 = vld [vmem:[%s196 + $0x128] sm:$0xff]
      %v243 = vld [vmem:[%s196 + $0x130] sm:$0xff]
      %v244 = vld [vmem:[%s196 + $0x138] sm:$0xff]
      %v245 = vld [vmem:[%s196 + $0x140] sm:$0xff]
      %v246 = vld [vmem:[%s196 + $0x148] sm:$0xff]
      %v247 = vld [vmem:[%s196 + $0x150] sm:$0xff]
      %v248 = vld [vmem:[%s196 + $0x158] sm:$0xff]
      %v249 = vld [vmem:[%s196 + $0x160] sm:$0xff]
      %v250 = vld [vmem:[%s196 + $0x168] sm:$0xff]
      %v251 = vld [vmem:[%s196 + $0x170] sm:$0xff]
      %v252 = vld [vmem:[%s196 + $0x178] sm:$0xff]
      %v253 = vld [vmem:[%s196 + $0x180] sm:$0xff]
      %v254 = vld [vmem:[%s196 + $0x188] sm:$0xff]
      %v255 = vld [vmem:[%s196 + $0x190] sm:$0xff]
      %v256 = vld [vmem:[%s196 + $0x198] sm:$0xff]
      %v257 = vld [vmem:[%s196 + $0x1a0] sm:$0xff]
      %v258 = vld [vmem:[%s196 + $0x1a8] sm:$0xff]
      %v259 = vld [vmem:[%s196 + $0x1b0] sm:$0xff]
      %v260 = vld [vmem:[%s196 + $0x1b8] sm:$0xff]
      %v261 = vld [vmem:[%s196 + $0x1c0] sm:$0xff]
      %v262 = vld [vmem:[%s196 + $0x1c8] sm:$0xff]
      %v263 = vld [vmem:[%s196 + $0x1d0] sm:$0xff]
      %v264 = vld [vmem:[%s196 + $0x1d8] sm:$0xff]
      %v265 = vld [vmem:[%s196 + $0x1e0] sm:$0xff]
      %v266 = vld [vmem:[%s196 + $0x1e8] sm:$0xff]
      %v267 = vld [vmem:[%s196 + $0x1f0] sm:$0xff]
      %v268 = vld [vmem:[%s196 + $0x1f8] sm:$0xff]
      %v269 = vld [vmem:[%s1] sm:$0xf]
      %v270 = vld [vmem:[%s1 + $0x4] sm:$0xf]
      %v271 = vld [vmem:[%s1 + $0x8] sm:$0xf]
      %v272 = vld [vmem:[%s1 + $0xc] sm:$0xf]
      %v273 = vld [vmem:[%s1 + $0x10] sm:$0xf]
      %v274 = vld [vmem:[%s1 + $0x14] sm:$0xf]
      %v275 = vld [vmem:[%s1 + $0x18] sm:$0xf]
      %v276 = vld [vmem:[%s1 + $0x1c] sm:$0xf]
      %v277 = vld [vmem:[%s1 + $0x20] sm:$0xf]
      %v278 = vld [vmem:[%s1 + $0x24] sm:$0xf]
      %v279 = vld [vmem:[%s1 + $0x28] sm:$0xf]
      %v280 = vld [vmem:[%s1 + $0x2c] sm:$0xf]
      %v281 = vld [vmem:[%s1 + $0x30] sm:$0xf]
      %v282 = vld [vmem:[%s1 + $0x34] sm:$0xf]
      %v283 = vld [vmem:[%s1 + $0x38] sm:$0xf]
      %v284 = vld [vmem:[%s1 + $0x3c] sm:$0xf]
      %v285 = vld [vmem:[%s1 + $0x40] sm:$0xf]
      %v286 = vld [vmem:[%s1 + $0x44] sm:$0xf]
      %v287 = vld [vmem:[%s1 + $0x48] sm:$0x3]
      %v352 = vunpack.c.l.b16 %v205
      %v353 = vunpack.c.h.b16 %v205
      %v354 = vunpack.c.l.b16 %v206
      %v355 = vunpack.c.h.b16 %v206
      %v356 = vunpack.c.l.b16 %v207
      %v357 = vunpack.c.h.b16 %v207
      %v358 = vunpack.c.l.b16 %v208
      %v359 = vunpack.c.h.b16 %v208
      %v360 = vunpack.c.l.b16 %v209
      %v361 = vunpack.c.h.b16 %v209
      %v362 = vunpack.c.l.b16 %v210
      %v363 = vunpack.c.h.b16 %v210
      %v364 = vunpack.c.l.b16 %v211
      %v365 = vunpack.c.h.b16 %v211
      %v366 = vunpack.c.l.b16 %v212
      %v367 = vunpack.c.h.b16 %v212
      %v368 = vunpack.c.l.b16 %v213
      %v369 = vunpack.c.h.b16 %v213
      %v370 = vunpack.c.l.b16 %v214
      %v371 = vunpack.c.h.b16 %v214
      %v372 = vunpack.c.l.b16 %v215
      %v373 = vunpack.c.h.b16 %v215
      %v374 = vunpack.c.l.b16 %v216
      %v375 = vunpack.c.h.b16 %v216
      %v376 = vunpack.c.l.b16 %v217
      %v377 = vunpack.c.h.b16 %v217
      %v378 = vunpack.c.l.b16 %v218
      %v379 = vunpack.c.h.b16 %v218
      %v380 = vunpack.c.l.b16 %v219
      %v381 = vunpack.c.h.b16 %v219
      %v382 = vunpack.c.l.b16 %v220
      %v383 = vunpack.c.h.b16 %v220
      %v384 = vunpack.c.l.b16 %v221
      %v385 = vunpack.c.h.b16 %v221
      %v386 = vunpack.c.l.b16 %v222
      %v387 = vunpack.c.h.b16 %v222
      %v388 = vunpack.c.l.b16 %v223
      %v389 = vunpack.c.h.b16 %v223
      %v390 = vunpack.c.l.b16 %v224
      %v391 = vunpack.c.h.b16 %v224
      %v392 = vunpack.c.l.b16 %v225
      %v393 = vunpack.c.h.b16 %v225
      %v394 = vunpack.c.l.b16 %v226
      %v395 = vunpack.c.h.b16 %v226
      %v396 = vunpack.c.l.b16 %v227
      %v397 = vunpack.c.h.b16 %v227
      %v398 = vunpack.c.l.b16 %v228
      %v399 = vunpack.c.h.b16 %v228
      %v400 = vunpack.c.l.b16 %v229
      %v401 = vunpack.c.h.b16 %v229
      %v402 = vunpack.c.l.b16 %v230
      %v403 = vunpack.c.h.b16 %v230
      %v404 = vunpack.c.l.b16 %v231
      %v405 = vunpack.c.h.b16 %v231
      %v406 = vunpack.c.l.b16 %v232
      %v407 = vunpack.c.h.b16 %v232
      %v408 = vunpack.c.l.b16 %v233
      %v409 = vunpack.c.h.b16 %v233
      %v410 = vunpack.c.l.b16 %v234
      %v411 = vunpack.c.h.b16 %v234
      %v412 = vunpack.c.l.b16 %v235
      %v413 = vunpack.c.h.b16 %v235
      %v414 = vunpack.c.l.b16 %v236
      %v415 = vunpack.c.h.b16 %v236
      %v416 = vunpack.c.l.b16 %v237
      %v417 = vunpack.c.h.b16 %v237
      %v418 = vunpack.c.l.b16 %v238
      %v419 = vunpack.c.h.b16 %v238
      %v420 = vunpack.c.l.b16 %v239
      %v421 = vunpack.c.h.b16 %v239
      %v422 = vunpack.c.l.b16 %v240
      %v423 = vunpack.c.h.b16 %v240
      %v424 = vunpack.c.l.b16 %v241
      %v425 = vunpack.c.h.b16 %v241
      %v426 = vunpack.c.l.b16 %v242
      %v427 = vunpack.c.h.b16 %v242
      %v428 = vunpack.c.l.b16 %v243
      %v429 = vunpack.c.h.b16 %v243
      %v430 = vunpack.c.l.b16 %v244
      %v431 = vunpack.c.h.b16 %v244
      %v432 = vunpack.c.l.b16 %v245
      %v433 = vunpack.c.h.b16 %v245
      %v434 = vunpack.c.l.b16 %v246
      %v435 = vunpack.c.h.b16 %v246
      %v436 = vunpack.c.l.b16 %v247
      %v437 = vunpack.c.h.b16 %v247
      %v438 = vunpack.c.l.b16 %v248
      %v439 = vunpack.c.h.b16 %v248
      %v440 = vunpack.c.l.b16 %v249
      %v441 = vunpack.c.h.b16 %v249
      %v442 = vunpack.c.l.b16 %v250
      %v443 = vunpack.c.h.b16 %v250
      %v444 = vunpack.c.l.b16 %v251
      %v445 = vunpack.c.h.b16 %v251
      %v446 = vunpack.c.l.b16 %v252
      %v447 = vunpack.c.h.b16 %v252
      %v448 = vunpack.c.l.b16 %v253
      %v449 = vunpack.c.h.b16 %v253
      %v450 = vunpack.c.l.b16 %v254
      %v451 = vunpack.c.h.b16 %v254
      %v452 = vunpack.c.l.b16 %v255
      %v453 = vunpack.c.h.b16 %v255
      %v454 = vunpack.c.l.b16 %v256
      %v455 = vunpack.c.h.b16 %v256
      %v456 = vunpack.c.l.b16 %v257
      %v457 = vunpack.c.h.b16 %v257
      %v458 = vunpack.c.l.b16 %v258
      %v459 = vunpack.c.h.b16 %v258
      %v460 = vunpack.c.l.b16 %v259
      %v461 = vunpack.c.h.b16 %v259
      %v462 = vunpack.c.l.b16 %v260
      %v463 = vunpack.c.h.b16 %v260
      %v464 = vunpack.c.l.b16 %v261
      %v465 = vunpack.c.h.b16 %v261
      %v466 = vunpack.c.l.b16 %v262
      %v467 = vunpack.c.h.b16 %v262
      %v468 = vunpack.c.l.b16 %v263
      %v469 = vunpack.c.h.b16 %v263
      %v470 = vunpack.c.l.b16 %v264
      %v471 = vunpack.c.h.b16 %v264
      %v472 = vunpack.c.l.b16 %v265
      %v473 = vunpack.c.h.b16 %v265
      %v474 = vunpack.c.l.b16 %v266
      %v475 = vunpack.c.h.b16 %v266
      %v476 = vunpack.c.l.b16 %v267
      %v477 = vunpack.c.h.b16 %v267
      %v478 = vunpack.c.l.b16 %v268
      %v479 = vunpack.c.h.b16 %v268
      %v480 = vpack.c.b16 %v354, %v352
      %v481 = vpack.c.b16 %v355, %v353
      %v482 = vpack.c.b16 %v358, %v356
      %v483 = vpack.c.b16 %v359, %v357
      %v484 = vpack.c.b16 %v362, %v360
      %v485 = vpack.c.b16 %v363, %v361
      %v486 = vpack.c.b16 %v366, %v364
      %v487 = vpack.c.b16 %v367, %v365
      %v488 = vpack.c.b16 %v370, %v368
      %v489 = vpack.c.b16 %v371, %v369
      %v490 = vpack.c.b16 %v374, %v372
      %v491 = vpack.c.b16 %v375, %v373
      %v492 = vpack.c.b16 %v378, %v376
      %v493 = vpack.c.b16 %v379, %v377
      %v494 = vpack.c.b16 %v382, %v380
      %v495 = vpack.c.b16 %v383, %v381
      %v496 = vpack.c.b16 %v386, %v384
      %v497 = vpack.c.b16 %v387, %v385
      %v498 = vpack.c.b16 %v390, %v388
      %v499 = vpack.c.b16 %v391, %v389
      %v500 = vpack.c.b16 %v394, %v392
      %v501 = vpack.c.b16 %v395, %v393
      %v502 = vpack.c.b16 %v398, %v396
      %v503 = vpack.c.b16 %v399, %v397
      %v504 = vpack.c.b16 %v402, %v400
      %v505 = vpack.c.b16 %v403, %v401
      %v506 = vpack.c.b16 %v406, %v404
      %v507 = vpack.c.b16 %v407, %v405
      %v508 = vpack.c.b16 %v410, %v408
      %v509 = vpack.c.b16 %v411, %v409
      %v510 = vpack.c.b16 %v414, %v412
      %v511 = vpack.c.b16 %v415, %v413
      %v512 = vpack.c.b16 %v418, %v416
      %v513 = vpack.c.b16 %v419, %v417
      %v514 = vpack.c.b16 %v422, %v420
      %v515 = vpack.c.b16 %v423, %v421
      %v516 = vpack.c.b16 %v426, %v424
      %v517 = vpack.c.b16 %v427, %v425
      %v518 = vpack.c.b16 %v430, %v428
      %v519 = vpack.c.b16 %v431, %v429
      %v520 = vpack.c.b16 %v434, %v432
      %v521 = vpack.c.b16 %v435, %v433
      %v522 = vpack.c.b16 %v438, %v436
      %v523 = vpack.c.b16 %v439, %v437
      %v524 = vpack.c.b16 %v442, %v440
      %v525 = vpack.c.b16 %v443, %v441
      %v526 = vpack.c.b16 %v446, %v444
      %v527 = vpack.c.b16 %v447, %v445
      %v528 = vpack.c.b16 %v450, %v448
      %v529 = vpack.c.b16 %v451, %v449
      %v530 = vpack.c.b16 %v454, %v452
      %v531 = vpack.c.b16 %v455, %v453
      %v532 = vpack.c.b16 %v458, %v456
      %v533 = vpack.c.b16 %v459, %v457
      %v534 = vpack.c.b16 %v462, %v460
      %v535 = vpack.c.b16 %v463, %v461
      %v536 = vpack.c.b16 %v466, %v464
      %v537 = vpack.c.b16 %v467, %v465
      %v538 = vpack.c.b16 %v470, %v468
      %v539 = vpack.c.b16 %v471, %v469
      %v540 = vpack.c.b16 %v474, %v472
      %v541 = vpack.c.b16 %v475, %v473
      %v542 = vpack.c.b16 %v478, %v476
      %v543 = vpack.c.b16 %v479, %v477
      %v595 = vunpack.c.l.b16 %v269
      %v596 = vunpack.c.l.b16 %v270
      %v597 = vunpack.c.l.b16 %v271
      %v598 = vunpack.c.l.b16 %v272
      %v599 = vunpack.c.l.b16 %v273
      %v600 = vunpack.c.l.b16 %v274
      %v601 = vunpack.c.l.b16 %v275
      %v602 = vunpack.c.l.b16 %v276
      %v603 = vunpack.c.l.b16 %v277
      %v604 = vunpack.c.l.b16 %v278
      %v605 = vunpack.c.l.b16 %v279
      %v606 = vunpack.c.l.b16 %v280
      %v607 = vunpack.c.l.b16 %v281
      %v608 = vunpack.c.l.b16 %v282
      %v609 = vunpack.c.l.b16 %v283
      %v610 = vunpack.c.l.b16 %v284
      %v611 = vunpack.c.l.b16 %v285
      %v612 = vunpack.c.l.b16 %v286
      %v613 = vunpack.c.l.b16 %v287
      %v614 = vpack.c.b16 %v596, %v595
      %v615 = vpack.c.b16 %v598, %v597
      %v616 = vpack.c.b16 %v600, %v599
      %v617 = vpack.c.b16 %v602, %v601
      %v618 = vpack.c.b16 %v604, %v603
      %v619 = vpack.c.b16 %v606, %v605
      %v620 = vpack.c.b16 %v608, %v607
      %v621 = vpack.c.b16 %v610, %v609
      %v622 = vpack.c.b16 %v612, %v611
      %v623 = vpack.c.b16 %v613, %v613
      %vm633 = vcmask 154624
      %v635 = vsel %vm633, %v481, 0
      %v638 = vsel %vm633, %v483, 0
      %v641 = vsel %vm633, %v485, 0
      %v644 = vsel %vm633, %v487, 0
      %v647 = vsel %vm633, %v489, 0
      %v650 = vsel %vm633, %v491, 0
      %v653 = vsel %vm633, %v493, 0
      %v656 = vsel %vm633, %v495, 0
      %v659 = vsel %vm633, %v497, 0
      %v662 = vsel %vm633, %v499, 0
      %v665 = vsel %vm633, %v501, 0
      %v668 = vsel %vm633, %v503, 0
      %v671 = vsel %vm633, %v505, 0
      %v674 = vsel %vm633, %v507, 0
      %v677 = vsel %vm633, %v509, 0
      %v680 = vsel %vm633, %v511, 0
      %v683 = vsel %vm633, %v513, 0
      %v686 = vsel %vm633, %v515, 0
      %v689 = vsel %vm633, %v517, 0
      %v692 = vsel %vm633, %v519, 0
      %v695 = vsel %vm633, %v521, 0
      %v698 = vsel %vm633, %v523, 0
      %v701 = vsel %vm633, %v525, 0
      %v704 = vsel %vm633, %v527, 0
      %v707 = vsel %vm633, %v529, 0
      %v710 = vsel %vm633, %v531, 0
      %v713 = vsel %vm633, %v533, 0
      %v716 = vsel %vm633, %v535, 0
      %v719 = vsel %vm633, %v537, 0
      %v722 = vsel %vm633, %v539, 0
      %v725 = vsel %vm633, %v541, 0
      %v728 = vsel %vm633, %v543, 0
      %vm730 = vcmask 1040384
      %vm731 = vcmask 1041408
      %v732 = vsel %vm730, 4294967295, 65535
      %v733 = vsel %vm731, %v732, 0
      %v735 = vand.u32 %v623, %v733
      %737 = vmatpush.bf16.msra.mxu0 %v621
      %738 = vmatpush.bf16.msra.mxu0 %v620
      %739 = vmatpush.bf16.msra.mxu0 %v619
      %740 = vmatpush.bf16.msra.mxu0 %v618
      %741 = vmatpush.bf16.msra.mxu0 %v617
      %742 = vmatpush.bf16.msra.mxu0 %v616
      %743 = vmatpush.bf16.msra.mxu0 %v615
      %744 = vmatpush.bf16.msra.mxu0 %v614
      %745 = vmatmul.bf16.gmra.mxu0 %v480
      %v746 = vpop.f32.mrf.mxu0
      %v747 = vadd.f32 0.0, %v746
      %v748 = vpop.f32.mrf.mxu0
      %v749 = vadd.f32 0.0, %v748
      %750 = vmatmul.bf16.gmra.mxu0 %v482
      %v751 = vpop.f32.mrf.mxu0
      %v752 = vadd.f32 0.0, %v751
      %v753 = vpop.f32.mrf.mxu0
      %v754 = vadd.f32 0.0, %v753
      %755 = vmatmul.bf16.gmra.mxu0 %v484
      %v756 = vpop.f32.mrf.mxu0
      %v757 = vadd.f32 0.0, %v756
      %v758 = vpop.f32.mrf.mxu0
      %v759 = vadd.f32 0.0, %v758
      %760 = vmatmul.bf16.gmra.mxu0 %v486
      %v761 = vpop.f32.mrf.mxu0
      %v762 = vadd.f32 0.0, %v761
      %v763 = vpop.f32.mrf.mxu0
      %v764 = vadd.f32 0.0, %v763
      %765 = vmatmul.bf16.gmra.mxu0 %v488
      %v766 = vpop.f32.mrf.mxu0
      %v767 = vadd.f32 0.0, %v766
      %v768 = vpop.f32.mrf.mxu0
      %v769 = vadd.f32 0.0, %v768
      %770 = vmatmul.bf16.gmra.mxu0 %v490
      %v771 = vpop.f32.mrf.mxu0
      %v772 = vadd.f32 0.0, %v771
      %v773 = vpop.f32.mrf.mxu0
      %v774 = vadd.f32 0.0, %v773
      %775 = vmatmul.bf16.gmra.mxu0 %v492
      %v776 = vpop.f32.mrf.mxu0
      %v777 = vadd.f32 0.0, %v776
      %v778 = vpop.f32.mrf.mxu0
      %v779 = vadd.f32 0.0, %v778
      %780 = vmatmul.bf16.gmra.mxu0 %v494
      %v781 = vpop.f32.mrf.mxu0
      %v782 = vadd.f32 0.0, %v781
      %v783 = vpop.f32.mrf.mxu0
      %v784 = vadd.f32 0.0, %v783
      %785 = vmatmul.bf16.gmra.mxu0 %v496
      %v786 = vpop.f32.mrf.mxu0
      %v787 = vadd.f32 0.0, %v786
      %v788 = vpop.f32.mrf.mxu0
      %v789 = vadd.f32 0.0, %v788
      %790 = vmatmul.bf16.gmra.mxu0 %v498
      %v791 = vpop.f32.mrf.mxu0
      %v792 = vadd.f32 0.0, %v791
      %v793 = vpop.f32.mrf.mxu0
      %v794 = vadd.f32 0.0, %v793
      %795 = vmatmul.bf16.gmra.mxu0 %v500
      %v796 = vpop.f32.mrf.mxu0
      %v797 = vadd.f32 0.0, %v796
      %v798 = vpop.f32.mrf.mxu0
      %v799 = vadd.f32 0.0, %v798
      %800 = vmatmul.bf16.gmra.mxu0 %v502
      %v801 = vpop.f32.mrf.mxu0
      %v802 = vadd.f32 0.0, %v801
      %v803 = vpop.f32.mrf.mxu0
      %v804 = vadd.f32 0.0, %v803
      %805 = vmatmul.bf16.gmra.mxu0 %v504
      %v806 = vpop.f32.mrf.mxu0
      %v807 = vadd.f32 0.0, %v806
      %v808 = vpop.f32.mrf.mxu0
      %v809 = vadd.f32 0.0, %v808
      %810 = vmatmul.bf16.gmra.mxu0 %v506
      %v811 = vpop.f32.mrf.mxu0
      %v812 = vadd.f32 0.0, %v811
      %v813 = vpop.f32.mrf.mxu0
      %v814 = vadd.f32 0.0, %v813
      %815 = vmatmul.bf16.gmra.mxu0 %v508
      %v816 = vpop.f32.mrf.mxu0
      %v817 = vadd.f32 0.0, %v816
      %v818 = vpop.f32.mrf.mxu0
      %v819 = vadd.f32 0.0, %v818
      %820 = vmatmul.bf16.gmra.mxu0 %v510
      %v821 = vpop.f32.mrf.mxu0
      %v822 = vadd.f32 0.0, %v821
      %v823 = vpop.f32.mrf.mxu0
      %v824 = vadd.f32 0.0, %v823
      %825 = vmatmul.bf16.gmra.mxu0 %v512
      %v826 = vpop.f32.mrf.mxu0
      %v827 = vadd.f32 0.0, %v826
      %v828 = vpop.f32.mrf.mxu0
      %v829 = vadd.f32 0.0, %v828
      %830 = vmatmul.bf16.gmra.mxu0 %v514
      %v831 = vpop.f32.mrf.mxu0
      %v832 = vadd.f32 0.0, %v831
      %v833 = vpop.f32.mrf.mxu0
      %v834 = vadd.f32 0.0, %v833
      %835 = vmatmul.bf16.gmra.mxu0 %v516
      %v836 = vpop.f32.mrf.mxu0
      %v837 = vadd.f32 0.0, %v836
      %v838 = vpop.f32.mrf.mxu0
      %v839 = vadd.f32 0.0, %v838
      %840 = vmatmul.bf16.gmra.mxu0 %v518
      %v841 = vpop.f32.mrf.mxu0
      %v842 = vadd.f32 0.0, %v841
      %v843 = vpop.f32.mrf.mxu0
      %v844 = vadd.f32 0.0, %v843
      %845 = vmatmul.bf16.gmra.mxu0 %v520
      %v846 = vpop.f32.mrf.mxu0
      %v847 = vadd.f32 0.0, %v846
      %v848 = vpop.f32.mrf.mxu0
      %v849 = vadd.f32 0.0, %v848
      %850 = vmatmul.bf16.gmra.mxu0 %v522
      %v851 = vpop.f32.mrf.mxu0
      %v852 = vadd.f32 0.0, %v851
      %v853 = vpop.f32.mrf.mxu0
      %v854 = vadd.f32 0.0, %v853
      %855 = vmatmul.bf16.gmra.mxu0 %v524
      %v856 = vpop.f32.mrf.mxu0
      %v857 = vadd.f32 0.0, %v856
      %v858 = vpop.f32.mrf.mxu0
      %v859 = vadd.f32 0.0, %v858
      %860 = vmatmul.bf16.gmra.mxu0 %v526
      %v861 = vpop.f32.mrf.mxu0
      %v862 = vadd.f32 0.0, %v861
      %v863 = vpop.f32.mrf.mxu0
      %v864 = vadd.f32 0.0, %v863
      %865 = vmatmul.bf16.gmra.mxu0 %v528
      %v866 = vpop.f32.mrf.mxu0
      %v867 = vadd.f32 0.0, %v866
      %v868 = vpop.f32.mrf.mxu0
      %v869 = vadd.f32 0.0, %v868
      %870 = vmatmul.bf16.gmra.mxu0 %v530
      %v871 = vpop.f32.mrf.mxu0
      %v872 = vadd.f32 0.0, %v871
      %v873 = vpop.f32.mrf.mxu0
      %v874 = vadd.f32 0.0, %v873
      %875 = vmatmul.bf16.gmra.mxu0 %v532
      %v876 = vpop.f32.mrf.mxu0
      %v877 = vadd.f32 0.0, %v876
      %v878 = vpop.f32.mrf.mxu0
      %v879 = vadd.f32 0.0, %v878
      %880 = vmatmul.bf16.gmra.mxu0 %v534
      %v881 = vpop.f32.mrf.mxu0
      %v882 = vadd.f32 0.0, %v881
      %v883 = vpop.f32.mrf.mxu0
      %v884 = vadd.f32 0.0, %v883
      %885 = vmatmul.bf16.gmra.mxu0 %v536
      %v886 = vpop.f32.mrf.mxu0
      %v887 = vadd.f32 0.0, %v886
      %v888 = vpop.f32.mrf.mxu0
      %v889 = vadd.f32 0.0, %v888
      %890 = vmatmul.bf16.gmra.mxu0 %v538
      %v891 = vpop.f32.mrf.mxu0
      %v892 = vadd.f32 0.0, %v891
      %v893 = vpop.f32.mrf.mxu0
      %v894 = vadd.f32 0.0, %v893
      %895 = vmatmul.bf16.gmra.mxu0 %v540
      %v896 = vpop.f32.mrf.mxu0
      %v897 = vadd.f32 0.0, %v896
      %v898 = vpop.f32.mrf.mxu0
      %v899 = vadd.f32 0.0, %v898
      %900 = vmatmul.bf16.gmra.mxu0 %v542
      %v901 = vpop.f32.mrf.mxu0
      %v902 = vadd.f32 0.0, %v901
      %v903 = vpop.f32.mrf.mxu0
      %v904 = vadd.f32 0.0, %v903
      %905 = vdwg.mxu0
      %906 = vmatpush.bf16.msra.mxu0 0
      %907 = vmatpush.bf16.msra.mxu0 0
      %908 = vmatpush.bf16.msra.mxu0 0
      %909 = vmatpush.bf16.msra.mxu0 0
      %910 = vmatpush.bf16.msra.mxu0 0
      %911 = vmatpush.bf16.msra.mxu0 0
      %912 = vmatpush.bf16.msra.mxu0 %v735
      %913 = vmatpush.bf16.msra.mxu0 %v622
      %914 = vmatmul.bf16.gmra.mxu0 %v635
      %v915 = vpop.f32.mrf.mxu0
      %v916 = vadd.f32 %v747, %v915
      %v917 = vpop.f32.mrf.mxu0
      %v918 = vadd.f32 %v749, %v917
      %919 = vmatmul.bf16.gmra.mxu0 %v638
      %v920 = vpop.f32.mrf.mxu0
      %v921 = vadd.f32 %v752, %v920
      %v922 = vpop.f32.mrf.mxu0
      %v923 = vadd.f32 %v754, %v922
      %924 = vmatmul.bf16.gmra.mxu0 %v641
      %v925 = vpop.f32.mrf.mxu0
      %v926 = vadd.f32 %v757, %v925
      %v927 = vpop.f32.mrf.mxu0
      %v928 = vadd.f32 %v759, %v927
      %929 = vmatmul.bf16.gmra.mxu0 %v644
      %v930 = vpop.f32.mrf.mxu0
      %v931 = vadd.f32 %v762, %v930
      %v932 = vpop.f32.mrf.mxu0
      %v933 = vadd.f32 %v764, %v932
      %934 = vmatmul.bf16.gmra.mxu0 %v647
      %v935 = vpop.f32.mrf.mxu0
      %v936 = vadd.f32 %v767, %v935
      %v937 = vpop.f32.mrf.mxu0
      %v938 = vadd.f32 %v769, %v937
      %939 = vmatmul.bf16.gmra.mxu0 %v650
      %v940 = vpop.f32.mrf.mxu0
      %v941 = vadd.f32 %v772, %v940
      %v942 = vpop.f32.mrf.mxu0
      %v943 = vadd.f32 %v774, %v942
      %944 = vmatmul.bf16.gmra.mxu0 %v653
      %v945 = vpop.f32.mrf.mxu0
      %v946 = vadd.f32 %v777, %v945
      %v947 = vpop.f32.mrf.mxu0
      %v948 = vadd.f32 %v779, %v947
      %949 = vmatmul.bf16.gmra.mxu0 %v656
      %v950 = vpop.f32.mrf.mxu0
      %v951 = vadd.f32 %v782, %v950
      %v952 = vpop.f32.mrf.mxu0
      %v953 = vadd.f32 %v784, %v952
      %954 = vmatmul.bf16.gmra.mxu0 %v659
      %v955 = vpop.f32.mrf.mxu0
      %v956 = vadd.f32 %v787, %v955
      %v957 = vpop.f32.mrf.mxu0
      %v958 = vadd.f32 %v789, %v957
      %959 = vmatmul.bf16.gmra.mxu0 %v662
      %v960 = vpop.f32.mrf.mxu0
      %v961 = vadd.f32 %v792, %v960
      %v962 = vpop.f32.mrf.mxu0
      %v963 = vadd.f32 %v794, %v962
      %964 = vmatmul.bf16.gmra.mxu0 %v665
      %v965 = vpop.f32.mrf.mxu0
      %v966 = vadd.f32 %v797, %v965
      %v967 = vpop.f32.mrf.mxu0
      %v968 = vadd.f32 %v799, %v967
      %969 = vmatmul.bf16.gmra.mxu0 %v668
      %v970 = vpop.f32.mrf.mxu0
      %v971 = vadd.f32 %v802, %v970
      %v972 = vpop.f32.mrf.mxu0
      %v973 = vadd.f32 %v804, %v972
      %974 = vmatmul.bf16.gmra.mxu0 %v671
      %v975 = vpop.f32.mrf.mxu0
      %v976 = vadd.f32 %v807, %v975
      %v977 = vpop.f32.mrf.mxu0
      %v978 = vadd.f32 %v809, %v977
      %979 = vmatmul.bf16.gmra.mxu0 %v674
      %v980 = vpop.f32.mrf.mxu0
      %v981 = vadd.f32 %v812, %v980
      %v982 = vpop.f32.mrf.mxu0
      %v983 = vadd.f32 %v814, %v982
      %984 = vmatmul.bf16.gmra.mxu0 %v677
      %v985 = vpop.f32.mrf.mxu0
      %v986 = vadd.f32 %v817, %v985
      %v987 = vpop.f32.mrf.mxu0
      %v988 = vadd.f32 %v819, %v987
      %989 = vmatmul.bf16.gmra.mxu0 %v680
      %v990 = vpop.f32.mrf.mxu0
      %v991 = vadd.f32 %v822, %v990
      %v992 = vpop.f32.mrf.mxu0
      %v993 = vadd.f32 %v824, %v992
      %994 = vmatmul.bf16.gmra.mxu0 %v683
      %v995 = vpop.f32.mrf.mxu0
      %v996 = vadd.f32 %v827, %v995
      %v997 = vpop.f32.mrf.mxu0
      %v998 = vadd.f32 %v829, %v997
      %999 = vmatmul.bf16.gmra.mxu0 %v686
      %v1000 = vpop.f32.mrf.mxu0
      %v1001 = vadd.f32 %v832, %v1000
      %v1002 = vpop.f32.mrf.mxu0
      %v1003 = vadd.f32 %v834, %v1002
      %1004 = vmatmul.bf16.gmra.mxu0 %v689
      %v1005 = vpop.f32.mrf.mxu0
      %v1006 = vadd.f32 %v837, %v1005
      %v1007 = vpop.f32.mrf.mxu0
      %v1008 = vadd.f32 %v839, %v1007
      %1009 = vmatmul.bf16.gmra.mxu0 %v692
      %v1010 = vpop.f32.mrf.mxu0
      %v1011 = vadd.f32 %v842, %v1010
      %v1012 = vpop.f32.mrf.mxu0
      %v1013 = vadd.f32 %v844, %v1012
      %1014 = vmatmul.bf16.gmra.mxu0 %v695
      %v1015 = vpop.f32.mrf.mxu0
      %v1016 = vadd.f32 %v847, %v1015
      %v1017 = vpop.f32.mrf.mxu0
      %v1018 = vadd.f32 %v849, %v1017
      %1019 = vmatmul.bf16.gmra.mxu0 %v698
      %v1020 = vpop.f32.mrf.mxu0
      %v1021 = vadd.f32 %v852, %v1020
      %v1022 = vpop.f32.mrf.mxu0
      %v1023 = vadd.f32 %v854, %v1022
      %1024 = vmatmul.bf16.gmra.mxu0 %v701
      %v1025 = vpop.f32.mrf.mxu0
      %v1026 = vadd.f32 %v857, %v1025
      %v1027 = vpop.f32.mrf.mxu0
      %v1028 = vadd.f32 %v859, %v1027
      %1029 = vmatmul.bf16.gmra.mxu0 %v704
      %v1030 = vpop.f32.mrf.mxu0
      %v1031 = vadd.f32 %v862, %v1030
      %v1032 = vpop.f32.mrf.mxu0
      %v1033 = vadd.f32 %v864, %v1032
      %1034 = vmatmul.bf16.gmra.mxu0 %v707
      %v1035 = vpop.f32.mrf.mxu0
      %v1036 = vadd.f32 %v867, %v1035
      %v1037 = vpop.f32.mrf.mxu0
      %v1038 = vadd.f32 %v869, %v1037
      %1039 = vmatmul.bf16.gmra.mxu0 %v710
      %v1040 = vpop.f32.mrf.mxu0
      %v1041 = vadd.f32 %v872, %v1040
      %v1042 = vpop.f32.mrf.mxu0
      %v1043 = vadd.f32 %v874, %v1042
      %1044 = vmatmul.bf16.gmra.mxu0 %v713
      %v1045 = vpop.f32.mrf.mxu0
      %v1046 = vadd.f32 %v877, %v1045
      %v1047 = vpop.f32.mrf.mxu0
      %v1048 = vadd.f32 %v879, %v1047
      %1049 = vmatmul.bf16.gmra.mxu0 %v716
      %v1050 = vpop.f32.mrf.mxu0
      %v1051 = vadd.f32 %v882, %v1050
      %v1052 = vpop.f32.mrf.mxu0
      %v1053 = vadd.f32 %v884, %v1052
      %1054 = vmatmul.bf16.gmra.mxu0 %v719
      %v1055 = vpop.f32.mrf.mxu0
      %v1056 = vadd.f32 %v887, %v1055
      %v1057 = vpop.f32.mrf.mxu0
      %v1058 = vadd.f32 %v889, %v1057
      %1059 = vmatmul.bf16.gmra.mxu0 %v722
      %v1060 = vpop.f32.mrf.mxu0
      %v1061 = vadd.f32 %v892, %v1060
      %v1062 = vpop.f32.mrf.mxu0
      %v1063 = vadd.f32 %v894, %v1062
      %1064 = vmatmul.bf16.gmra.mxu0 %v725
      %v1065 = vpop.f32.mrf.mxu0
      %v1066 = vadd.f32 %v897, %v1065
      %v1067 = vpop.f32.mrf.mxu0
      %v1068 = vadd.f32 %v899, %v1067
      %1069 = vmatmul.bf16.gmra.mxu0 %v728
      %v1070 = vpop.f32.mrf.mxu0
      %v1071 = vadd.f32 %v902, %v1070
      %v1072 = vpop.f32.mrf.mxu0
      %v1073 = vadd.f32 %v904, %v1072
      %1074 = vdwg.mxu0
      %v1075 = vld [vmem:[%s2] sm:$0x1]
      %v1077 = vperm.slane %v1075, 0
      %v1079 = vmul.f32 %v916, %v1077
      %v1080 = vmul.f32 %v918, %v1077
      %v1081 = vmul.f32 %v921, %v1077
      %v1082 = vmul.f32 %v923, %v1077
      %v1083 = vmul.f32 %v926, %v1077
      %v1084 = vmul.f32 %v928, %v1077
      %v1085 = vmul.f32 %v931, %v1077
      %v1086 = vmul.f32 %v933, %v1077
      %v1087 = vmul.f32 %v936, %v1077
      %v1088 = vmul.f32 %v938, %v1077
      %v1089 = vmul.f32 %v941, %v1077
      %v1090 = vmul.f32 %v943, %v1077
      %v1091 = vmul.f32 %v946, %v1077
      %v1092 = vmul.f32 %v948, %v1077
      %v1093 = vmul.f32 %v951, %v1077
      %v1094 = vmul.f32 %v953, %v1077
      %v1095 = vmul.f32 %v956, %v1077
      %v1096 = vmul.f32 %v958, %v1077
      %v1097 = vmul.f32 %v961, %v1077
      %v1098 = vmul.f32 %v963, %v1077
      %v1099 = vmul.f32 %v966, %v1077
      %v1100 = vmul.f32 %v968, %v1077
      %v1101 = vmul.f32 %v971, %v1077
      %v1102 = vmul.f32 %v973, %v1077
      %v1103 = vmul.f32 %v976, %v1077
      %v1104 = vmul.f32 %v978, %v1077
      %v1105 = vmul.f32 %v981, %v1077
      %v1106 = vmul.f32 %v983, %v1077
      %v1107 = vmul.f32 %v986, %v1077
      %v1108 = vmul.f32 %v988, %v1077
      %v1109 = vmul.f32 %v991, %v1077
      %v1110 = vmul.f32 %v993, %v1077
      %v1111 = vmul.f32 %v996, %v1077
      %v1112 = vmul.f32 %v998, %v1077
      %v1113 = vmul.f32 %v1001, %v1077
      %v1114 = vmul.f32 %v1003, %v1077
      %v1115 = vmul.f32 %v1006, %v1077
      %v1116 = vmul.f32 %v1008, %v1077
      %v1117 = vmul.f32 %v1011, %v1077
      %v1118 = vmul.f32 %v1013, %v1077
      %v1119 = vmul.f32 %v1016, %v1077
      %v1120 = vmul.f32 %v1018, %v1077
      %v1121 = vmul.f32 %v1021, %v1077
      %v1122 = vmul.f32 %v1023, %v1077
      %v1123 = vmul.f32 %v1026, %v1077
      %v1124 = vmul.f32 %v1028, %v1077
      %v1125 = vmul.f32 %v1031, %v1077
      %v1126 = vmul.f32 %v1033, %v1077
      %v1127 = vmul.f32 %v1036, %v1077
      %v1128 = vmul.f32 %v1038, %v1077
      %v1129 = vmul.f32 %v1041, %v1077
      %v1130 = vmul.f32 %v1043, %v1077
      %v1131 = vmul.f32 %v1046, %v1077
      %v1132 = vmul.f32 %v1048, %v1077
      %v1133 = vmul.f32 %v1051, %v1077
      %v1134 = vmul.f32 %v1053, %v1077
      %v1135 = vmul.f32 %v1056, %v1077
      %v1136 = vmul.f32 %v1058, %v1077
      %v1137 = vmul.f32 %v1061, %v1077
      %v1138 = vmul.f32 %v1063, %v1077
      %v1139 = vmul.f32 %v1066, %v1077
      %v1140 = vmul.f32 %v1068, %v1077
      %v1141 = vmul.f32 %v1071, %v1077
      %v1142 = vmul.f32 %v1073, %v1077
      %v1143 = vld [vmem:[%s3] sm:$0x1]
      %v1145 = vperm.slane %v1143, 0
      %v1147 = vadd.f32 %v1079, %v1145
      %v1148 = vadd.f32 %v1080, %v1145
      %v1149 = vadd.f32 %v1081, %v1145
      %v1150 = vadd.f32 %v1082, %v1145
      %v1151 = vadd.f32 %v1083, %v1145
      %v1152 = vadd.f32 %v1084, %v1145
      %v1153 = vadd.f32 %v1085, %v1145
      %v1154 = vadd.f32 %v1086, %v1145
      %v1155 = vadd.f32 %v1087, %v1145
      %v1156 = vadd.f32 %v1088, %v1145
      %v1157 = vadd.f32 %v1089, %v1145
      %v1158 = vadd.f32 %v1090, %v1145
      %v1159 = vadd.f32 %v1091, %v1145
      %v1160 = vadd.f32 %v1092, %v1145
      %v1161 = vadd.f32 %v1093, %v1145
      %v1162 = vadd.f32 %v1094, %v1145
      %v1163 = vadd.f32 %v1095, %v1145
      %v1164 = vadd.f32 %v1096, %v1145
      %v1165 = vadd.f32 %v1097, %v1145
      %v1166 = vadd.f32 %v1098, %v1145
      %v1167 = vadd.f32 %v1099, %v1145
      %v1168 = vadd.f32 %v1100, %v1145
      %v1169 = vadd.f32 %v1101, %v1145
      %v1170 = vadd.f32 %v1102, %v1145
      %v1171 = vadd.f32 %v1103, %v1145
      %v1172 = vadd.f32 %v1104, %v1145
      %v1173 = vadd.f32 %v1105, %v1145
      %v1174 = vadd.f32 %v1106, %v1145
      %v1175 = vadd.f32 %v1107, %v1145
      %v1176 = vadd.f32 %v1108, %v1145
      %v1177 = vadd.f32 %v1109, %v1145
      %v1178 = vadd.f32 %v1110, %v1145
      %v1179 = vadd.f32 %v1111, %v1145
      %v1180 = vadd.f32 %v1112, %v1145
      %v1181 = vadd.f32 %v1113, %v1145
      %v1182 = vadd.f32 %v1114, %v1145
      %v1183 = vadd.f32 %v1115, %v1145
      %v1184 = vadd.f32 %v1116, %v1145
      %v1185 = vadd.f32 %v1117, %v1145
      %v1186 = vadd.f32 %v1118, %v1145
      %v1187 = vadd.f32 %v1119, %v1145
      %v1188 = vadd.f32 %v1120, %v1145
      %v1189 = vadd.f32 %v1121, %v1145
      %v1190 = vadd.f32 %v1122, %v1145
      %v1191 = vadd.f32 %v1123, %v1145
      %v1192 = vadd.f32 %v1124, %v1145
      %v1193 = vadd.f32 %v1125, %v1145
      %v1194 = vadd.f32 %v1126, %v1145
      %v1195 = vadd.f32 %v1127, %v1145
      %v1196 = vadd.f32 %v1128, %v1145
      %v1197 = vadd.f32 %v1129, %v1145
      %v1198 = vadd.f32 %v1130, %v1145
      %v1199 = vadd.f32 %v1131, %v1145
      %v1200 = vadd.f32 %v1132, %v1145
      %v1201 = vadd.f32 %v1133, %v1145
      %v1202 = vadd.f32 %v1134, %v1145
      %v1203 = vadd.f32 %v1135, %v1145
      %v1204 = vadd.f32 %v1136, %v1145
      %v1205 = vadd.f32 %v1137, %v1145
      %v1206 = vadd.f32 %v1138, %v1145
      %v1207 = vadd.f32 %v1139, %v1145
      %v1208 = vadd.f32 %v1140, %v1145
      %v1209 = vadd.f32 %v1141, %v1145
      %v1210 = vadd.f32 %v1142, %v1145
      %v1211 = vmax.f32 %v1147, 0.0
      %v1212 = vmax.f32 %v1148, 0.0
      %v1213 = vmax.f32 %v1149, 0.0
      %v1214 = vmax.f32 %v1150, 0.0
      %v1215 = vmax.f32 %v1151, 0.0
      %v1216 = vmax.f32 %v1152, 0.0
      %v1217 = vmax.f32 %v1153, 0.0
      %v1218 = vmax.f32 %v1154, 0.0
      %v1219 = vmax.f32 %v1155, 0.0
      %v1220 = vmax.f32 %v1156, 0.0
      %v1221 = vmax.f32 %v1157, 0.0
      %v1222 = vmax.f32 %v1158, 0.0
      %v1223 = vmax.f32 %v1159, 0.0
      %v1224 = vmax.f32 %v1160, 0.0
      %v1225 = vmax.f32 %v1161, 0.0
      %v1226 = vmax.f32 %v1162, 0.0
      %v1227 = vmax.f32 %v1163, 0.0
      %v1228 = vmax.f32 %v1164, 0.0
      %v1229 = vmax.f32 %v1165, 0.0
      %v1230 = vmax.f32 %v1166, 0.0
      %v1231 = vmax.f32 %v1167, 0.0
      %v1232 = vmax.f32 %v1168, 0.0
      %v1233 = vmax.f32 %v1169, 0.0
      %v1234 = vmax.f32 %v1170, 0.0
      %v1235 = vmax.f32 %v1171, 0.0
      %v1236 = vmax.f32 %v1172, 0.0
      %v1237 = vmax.f32 %v1173, 0.0
      %v1238 = vmax.f32 %v1174, 0.0
      %v1239 = vmax.f32 %v1175, 0.0
      %v1240 = vmax.f32 %v1176, 0.0
      %v1241 = vmax.f32 %v1177, 0.0
      %v1242 = vmax.f32 %v1178, 0.0
      %v1243 = vmax.f32 %v1179, 0.0
      %v1244 = vmax.f32 %v1180, 0.0
      %v1245 = vmax.f32 %v1181, 0.0
      %v1246 = vmax.f32 %v1182, 0.0
      %v1247 = vmax.f32 %v1183, 0.0
      %v1248 = vmax.f32 %v1184, 0.0
      %v1249 = vmax.f32 %v1185, 0.0
      %v1250 = vmax.f32 %v1186, 0.0
      %v1251 = vmax.f32 %v1187, 0.0
      %v1252 = vmax.f32 %v1188, 0.0
      %v1253 = vmax.f32 %v1189, 0.0
      %v1254 = vmax.f32 %v1190, 0.0
      %v1255 = vmax.f32 %v1191, 0.0
      %v1256 = vmax.f32 %v1192, 0.0
      %v1257 = vmax.f32 %v1193, 0.0
      %v1258 = vmax.f32 %v1194, 0.0
      %v1259 = vmax.f32 %v1195, 0.0
      %v1260 = vmax.f32 %v1196, 0.0
      %v1261 = vmax.f32 %v1197, 0.0
      %v1262 = vmax.f32 %v1198, 0.0
      %v1263 = vmax.f32 %v1199, 0.0
      %v1264 = vmax.f32 %v1200, 0.0
      %v1265 = vmax.f32 %v1201, 0.0
      %v1266 = vmax.f32 %v1202, 0.0
      %v1267 = vmax.f32 %v1203, 0.0
      %v1268 = vmax.f32 %v1204, 0.0
      %v1269 = vmax.f32 %v1205, 0.0
      %v1270 = vmax.f32 %v1206, 0.0
      %v1271 = vmax.f32 %v1207, 0.0
      %v1272 = vmax.f32 %v1208, 0.0
      %v1273 = vmax.f32 %v1209, 0.0
      %v1274 = vmax.f32 %v1210, 0.0
      %v1275 = vpack.c.bf16 %v1211, %v1211
      %v1276 = vpack.c.bf16 %v1212, %v1212
      %v1277 = vpack.c.bf16 %v1213, %v1213
      %v1278 = vpack.c.bf16 %v1214, %v1214
      %v1279 = vpack.c.bf16 %v1215, %v1215
      %v1280 = vpack.c.bf16 %v1216, %v1216
      %v1281 = vpack.c.bf16 %v1217, %v1217
      %v1282 = vpack.c.bf16 %v1218, %v1218
      %v1283 = vpack.c.bf16 %v1219, %v1219
      %v1284 = vpack.c.bf16 %v1220, %v1220
      %v1285 = vpack.c.bf16 %v1221, %v1221
      %v1286 = vpack.c.bf16 %v1222, %v1222
      %v1287 = vpack.c.bf16 %v1223, %v1223
      %v1288 = vpack.c.bf16 %v1224, %v1224
      %v1289 = vpack.c.bf16 %v1225, %v1225
      %v1290 = vpack.c.bf16 %v1226, %v1226
      %v1291 = vpack.c.bf16 %v1227, %v1227
      %v1292 = vpack.c.bf16 %v1228, %v1228
      %v1293 = vpack.c.bf16 %v1229, %v1229
      %v1294 = vpack.c.bf16 %v1230, %v1230
      %v1295 = vpack.c.bf16 %v1231, %v1231
      %v1296 = vpack.c.bf16 %v1232, %v1232
      %v1297 = vpack.c.bf16 %v1233, %v1233
      %v1298 = vpack.c.bf16 %v1234, %v1234
      %v1299 = vpack.c.bf16 %v1235, %v1235
      %v1300 = vpack.c.bf16 %v1236, %v1236
      %v1301 = vpack.c.bf16 %v1237, %v1237
      %v1302 = vpack.c.bf16 %v1238, %v1238
      %v1303 = vpack.c.bf16 %v1239, %v1239
      %v1304 = vpack.c.bf16 %v1240, %v1240
      %v1305 = vpack.c.bf16 %v1241, %v1241
      %v1306 = vpack.c.bf16 %v1242, %v1242
      %v1307 = vpack.c.bf16 %v1243, %v1243
      %v1308 = vpack.c.bf16 %v1244, %v1244
      %v1309 = vpack.c.bf16 %v1245, %v1245
      %v1310 = vpack.c.bf16 %v1246, %v1246
      %v1311 = vpack.c.bf16 %v1247, %v1247
      %v1312 = vpack.c.bf16 %v1248, %v1248
      %v1313 = vpack.c.bf16 %v1249, %v1249
      %v1314 = vpack.c.bf16 %v1250, %v1250
      %v1315 = vpack.c.bf16 %v1251, %v1251
      %v1316 = vpack.c.bf16 %v1252, %v1252
      %v1317 = vpack.c.bf16 %v1253, %v1253
      %v1318 = vpack.c.bf16 %v1254, %v1254
      %v1319 = vpack.c.bf16 %v1255, %v1255
      %v1320 = vpack.c.bf16 %v1256, %v1256
      %v1321 = vpack.c.bf16 %v1257, %v1257
      %v1322 = vpack.c.bf16 %v1258, %v1258
      %v1323 = vpack.c.bf16 %v1259, %v1259
      %v1324 = vpack.c.bf16 %v1260, %v1260
      %v1325 = vpack.c.bf16 %v1261, %v1261
      %v1326 = vpack.c.bf16 %v1262, %v1262
      %v1327 = vpack.c.bf16 %v1263, %v1263
      %v1328 = vpack.c.bf16 %v1264, %v1264
      %v1329 = vpack.c.bf16 %v1265, %v1265
      %v1330 = vpack.c.bf16 %v1266, %v1266
      %v1331 = vpack.c.bf16 %v1267, %v1267
      %v1332 = vpack.c.bf16 %v1268, %v1268
      %v1333 = vpack.c.bf16 %v1269, %v1269
      %v1334 = vpack.c.bf16 %v1270, %v1270
      %v1335 = vpack.c.bf16 %v1271, %v1271
      %v1336 = vpack.c.bf16 %v1272, %v1272
      %v1337 = vpack.c.bf16 %v1273, %v1273
      %v1338 = vpack.c.bf16 %v1274, %v1274
      %vm1339 = vcmask 519168
      %1340 = vst.msk [vmem:[%s202] sm:$0xf] %vm1339, %v1275
      %1341 = vst.msk [vmem:[%s202 + $0x4] sm:$0xf] %vm1339, %v1276
      %1342 = vst.msk [vmem:[%s202 + $0x8] sm:$0xf] %vm1339, %v1277
      %1343 = vst.msk [vmem:[%s202 + $0xc] sm:$0xf] %vm1339, %v1278
      %1344 = vst.msk [vmem:[%s202 + $0x10] sm:$0xf] %vm1339, %v1279
      %1345 = vst.msk [vmem:[%s202 + $0x14] sm:$0xf] %vm1339, %v1280
      %1346 = vst.msk [vmem:[%s202 + $0x18] sm:$0xf] %vm1339, %v1281
      %1347 = vst.msk [vmem:[%s202 + $0x1c] sm:$0xf] %vm1339, %v1282
      %1348 = vst.msk [vmem:[%s202 + $0x20] sm:$0xf] %vm1339, %v1283
      %1349 = vst.msk [vmem:[%s202 + $0x24] sm:$0xf] %vm1339, %v1284
      %1350 = vst.msk [vmem:[%s202 + $0x28] sm:$0xf] %vm1339, %v1285
      %1351 = vst.msk [vmem:[%s202 + $0x2c] sm:$0xf] %vm1339, %v1286
      %1352 = vst.msk [vmem:[%s202 + $0x30] sm:$0xf] %vm1339, %v1287
      %1353 = vst.msk [vmem:[%s202 + $0x34] sm:$0xf] %vm1339, %v1288
      %1354 = vst.msk [vmem:[%s202 + $0x38] sm:$0xf] %vm1339, %v1289
      %1355 = vst.msk [vmem:[%s202 + $0x3c] sm:$0xf] %vm1339, %v1290
      %1356 = vst.msk [vmem:[%s202 + $0x40] sm:$0xf] %vm1339, %v1291
      %1357 = vst.msk [vmem:[%s202 + $0x44] sm:$0xf] %vm1339, %v1292
      %1358 = vst.msk [vmem:[%s202 + $0x48] sm:$0xf] %vm1339, %v1293
      %1359 = vst.msk [vmem:[%s202 + $0x4c] sm:$0xf] %vm1339, %v1294
      %1360 = vst.msk [vmem:[%s202 + $0x50] sm:$0xf] %vm1339, %v1295
      %1361 = vst.msk [vmem:[%s202 + $0x54] sm:$0xf] %vm1339, %v1296
      %1362 = vst.msk [vmem:[%s202 + $0x58] sm:$0xf] %vm1339, %v1297
      %1363 = vst.msk [vmem:[%s202 + $0x5c] sm:$0xf] %vm1339, %v1298
      %1364 = vst.msk [vmem:[%s202 + $0x60] sm:$0xf] %vm1339, %v1299
      %1365 = vst.msk [vmem:[%s202 + $0x64] sm:$0xf] %vm1339, %v1300
      %1366 = vst.msk [vmem:[%s202 + $0x68] sm:$0xf] %vm1339, %v1301
      %1367 = vst.msk [vmem:[%s202 + $0x6c] sm:$0xf] %vm1339, %v1302
      %1368 = vst.msk [vmem:[%s202 + $0x70] sm:$0xf] %vm1339, %v1303
      %1369 = vst.msk [vmem:[%s202 + $0x74] sm:$0xf] %vm1339, %v1304
      %1370 = vst.msk [vmem:[%s202 + $0x78] sm:$0xf] %vm1339, %v1305
      %1371 = vst.msk [vmem:[%s202 + $0x7c] sm:$0xf] %vm1339, %v1306
      %1372 = vst.msk [vmem:[%s202 + $0x80] sm:$0xf] %vm1339, %v1307
      %1373 = vst.msk [vmem:[%s202 + $0x84] sm:$0xf] %vm1339, %v1308
      %1374 = vst.msk [vmem:[%s202 + $0x88] sm:$0xf] %vm1339, %v1309
      %1375 = vst.msk [vmem:[%s202 + $0x8c] sm:$0xf] %vm1339, %v1310
      %1376 = vst.msk [vmem:[%s202 + $0x90] sm:$0xf] %vm1339, %v1311
      %1377 = vst.msk [vmem:[%s202 + $0x94] sm:$0xf] %vm1339, %v1312
      %1378 = vst.msk [vmem:[%s202 + $0x98] sm:$0xf] %vm1339, %v1313
      %1379 = vst.msk [vmem:[%s202 + $0x9c] sm:$0xf] %vm1339, %v1314
      %1380 = vst.msk [vmem:[%s202 + $0xa0] sm:$0xf] %vm1339, %v1315
      %1381 = vst.msk [vmem:[%s202 + $0xa4] sm:$0xf] %vm1339, %v1316
      %1382 = vst.msk [vmem:[%s202 + $0xa8] sm:$0xf] %vm1339, %v1317
      %1383 = vst.msk [vmem:[%s202 + $0xac] sm:$0xf] %vm1339, %v1318
      %1384 = vst.msk [vmem:[%s202 + $0xb0] sm:$0xf] %vm1339, %v1319
      %1385 = vst.msk [vmem:[%s202 + $0xb4] sm:$0xf] %vm1339, %v1320
      %1386 = vst.msk [vmem:[%s202 + $0xb8] sm:$0xf] %vm1339, %v1321
      %1387 = vst.msk [vmem:[%s202 + $0xbc] sm:$0xf] %vm1339, %v1322
      %1388 = vst.msk [vmem:[%s202 + $0xc0] sm:$0xf] %vm1339, %v1323
      %1389 = vst.msk [vmem:[%s202 + $0xc4] sm:$0xf] %vm1339, %v1324
      %1390 = vst.msk [vmem:[%s202 + $0xc8] sm:$0xf] %vm1339, %v1325
      %1391 = vst.msk [vmem:[%s202 + $0xcc] sm:$0xf] %vm1339, %v1326
      %1392 = vst.msk [vmem:[%s202 + $0xd0] sm:$0xf] %vm1339, %v1327
      %1393 = vst.msk [vmem:[%s202 + $0xd4] sm:$0xf] %vm1339, %v1328
      %1394 = vst.msk [vmem:[%s202 + $0xd8] sm:$0xf] %vm1339, %v1329
      %1395 = vst.msk [vmem:[%s202 + $0xdc] sm:$0xf] %vm1339, %v1330
      %1396 = vst.msk [vmem:[%s202 + $0xe0] sm:$0xf] %vm1339, %v1331
      %1397 = vst.msk [vmem:[%s202 + $0xe4] sm:$0xf] %vm1339, %v1332
      %1398 = vst.msk [vmem:[%s202 + $0xe8] sm:$0xf] %vm1339, %v1333
      %1399 = vst.msk [vmem:[%s202 + $0xec] sm:$0xf] %vm1339, %v1334
      %1400 = vst.msk [vmem:[%s202 + $0xf0] sm:$0xf] %vm1339, %v1335
      %1401 = vst.msk [vmem:[%s202 + $0xf4] sm:$0xf] %vm1339, %v1336
      %1402 = vst.msk [vmem:[%s202 + $0xf8] sm:$0xf] %vm1339, %v1337
      %1403 = vst.msk [vmem:[%s202 + $0xfc] sm:$0xf] %vm1339, %v1338
      %s1404 = smul.u32 64, %s15
      %p1405 = scmp.lt.s32.totalorder %s1404, 255
      %s1406 = scalar_select %p1405, %s1404, 255
      %s1407 = smul.addr %s1406, 4
      %s1408 = scalar_lea.vmem %s4, %s1407
      // Predicated region
      $region37: #{resnext_ida_forward.22} parent=35 // pred_check
        %p1409 = pneg %p122
      $region38: #{resnext_ida_forward.22} parent=35 // pred_check_branch
        %1411 = sbr.rel (%p1409) target = $region40
      $region39: #{resnext_ida_forward.22} parent=35 // pred_region
        %s1412 = smul.u32 64, %s15
      $region40: #{resnext_ida_forward.22} parent=35 // pred_fallthru
        _
    $region36: #{resnext_ida_forward.22} parent=5 // pred_fallthru
      _
    %p1413 = scmp.le.s32.totalorder 2, %s10
    // Predicated region
    $region41: #{resnext_ida_forward.22} parent=5 // pred_check
      %p1414 = pneg %p1413
    $region42: #{resnext_ida_forward.22} parent=5 // pred_check_branch
      %1416 = sbr.rel (%p1414) target = $region44
    $region43: #{resnext_ida_forward.22} parent=5 // pred_region
      %s1417 = ssub.s32 %s10, 2
      // Predicated region
      $region45: #{resnext_ida_forward.22} parent=43 // pred_check
        %p1418 = pneg %p128
      $region46: #{resnext_ida_forward.22} parent=43 // pred_check_branch
        %1420 = sbr.rel (%p1418) target = $region48
      $region47: #{resnext_ida_forward.22} parent=43 // pred_region
        %s1421 = smul.u32 64, %s16
        %p1422 = scmp.lt.s32.totalorder %s1421, 255
        %s1423 = scalar_select %p1422, %s1421, 255
        %s1424 = smul.addr %s1423, 4
        %s1425 = scalar_lea.vmem %s4, %s1424
      $region48: #{resnext_ida_forward.22} parent=43 // pred_fallthru
        _
    $region44: #{resnext_ida_forward.22} parent=5 // pred_fallthru
      _
  $region6: #{resnext_ida_forward.22} parent=0 // loop_footer
    %s14 = sadd.s32 1, %s10
  $region7: #{resnext_ida_forward.22} parent=0 // loop_footer_branch
    %9 = sbr.rel target = $region3
  $region8: #{resnext_ida_forward.22} parent=0 // loop_exit
    _

// kernel: resnext_ida_forward.24
$region0: #{resnext_ida_forward.24}
  #allocation0 [shape = 'u32[]', space=smem, size = 0x4, offset = 0x4, fixed_abs, tag = 'smem constant byte address 0x4 - core index']
  #allocation1 [shape = 'u32[72,128]{1,0:T(1,128)}', space=vmem, size = 0x9000, scoped, tag = 'internal scratch']
  %s0 = inlined_call_operand.vmem [shape: bf16[512,64], index: 0, kind: input, shape index: {}]
  %s1 = inlined_call_operand.vmem [shape: bf16[64,32], index: 1, kind: input, shape index: {}]
  %s2 = inlined_call_operand.vmem [shape: f32[1,32], index: 2, kind: input, shape index: {}]
  %s3 = inlined_call_operand.vmem [shape: f32[1,32], index: 3, kind: input, shape index: {}]
  %s4 = inlined_call_operand.vmem [shape: bf16[512,32], index: 4, kind: output, shape index: {}]
  %s5 = sld [smem:[#allocation0]]
  $region26: #{resnext_ida_forward.24} parent=0
    _
  %s7 = ssub.s32 1, %s5
  %s8 = scalar_select 0, %s7, %s5
  // Predicated region
  $region2: #{resnext_ida_forward.24} parent=0 // pred_check
    _
  $region3: #{resnext_ida_forward.24} parent=0 // pred_check_branch
    %10 = sbr.rel (0) target = $region5
  $region4: #{resnext_ida_forward.24} parent=0 // pred_region
    _
  $region5: #{resnext_ida_forward.24} parent=0 // pred_fallthru
    _
  // Predicated region
  $region6: #{resnext_ida_forward.24} parent=0 // pred_check
    _
  $region7: #{resnext_ida_forward.24} parent=0 // pred_check_branch
    %12 = sbr.rel (0) target = $region9
  $region8: #{resnext_ida_forward.24} parent=0 // pred_region
    _
  $region9: #{resnext_ida_forward.24} parent=0 // pred_fallthru
    _
  // Predicated region
  $region10: #{resnext_ida_forward.24} parent=0 // pred_check
    _
  $region11: #{resnext_ida_forward.24} parent=0 // pred_check_branch
    %14 = sbr.rel (0) target = $region13
  $region12: #{resnext_ida_forward.24} parent=0 // pred_region
    _
  $region13: #{resnext_ida_forward.24} parent=0 // pred_fallthru
    _
  // Predicated region
  $region14: #{resnext_ida_forward.24} parent=0 // pred_check
    _
  $region15: #{resnext_ida_forward.24} parent=0 // pred_check_branch
    %16 = sbr.rel (0) target = $region17
  $region16: #{resnext_ida_forward.24} parent=0 // pred_region
    _
  $region17: #{resnext_ida_forward.24} parent=0 // pred_fallthru
    _
  %v18 = vld [vmem:[%s0] sm:$0xf]
  %v19 = vld [vmem:[%s0 + $0x4] sm:$0xf]
  %v20 = vld [vmem:[%s0 + $0x8] sm:$0xf]
  %v21 = vld [vmem:[%s0 + $0xc] sm:$0xf]
  %v22 = vld [vmem:[%s0 + $0x10] sm:$0xf]
  %v23 = vld [vmem:[%s0 + $0x14] sm:$0xf]
  %v24 = vld [vmem:[%s0 + $0x18] sm:$0xf]
  %v25 = vld [vmem:[%s0 + $0x1c] sm:$0xf]
  %v26 = vld [vmem:[%s0 + $0x20] sm:$0xf]
  %v27 = vld [vmem:[%s0 + $0x24] sm:$0xf]
  %v28 = vld [vmem:[%s0 + $0x28] sm:$0xf]
  %v29 = vld [vmem:[%s0 + $0x2c] sm:$0xf]
  %v30 = vld [vmem:[%s0 + $0x30] sm:$0xf]
  %v31 = vld [vmem:[%s0 + $0x34] sm:$0xf]
  %v32 = vld [vmem:[%s0 + $0x38] sm:$0xf]
  %v33 = vld [vmem:[%s0 + $0x3c] sm:$0xf]
  %v34 = vld [vmem:[%s0 + $0x40] sm:$0xf]
  %v35 = vld [vmem:[%s0 + $0x44] sm:$0xf]
  %v36 = vld [vmem:[%s0 + $0x48] sm:$0xf]
  %v37 = vld [vmem:[%s0 + $0x4c] sm:$0xf]
  %v38 = vld [vmem:[%s0 + $0x50] sm:$0xf]
  %v39 = vld [vmem:[%s0 + $0x54] sm:$0xf]
  %v40 = vld [vmem:[%s0 + $0x58] sm:$0xf]
  %v41 = vld [vmem:[%s0 + $0x5c] sm:$0xf]
  %v42 = vld [vmem:[%s0 + $0x60] sm:$0xf]
  %v43 = vld [vmem:[%s0 + $0x64] sm:$0xf]
  %v44 = vld [vmem:[%s0 + $0x68] sm:$0xf]
  %v45 = vld [vmem:[%s0 + $0x6c] sm:$0xf]
  %v46 = vld [vmem:[%s0 + $0x70] sm:$0xf]
  %v47 = vld [vmem:[%s0 + $0x74] sm:$0xf]
  %v48 = vld [vmem:[%s0 + $0x78] sm:$0xf]
  %v49 = vld [vmem:[%s0 + $0x7c] sm:$0xf]
  %v50 = vld [vmem:[%s0 + $0x80] sm:$0xf]
  %v51 = vld [vmem:[%s0 + $0x84] sm:$0xf]
  %v52 = vld [vmem:[%s0 + $0x88] sm:$0xf]
  %v53 = vld [vmem:[%s0 + $0x8c] sm:$0xf]
  %v54 = vld [vmem:[%s0 + $0x90] sm:$0xf]
  %v55 = vld [vmem:[%s0 + $0x94] sm:$0xf]
  %v56 = vld [vmem:[%s0 + $0x98] sm:$0xf]
  %v57 = vld [vmem:[%s0 + $0x9c] sm:$0xf]
  %v58 = vld [vmem:[%s0 + $0xa0] sm:$0xf]
  %v59 = vld [vmem:[%s0 + $0xa4] sm:$0xf]
  %v60 = vld [vmem:[%s0 + $0xa8] sm:$0xf]
  %v61 = vld [vmem:[%s0 + $0xac] sm:$0xf]
  %v62 = vld [vmem:[%s0 + $0xb0] sm:$0xf]
  %v63 = vld [vmem:[%s0 + $0xb4] sm:$0xf]
  %v64 = vld [vmem:[%s0 + $0xb8] sm:$0xf]
  %v65 = vld [vmem:[%s0 + $0xbc] sm:$0xf]
  %v66 = vld [vmem:[%s0 + $0xc0] sm:$0xf]
  %v67 = vld [vmem:[%s0 + $0xc4] sm:$0xf]
  %v68 = vld [vmem:[%s0 + $0xc8] sm:$0xf]
  %v69 = vld [vmem:[%s0 + $0xcc] sm:$0xf]
  %v70 = vld [vmem:[%s0 + $0xd0] sm:$0xf]
  %v71 = vld [vmem:[%s0 + $0xd4] sm:$0xf]
  %v72 = vld [vmem:[%s0 + $0xd8] sm:$0xf]
  %v73 = vld [vmem:[%s0 + $0xdc] sm:$0xf]
  %v74 = vld [vmem:[%s0 + $0xe0] sm:$0xf]
  %v75 = vld [vmem:[%s0 + $0xe4] sm:$0xf]
  %v76 = vld [vmem:[%s0 + $0xe8] sm:$0xf]
  %v77 = vld [vmem:[%s0 + $0xec] sm:$0xf]
  %v78 = vld [vmem:[%s0 + $0xf0] sm:$0xf]
  %v79 = vld [vmem:[%s0 + $0xf4] sm:$0xf]
  %v80 = vld [vmem:[%s0 + $0xf8] sm:$0xf]
  %v81 = vld [vmem:[%s0 + $0xfc] sm:$0xf]
  %v82 = vld [vmem:[%s1] sm:$0xf]
  %v83 = vld [vmem:[%s1 + $0x4] sm:$0xf]
  %v84 = vld [vmem:[%s1 + $0x8] sm:$0xf]
  %v85 = vld [vmem:[%s1 + $0xc] sm:$0xf]
  %v86 = vld [vmem:[%s1 + $0x10] sm:$0xf]
  %v87 = vld [vmem:[%s1 + $0x14] sm:$0xf]
  %v88 = vld [vmem:[%s1 + $0x18] sm:$0xf]
  %v89 = vld [vmem:[%s1 + $0x1c] sm:$0xf]
  %v154 = vunpack.c.l.b16 %v18
  %v155 = vunpack.c.l.b16 %v19
  %v156 = vunpack.c.l.b16 %v20
  %v157 = vunpack.c.l.b16 %v21
  %v158 = vunpack.c.l.b16 %v22
  %v159 = vunpack.c.l.b16 %v23
  %v160 = vunpack.c.l.b16 %v24
  %v161 = vunpack.c.l.b16 %v25
  %v162 = vunpack.c.l.b16 %v26
  %v163 = vunpack.c.l.b16 %v27
  %v164 = vunpack.c.l.b16 %v28
  %v165 = vunpack.c.l.b16 %v29
  %v166 = vunpack.c.l.b16 %v30
  %v167 = vunpack.c.l.b16 %v31
  %v168 = vunpack.c.l.b16 %v32
  %v169 = vunpack.c.l.b16 %v33
  %v170 = vunpack.c.l.b16 %v34
  %v171 = vunpack.c.l.b16 %v35
  %v172 = vunpack.c.l.b16 %v36
  %v173 = vunpack.c.l.b16 %v37
  %v174 = vunpack.c.l.b16 %v38
  %v175 = vunpack.c.l.b16 %v39
  %v176 = vunpack.c.l.b16 %v40
  %v177 = vunpack.c.l.b16 %v41
  %v178 = vunpack.c.l.b16 %v42
  %v179 = vunpack.c.l.b16 %v43
  %v180 = vunpack.c.l.b16 %v44
  %v181 = vunpack.c.l.b16 %v45
  %v182 = vunpack.c.l.b16 %v46
  %v183 = vunpack.c.l.b16 %v47
  %v184 = vunpack.c.l.b16 %v48
  %v185 = vunpack.c.l.b16 %v49
  %v186 = vunpack.c.l.b16 %v50
  %v187 = vunpack.c.l.b16 %v51
  %v188 = vunpack.c.l.b16 %v52
  %v189 = vunpack.c.l.b16 %v53
  %v190 = vunpack.c.l.b16 %v54
  %v191 = vunpack.c.l.b16 %v55
  %v192 = vunpack.c.l.b16 %v56
  %v193 = vunpack.c.l.b16 %v57
  %v194 = vunpack.c.l.b16 %v58
  %v195 = vunpack.c.l.b16 %v59
  %v196 = vunpack.c.l.b16 %v60
  %v197 = vunpack.c.l.b16 %v61
  %v198 = vunpack.c.l.b16 %v62
  %v199 = vunpack.c.l.b16 %v63
  %v200 = vunpack.c.l.b16 %v64
  %v201 = vunpack.c.l.b16 %v65
  %v202 = vunpack.c.l.b16 %v66
  %v203 = vunpack.c.l.b16 %v67
  %v204 = vunpack.c.l.b16 %v68
  %v205 = vunpack.c.l.b16 %v69
  %v206 = vunpack.c.l.b16 %v70
  %v207 = vunpack.c.l.b16 %v71
  %v208 = vunpack.c.l.b16 %v72
  %v209 = vunpack.c.l.b16 %v73
  %v210 = vunpack.c.l.b16 %v74
  %v211 = vunpack.c.l.b16 %v75
  %v212 = vunpack.c.l.b16 %v76
  %v213 = vunpack.c.l.b16 %v77
  %v214 = vunpack.c.l.b16 %v78
  %v215 = vunpack.c.l.b16 %v79
  %v216 = vunpack.c.l.b16 %v80
  %v217 = vunpack.c.l.b16 %v81
  %v218 = vpack.c.b16 %v155, %v154
  %v219 = vpack.c.b16 %v157, %v156
  %v220 = vpack.c.b16 %v159, %v158
  %v221 = vpack.c.b16 %v161, %v160
  %v222 = vpack.c.b16 %v163, %v162
  %v223 = vpack.c.b16 %v165, %v164
  %v224 = vpack.c.b16 %v167, %v166
  %v225 = vpack.c.b16 %v169, %v168
  %v226 = vpack.c.b16 %v171, %v170
  %v227 = vpack.c.b16 %v173, %v172
  %v228 = vpack.c.b16 %v175, %v174
  %v229 = vpack.c.b16 %v177, %v176
  %v230 = vpack.c.b16 %v179, %v178
  %v231 = vpack.c.b16 %v181, %v180
  %v232 = vpack.c.b16 %v183, %v182
  %v233 = vpack.c.b16 %v185, %v184
  %v234 = vpack.c.b16 %v187, %v186
  %v235 = vpack.c.b16 %v189, %v188
  %v236 = vpack.c.b16 %v191, %v190
  %v237 = vpack.c.b16 %v193, %v192
  %v238 = vpack.c.b16 %v195, %v194
  %v239 = vpack.c.b16 %v197, %v196
  %v240 = vpack.c.b16 %v199, %v198
  %v241 = vpack.c.b16 %v201, %v200
  %v242 = vpack.c.b16 %v203, %v202
  %v243 = vpack.c.b16 %v205, %v204
  %v244 = vpack.c.b16 %v207, %v206
  %v245 = vpack.c.b16 %v209, %v208
  %v246 = vpack.c.b16 %v211, %v210
  %v247 = vpack.c.b16 %v213, %v212
  %v248 = vpack.c.b16 %v215, %v214
  %v249 = vpack.c.b16 %v217, %v216
  %v258 = vunpack.c.l.b16 %v82
  %v259 = vunpack.c.l.b16 %v83
  %v260 = vunpack.c.l.b16 %v84
  %v261 = vunpack.c.l.b16 %v85
  %v262 = vunpack.c.l.b16 %v86
  %v263 = vunpack.c.l.b16 %v87
  %v264 = vunpack.c.l.b16 %v88
  %v265 = vunpack.c.l.b16 %v89
  %v266 = vpack.c.b16 %v259, %v258
  %v267 = vpack.c.b16 %v261, %v260
  %v268 = vpack.c.b16 %v263, %v262
  %v269 = vpack.c.b16 %v265, %v264
  %vm274 = vcmask 523264
  %v276 = vsel %vm274, %v218, 0
  %v279 = vsel %vm274, %v219, 0
  %v282 = vsel %vm274, %v220, 0
  %v285 = vsel %vm274, %v221, 0
  %v288 = vsel %vm274, %v222, 0
  %v291 = vsel %vm274, %v223, 0
  %v294 = vsel %vm274, %v224, 0
  %v297 = vsel %vm274, %v225, 0
  %v300 = vsel %vm274, %v226, 0
  %v303 = vsel %vm274, %v227, 0
  %v306 = vsel %vm274, %v228, 0
  %v309 = vsel %vm274, %v229, 0
  %v312 = vsel %vm274, %v230, 0
  %v315 = vsel %vm274, %v231, 0
  %v318 = vsel %vm274, %v232, 0
  %v321 = vsel %vm274, %v233, 0
  %v324 = vsel %vm274, %v234, 0
  %v327 = vsel %vm274, %v235, 0
  %v330 = vsel %vm274, %v236, 0
  %v333 = vsel %vm274, %v237, 0
  %v336 = vsel %vm274, %v238, 0
  %v339 = vsel %vm274, %v239, 0
  %v342 = vsel %vm274, %v240, 0
  %v345 = vsel %vm274, %v241, 0
  %v348 = vsel %vm274, %v242, 0
  %v351 = vsel %vm274, %v243, 0
  %v354 = vsel %vm274, %v244, 0
  %v357 = vsel %vm274, %v245, 0
  %v360 = vsel %vm274, %v246, 0
  %v363 = vsel %vm274, %v247, 0
  %v366 = vsel %vm274, %v248, 0
  %v369 = vsel %vm274, %v249, 0
  %371 = vmatpush.bf16.msra.mxu0 0
  %372 = vmatpush.bf16.msra.mxu0 0
  %373 = vmatpush.bf16.msra.mxu0 0
  %374 = vmatpush.bf16.msra.mxu0 0
  %375 = vmatpush.bf16.msra.mxu0 %v269
  %376 = vmatpush.bf16.msra.mxu0 %v268
  %377 = vmatpush.bf16.msra.mxu0 %v267
  %378 = vmatpush.bf16.msra.mxu0 %v266
  %379 = vmatmul.bf16.gmra.mxu0 %v276
  %v380 = vpop.f32.mrf.mxu0
  %v381 = vadd.f32 0.0, %v380
  %v382 = vpop.f32.mrf.mxu0
  %v383 = vadd.f32 0.0, %v382
  %384 = vmatmul.bf16.gmra.mxu0 %v279
  %v385 = vpop.f32.mrf.mxu0
  %v386 = vadd.f32 0.0, %v385
  %v387 = vpop.f32.mrf.mxu0
  %v388 = vadd.f32 0.0, %v387
  %389 = vmatmul.bf16.gmra.mxu0 %v282
  %v390 = vpop.f32.mrf.mxu0
  %v391 = vadd.f32 0.0, %v390
  %v392 = vpop.f32.mrf.mxu0
  %v393 = vadd.f32 0.0, %v392
  %394 = vmatmul.bf16.gmra.mxu0 %v285
  %v395 = vpop.f32.mrf.mxu0
  %v396 = vadd.f32 0.0, %v395
  %v397 = vpop.f32.mrf.mxu0
  %v398 = vadd.f32 0.0, %v397
  %399 = vmatmul.bf16.gmra.mxu0 %v288
  %v400 = vpop.f32.mrf.mxu0
  %v401 = vadd.f32 0.0, %v400
  %v402 = vpop.f32.mrf.mxu0
  %v403 = vadd.f32 0.0, %v402
  %404 = vmatmul.bf16.gmra.mxu0 %v291
  %v405 = vpop.f32.mrf.mxu0
  %v406 = vadd.f32 0.0, %v405
  %v407 = vpop.f32.mrf.mxu0
  %v408 = vadd.f32 0.0, %v407
  %409 = vmatmul.bf16.gmra.mxu0 %v294
  %v410 = vpop.f32.mrf.mxu0
  %v411 = vadd.f32 0.0, %v410
  %v412 = vpop.f32.mrf.mxu0
  %v413 = vadd.f32 0.0, %v412
  %414 = vmatmul.bf16.gmra.mxu0 %v297
  %v415 = vpop.f32.mrf.mxu0
  %v416 = vadd.f32 0.0, %v415
  %v417 = vpop.f32.mrf.mxu0
  %v418 = vadd.f32 0.0, %v417
  %419 = vmatmul.bf16.gmra.mxu0 %v300
  %v420 = vpop.f32.mrf.mxu0
  %v421 = vadd.f32 0.0, %v420
  %v422 = vpop.f32.mrf.mxu0
  %v423 = vadd.f32 0.0, %v422
  %424 = vmatmul.bf16.gmra.mxu0 %v303
  %v425 = vpop.f32.mrf.mxu0
  %v426 = vadd.f32 0.0, %v425
  %v427 = vpop.f32.mrf.mxu0
  %v428 = vadd.f32 0.0, %v427
  %429 = vmatmul.bf16.gmra.mxu0 %v306
  %v430 = vpop.f32.mrf.mxu0
  %v431 = vadd.f32 0.0, %v430
  %v432 = vpop.f32.mrf.mxu0
  %v433 = vadd.f32 0.0, %v432
  %434 = vmatmul.bf16.gmra.mxu0 %v309
  %v435 = vpop.f32.mrf.mxu0
  %v436 = vadd.f32 0.0, %v435
  %v437 = vpop.f32.mrf.mxu0
  %v438 = vadd.f32 0.0, %v437
  %439 = vmatmul.bf16.gmra.mxu0 %v312
  %v440 = vpop.f32.mrf.mxu0
  %v441 = vadd.f32 0.0, %v440
  %v442 = vpop.f32.mrf.mxu0
  %v443 = vadd.f32 0.0, %v442
  %444 = vmatmul.bf16.gmra.mxu0 %v315
  %v445 = vpop.f32.mrf.mxu0
  %v446 = vadd.f32 0.0, %v445
  %v447 = vpop.f32.mrf.mxu0
  %v448 = vadd.f32 0.0, %v447
  %449 = vmatmul.bf16.gmra.mxu0 %v318
  %v450 = vpop.f32.mrf.mxu0
  %v451 = vadd.f32 0.0, %v450
  %v452 = vpop.f32.mrf.mxu0
  %v453 = vadd.f32 0.0, %v452
  %454 = vmatmul.bf16.gmra.mxu0 %v321
  %v455 = vpop.f32.mrf.mxu0
  %v456 = vadd.f32 0.0, %v455
  %v457 = vpop.f32.mrf.mxu0
  %v458 = vadd.f32 0.0, %v457
  %459 = vmatmul.bf16.gmra.mxu0 %v324
  %v460 = vpop.f32.mrf.mxu0
  %v461 = vadd.f32 0.0, %v460
  %v462 = vpop.f32.mrf.mxu0
  %v463 = vadd.f32 0.0, %v462
  %464 = vmatmul.bf16.gmra.mxu0 %v327
  %v465 = vpop.f32.mrf.mxu0
  %v466 = vadd.f32 0.0, %v465
  %v467 = vpop.f32.mrf.mxu0
  %v468 = vadd.f32 0.0, %v467
  %469 = vmatmul.bf16.gmra.mxu0 %v330
  %v470 = vpop.f32.mrf.mxu0
  %v471 = vadd.f32 0.0, %v470
  %v472 = vpop.f32.mrf.mxu0
  %v473 = vadd.f32 0.0, %v472
  %474 = vmatmul.bf16.gmra.mxu0 %v333
  %v475 = vpop.f32.mrf.mxu0
  %v476 = vadd.f32 0.0, %v475
  %v477 = vpop.f32.mrf.mxu0
  %v478 = vadd.f32 0.0, %v477
  %479 = vmatmul.bf16.gmra.mxu0 %v336
  %v480 = vpop.f32.mrf.mxu0
  %v481 = vadd.f32 0.0, %v480
  %v482 = vpop.f32.mrf.mxu0
  %v483 = vadd.f32 0.0, %v482
  %484 = vmatmul.bf16.gmra.mxu0 %v339
  %v485 = vpop.f32.mrf.mxu0
  %v486 = vadd.f32 0.0, %v485
  %v487 = vpop.f32.mrf.mxu0
  %v488 = vadd.f32 0.0, %v487
  %489 = vmatmul.bf16.gmra.mxu0 %v342
  %v490 = vpop.f32.mrf.mxu0
  %v491 = vadd.f32 0.0, %v490
  %v492 = vpop.f32.mrf.mxu0
  %v493 = vadd.f32 0.0, %v492
  %494 = vmatmul.bf16.gmra.mxu0 %v345
  %v495 = vpop.f32.mrf.mxu0
  %v496 = vadd.f32 0.0, %v495
  %v497 = vpop.f32.mrf.mxu0
  %v498 = vadd.f32 0.0, %v497
  %499 = vmatmul.bf16.gmra.mxu0 %v348
  %v500 = vpop.f32.mrf.mxu0
  %v501 = vadd.f32 0.0, %v500
  %v502 = vpop.f32.mrf.mxu0
  %v503 = vadd.f32 0.0, %v502
  %504 = vmatmul.bf16.gmra.mxu0 %v351
  %v505 = vpop.f32.mrf.mxu0
  %v506 = vadd.f32 0.0, %v505
  %v507 = vpop.f32.mrf.mxu0
  %v508 = vadd.f32 0.0, %v507
  %509 = vmatmul.bf16.gmra.mxu0 %v354
  %v510 = vpop.f32.mrf.mxu0
  %v511 = vadd.f32 0.0, %v510
  %v512 = vpop.f32.mrf.mxu0
  %v513 = vadd.f32 0.0, %v512
  %514 = vmatmul.bf16.gmra.mxu0 %v357
  %v515 = vpop.f32.mrf.mxu0
  %v516 = vadd.f32 0.0, %v515
  %v517 = vpop.f32.mrf.mxu0
  %v518 = vadd.f32 0.0, %v517
  %519 = vmatmul.bf16.gmra.mxu0 %v360
  %v520 = vpop.f32.mrf.mxu0
  %v521 = vadd.f32 0.0, %v520
  %v522 = vpop.f32.mrf.mxu0
  %v523 = vadd.f32 0.0, %v522
  %524 = vmatmul.bf16.gmra.mxu0 %v363
  %v525 = vpop.f32.mrf.mxu0
  %v526 = vadd.f32 0.0, %v525
  %v527 = vpop.f32.mrf.mxu0
  %v528 = vadd.f32 0.0, %v527
  %529 = vmatmul.bf16.gmra.mxu0 %v366
  %v530 = vpop.f32.mrf.mxu0
  %v531 = vadd.f32 0.0, %v530
  %v532 = vpop.f32.mrf.mxu0
  %v533 = vadd.f32 0.0, %v532
  %534 = vmatmul.bf16.gmra.mxu0 %v369
  %v535 = vpop.f32.mrf.mxu0
  %v536 = vadd.f32 0.0, %v535
  %v537 = vpop.f32.mrf.mxu0
  %v538 = vadd.f32 0.0, %v537
  %539 = vdwg.mxu0
  %v540 = vld [vmem:[%s2] sm:$0x1]
  %v542 = vperm.slane %v540, 0
  %v544 = vmul.f32 %v381, %v542
  %v545 = vmul.f32 %v383, %v542
  %v546 = vmul.f32 %v386, %v542
  %v547 = vmul.f32 %v388, %v542
  %v548 = vmul.f32 %v391, %v542
  %v549 = vmul.f32 %v393, %v542
  %v550 = vmul.f32 %v396, %v542
  %v551 = vmul.f32 %v398, %v542
  %v552 = vmul.f32 %v401, %v542
  %v553 = vmul.f32 %v403, %v542
  %v554 = vmul.f32 %v406, %v542
  %v555 = vmul.f32 %v408, %v542
  %v556 = vmul.f32 %v411, %v542
  %v557 = vmul.f32 %v413, %v542
  %v558 = vmul.f32 %v416, %v542
  %v559 = vmul.f32 %v418, %v542
  %v560 = vmul.f32 %v421, %v542
  %v561 = vmul.f32 %v423, %v542
  %v562 = vmul.f32 %v426, %v542
  %v563 = vmul.f32 %v428, %v542
  %v564 = vmul.f32 %v431, %v542
  %v565 = vmul.f32 %v433, %v542
  %v566 = vmul.f32 %v436, %v542
  %v567 = vmul.f32 %v438, %v542
  %v568 = vmul.f32 %v441, %v542
  %v569 = vmul.f32 %v443, %v542
  %v570 = vmul.f32 %v446, %v542
  %v571 = vmul.f32 %v448, %v542
  %v572 = vmul.f32 %v451, %v542
  %v573 = vmul.f32 %v453, %v542
  %v574 = vmul.f32 %v456, %v542
  %v575 = vmul.f32 %v458, %v542
  %v576 = vmul.f32 %v461, %v542
  %v577 = vmul.f32 %v463, %v542
  %v578 = vmul.f32 %v466, %v542
  %v579 = vmul.f32 %v468, %v542
  %v580 = vmul.f32 %v471, %v542
  %v581 = vmul.f32 %v473, %v542
  %v582 = vmul.f32 %v476, %v542
  %v583 = vmul.f32 %v478, %v542
  %v584 = vmul.f32 %v481, %v542
  %v585 = vmul.f32 %v483, %v542
  %v586 = vmul.f32 %v486, %v542
  %v587 = vmul.f32 %v488, %v542
  %v588 = vmul.f32 %v491, %v542
  %v589 = vmul.f32 %v493, %v542
  %v590 = vmul.f32 %v496, %v542
  %v591 = vmul.f32 %v498, %v542
  %v592 = vmul.f32 %v501, %v542
  %v593 = vmul.f32 %v503, %v542
  %v594 = vmul.f32 %v506, %v542
  %v595 = vmul.f32 %v508, %v542
  %v596 = vmul.f32 %v511, %v542
  %v597 = vmul.f32 %v513, %v542
  %v598 = vmul.f32 %v516, %v542
  %v599 = vmul.f32 %v518, %v542
  %v600 = vmul.f32 %v521, %v542
  %v601 = vmul.f32 %v523, %v542
  %v602 = vmul.f32 %v526, %v542
  %v603 = vmul.f32 %v528, %v542
  %v604 = vmul.f32 %v531, %v542
  %v605 = vmul.f32 %v533, %v542
  %v606 = vmul.f32 %v536, %v542
  %v607 = vmul.f32 %v538, %v542
  %v608 = vld [vmem:[%s3] sm:$0x1]
  %v610 = vperm.slane %v608, 0
  %v612 = vadd.f32 %v544, %v610
  %v613 = vadd.f32 %v545, %v610
  %v614 = vadd.f32 %v546, %v610
  %v615 = vadd.f32 %v547, %v610
  %v616 = vadd.f32 %v548, %v610
  %v617 = vadd.f32 %v549, %v610
  %v618 = vadd.f32 %v550, %v610
  %v619 = vadd.f32 %v551, %v610
  %v620 = vadd.f32 %v552, %v610
  %v621 = vadd.f32 %v553, %v610
  %v622 = vadd.f32 %v554, %v610
  %v623 = vadd.f32 %v555, %v610
  %v624 = vadd.f32 %v556, %v610
  %v625 = vadd.f32 %v557, %v610
  %v626 = vadd.f32 %v558, %v610
  %v627 = vadd.f32 %v559, %v610
  %v628 = vadd.f32 %v560, %v610
  %v629 = vadd.f32 %v561, %v610
  %v630 = vadd.f32 %v562, %v610
  %v631 = vadd.f32 %v563, %v610
  %v632 = vadd.f32 %v564, %v610
  %v633 = vadd.f32 %v565, %v610
  %v634 = vadd.f32 %v566, %v610
  %v635 = vadd.f32 %v567, %v610
  %v636 = vadd.f32 %v568, %v610
  %v637 = vadd.f32 %v569, %v610
  %v638 = vadd.f32 %v570, %v610
  %v639 = vadd.f32 %v571, %v610
  %v640 = vadd.f32 %v572, %v610
  %v641 = vadd.f32 %v573, %v610
  %v642 = vadd.f32 %v574, %v610
  %v643 = vadd.f32 %v575, %v610
  %v644 = vadd.f32 %v576, %v610
  %v645 = vadd.f32 %v577, %v610
  %v646 = vadd.f32 %v578, %v610
  %v647 = vadd.f32 %v579, %v610
  %v648 = vadd.f32 %v580, %v610
  %v649 = vadd.f32 %v581, %v610
  %v650 = vadd.f32 %v582, %v610
  %v651 = vadd.f32 %v583, %v610
  %v652 = vadd.f32 %v584, %v610
  %v653 = vadd.f32 %v585, %v610
  %v654 = vadd.f32 %v586, %v610
  %v655 = vadd.f32 %v587, %v610
  %v656 = vadd.f32 %v588, %v610
  %v657 = vadd.f32 %v589, %v610
  %v658 = vadd.f32 %v590, %v610
  %v659 = vadd.f32 %v591, %v610
  %v660 = vadd.f32 %v592, %v610
  %v661 = vadd.f32 %v593, %v610
  %v662 = vadd.f32 %v594, %v610
  %v663 = vadd.f32 %v595, %v610
  %v664 = vadd.f32 %v596, %v610
  %v665 = vadd.f32 %v597, %v610
  %v666 = vadd.f32 %v598, %v610
  %v667 = vadd.f32 %v599, %v610
  %v668 = vadd.f32 %v600, %v610
  %v669 = vadd.f32 %v601, %v610
  %v670 = vadd.f32 %v602, %v610
  %v671 = vadd.f32 %v603, %v610
  %v672 = vadd.f32 %v604, %v610
  %v673 = vadd.f32 %v605, %v610
  %v674 = vadd.f32 %v606, %v610
  %v675 = vadd.f32 %v607, %v610
  %v676 = vmax.f32 %v612, 0.0
  %v677 = vmax.f32 %v613, 0.0
  %v678 = vmax.f32 %v614, 0.0
  %v679 = vmax.f32 %v615, 0.0
  %v680 = vmax.f32 %v616, 0.0
  %v681 = vmax.f32 %v617, 0.0
  %v682 = vmax.f32 %v618, 0.0
  %v683 = vmax.f32 %v619, 0.0
  %v684 = vmax.f32 %v620, 0.0
  %v685 = vmax.f32 %v621, 0.0
  %v686 = vmax.f32 %v622, 0.0
  %v687 = vmax.f32 %v623, 0.0
  %v688 = vmax.f32 %v624, 0.0
  %v689 = vmax.f32 %v625, 0.0
  %v690 = vmax.f32 %v626, 0.0
  %v691 = vmax.f32 %v627, 0.0
  %v692 = vmax.f32 %v628, 0.0
  %v693 = vmax.f32 %v629, 0.0
  %v694 = vmax.f32 %v630, 0.0
  %v695 = vmax.f32 %v631, 0.0
  %v696 = vmax.f32 %v632, 0.0
  %v697 = vmax.f32 %v633, 0.0
  %v698 = vmax.f32 %v634, 0.0
  %v699 = vmax.f32 %v635, 0.0
  %v700 = vmax.f32 %v636, 0.0
  %v701 = vmax.f32 %v637, 0.0
  %v702 = vmax.f32 %v638, 0.0
  %v703 = vmax.f32 %v639, 0.0
  %v704 = vmax.f32 %v640, 0.0
  %v705 = vmax.f32 %v641, 0.0
  %v706 = vmax.f32 %v642, 0.0
  %v707 = vmax.f32 %v643, 0.0
  %v708 = vmax.f32 %v644, 0.0
  %v709 = vmax.f32 %v645, 0.0
  %v710 = vmax.f32 %v646, 0.0
  %v711 = vmax.f32 %v647, 0.0
  %v712 = vmax.f32 %v648, 0.0
  %v713 = vmax.f32 %v649, 0.0
  %v714 = vmax.f32 %v650, 0.0
  %v715 = vmax.f32 %v651, 0.0
  %v716 = vmax.f32 %v652, 0.0
  %v717 = vmax.f32 %v653, 0.0
  %v718 = vmax.f32 %v654, 0.0
  %v719 = vmax.f32 %v655, 0.0
  %v720 = vmax.f32 %v656, 0.0
  %v721 = vmax.f32 %v657, 0.0
  %v722 = vmax.f32 %v658, 0.0
  %v723 = vmax.f32 %v659, 0.0
  %v724 = vmax.f32 %v660, 0.0
  %v725 = vmax.f32 %v661, 0.0
  %v726 = vmax.f32 %v662, 0.0
  %v727 = vmax.f32 %v663, 0.0
  %v728 = vmax.f32 %v664, 0.0
  %v729 = vmax.f32 %v665, 0.0
  %v730 = vmax.f32 %v666, 0.0
  %v731 = vmax.f32 %v667, 0.0
  %v732 = vmax.f32 %v668, 0.0
  %v733 = vmax.f32 %v669, 0.0
  %v734 = vmax.f32 %v670, 0.0
  %v735 = vmax.f32 %v671, 0.0
  %v736 = vmax.f32 %v672, 0.0
  %v737 = vmax.f32 %v673, 0.0
  %v738 = vmax.f32 %v674, 0.0
  %v739 = vmax.f32 %v675, 0.0
  %v740 = vpack.c.bf16 %v676, %v676
  %v741 = vpack.c.bf16 %v677, %v677
  %v742 = vpack.c.bf16 %v678, %v678
  %v743 = vpack.c.bf16 %v679, %v679
  %v744 = vpack.c.bf16 %v680, %v680
  %v745 = vpack.c.bf16 %v681, %v681
  %v746 = vpack.c.bf16 %v682, %v682
  %v747 = vpack.c.bf16 %v683, %v683
  %v748 = vpack.c.bf16 %v684, %v684
  %v749 = vpack.c.bf16 %v685, %v685
  %v750 = vpack.c.bf16 %v686, %v686
  %v751 = vpack.c.bf16 %v687, %v687
  %v752 = vpack.c.bf16 %v688, %v688
  %v753 = vpack.c.bf16 %v689, %v689
  %v754 = vpack.c.bf16 %v690, %v690
  %v755 = vpack.c.bf16 %v691, %v691
  %v756 = vpack.c.bf16 %v692, %v692
  %v757 = vpack.c.bf16 %v693, %v693
  %v758 = vpack.c.bf16 %v694, %v694
  %v759 = vpack.c.bf16 %v695, %v695
  %v760 = vpack.c.bf16 %v696, %v696
  %v761 = vpack.c.bf16 %v697, %v697
  %v762 = vpack.c.bf16 %v698, %v698
  %v763 = vpack.c.bf16 %v699, %v699
  %v764 = vpack.c.bf16 %v700, %v700
  %v765 = vpack.c.bf16 %v701, %v701
  %v766 = vpack.c.bf16 %v702, %v702
  %v767 = vpack.c.bf16 %v703, %v703
  %v768 = vpack.c.bf16 %v704, %v704
  %v769 = vpack.c.bf16 %v705, %v705
  %v770 = vpack.c.bf16 %v706, %v706
  %v771 = vpack.c.bf16 %v707, %v707
  %v772 = vpack.c.bf16 %v708, %v708
  %v773 = vpack.c.bf16 %v709, %v709
  %v774 = vpack.c.bf16 %v710, %v710
  %v775 = vpack.c.bf16 %v711, %v711
  %v776 = vpack.c.bf16 %v712, %v712
  %v777 = vpack.c.bf16 %v713, %v713
  %v778 = vpack.c.bf16 %v714, %v714
  %v779 = vpack.c.bf16 %v715, %v715
  %v780 = vpack.c.bf16 %v716, %v716
  %v781 = vpack.c.bf16 %v717, %v717
  %v782 = vpack.c.bf16 %v718, %v718
  %v783 = vpack.c.bf16 %v719, %v719
  %v784 = vpack.c.bf16 %v720, %v720
  %v785 = vpack.c.bf16 %v721, %v721
  %v786 = vpack.c.bf16 %v722, %v722
  %v787 = vpack.c.bf16 %v723, %v723
  %v788 = vpack.c.bf16 %v724, %v724
  %v789 = vpack.c.bf16 %v725, %v725
  %v790 = vpack.c.bf16 %v726, %v726
  %v791 = vpack.c.bf16 %v727, %v727
  %v792 = vpack.c.bf16 %v728, %v728
  %v793 = vpack.c.bf16 %v729, %v729
  %v794 = vpack.c.bf16 %v730, %v730
  %v795 = vpack.c.bf16 %v731, %v731
  %v796 = vpack.c.bf16 %v732, %v732
  %v797 = vpack.c.bf16 %v733, %v733
  %v798 = vpack.c.bf16 %v734, %v734
  %v799 = vpack.c.bf16 %v735, %v735
  %v800 = vpack.c.bf16 %v736, %v736
  %v801 = vpack.c.bf16 %v737, %v737
  %v802 = vpack.c.bf16 %v738, %v738
  %v803 = vpack.c.bf16 %v739, %v739
  %vm804 = vcmask 257024
  %805 = vst.msk [vmem:[%s4] sm:$0xf] %vm804, %v740
  %806 = vst.msk [vmem:[%s4 + $0x4] sm:$0xf] %vm804, %v741
  %807 = vst.msk [vmem:[%s4 + $0x8] sm:$0xf] %vm804, %v742
  %808 = vst.msk [vmem:[%s4 + $0xc] sm:$0xf] %vm804, %v743
  %809 = vst.msk [vmem:[%s4 + $0x10] sm:$0xf] %vm804, %v744
  %810 = vst.msk [vmem:[%s4 + $0x14] sm:$0xf] %vm804, %v745
  %811 = vst.msk [vmem:[%s4 + $0x18] sm:$0xf] %vm804, %v746
  %812 = vst.msk [vmem:[%s4 + $0x1c] sm:$0xf] %vm804, %v747
  %813 = vst.msk [vmem:[%s4 + $0x20] sm:$0xf] %vm804, %v748
  %814 = vst.msk [vmem:[%s4 + $0x24] sm:$0xf] %vm804, %v749
  %815 = vst.msk [vmem:[%s4 + $0x28] sm:$0xf] %vm804, %v750
  %816 = vst.msk [vmem:[%s4 + $0x2c] sm:$0xf] %vm804, %v751
  %817 = vst.msk [vmem:[%s4 + $0x30] sm:$0xf] %vm804, %v752
  %818 = vst.msk [vmem:[%s4 + $0x34] sm:$0xf] %vm804, %v753
  %819 = vst.msk [vmem:[%s4 + $0x38] sm:$0xf] %vm804, %v754
  %820 = vst.msk [vmem:[%s4 + $0x3c] sm:$0xf] %vm804, %v755
  %821 = vst.msk [vmem:[%s4 + $0x40] sm:$0xf] %vm804, %v756
  %822 = vst.msk [vmem:[%s4 + $0x44] sm:$0xf] %vm804, %v757
  %823 = vst.msk [vmem:[%s4 + $0x48] sm:$0xf] %vm804, %v758
  %824 = vst.msk [vmem:[%s4 + $0x4c] sm:$0xf] %vm804, %v759
  %825 = vst.msk [vmem:[%s4 + $0x50] sm:$0xf] %vm804, %v760
  %826 = vst.msk [vmem:[%s4 + $0x54] sm:$0xf] %vm804, %v761
  %827 = vst.msk [vmem:[%s4 + $0x58] sm:$0xf] %vm804, %v762
  %828 = vst.msk [vmem:[%s4 + $0x5c] sm:$0xf] %vm804, %v763
  %829 = vst.msk [vmem:[%s4 + $0x60] sm:$0xf] %vm804, %v764
  %830 = vst.msk [vmem:[%s4 + $0x64] sm:$0xf] %vm804, %v765
  %831 = vst.msk [vmem:[%s4 + $0x68] sm:$0xf] %vm804, %v766
  %832 = vst.msk [vmem:[%s4 + $0x6c] sm:$0xf] %vm804, %v767
  %833 = vst.msk [vmem:[%s4 + $0x70] sm:$0xf] %vm804, %v768
  %834 = vst.msk [vmem:[%s4 + $0x74] sm:$0xf] %vm804, %v769
  %835 = vst.msk [vmem:[%s4 + $0x78] sm:$0xf] %vm804, %v770
  %836 = vst.msk [vmem:[%s4 + $0x7c] sm:$0xf] %vm804, %v771
  %837 = vst.msk [vmem:[%s4 + $0x80] sm:$0xf] %vm804, %v772
  %838 = vst.msk [vmem:[%s4 + $0x84] sm:$0xf] %vm804, %v773
  %839 = vst.msk [vmem:[%s4 + $0x88] sm:$0xf] %vm804, %v774
  %840 = vst.msk [vmem:[%s4 + $0x8c] sm:$0xf] %vm804, %v775
  %841 = vst.msk [vmem:[%s4 + $0x90] sm:$0xf] %vm804, %v776
  %842 = vst.msk [vmem:[%s4 + $0x94] sm:$0xf] %vm804, %v777
  %843 = vst.msk [vmem:[%s4 + $0x98] sm:$0xf] %vm804, %v778
  %844 = vst.msk [vmem:[%s4 + $0x9c] sm:$0xf] %vm804, %v779
  %845 = vst.msk [vmem:[%s4 + $0xa0] sm:$0xf] %vm804, %v780
  %846 = vst.msk [vmem:[%s4 + $0xa4] sm:$0xf] %vm804, %v781
  %847 = vst.msk [vmem:[%s4 + $0xa8] sm:$0xf] %vm804, %v782
  %848 = vst.msk [vmem:[%s4 + $0xac] sm:$0xf] %vm804, %v783
  %849 = vst.msk [vmem:[%s4 + $0xb0] sm:$0xf] %vm804, %v784
  %850 = vst.msk [vmem:[%s4 + $0xb4] sm:$0xf] %vm804, %v785
  %851 = vst.msk [vmem:[%s4 + $0xb8] sm:$0xf] %vm804, %v786
  %852 = vst.msk [vmem:[%s4 + $0xbc] sm:$0xf] %vm804, %v787
  %853 = vst.msk [vmem:[%s4 + $0xc0] sm:$0xf] %vm804, %v788
  %854 = vst.msk [vmem:[%s4 + $0xc4] sm:$0xf] %vm804, %v789
  %855 = vst.msk [vmem:[%s4 + $0xc8] sm:$0xf] %vm804, %v790
  %856 = vst.msk [vmem:[%s4 + $0xcc] sm:$0xf] %vm804, %v791
  %857 = vst.msk [vmem:[%s4 + $0xd0] sm:$0xf] %vm804, %v792
  %858 = vst.msk [vmem:[%s4 + $0xd4] sm:$0xf] %vm804, %v793
  %859 = vst.msk [vmem:[%s4 + $0xd8] sm:$0xf] %vm804, %v794
  %860 = vst.msk [vmem:[%s4 + $0xdc] sm:$0xf] %vm804, %v795
  %861 = vst.msk [vmem:[%s4 + $0xe0] sm:$0xf] %vm804, %v796
  %862 = vst.msk [vmem:[%s4 + $0xe4] sm:$0xf] %vm804, %v797
  %863 = vst.msk [vmem:[%s4 + $0xe8] sm:$0xf] %vm804, %v798
  %864 = vst.msk [vmem:[%s4 + $0xec] sm:$0xf] %vm804, %v799
  %865 = vst.msk [vmem:[%s4 + $0xf0] sm:$0xf] %vm804, %v800
  %866 = vst.msk [vmem:[%s4 + $0xf4] sm:$0xf] %vm804, %v801
  %867 = vst.msk [vmem:[%s4 + $0xf8] sm:$0xf] %vm804, %v802
  %868 = vst.msk [vmem:[%s4 + $0xfc] sm:$0xf] %vm804, %v803
  // Predicated region
  $region18: #{resnext_ida_forward.24} parent=0 // pred_check
    _
  $region19: #{resnext_ida_forward.24} parent=0 // pred_check_branch
    %870 = sbr.rel (0) target = $region21
  $region20: #{resnext_ida_forward.24} parent=0 // pred_region
    _
  $region21: #{resnext_ida_forward.24} parent=0 // pred_fallthru
    _
  // Predicated region
  $region22: #{resnext_ida_forward.24} parent=0 // pred_check
    _
  $region23: #{resnext_ida_forward.24} parent=0 // pred_check_branch
    %872 = sbr.rel (0) target = $region25
  $region24: #{resnext_ida_forward.24} parent=0 // pred_region
    _
  $region25: #{resnext_ida_forward.24} parent=0 // pred_fallthru
    _

// kernel: resnext_ida_forward.26
$region0: #{resnext_ida_forward.26}
  #allocation0 [shape = 'u32[]', space=smem, size = 0x4, offset = 0x4, fixed_abs, tag = 'smem constant byte address 0x4 - core index']
  #allocation1 [shape = 'u32[72,128]{1,0:T(1,128)}', space=vmem, size = 0x9000, scoped, tag = 'internal scratch']
  %s0 = inlined_call_operand.vmem [shape: bf16[128,64], index: 0, kind: input, shape index: {}]
  %s1 = inlined_call_operand.vmem [shape: bf16[64,32], index: 1, kind: input, shape index: {}]
  %s2 = inlined_call_operand.vmem [shape: f32[1,32], index: 2, kind: input, shape index: {}]
  %s3 = inlined_call_operand.vmem [shape: f32[1,32], index: 3, kind: input, shape index: {}]
  %s4 = inlined_call_operand.vmem [shape: bf16[128,32], index: 4, kind: output, shape index: {}]
  %s5 = sld [smem:[#allocation0]]
  $region26: #{resnext_ida_forward.26} parent=0
    _
  %s7 = ssub.s32 1, %s5
  %s8 = scalar_select 0, %s7, %s5
  // Predicated region
  $region2: #{resnext_ida_forward.26} parent=0 // pred_check
    _
  $region3: #{resnext_ida_forward.26} parent=0 // pred_check_branch
    %10 = sbr.rel (0) target = $region5
  $region4: #{resnext_ida_forward.26} parent=0 // pred_region
    _
  $region5: #{resnext_ida_forward.26} parent=0 // pred_fallthru
    _
  // Predicated region
  $region6: #{resnext_ida_forward.26} parent=0 // pred_check
    _
  $region7: #{resnext_ida_forward.26} parent=0 // pred_check_branch
    %12 = sbr.rel (0) target = $region9
  $region8: #{resnext_ida_forward.26} parent=0 // pred_region
    _
  $region9: #{resnext_ida_forward.26} parent=0 // pred_fallthru
    _
  // Predicated region
  $region10: #{resnext_ida_forward.26} parent=0 // pred_check
    _
  $region11: #{resnext_ida_forward.26} parent=0 // pred_check_branch
    %14 = sbr.rel (0) target = $region13
  $region12: #{resnext_ida_forward.26} parent=0 // pred_region
    _
  $region13: #{resnext_ida_forward.26} parent=0 // pred_fallthru
    _
  // Predicated region
  $region14: #{resnext_ida_forward.26} parent=0 // pred_check
    _
  $region15: #{resnext_ida_forward.26} parent=0 // pred_check_branch
    %16 = sbr.rel (0) target = $region17
  $region16: #{resnext_ida_forward.26} parent=0 // pred_region
    _
  $region17: #{resnext_ida_forward.26} parent=0 // pred_fallthru
    _
  %v18 = vld [vmem:[%s0] sm:$0xf]
  %v19 = vld [vmem:[%s0 + $0x4] sm:$0xf]
  %v20 = vld [vmem:[%s0 + $0x8] sm:$0xf]
  %v21 = vld [vmem:[%s0 + $0xc] sm:$0xf]
  %v22 = vld [vmem:[%s0 + $0x10] sm:$0xf]
  %v23 = vld [vmem:[%s0 + $0x14] sm:$0xf]
  %v24 = vld [vmem:[%s0 + $0x18] sm:$0xf]
  %v25 = vld [vmem:[%s0 + $0x1c] sm:$0xf]
  %v26 = vld [vmem:[%s0 + $0x20] sm:$0xf]
  %v27 = vld [vmem:[%s0 + $0x24] sm:$0xf]
  %v28 = vld [vmem:[%s0 + $0x28] sm:$0xf]
  %v29 = vld [vmem:[%s0 + $0x2c] sm:$0xf]
  %v30 = vld [vmem:[%s0 + $0x30] sm:$0xf]
  %v31 = vld [vmem:[%s0 + $0x34] sm:$0xf]
  %v32 = vld [vmem:[%s0 + $0x38] sm:$0xf]
  %v33 = vld [vmem:[%s0 + $0x3c] sm:$0xf]
  %v34 = vld [vmem:[%s1] sm:$0xf]
  %v35 = vld [vmem:[%s1 + $0x4] sm:$0xf]
  %v36 = vld [vmem:[%s1 + $0x8] sm:$0xf]
  %v37 = vld [vmem:[%s1 + $0xc] sm:$0xf]
  %v38 = vld [vmem:[%s1 + $0x10] sm:$0xf]
  %v39 = vld [vmem:[%s1 + $0x14] sm:$0xf]
  %v40 = vld [vmem:[%s1 + $0x18] sm:$0xf]
  %v41 = vld [vmem:[%s1 + $0x1c] sm:$0xf]
  %v58 = vunpack.c.l.b16 %v18
  %v59 = vunpack.c.l.b16 %v19
  %v60 = vunpack.c.l.b16 %v20
  %v61 = vunpack.c.l.b16 %v21
  %v62 = vunpack.c.l.b16 %v22
  %v63 = vunpack.c.l.b16 %v23
  %v64 = vunpack.c.l.b16 %v24
  %v65 = vunpack.c.l.b16 %v25
  %v66 = vunpack.c.l.b16 %v26
  %v67 = vunpack.c.l.b16 %v27
  %v68 = vunpack.c.l.b16 %v28
  %v69 = vunpack.c.l.b16 %v29
  %v70 = vunpack.c.l.b16 %v30
  %v71 = vunpack.c.l.b16 %v31
  %v72 = vunpack.c.l.b16 %v32
  %v73 = vunpack.c.l.b16 %v33
  %v74 = vpack.c.b16 %v59, %v58
  %v75 = vpack.c.b16 %v61, %v60
  %v76 = vpack.c.b16 %v63, %v62
  %v77 = vpack.c.b16 %v65, %v64
  %v78 = vpack.c.b16 %v67, %v66
  %v79 = vpack.c.b16 %v69, %v68
  %v80 = vpack.c.b16 %v71, %v70
  %v81 = vpack.c.b16 %v73, %v72
  %v90 = vunpack.c.l.b16 %v34
  %v91 = vunpack.c.l.b16 %v35
  %v92 = vunpack.c.l.b16 %v36
  %v93 = vunpack.c.l.b16 %v37
  %v94 = vunpack.c.l.b16 %v38
  %v95 = vunpack.c.l.b16 %v39
  %v96 = vunpack.c.l.b16 %v40
  %v97 = vunpack.c.l.b16 %v41
  %v98 = vpack.c.b16 %v91, %v90
  %v99 = vpack.c.b16 %v93, %v92
  %v100 = vpack.c.b16 %v95, %v94
  %v101 = vpack.c.b16 %v97, %v96
  %vm106 = vcmask 523264
  %v108 = vsel %vm106, %v74, 0
  %v111 = vsel %vm106, %v75, 0
  %v114 = vsel %vm106, %v76, 0
  %v117 = vsel %vm106, %v77, 0
  %v120 = vsel %vm106, %v78, 0
  %v123 = vsel %vm106, %v79, 0
  %v126 = vsel %vm106, %v80, 0
  %v129 = vsel %vm106, %v81, 0
  %131 = vmatpush.bf16.msra.mxu0 0
  %132 = vmatpush.bf16.msra.mxu0 0
  %133 = vmatpush.bf16.msra.mxu0 0
  %134 = vmatpush.bf16.msra.mxu0 0
  %135 = vmatpush.bf16.msra.mxu0 %v101
  %136 = vmatpush.bf16.msra.mxu0 %v100
  %137 = vmatpush.bf16.msra.mxu0 %v99
  %138 = vmatpush.bf16.msra.mxu0 %v98
  %139 = vmatmul.bf16.gmra.mxu0 %v108
  %v140 = vpop.f32.mrf.mxu0
  %v141 = vadd.f32 0.0, %v140
  %v142 = vpop.f32.mrf.mxu0
  %v143 = vadd.f32 0.0, %v142
  %144 = vmatmul.bf16.gmra.mxu0 %v111
  %v145 = vpop.f32.mrf.mxu0
  %v146 = vadd.f32 0.0, %v145
  %v147 = vpop.f32.mrf.mxu0
  %v148 = vadd.f32 0.0, %v147
  %149 = vmatmul.bf16.gmra.mxu0 %v114
  %v150 = vpop.f32.mrf.mxu0
  %v151 = vadd.f32 0.0, %v150
  %v152 = vpop.f32.mrf.mxu0
  %v153 = vadd.f32 0.0, %v152
  %154 = vmatmul.bf16.gmra.mxu0 %v117
  %v155 = vpop.f32.mrf.mxu0
  %v156 = vadd.f32 0.0, %v155
  %v157 = vpop.f32.mrf.mxu0
  %v158 = vadd.f32 0.0, %v157
  %159 = vmatmul.bf16.gmra.mxu0 %v120
  %v160 = vpop.f32.mrf.mxu0
  %v161 = vadd.f32 0.0, %v160
  %v162 = vpop.f32.mrf.mxu0
  %v163 = vadd.f32 0.0, %v162
  %164 = vmatmul.bf16.gmra.mxu0 %v123
  %v165 = vpop.f32.mrf.mxu0
  %v166 = vadd.f32 0.0, %v165
  %v167 = vpop.f32.mrf.mxu0
  %v168 = vadd.f32 0.0, %v167
  %169 = vmatmul.bf16.gmra.mxu0 %v126
  %v170 = vpop.f32.mrf.mxu0
  %v171 = vadd.f32 0.0, %v170
  %v172 = vpop.f32.mrf.mxu0
  %v173 = vadd.f32 0.0, %v172
  %174 = vmatmul.bf16.gmra.mxu0 %v129
  %v175 = vpop.f32.mrf.mxu0
  %v176 = vadd.f32 0.0, %v175
  %v177 = vpop.f32.mrf.mxu0
  %v178 = vadd.f32 0.0, %v177
  %179 = vdwg.mxu0
  %v180 = vld [vmem:[%s2] sm:$0x1]
  %v182 = vperm.slane %v180, 0
  %v184 = vmul.f32 %v141, %v182
  %v185 = vmul.f32 %v143, %v182
  %v186 = vmul.f32 %v146, %v182
  %v187 = vmul.f32 %v148, %v182
  %v188 = vmul.f32 %v151, %v182
  %v189 = vmul.f32 %v153, %v182
  %v190 = vmul.f32 %v156, %v182
  %v191 = vmul.f32 %v158, %v182
  %v192 = vmul.f32 %v161, %v182
  %v193 = vmul.f32 %v163, %v182
  %v194 = vmul.f32 %v166, %v182
  %v195 = vmul.f32 %v168, %v182
  %v196 = vmul.f32 %v171, %v182
  %v197 = vmul.f32 %v173, %v182
  %v198 = vmul.f32 %v176, %v182
  %v199 = vmul.f32 %v178, %v182
  %v200 = vld [vmem:[%s3] sm:$0x1]
  %v202 = vperm.slane %v200, 0
  %v204 = vadd.f32 %v184, %v202
  %v205 = vadd.f32 %v185, %v202
  %v206 = vadd.f32 %v186, %v202
  %v207 = vadd.f32 %v187, %v202
  %v208 = vadd.f32 %v188, %v202
  %v209 = vadd.f32 %v189, %v202
  %v210 = vadd.f32 %v190, %v202
  %v211 = vadd.f32 %v191, %v202
  %v212 = vadd.f32 %v192, %v202
  %v213 = vadd.f32 %v193, %v202
  %v214 = vadd.f32 %v194, %v202
  %v215 = vadd.f32 %v195, %v202
  %v216 = vadd.f32 %v196, %v202
  %v217 = vadd.f32 %v197, %v202
  %v218 = vadd.f32 %v198, %v202
  %v219 = vadd.f32 %v199, %v202
  %v220 = vmax.f32 %v204, 0.0
  %v221 = vmax.f32 %v205, 0.0
  %v222 = vmax.f32 %v206, 0.0
  %v223 = vmax.f32 %v207, 0.0
  %v224 = vmax.f32 %v208, 0.0
  %v225 = vmax.f32 %v209, 0.0
  %v226 = vmax.f32 %v210, 0.0
  %v227 = vmax.f32 %v211, 0.0
  %v228 = vmax.f32 %v212, 0.0
  %v229 = vmax.f32 %v213, 0.0
  %v230 = vmax.f32 %v214, 0.0
  %v231 = vmax.f32 %v215, 0.0
  %v232 = vmax.f32 %v216, 0.0
  %v233 = vmax.f32 %v217, 0.0
  %v234 = vmax.f32 %v218, 0.0
  %v235 = vmax.f32 %v219, 0.0
  %v236 = vpack.c.bf16 %v220, %v220
  %v237 = vpack.c.bf16 %v221, %v221
  %v238 = vpack.c.bf16 %v222, %v222
  %v239 = vpack.c.bf16 %v223, %v223
  %v240 = vpack.c.bf16 %v224, %v224
  %v241 = vpack.c.bf16 %v225, %v225
  %v242 = vpack.c.bf16 %v226, %v226
  %v243 = vpack.c.bf16 %v227, %v227
  %v244 = vpack.c.bf16 %v228, %v228
  %v245 = vpack.c.bf16 %v229, %v229
  %v246 = vpack.c.bf16 %v230, %v230
  %v247 = vpack.c.bf16 %v231, %v231
  %v248 = vpack.c.bf16 %v232, %v232
  %v249 = vpack.c.bf16 %v233, %v233
  %v250 = vpack.c.bf16 %v234, %v234
  %v251 = vpack.c.bf16 %v235, %v235
  %vm252 = vcmask 257024
  %253 = vst.msk [vmem:[%s4] sm:$0xf] %vm252, %v236
  %254 = vst.msk [vmem:[%s4 + $0x4] sm:$0xf] %vm252, %v237
  %255 = vst.msk [vmem:[%s4 + $0x8] sm:$0xf] %vm252, %v238
  %256 = vst.msk [vmem:[%s4 + $0xc] sm:$0xf] %vm252, %v239
  %257 = vst.msk [vmem:[%s4 + $0x10] sm:$0xf] %vm252, %v240
  %258 = vst.msk [vmem:[%s4 + $0x14] sm:$0xf] %vm252, %v241
  %259 = vst.msk [vmem:[%s4 + $0x18] sm:$0xf] %vm252, %v242
  %260 = vst.msk [vmem:[%s4 + $0x1c] sm:$0xf] %vm252, %v243
  %261 = vst.msk [vmem:[%s4 + $0x20] sm:$0xf] %vm252, %v244
  %262 = vst.msk [vmem:[%s4 + $0x24] sm:$0xf] %vm252, %v245
  %263 = vst.msk [vmem:[%s4 + $0x28] sm:$0xf] %vm252, %v246
  %264 = vst.msk [vmem:[%s4 + $0x2c] sm:$0xf] %vm252, %v247
  %265 = vst.msk [vmem:[%s4 + $0x30] sm:$0xf] %vm252, %v248
  %266 = vst.msk [vmem:[%s4 + $0x34] sm:$0xf] %vm252, %v249
  %267 = vst.msk [vmem:[%s4 + $0x38] sm:$0xf] %vm252, %v250
  %268 = vst.msk [vmem:[%s4 + $0x3c] sm:$0xf] %vm252, %v251
  // Predicated region
  $region18: #{resnext_ida_forward.26} parent=0 // pred_check
    _
  $region19: #{resnext_ida_forward.26} parent=0 // pred_check_branch
    %270 = sbr.rel (0) target = $region21
  $region20: #{resnext_ida_forward.26} parent=0 // pred_region
    _
  $region21: #{resnext_ida_forward.26} parent=0 // pred_fallthru
    _
  // Predicated region
  $region22: #{resnext_ida_forward.26} parent=0 // pred_check
    _
  $region23: #{resnext_ida_forward.26} parent=0 // pred_check_branch
    %272 = sbr.rel (0) target = $region25
  $region24: #{resnext_ida_forward.26} parent=0 // pred_region
    _
  $region25: #{resnext_ida_forward.26} parent=0 // pred_fallthru
    _

// kernel: resnext_ida_forward.23
$region0: #{resnext_ida_forward.23}
  #allocation0 [shape = 'u32[]', space=smem, size = 0x4, offset = 0x4, fixed_abs, tag = 'smem constant byte address 0x4 - core index']
  #allocation1 [shape = 'u32[72,128]{1,0:T(1,128)}', space=vmem, size = 0x9000, scoped, tag = 'internal scratch']
  %s0 = inlined_call_operand.vmem [shape: bf16[9,512,64], index: 0, kind: input, shape index: {}]
  %s1 = inlined_call_operand.vmem [shape: bf16[512,64], index: 1, kind: output, shape index: {}]
  %s2 = sld [smem:[#allocation0]]
  $region14: #{resnext_ida_forward.23} parent=0
    _
  %s4 = ssub.s32 1, %s2
  %s5 = scalar_select 0, %s4, %s2
  // Predicated region
  $region2: #{resnext_ida_forward.23} parent=0 // pred_check
    _
  $region3: #{resnext_ida_forward.23} parent=0 // pred_check_branch
    %7 = sbr.rel (0) target = $region5
  $region4: #{resnext_ida_forward.23} parent=0 // pred_region
    _
  $region5: #{resnext_ida_forward.23} parent=0 // pred_fallthru
    _
  %v8 = vld [vmem:[%s0] sm:$0xf]
  %v9 = vld [vmem:[%s0 + $0x4] sm:$0xf]
  %v10 = vld [vmem:[%s0 + $0x8] sm:$0xf]
  %v11 = vld [vmem:[%s0 + $0xc] sm:$0xf]
  %v12 = vld [vmem:[%s0 + $0x10] sm:$0xf]
  %v13 = vld [vmem:[%s0 + $0x14] sm:$0xf]
  %v14 = vld [vmem:[%s0 + $0x18] sm:$0xf]
  %v15 = vld [vmem:[%s0 + $0x1c] sm:$0xf]
  %v16 = vld [vmem:[%s0 + $0x20] sm:$0xf]
  %v17 = vld [vmem:[%s0 + $0x24] sm:$0xf]
  %v18 = vld [vmem:[%s0 + $0x28] sm:$0xf]
  %v19 = vld [vmem:[%s0 + $0x2c] sm:$0xf]
  %v20 = vld [vmem:[%s0 + $0x30] sm:$0xf]
  %v21 = vld [vmem:[%s0 + $0x34] sm:$0xf]
  %v22 = vld [vmem:[%s0 + $0x38] sm:$0xf]
  %v23 = vld [vmem:[%s0 + $0x3c] sm:$0xf]
  %v24 = vld [vmem:[%s0 + $0x40] sm:$0xf]
  %v25 = vld [vmem:[%s0 + $0x44] sm:$0xf]
  %v26 = vld [vmem:[%s0 + $0x48] sm:$0xf]
  %v27 = vld [vmem:[%s0 + $0x4c] sm:$0xf]
  %v28 = vld [vmem:[%s0 + $0x50] sm:$0xf]
  %v29 = vld [vmem:[%s0 + $0x54] sm:$0xf]
  %v30 = vld [vmem:[%s0 + $0x58] sm:$0xf]
  %v31 = vld [vmem:[%s0 + $0x5c] sm:$0xf]
  %v32 = vld [vmem:[%s0 + $0x60] sm:$0xf]
  %v33 = vld [vmem:[%s0 + $0x64] sm:$0xf]
  %v34 = vld [vmem:[%s0 + $0x68] sm:$0xf]
  %v35 = vld [vmem:[%s0 + $0x6c] sm:$0xf]
  %v36 = vld [vmem:[%s0 + $0x70] sm:$0xf]
  %v37 = vld [vmem:[%s0 + $0x74] sm:$0xf]
  %v38 = vld [vmem:[%s0 + $0x78] sm:$0xf]
  %v39 = vld [vmem:[%s0 + $0x7c] sm:$0xf]
  %v40 = vld [vmem:[%s0 + $0x80] sm:$0xf]
  %v41 = vld [vmem:[%s0 + $0x84] sm:$0xf]
  %v42 = vld [vmem:[%s0 + $0x88] sm:$0xf]
  %v43 = vld [vmem:[%s0 + $0x8c] sm:$0xf]
  %v44 = vld [vmem:[%s0 + $0x90] sm:$0xf]
  %v45 = vld [vmem:[%s0 + $0x94] sm:$0xf]
  %v46 = vld [vmem:[%s0 + $0x98] sm:$0xf]
  %v47 = vld [vmem:[%s0 + $0x9c] sm:$0xf]
  %v48 = vld [vmem:[%s0 + $0xa0] sm:$0xf]
  %v49 = vld [vmem:[%s0 + $0xa4] sm:$0xf]
  %v50 = vld [vmem:[%s0 + $0xa8] sm:$0xf]
  %v51 = vld [vmem:[%s0 + $0xac] sm:$0xf]
  %v52 = vld [vmem:[%s0 + $0xb0] sm:$0xf]
  %v53 = vld [vmem:[%s0 + $0xb4] sm:$0xf]
  %v54 = vld [vmem:[%s0 + $0xb8] sm:$0xf]
  %v55 = vld [vmem:[%s0 + $0xbc] sm:$0xf]
  %v56 = vld [vmem:[%s0 + $0xc0] sm:$0xf]
  %v57 = vld [vmem:[%s0 + $0xc4] sm:$0xf]
  %v58 = vld [vmem:[%s0 + $0xc8] sm:$0xf]
  %v59 = vld [vmem:[%s0 + $0xcc] sm:$0xf]
  %v60 = vld [vmem:[%s0 + $0xd0] sm:$0xf]
  %v61 = vld [vmem:[%s0 + $0xd4] sm:$0xf]
  %v62 = vld [vmem:[%s0 + $0xd8] sm:$0xf]
  %v63 = vld [vmem:[%s0 + $0xdc] sm:$0xf]
  %v64 = vld [vmem:[%s0 + $0xe0] sm:$0xf]
  %v65 = vld [vmem:[%s0 + $0xe4] sm:$0xf]
  %v66 = vld [vmem:[%s0 + $0xe8] sm:$0xf]
  %v67 = vld [vmem:[%s0 + $0xec] sm:$0xf]
  %v68 = vld [vmem:[%s0 + $0xf0] sm:$0xf]
  %v69 = vld [vmem:[%s0 + $0xf4] sm:$0xf]
  %v70 = vld [vmem:[%s0 + $0xf8] sm:$0xf]
  %v71 = vld [vmem:[%s0 + $0xfc] sm:$0xf]
  %s72 = scalar_lea.vmem %s0, 256
  %v73 = vld [vmem:[%s72] sm:$0xf]
  %v74 = vld [vmem:[%s72 + $0x4] sm:$0xf]
  %v75 = vld [vmem:[%s72 + $0x8] sm:$0xf]
  %v76 = vld [vmem:[%s72 + $0xc] sm:$0xf]
  %v77 = vld [vmem:[%s72 + $0x10] sm:$0xf]
  %v78 = vld [vmem:[%s72 + $0x14] sm:$0xf]
  %v79 = vld [vmem:[%s72 + $0x18] sm:$0xf]
  %v80 = vld [vmem:[%s72 + $0x1c] sm:$0xf]
  %v81 = vld [vmem:[%s72 + $0x20] sm:$0xf]
  %v82 = vld [vmem:[%s72 + $0x24] sm:$0xf]
  %v83 = vld [vmem:[%s72 + $0x28] sm:$0xf]
  %v84 = vld [vmem:[%s72 + $0x2c] sm:$0xf]
  %v85 = vld [vmem:[%s72 + $0x30] sm:$0xf]
  %v86 = vld [vmem:[%s72 + $0x34] sm:$0xf]
  %v87 = vld [vmem:[%s72 + $0x38] sm:$0xf]
  %v88 = vld [vmem:[%s72 + $0x3c] sm:$0xf]
  %v89 = vld [vmem:[%s72 + $0x40] sm:$0xf]
  %v90 = vld [vmem:[%s72 + $0x44] sm:$0xf]
  %v91 = vld [vmem:[%s72 + $0x48] sm:$0xf]
  %v92 = vld [vmem:[%s72 + $0x4c] sm:$0xf]
  %v93 = vld [vmem:[%s72 + $0x50] sm:$0xf]
  %v94 = vld [vmem:[%s72 + $0x54] sm:$0xf]
  %v95 = vld [vmem:[%s72 + $0x58] sm:$0xf]
  %v96 = vld [vmem:[%s72 + $0x5c] sm:$0xf]
  %v97 = vld [vmem:[%s72 + $0x60] sm:$0xf]
  %v98 = vld [vmem:[%s72 + $0x64] sm:$0xf]
  %v99 = vld [vmem:[%s72 + $0x68] sm:$0xf]
  %v100 = vld [vmem:[%s72 + $0x6c] sm:$0xf]
  %v101 = vld [vmem:[%s72 + $0x70] sm:$0xf]
  %v102 = vld [vmem:[%s72 + $0x74] sm:$0xf]
  %v103 = vld [vmem:[%s72 + $0x78] sm:$0xf]
  %v104 = vld [vmem:[%s72 + $0x7c] sm:$0xf]
  %v105 = vld [vmem:[%s72 + $0x80] sm:$0xf]
  %v106 = vld [vmem:[%s72 + $0x84] sm:$0xf]
  %v107 = vld [vmem:[%s72 + $0x88] sm:$0xf]
  %v108 = vld [vmem:[%s72 + $0x8c] sm:$0xf]
  %v109 = vld [vmem:[%s72 + $0x90] sm:$0xf]
  %v110 = vld [vmem:[%s72 + $0x94] sm:$0xf]
  %v111 = vld [vmem:[%s72 + $0x98] sm:$0xf]
  %v112 = vld [vmem:[%s72 + $0x9c] sm:$0xf]
  %v113 = vld [vmem:[%s72 + $0xa0] sm:$0xf]
  %v114 = vld [vmem:[%s72 + $0xa4] sm:$0xf]
  %v115 = vld [vmem:[%s72 + $0xa8] sm:$0xf]
  %v116 = vld [vmem:[%s72 + $0xac] sm:$0xf]
  %v117 = vld [vmem:[%s72 + $0xb0] sm:$0xf]
  %v118 = vld [vmem:[%s72 + $0xb4] sm:$0xf]
  %v119 = vld [vmem:[%s72 + $0xb8] sm:$0xf]
  %v120 = vld [vmem:[%s72 + $0xbc] sm:$0xf]
  %v121 = vld [vmem:[%s72 + $0xc0] sm:$0xf]
  %v122 = vld [vmem:[%s72 + $0xc4] sm:$0xf]
  %v123 = vld [vmem:[%s72 + $0xc8] sm:$0xf]
  %v124 = vld [vmem:[%s72 + $0xcc] sm:$0xf]
  %v125 = vld [vmem:[%s72 + $0xd0] sm:$0xf]
  %v126 = vld [vmem:[%s72 + $0xd4] sm:$0xf]
  %v127 = vld [vmem:[%s72 + $0xd8] sm:$0xf]
  %v128 = vld [vmem:[%s72 + $0xdc] sm:$0xf]
  %v129 = vld [vmem:[%s72 + $0xe0] sm:$0xf]
  %v130 = vld [vmem:[%s72 + $0xe4] sm:$0xf]
  %v131 = vld [vmem:[%s72 + $0xe8] sm:$0xf]
  %v132 = vld [vmem:[%s72 + $0xec] sm:$0xf]
  %v133 = vld [vmem:[%s72 + $0xf0] sm:$0xf]
  %v134 = vld [vmem:[%s72 + $0xf4] sm:$0xf]
  %v135 = vld [vmem:[%s72 + $0xf8] sm:$0xf]
  %v136 = vld [vmem:[%s72 + $0xfc] sm:$0xf]
  %v137 = vunpack.c.l.bf16 %v8
  %v138 = vunpack.c.l.bf16 %v9
  %v139 = vunpack.c.l.bf16 %v10
  %v140 = vunpack.c.l.bf16 %v11
  %v141 = vunpack.c.l.bf16 %v12
  %v142 = vunpack.c.l.bf16 %v13
  %v143 = vunpack.c.l.bf16 %v14
  %v144 = vunpack.c.l.bf16 %v15
  %v145 = vunpack.c.l.bf16 %v16
  %v146 = vunpack.c.l.bf16 %v17
  %v147 = vunpack.c.l.bf16 %v18
  %v148 = vunpack.c.l.bf16 %v19
  %v149 = vunpack.c.l.bf16 %v20
  %v150 = vunpack.c.l.bf16 %v21
  %v151 = vunpack.c.l.bf16 %v22
  %v152 = vunpack.c.l.bf16 %v23
  %v153 = vunpack.c.l.bf16 %v24
  %v154 = vunpack.c.l.bf16 %v25
  %v155 = vunpack.c.l.bf16 %v26
  %v156 = vunpack.c.l.bf16 %v27
  %v157 = vunpack.c.l.bf16 %v28
  %v158 = vunpack.c.l.bf16 %v29
  %v159 = vunpack.c.l.bf16 %v30
  %v160 = vunpack.c.l.bf16 %v31
  %v161 = vunpack.c.l.bf16 %v32
  %v162 = vunpack.c.l.bf16 %v33
  %v163 = vunpack.c.l.bf16 %v34
  %v164 = vunpack.c.l.bf16 %v35
  %v165 = vunpack.c.l.bf16 %v36
  %v166 = vunpack.c.l.bf16 %v37
  %v167 = vunpack.c.l.bf16 %v38
  %v168 = vunpack.c.l.bf16 %v39
  %v169 = vunpack.c.l.bf16 %v40
  %v170 = vunpack.c.l.bf16 %v41
  %v171 = vunpack.c.l.bf16 %v42
  %v172 = vunpack.c.l.bf16 %v43
  %v173 = vunpack.c.l.bf16 %v44
  %v174 = vunpack.c.l.bf16 %v45
  %v175 = vunpack.c.l.bf16 %v46
  %v176 = vunpack.c.l.bf16 %v47
  %v177 = vunpack.c.l.bf16 %v48
  %v178 = vunpack.c.l.bf16 %v49
  %v179 = vunpack.c.l.bf16 %v50
  %v180 = vunpack.c.l.bf16 %v51
  %v181 = vunpack.c.l.bf16 %v52
  %v182 = vunpack.c.l.bf16 %v53
  %v183 = vunpack.c.l.bf16 %v54
  %v184 = vunpack.c.l.bf16 %v55
  %v185 = vunpack.c.l.bf16 %v56
  %v186 = vunpack.c.l.bf16 %v57
  %v187 = vunpack.c.l.bf16 %v58
  %v188 = vunpack.c.l.bf16 %v59
  %v189 = vunpack.c.l.bf16 %v60
  %v190 = vunpack.c.l.bf16 %v61
  %v191 = vunpack.c.l.bf16 %v62
  %v192 = vunpack.c.l.bf16 %v63
  %v193 = vunpack.c.l.bf16 %v64
  %v194 = vunpack.c.l.bf16 %v65
  %v195 = vunpack.c.l.bf16 %v66
  %v196 = vunpack.c.l.bf16 %v67
  %v197 = vunpack.c.l.bf16 %v68
  %v198 = vunpack.c.l.bf16 %v69
  %v199 = vunpack.c.l.bf16 %v70
  %v200 = vunpack.c.l.bf16 %v71
  %v201 = vunpack.c.l.bf16 %v73
  %v202 = vunpack.c.l.bf16 %v74
  %v203 = vunpack.c.l.bf16 %v75
  %v204 = vunpack.c.l.bf16 %v76
  %v205 = vunpack.c.l.bf16 %v77
  %v206 = vunpack.c.l.bf16 %v78
  %v207 = vunpack.c.l.bf16 %v79
  %v208 = vunpack.c.l.bf16 %v80
  %v209 = vunpack.c.l.bf16 %v81
  %v210 = vunpack.c.l.bf16 %v82
  %v211 = vunpack.c.l.bf16 %v83
  %v212 = vunpack.c.l.bf16 %v84
  %v213 = vunpack.c.l.bf16 %v85
  %v214 = vunpack.c.l.bf16 %v86
  %v215 = vunpack.c.l.bf16 %v87
  %v216 = vunpack.c.l.bf16 %v88
  %v217 = vunpack.c.l.bf16 %v89
  %v218 = vunpack.c.l.bf16 %v90
  %v219 = vunpack.c.l.bf16 %v91
  %v220 = vunpack.c.l.bf16 %v92
  %v221 = vunpack.c.l.bf16 %v93
  %v222 = vunpack.c.l.bf16 %v94
  %v223 = vunpack.c.l.bf16 %v95
  %v224 = vunpack.c.l.bf16 %v96
  %v225 = vunpack.c.l.bf16 %v97
  %v226 = vunpack.c.l.bf16 %v98
  %v227 = vunpack.c.l.bf16 %v99
  %v228 = vunpack.c.l.bf16 %v100
  %v229 = vunpack.c.l.bf16 %v101
  %v230 = vunpack.c.l.bf16 %v102
  %v231 = vunpack.c.l.bf16 %v103
  %v232 = vunpack.c.l.bf16 %v104
  %v233 = vunpack.c.l.bf16 %v105
  %v234 = vunpack.c.l.bf16 %v106
  %v235 = vunpack.c.l.bf16 %v107
  %v236 = vunpack.c.l.bf16 %v108
  %v237 = vunpack.c.l.bf16 %v109
  %v238 = vunpack.c.l.bf16 %v110
  %v239 = vunpack.c.l.bf16 %v111
  %v240 = vunpack.c.l.bf16 %v112
  %v241 = vunpack.c.l.bf16 %v113
  %v242 = vunpack.c.l.bf16 %v114
  %v243 = vunpack.c.l.bf16 %v115
  %v244 = vunpack.c.l.bf16 %v116
  %v245 = vunpack.c.l.bf16 %v117
  %v246 = vunpack.c.l.bf16 %v118
  %v247 = vunpack.c.l.bf16 %v119
  %v248 = vunpack.c.l.bf16 %v120
  %v249 = vunpack.c.l.bf16 %v121
  %v250 = vunpack.c.l.bf16 %v122
  %v251 = vunpack.c.l.bf16 %v123
  %v252 = vunpack.c.l.bf16 %v124
  %v253 = vunpack.c.l.bf16 %v125
  %v254 = vunpack.c.l.bf16 %v126
  %v255 = vunpack.c.l.bf16 %v127
  %v256 = vunpack.c.l.bf16 %v128
  %v257 = vunpack.c.l.bf16 %v129
  %v258 = vunpack.c.l.bf16 %v130
  %v259 = vunpack.c.l.bf16 %v131
  %v260 = vunpack.c.l.bf16 %v132
  %v261 = vunpack.c.l.bf16 %v133
  %v262 = vunpack.c.l.bf16 %v134
  %v263 = vunpack.c.l.bf16 %v135
  %v264 = vunpack.c.l.bf16 %v136
  %v265 = vmax.f32 %v137, %v201
  %v266 = vmax.f32 %v138, %v202
  %v267 = vmax.f32 %v139, %v203
  %v268 = vmax.f32 %v140, %v204
  %v269 = vmax.f32 %v141, %v205
  %v270 = vmax.f32 %v142, %v206
  %v271 = vmax.f32 %v143, %v207
  %v272 = vmax.f32 %v144, %v208
  %v273 = vmax.f32 %v145, %v209
  %v274 = vmax.f32 %v146, %v210
  %v275 = vmax.f32 %v147, %v211
  %v276 = vmax.f32 %v148, %v212
  %v277 = vmax.f32 %v149, %v213
  %v278 = vmax.f32 %v150, %v214
  %v279 = vmax.f32 %v151, %v215
  %v280 = vmax.f32 %v152, %v216
  %v281 = vmax.f32 %v153, %v217
  %v282 = vmax.f32 %v154, %v218
  %v283 = vmax.f32 %v155, %v219
  %v284 = vmax.f32 %v156, %v220
  %v285 = vmax.f32 %v157, %v221
  %v286 = vmax.f32 %v158, %v222
  %v287 = vmax.f32 %v159, %v223
  %v288 = vmax.f32 %v160, %v224
  %v289 = vmax.f32 %v161, %v225
  %v290 = vmax.f32 %v162, %v226
  %v291 = vmax.f32 %v163, %v227
  %v292 = vmax.f32 %v164, %v228
  %v293 = vmax.f32 %v165, %v229
  %v294 = vmax.f32 %v166, %v230
  %v295 = vmax.f32 %v167, %v231
  %v296 = vmax.f32 %v168, %v232
  %v297 = vmax.f32 %v169, %v233
  %v298 = vmax.f32 %v170, %v234
  %v299 = vmax.f32 %v171, %v235
  %v300 = vmax.f32 %v172, %v236
  %v301 = vmax.f32 %v173, %v237
  %v302 = vmax.f32 %v174, %v238
  %v303 = vmax.f32 %v175, %v239
  %v304 = vmax.f32 %v176, %v240
  %v305 = vmax.f32 %v177, %v241
  %v306 = vmax.f32 %v178, %v242
  %v307 = vmax.f32 %v179, %v243
  %v308 = vmax.f32 %v180, %v244
  %v309 = vmax.f32 %v181, %v245
  %v310 = vmax.f32 %v182, %v246
  %v311 = vmax.f32 %v183, %v247
  %v312 = vmax.f32 %v184, %v248
  %v313 = vmax.f32 %v185, %v249
  %v314 = vmax.f32 %v186, %v250
  %v315 = vmax.f32 %v187, %v251
  %v316 = vmax.f32 %v188, %v252
  %v317 = vmax.f32 %v189, %v253
  %v318 = vmax.f32 %v190, %v254
  %v319 = vmax.f32 %v191, %v255
  %v320 = vmax.f32 %v192, %v256
  %v321 = vmax.f32 %v193, %v257
  %v322 = vmax.f32 %v194, %v258
  %v323 = vmax.f32 %v195, %v259
  %v324 = vmax.f32 %v196, %v260
  %v325 = vmax.f32 %v197, %v261
  %v326 = vmax.f32 %v198, %v262
  %v327 = vmax.f32 %v199, %v263
  %v328 = vmax.f32 %v200, %v264
  %v329 = vpack.c.bf16 %v265, %v265
  %v330 = vpack.c.bf16 %v266, %v266
  %v331 = vpack.c.bf16 %v267, %v267
  %v332 = vpack.c.bf16 %v268, %v268
  %v333 = vpack.c.bf16 %v269, %v269
  %v334 = vpack.c.bf16 %v270, %v270
  %v335 = vpack.c.bf16 %v271, %v271
  %v336 = vpack.c.bf16 %v272, %v272
  %v337 = vpack.c.bf16 %v273, %v273
  %v338 = vpack.c.bf16 %v274, %v274
  %v339 = vpack.c.bf16 %v275, %v275
  %v340 = vpack.c.bf16 %v276, %v276
  %v341 = vpack.c.bf16 %v277, %v277
  %v342 = vpack.c.bf16 %v278, %v278
  %v343 = vpack.c.bf16 %v279, %v279
  %v344 = vpack.c.bf16 %v280, %v280
  %v345 = vpack.c.bf16 %v281, %v281
  %v346 = vpack.c.bf16 %v282, %v282
  %v347 = vpack.c.bf16 %v283, %v283
  %v348 = vpack.c.bf16 %v284, %v284
  %v349 = vpack.c.bf16 %v285, %v285
  %v350 = vpack.c.bf16 %v286, %v286
  %v351 = vpack.c.bf16 %v287, %v287
  %v352 = vpack.c.bf16 %v288, %v288
  %v353 = vpack.c.bf16 %v289, %v289
  %v354 = vpack.c.bf16 %v290, %v290
  %v355 = vpack.c.bf16 %v291, %v291
  %v356 = vpack.c.bf16 %v292, %v292
  %v357 = vpack.c.bf16 %v293, %v293
  %v358 = vpack.c.bf16 %v294, %v294
  %v359 = vpack.c.bf16 %v295, %v295
  %v360 = vpack.c.bf16 %v296, %v296
  %v361 = vpack.c.bf16 %v297, %v297
  %v362 = vpack.c.bf16 %v298, %v298
  %v363 = vpack.c.bf16 %v299, %v299
  %v364 = vpack.c.bf16 %v300, %v300
  %v365 = vpack.c.bf16 %v301, %v301
  %v366 = vpack.c.bf16 %v302, %v302
  %v367 = vpack.c.bf16 %v303, %v303
  %v368 = vpack.c.bf16 %v304, %v304
  %v369 = vpack.c.bf16 %v305, %v305
  %v370 = vpack.c.bf16 %v306, %v306
  %v371 = vpack.c.bf16 %v307, %v307
  %v372 = vpack.c.bf16 %v308, %v308
  %v373 = vpack.c.bf16 %v309, %v309
  %v374 = vpack.c.bf16 %v310, %v310
  %v375 = vpack.c.bf16 %v311, %v311
  %v376 = vpack.c.bf16 %v312, %v312
  %v377 = vpack.c.bf16 %v313, %v313
  %v378 = vpack.c.bf16 %v314, %v314
  %v379 = vpack.c.bf16 %v315, %v315
  %v380 = vpack.c.bf16 %v316, %v316
  %v381 = vpack.c.bf16 %v317, %v317
  %v382 = vpack.c.bf16 %v318, %v318
  %v383 = vpack.c.bf16 %v319, %v319
  %v384 = vpack.c.bf16 %v320, %v320
  %v385 = vpack.c.bf16 %v321, %v321
  %v386 = vpack.c.bf16 %v322, %v322
  %v387 = vpack.c.bf16 %v323, %v323
  %v388 = vpack.c.bf16 %v324, %v324
  %v389 = vpack.c.bf16 %v325, %v325
  %v390 = vpack.c.bf16 %v326, %v326
  %v391 = vpack.c.bf16 %v327, %v327
  %v392 = vpack.c.bf16 %v328, %v328
  %s393 = scalar_lea.vmem %s0, 512
  %v394 = vld [vmem:[%s393] sm:$0xf]
  %v395 = vld [vmem:[%s393 + $0x4] sm:$0xf]
  %v396 = vld [vmem:[%s393 + $0x8] sm:$0xf]
  %v397 = vld [vmem:[%s393 + $0xc] sm:$0xf]
  %v398 = vld [vmem:[%s393 + $0x10] sm:$0xf]
  %v399 = vld [vmem:[%s393 + $0x14] sm:$0xf]
  %v400 = vld [vmem:[%s393 + $0x18] sm:$0xf]
  %v401 = vld [vmem:[%s393 + $0x1c] sm:$0xf]
  %v402 = vld [vmem:[%s393 + $0x20] sm:$0xf]
  %v403 = vld [vmem:[%s393 + $0x24] sm:$0xf]
  %v404 = vld [vmem:[%s393 + $0x28] sm:$0xf]
  %v405 = vld [vmem:[%s393 + $0x2c] sm:$0xf]
  %v406 = vld [vmem:[%s393 + $0x30] sm:$0xf]
  %v407 = vld [vmem:[%s393 + $0x34] sm:$0xf]
  %v408 = vld [vmem:[%s393 + $0x38] sm:$0xf]
  %v409 = vld [vmem:[%s393 + $0x3c] sm:$0xf]
  %v410 = vld [vmem:[%s393 + $0x40] sm:$0xf]
  %v411 = vld [vmem:[%s393 + $0x44] sm:$0xf]
  %v412 = vld [vmem:[%s393 + $0x48] sm:$0xf]
  %v413 = vld [vmem:[%s393 + $0x4c] sm:$0xf]
  %v414 = vld [vmem:[%s393 + $0x50] sm:$0xf]
  %v415 = vld [vmem:[%s393 + $0x54] sm:$0xf]
  %v416 = vld [vmem:[%s393 + $0x58] sm:$0xf]
  %v417 = vld [vmem:[%s393 + $0x5c] sm:$0xf]
  %v418 = vld [vmem:[%s393 + $0x60] sm:$0xf]
  %v419 = vld [vmem:[%s393 + $0x64] sm:$0xf]
  %v420 = vld [vmem:[%s393 + $0x68] sm:$0xf]
  %v421 = vld [vmem:[%s393 + $0x6c] sm:$0xf]
  %v422 = vld [vmem:[%s393 + $0x70] sm:$0xf]
  %v423 = vld [vmem:[%s393 + $0x74] sm:$0xf]
  %v424 = vld [vmem:[%s393 + $0x78] sm:$0xf]
  %v425 = vld [vmem:[%s393 + $0x7c] sm:$0xf]
  %v426 = vld [vmem:[%s393 + $0x80] sm:$0xf]
  %v427 = vld [vmem:[%s393 + $0x84] sm:$0xf]
  %v428 = vld [vmem:[%s393 + $0x88] sm:$0xf]
  %v429 = vld [vmem:[%s393 + $0x8c] sm:$0xf]
  %v430 = vld [vmem:[%s393 + $0x90] sm:$0xf]
  %v431 = vld [vmem:[%s393 + $0x94] sm:$0xf]
  %v432 = vld [vmem:[%s393 + $0x98] sm:$0xf]
  %v433 = vld [vmem:[%s393 + $0x9c] sm:$0xf]
  %v434 = vld [vmem:[%s393 + $0xa0] sm:$0xf]
  %v435 = vld [vmem:[%s393 + $0xa4] sm:$0xf]
  %v436 = vld [vmem:[%s393 + $0xa8] sm:$0xf]
  %v437 = vld [vmem:[%s393 + $0xac] sm:$0xf]
  %v438 = vld [vmem:[%s393 + $0xb0] sm:$0xf]
  %v439 = vld [vmem:[%s393 + $0xb4] sm:$0xf]
  %v440 = vld [vmem:[%s393 + $0xb8] sm:$0xf]
  %v441 = vld [vmem:[%s393 + $0xbc] sm:$0xf]
  %v442 = vld [vmem:[%s393 + $0xc0] sm:$0xf]
  %v443 = vld [vmem:[%s393 + $0xc4] sm:$0xf]
  %v444 = vld [vmem:[%s393 + $0xc8] sm:$0xf]
  %v445 = vld [vmem:[%s393 + $0xcc] sm:$0xf]
  %v446 = vld [vmem:[%s393 + $0xd0] sm:$0xf]
  %v447 = vld [vmem:[%s393 + $0xd4] sm:$0xf]
  %v448 = vld [vmem:[%s393 + $0xd8] sm:$0xf]
  %v449 = vld [vmem:[%s393 + $0xdc] sm:$0xf]
  %v450 = vld [vmem:[%s393 + $0xe0] sm:$0xf]
  %v451 = vld [vmem:[%s393 + $0xe4] sm:$0xf]
  %v452 = vld [vmem:[%s393 + $0xe8] sm:$0xf]
  %v453 = vld [vmem:[%s393 + $0xec] sm:$0xf]
  %v454 = vld [vmem:[%s393 + $0xf0] sm:$0xf]
  %v455 = vld [vmem:[%s393 + $0xf4] sm:$0xf]
  %v456 = vld [vmem:[%s393 + $0xf8] sm:$0xf]
  %v457 = vld [vmem:[%s393 + $0xfc] sm:$0xf]
  %v458 = vunpack.c.l.bf16 %v329
  %v459 = vunpack.c.l.bf16 %v330
  %v460 = vunpack.c.l.bf16 %v331
  %v461 = vunpack.c.l.bf16 %v332
  %v462 = vunpack.c.l.bf16 %v333
  %v463 = vunpack.c.l.bf16 %v334
  %v464 = vunpack.c.l.bf16 %v335
  %v465 = vunpack.c.l.bf16 %v336
  %v466 = vunpack.c.l.bf16 %v337
  %v467 = vunpack.c.l.bf16 %v338
  %v468 = vunpack.c.l.bf16 %v339
  %v469 = vunpack.c.l.bf16 %v340
  %v470 = vunpack.c.l.bf16 %v341
  %v471 = vunpack.c.l.bf16 %v342
  %v472 = vunpack.c.l.bf16 %v343
  %v473 = vunpack.c.l.bf16 %v344
  %v474 = vunpack.c.l.bf16 %v345
  %v475 = vunpack.c.l.bf16 %v346
  %v476 = vunpack.c.l.bf16 %v347
  %v477 = vunpack.c.l.bf16 %v348
  %v478 = vunpack.c.l.bf16 %v349
  %v479 = vunpack.c.l.bf16 %v350
  %v480 = vunpack.c.l.bf16 %v351
  %v481 = vunpack.c.l.bf16 %v352
  %v482 = vunpack.c.l.bf16 %v353
  %v483 = vunpack.c.l.bf16 %v354
  %v484 = vunpack.c.l.bf16 %v355
  %v485 = vunpack.c.l.bf16 %v356
  %v486 = vunpack.c.l.bf16 %v357
  %v487 = vunpack.c.l.bf16 %v358
  %v488 = vunpack.c.l.bf16 %v359
  %v489 = vunpack.c.l.bf16 %v360
  %v490 = vunpack.c.l.bf16 %v361
  %v491 = vunpack.c.l.bf16 %v362
  %v492 = vunpack.c.l.bf16 %v363
  %v493 = vunpack.c.l.bf16 %v364
  %v494 = vunpack.c.l.bf16 %v365
  %v495 = vunpack.c.l.bf16 %v366
  %v496 = vunpack.c.l.bf16 %v367
  %v497 = vunpack.c.l.bf16 %v368
  %v498 = vunpack.c.l.bf16 %v369
  %v499 = vunpack.c.l.bf16 %v370
  %v500 = vunpack.c.l.bf16 %v371
  %v501 = vunpack.c.l.bf16 %v372
  %v502 = vunpack.c.l.bf16 %v373
  %v503 = vunpack.c.l.bf16 %v374
  %v504 = vunpack.c.l.bf16 %v375
  %v505 = vunpack.c.l.bf16 %v376
  %v506 = vunpack.c.l.bf16 %v377
  %v507 = vunpack.c.l.bf16 %v378
  %v508 = vunpack.c.l.bf16 %v379
  %v509 = vunpack.c.l.bf16 %v380
  %v510 = vunpack.c.l.bf16 %v381
  %v511 = vunpack.c.l.bf16 %v382
  %v512 = vunpack.c.l.bf16 %v383
  %v513 = vunpack.c.l.bf16 %v384
  %v514 = vunpack.c.l.bf16 %v385
  %v515 = vunpack.c.l.bf16 %v386
  %v516 = vunpack.c.l.bf16 %v387
  %v517 = vunpack.c.l.bf16 %v388
  %v518 = vunpack.c.l.bf16 %v389
  %v519 = vunpack.c.l.bf16 %v390
  %v520 = vunpack.c.l.bf16 %v391
  %v521 = vunpack.c.l.bf16 %v392
  %v522 = vunpack.c.l.bf16 %v394
  %v523 = vunpack.c.l.bf16 %v395
  %v524 = vunpack.c.l.bf16 %v396
  %v525 = vunpack.c.l.bf16 %v397
  %v526 = vunpack.c.l.bf16 %v398
  %v527 = vunpack.c.l.bf16 %v399
  %v528 = vunpack.c.l.bf16 %v400
  %v529 = vunpack.c.l.bf16 %v401
  %v530 = vunpack.c.l.bf16 %v402
  %v531 = vunpack.c.l.bf16 %v403
  %v532 = vunpack.c.l.bf16 %v404
  %v533 = vunpack.c.l.bf16 %v405
  %v534 = vunpack.c.l.bf16 %v406
  %v535 = vunpack.c.l.bf16 %v407
  %v536 = vunpack.c.l.bf16 %v408
  %v537 = vunpack.c.l.bf16 %v409
  %v538 = vunpack.c.l.bf16 %v410
  %v539 = vunpack.c.l.bf16 %v411
  %v540 = vunpack.c.l.bf16 %v412
  %v541 = vunpack.c.l.bf16 %v413
  %v542 = vunpack.c.l.bf16 %v414
  %v543 = vunpack.c.l.bf16 %v415
  %v544 = vunpack.c.l.bf16 %v416
  %v545 = vunpack.c.l.bf16 %v417
  %v546 = vunpack.c.l.bf16 %v418
  %v547 = vunpack.c.l.bf16 %v419
  %v548 = vunpack.c.l.bf16 %v420
  %v549 = vunpack.c.l.bf16 %v421
  %v550 = vunpack.c.l.bf16 %v422
  %v551 = vunpack.c.l.bf16 %v423
  %v552 = vunpack.c.l.bf16 %v424
  %v553 = vunpack.c.l.bf16 %v425
  %v554 = vunpack.c.l.bf16 %v426
  %v555 = vunpack.c.l.bf16 %v427
  %v556 = vunpack.c.l.bf16 %v428
  %v557 = vunpack.c.l.bf16 %v429
  %v558 = vunpack.c.l.bf16 %v430
  %v559 = vunpack.c.l.bf16 %v431
  %v560 = vunpack.c.l.bf16 %v432
  %v561 = vunpack.c.l.bf16 %v433
  %v562 = vunpack.c.l.bf16 %v434
  %v563 = vunpack.c.l.bf16 %v435
  %v564 = vunpack.c.l.bf16 %v436
  %v565 = vunpack.c.l.bf16 %v437
  %v566 = vunpack.c.l.bf16 %v438
  %v567 = vunpack.c.l.bf16 %v439
  %v568 = vunpack.c.l.bf16 %v440
  %v569 = vunpack.c.l.bf16 %v441
  %v570 = vunpack.c.l.bf16 %v442
  %v571 = vunpack.c.l.bf16 %v443
  %v572 = vunpack.c.l.bf16 %v444
  %v573 = vunpack.c.l.bf16 %v445
  %v574 = vunpack.c.l.bf16 %v446
  %v575 = vunpack.c.l.bf16 %v447
  %v576 = vunpack.c.l.bf16 %v448
  %v577 = vunpack.c.l.bf16 %v449
  %v578 = vunpack.c.l.bf16 %v450
  %v579 = vunpack.c.l.bf16 %v451
  %v580 = vunpack.c.l.bf16 %v452
  %v581 = vunpack.c.l.bf16 %v453
  %v582 = vunpack.c.l.bf16 %v454
  %v583 = vunpack.c.l.bf16 %v455
  %v584 = vunpack.c.l.bf16 %v456
  %v585 = vunpack.c.l.bf16 %v457
  %v586 = vmax.f32 %v458, %v522
  %v587 = vmax.f32 %v459, %v523
  %v588 = vmax.f32 %v460, %v524
  %v589 = vmax.f32 %v461, %v525
  %v590 = vmax.f32 %v462, %v526
  %v591 = vmax.f32 %v463, %v527
  %v592 = vmax.f32 %v464, %v528
  %v593 = vmax.f32 %v465, %v529
  %v594 = vmax.f32 %v466, %v530
  %v595 = vmax.f32 %v467, %v531
  %v596 = vmax.f32 %v468, %v532
  %v597 = vmax.f32 %v469, %v533
  %v598 = vmax.f32 %v470, %v534
  %v599 = vmax.f32 %v471, %v535
  %v600 = vmax.f32 %v472, %v536
  %v601 = vmax.f32 %v473, %v537
  %v602 = vmax.f32 %v474, %v538
  %v603 = vmax.f32 %v475, %v539
  %v604 = vmax.f32 %v476, %v540
  %v605 = vmax.f32 %v477, %v541
  %v606 = vmax.f32 %v478, %v542
  %v607 = vmax.f32 %v479, %v543
  %v608 = vmax.f32 %v480, %v544
  %v609 = vmax.f32 %v481, %v545
  %v610 = vmax.f32 %v482, %v546
  %v611 = vmax.f32 %v483, %v547
  %v612 = vmax.f32 %v484, %v548
  %v613 = vmax.f32 %v485, %v549
  %v614 = vmax.f32 %v486, %v550
  %v615 = vmax.f32 %v487, %v551
  %v616 = vmax.f32 %v488, %v552
  %v617 = vmax.f32 %v489, %v553
  %v618 = vmax.f32 %v490, %v554
  %v619 = vmax.f32 %v491, %v555
  %v620 = vmax.f32 %v492, %v556
  %v621 = vmax.f32 %v493, %v557
  %v622 = vmax.f32 %v494, %v558
  %v623 = vmax.f32 %v495, %v559
  %v624 = vmax.f32 %v496, %v560
  %v625 = vmax.f32 %v497, %v561
  %v626 = vmax.f32 %v498, %v562
  %v627 = vmax.f32 %v499, %v563
  %v628 = vmax.f32 %v500, %v564
  %v629 = vmax.f32 %v501, %v565
  %v630 = vmax.f32 %v502, %v566
  %v631 = vmax.f32 %v503, %v567
  %v632 = vmax.f32 %v504, %v568
  %v633 = vmax.f32 %v505, %v569
  %v634 = vmax.f32 %v506, %v570
  %v635 = vmax.f32 %v507, %v571
  %v636 = vmax.f32 %v508, %v572
  %v637 = vmax.f32 %v509, %v573
  %v638 = vmax.f32 %v510, %v574
  %v639 = vmax.f32 %v511, %v575
  %v640 = vmax.f32 %v512, %v576
  %v641 = vmax.f32 %v513, %v577
  %v642 = vmax.f32 %v514, %v578
  %v643 = vmax.f32 %v515, %v579
  %v644 = vmax.f32 %v516, %v580
  %v645 = vmax.f32 %v517, %v581
  %v646 = vmax.f32 %v518, %v582
  %v647 = vmax.f32 %v519, %v583
  %v648 = vmax.f32 %v520, %v584
  %v649 = vmax.f32 %v521, %v585
  %v650 = vpack.c.bf16 %v586, %v586
  %v651 = vpack.c.bf16 %v587, %v587
  %v652 = vpack.c.bf16 %v588, %v588
  %v653 = vpack.c.bf16 %v589, %v589
  %v654 = vpack.c.bf16 %v590, %v590
  %v655 = vpack.c.bf16 %v591, %v591
  %v656 = vpack.c.bf16 %v592, %v592
  %v657 = vpack.c.bf16 %v593, %v593
  %v658 = vpack.c.bf16 %v594, %v594
  %v659 = vpack.c.bf16 %v595, %v595
  %v660 = vpack.c.bf16 %v596, %v596
  %v661 = vpack.c.bf16 %v597, %v597
  %v662 = vpack.c.bf16 %v598, %v598
  %v663 = vpack.c.bf16 %v599, %v599
  %v664 = vpack.c.bf16 %v600, %v600
  %v665 = vpack.c.bf16 %v601, %v601
  %v666 = vpack.c.bf16 %v602, %v602
  %v667 = vpack.c.bf16 %v603, %v603
  %v668 = vpack.c.bf16 %v604, %v604
  %v669 = vpack.c.bf16 %v605, %v605
  %v670 = vpack.c.bf16 %v606, %v606
  %v671 = vpack.c.bf16 %v607, %v607
  %v672 = vpack.c.bf16 %v608, %v608
  %v673 = vpack.c.bf16 %v609, %v609
  %v674 = vpack.c.bf16 %v610, %v610
  %v675 = vpack.c.bf16 %v611, %v611
  %v676 = vpack.c.bf16 %v612, %v612
  %v677 = vpack.c.bf16 %v613, %v613
  %v678 = vpack.c.bf16 %v614, %v614
  %v679 = vpack.c.bf16 %v615, %v615
  %v680 = vpack.c.bf16 %v616, %v616
  %v681 = vpack.c.bf16 %v617, %v617
  %v682 = vpack.c.bf16 %v618, %v618
  %v683 = vpack.c.bf16 %v619, %v619
  %v684 = vpack.c.bf16 %v620, %v620
  %v685 = vpack.c.bf16 %v621, %v621
  %v686 = vpack.c.bf16 %v622, %v622
  %v687 = vpack.c.bf16 %v623, %v623
  %v688 = vpack.c.bf16 %v624, %v624
  %v689 = vpack.c.bf16 %v625, %v625
  %v690 = vpack.c.bf16 %v626, %v626
  %v691 = vpack.c.bf16 %v627, %v627
  %v692 = vpack.c.bf16 %v628, %v628
  %v693 = vpack.c.bf16 %v629, %v629
  %v694 = vpack.c.bf16 %v630, %v630
  %v695 = vpack.c.bf16 %v631, %v631
  %v696 = vpack.c.bf16 %v632, %v632
  %v697 = vpack.c.bf16 %v633, %v633
  %v698 = vpack.c.bf16 %v634, %v634
  %v699 = vpack.c.bf16 %v635, %v635
  %v700 = vpack.c.bf16 %v636, %v636
  %v701 = vpack.c.bf16 %v637, %v637
  %v702 = vpack.c.bf16 %v638, %v638
  %v703 = vpack.c.bf16 %v639, %v639
  %v704 = vpack.c.bf16 %v640, %v640
  %v705 = vpack.c.bf16 %v641, %v641
  %v706 = vpack.c.bf16 %v642, %v642
  %v707 = vpack.c.bf16 %v643, %v643
  %v708 = vpack.c.bf16 %v644, %v644
  %v709 = vpack.c.bf16 %v645, %v645
  %v710 = vpack.c.bf16 %v646, %v646
  %v711 = vpack.c.bf16 %v647, %v647
  %v712 = vpack.c.bf16 %v648, %v648
  %v713 = vpack.c.bf16 %v649, %v649
  %s714 = scalar_lea.vmem %s0, 768
  %v715 = vld [vmem:[%s714] sm:$0xf]
  %v716 = vld [vmem:[%s714 + $0x4] sm:$0xf]
  %v717 = vld [vmem:[%s714 + $0x8] sm:$0xf]
  %v718 = vld [vmem:[%s714 + $0xc] sm:$0xf]
  %v719 = vld [vmem:[%s714 + $0x10] sm:$0xf]
  %v720 = vld [vmem:[%s714 + $0x14] sm:$0xf]
  %v721 = vld [vmem:[%s714 + $0x18] sm:$0xf]
  %v722 = vld [vmem:[%s714 + $0x1c] sm:$0xf]
  %v723 = vld [vmem:[%s714 + $0x20] sm:$0xf]
  %v724 = vld [vmem:[%s714 + $0x24] sm:$0xf]
  %v725 = vld [vmem:[%s714 + $0x28] sm:$0xf]
  %v726 = vld [vmem:[%s714 + $0x2c] sm:$0xf]
  %v727 = vld [vmem:[%s714 + $0x30] sm:$0xf]
  %v728 = vld [vmem:[%s714 + $0x34] sm:$0xf]
  %v729 = vld [vmem:[%s714 + $0x38] sm:$0xf]
  %v730 = vld [vmem:[%s714 + $0x3c] sm:$0xf]
  %v731 = vld [vmem:[%s714 + $0x40] sm:$0xf]
  %v732 = vld [vmem:[%s714 + $0x44] sm:$0xf]
  %v733 = vld [vmem:[%s714 + $0x48] sm:$0xf]
  %v734 = vld [vmem:[%s714 + $0x4c] sm:$0xf]
  %v735 = vld [vmem:[%s714 + $0x50] sm:$0xf]
  %v736 = vld [vmem:[%s714 + $0x54] sm:$0xf]
  %v737 = vld [vmem:[%s714 + $0x58] sm:$0xf]
  %v738 = vld [vmem:[%s714 + $0x5c] sm:$0xf]
  %v739 = vld [vmem:[%s714 + $0x60] sm:$0xf]
  %v740 = vld [vmem:[%s714 + $0x64] sm:$0xf]
  %v741 = vld [vmem:[%s714 + $0x68] sm:$0xf]
  %v742 = vld [vmem:[%s714 + $0x6c] sm:$0xf]
  %v743 = vld [vmem:[%s714 + $0x70] sm:$0xf]
  %v744 = vld [vmem:[%s714 + $0x74] sm:$0xf]
  %v745 = vld [vmem:[%s714 + $0x78] sm:$0xf]
  %v746 = vld [vmem:[%s714 + $0x7c] sm:$0xf]
  %v747 = vld [vmem:[%s714 + $0x80] sm:$0xf]
  %v748 = vld [vmem:[%s714 + $0x84] sm:$0xf]
  %v749 = vld [vmem:[%s714 + $0x88] sm:$0xf]
  %v750 = vld [vmem:[%s714 + $0x8c] sm:$0xf]
  %v751 = vld [vmem:[%s714 + $0x90] sm:$0xf]
  %v752 = vld [vmem:[%s714 + $0x94] sm:$0xf]
  %v753 = vld [vmem:[%s714 + $0x98] sm:$0xf]
  %v754 = vld [vmem:[%s714 + $0x9c] sm:$0xf]
  %v755 = vld [vmem:[%s714 + $0xa0] sm:$0xf]
  %v756 = vld [vmem:[%s714 + $0xa4] sm:$0xf]
  %v757 = vld [vmem:[%s714 + $0xa8] sm:$0xf]
  %v758 = vld [vmem:[%s714 + $0xac] sm:$0xf]
  %v759 = vld [vmem:[%s714 + $0xb0] sm:$0xf]
  %v760 = vld [vmem:[%s714 + $0xb4] sm:$0xf]
  %v761 = vld [vmem:[%s714 + $0xb8] sm:$0xf]
  %v762 = vld [vmem:[%s714 + $0xbc] sm:$0xf]
  %v763 = vld [vmem:[%s714 + $0xc0] sm:$0xf]
  %v764 = vld [vmem:[%s714 + $0xc4] sm:$0xf]
  %v765 = vld [vmem:[%s714 + $0xc8] sm:$0xf]
  %v766 = vld [vmem:[%s714 + $0xcc] sm:$0xf]
  %v767 = vld [vmem:[%s714 + $0xd0] sm:$0xf]
  %v768 = vld [vmem:[%s714 + $0xd4] sm:$0xf]
  %v769 = vld [vmem:[%s714 + $0xd8] sm:$0xf]
  %v770 = vld [vmem:[%s714 + $0xdc] sm:$0xf]
  %v771 = vld [vmem:[%s714 + $0xe0] sm:$0xf]
  %v772 = vld [vmem:[%s714 + $0xe4] sm:$0xf]
  %v773 = vld [vmem:[%s714 + $0xe8] sm:$0xf]
  %v774 = vld [vmem:[%s714 + $0xec] sm:$0xf]
  %v775 = vld [vmem:[%s714 + $0xf0] sm:$0xf]
  %v776 = vld [vmem:[%s714 + $0xf4] sm:$0xf]
  %v777 = vld [vmem:[%s714 + $0xf8] sm:$0xf]
  %v778 = vld [vmem:[%s714 + $0xfc] sm:$0xf]
  %v779 = vunpack.c.l.bf16 %v650
  %v780 = vunpack.c.l.bf16 %v651
  %v781 = vunpack.c.l.bf16 %v652
  %v782 = vunpack.c.l.bf16 %v653
  %v783 = vunpack.c.l.bf16 %v654
  %v784 = vunpack.c.l.bf16 %v655
  %v785 = vunpack.c.l.bf16 %v656
  %v786 = vunpack.c.l.bf16 %v657
  %v787 = vunpack.c.l.bf16 %v658
  %v788 = vunpack.c.l.bf16 %v659
  %v789 = vunpack.c.l.bf16 %v660
  %v790 = vunpack.c.l.bf16 %v661
  %v791 = vunpack.c.l.bf16 %v662
  %v792 = vunpack.c.l.bf16 %v663
  %v793 = vunpack.c.l.bf16 %v664
  %v794 = vunpack.c.l.bf16 %v665
  %v795 = vunpack.c.l.bf16 %v666
  %v796 = vunpack.c.l.bf16 %v667
  %v797 = vunpack.c.l.bf16 %v668
  %v798 = vunpack.c.l.bf16 %v669
  %v799 = vunpack.c.l.bf16 %v670
  %v800 = vunpack.c.l.bf16 %v671
  %v801 = vunpack.c.l.bf16 %v672
  %v802 = vunpack.c.l.bf16 %v673
  %v803 = vunpack.c.l.bf16 %v674
  %v804 = vunpack.c.l.bf16 %v675
  %v805 = vunpack.c.l.bf16 %v676
  %v806 = vunpack.c.l.bf16 %v677
  %v807 = vunpack.c.l.bf16 %v678
  %v808 = vunpack.c.l.bf16 %v679
  %v809 = vunpack.c.l.bf16 %v680
  %v810 = vunpack.c.l.bf16 %v681
  %v811 = vunpack.c.l.bf16 %v682
  %v812 = vunpack.c.l.bf16 %v683
  %v813 = vunpack.c.l.bf16 %v684
  %v814 = vunpack.c.l.bf16 %v685
  %v815 = vunpack.c.l.bf16 %v686
  %v816 = vunpack.c.l.bf16 %v687
  %v817 = vunpack.c.l.bf16 %v688
  %v818 = vunpack.c.l.bf16 %v689
  %v819 = vunpack.c.l.bf16 %v690
  %v820 = vunpack.c.l.bf16 %v691
  %v821 = vunpack.c.l.bf16 %v692
  %v822 = vunpack.c.l.bf16 %v693
  %v823 = vunpack.c.l.bf16 %v694
  %v824 = vunpack.c.l.bf16 %v695
  %v825 = vunpack.c.l.bf16 %v696
  %v826 = vunpack.c.l.bf16 %v697
  %v827 = vunpack.c.l.bf16 %v698
  %v828 = vunpack.c.l.bf16 %v699
  %v829 = vunpack.c.l.bf16 %v700
  %v830 = vunpack.c.l.bf16 %v701
  %v831 = vunpack.c.l.bf16 %v702
  %v832 = vunpack.c.l.bf16 %v703
  %v833 = vunpack.c.l.bf16 %v704
  %v834 = vunpack.c.l.bf16 %v705
  %v835 = vunpack.c.l.bf16 %v706
  %v836 = vunpack.c.l.bf16 %v707
  %v837 = vunpack.c.l.bf16 %v708
  %v838 = vunpack.c.l.bf16 %v709
  %v839 = vunpack.c.l.bf16 %v710
  %v840 = vunpack.c.l.bf16 %v711
  %v841 = vunpack.c.l.bf16 %v712
  %v842 = vunpack.c.l.bf16 %v713
  %v843 = vunpack.c.l.bf16 %v715
  %v844 = vunpack.c.l.bf16 %v716
  %v845 = vunpack.c.l.bf16 %v717
  %v846 = vunpack.c.l.bf16 %v718
  %v847 = vunpack.c.l.bf16 %v719
  %v848 = vunpack.c.l.bf16 %v720
  %v849 = vunpack.c.l.bf16 %v721
  %v850 = vunpack.c.l.bf16 %v722
  %v851 = vunpack.c.l.bf16 %v723
  %v852 = vunpack.c.l.bf16 %v724
  %v853 = vunpack.c.l.bf16 %v725
  %v854 = vunpack.c.l.bf16 %v726
  %v855 = vunpack.c.l.bf16 %v727
  %v856 = vunpack.c.l.bf16 %v728
  %v857 = vunpack.c.l.bf16 %v729
  %v858 = vunpack.c.l.bf16 %v730
  %v859 = vunpack.c.l.bf16 %v731
  %v860 = vunpack.c.l.bf16 %v732
  %v861 = vunpack.c.l.bf16 %v733
  %v862 = vunpack.c.l.bf16 %v734
  %v863 = vunpack.c.l.bf16 %v735
  %v864 = vunpack.c.l.bf16 %v736
  %v865 = vunpack.c.l.bf16 %v737
  %v866 = vunpack.c.l.bf16 %v738
  %v867 = vunpack.c.l.bf16 %v739
  %v868 = vunpack.c.l.bf16 %v740
  %v869 = vunpack.c.l.bf16 %v741
  %v870 = vunpack.c.l.bf16 %v742
  %v871 = vunpack.c.l.bf16 %v743
  %v872 = vunpack.c.l.bf16 %v744
  %v873 = vunpack.c.l.bf16 %v745
  %v874 = vunpack.c.l.bf16 %v746
  %v875 = vunpack.c.l.bf16 %v747
  %v876 = vunpack.c.l.bf16 %v748
  %v877 = vunpack.c.l.bf16 %v749
  %v878 = vunpack.c.l.bf16 %v750
  %v879 = vunpack.c.l.bf16 %v751
  %v880 = vunpack.c.l.bf16 %v752
  %v881 = vunpack.c.l.bf16 %v753
  %v882 = vunpack.c.l.bf16 %v754
  %v883 = vunpack.c.l.bf16 %v755
  %v884 = vunpack.c.l.bf16 %v756
  %v885 = vunpack.c.l.bf16 %v757
  %v886 = vunpack.c.l.bf16 %v758
  %v887 = vunpack.c.l.bf16 %v759
  %v888 = vunpack.c.l.bf16 %v760
  %v889 = vunpack.c.l.bf16 %v761
  %v890 = vunpack.c.l.bf16 %v762
  %v891 = vunpack.c.l.bf16 %v763
  %v892 = vunpack.c.l.bf16 %v764
  %v893 = vunpack.c.l.bf16 %v765
  %v894 = vunpack.c.l.bf16 %v766
  %v895 = vunpack.c.l.bf16 %v767
  %v896 = vunpack.c.l.bf16 %v768
  %v897 = vunpack.c.l.bf16 %v769
  %v898 = vunpack.c.l.bf16 %v770
  %v899 = vunpack.c.l.bf16 %v771
  %v900 = vunpack.c.l.bf16 %v772
  %v901 = vunpack.c.l.bf16 %v773
  %v902 = vunpack.c.l.bf16 %v774
  %v903 = vunpack.c.l.bf16 %v775
  %v904 = vunpack.c.l.bf16 %v776
  %v905 = vunpack.c.l.bf16 %v777
  %v906 = vunpack.c.l.bf16 %v778
  %v907 = vmax.f32 %v779, %v843
  %v908 = vmax.f32 %v780, %v844
  %v909 = vmax.f32 %v781, %v845
  %v910 = vmax.f32 %v782, %v846
  %v911 = vmax.f32 %v783, %v847
  %v912 = vmax.f32 %v784, %v848
  %v913 = vmax.f32 %v785, %v849
  %v914 = vmax.f32 %v786, %v850
  %v915 = vmax.f32 %v787, %v851
  %v916 = vmax.f32 %v788, %v852
  %v917 = vmax.f32 %v789, %v853
  %v918 = vmax.f32 %v790, %v854
  %v919 = vmax.f32 %v791, %v855
  %v920 = vmax.f32 %v792, %v856
  %v921 = vmax.f32 %v793, %v857
  %v922 = vmax.f32 %v794, %v858
  %v923 = vmax.f32 %v795, %v859
  %v924 = vmax.f32 %v796, %v860
  %v925 = vmax.f32 %v797, %v861
  %v926 = vmax.f32 %v798, %v862
  %v927 = vmax.f32 %v799, %v863
  %v928 = vmax.f32 %v800, %v864
  %v929 = vmax.f32 %v801, %v865
  %v930 = vmax.f32 %v802, %v866
  %v931 = vmax.f32 %v803, %v867
  %v932 = vmax.f32 %v804, %v868
  %v933 = vmax.f32 %v805, %v869
  %v934 = vmax.f32 %v806, %v870
  %v935 = vmax.f32 %v807, %v871
  %v936 = vmax.f32 %v808, %v872
  %v937 = vmax.f32 %v809, %v873
  %v938 = vmax.f32 %v810, %v874
  %v939 = vmax.f32 %v811, %v875
  %v940 = vmax.f32 %v812, %v876
  %v941 = vmax.f32 %v813, %v877
  %v942 = vmax.f32 %v814, %v878
  %v943 = vmax.f32 %v815, %v879
  %v944 = vmax.f32 %v816, %v880
  %v945 = vmax.f32 %v817, %v881
  %v946 = vmax.f32 %v818, %v882
  %v947 = vmax.f32 %v819, %v883
  %v948 = vmax.f32 %v820, %v884
  %v949 = vmax.f32 %v821, %v885
  %v950 = vmax.f32 %v822, %v886
  %v951 = vmax.f32 %v823, %v887
  %v952 = vmax.f32 %v824, %v888
  %v953 = vmax.f32 %v825, %v889
  %v954 = vmax.f32 %v826, %v890
  %v955 = vmax.f32 %v827, %v891
  %v956 = vmax.f32 %v828, %v892
  %v957 = vmax.f32 %v829, %v893
  %v958 = vmax.f32 %v830, %v894
  %v959 = vmax.f32 %v831, %v895
  %v960 = vmax.f32 %v832, %v896
  %v961 = vmax.f32 %v833, %v897
  %v962 = vmax.f32 %v834, %v898
  %v963 = vmax.f32 %v835, %v899
  %v964 = vmax.f32 %v836, %v900
  %v965 = vmax.f32 %v837, %v901
  %v966 = vmax.f32 %v838, %v902
  %v967 = vmax.f32 %v839, %v903
  %v968 = vmax.f32 %v840, %v904
  %v969 = vmax.f32 %v841, %v905
  %v970 = vmax.f32 %v842, %v906
  %v971 = vpack.c.bf16 %v907, %v907
  %v972 = vpack.c.bf16 %v908, %v908
  %v973 = vpack.c.bf16 %v909, %v909
  %v974 = vpack.c.bf16 %v910, %v910
  %v975 = vpack.c.bf16 %v911, %v911
  %v976 = vpack.c.bf16 %v912, %v912
  %v977 = vpack.c.bf16 %v913, %v913
  %v978 = vpack.c.bf16 %v914, %v914
  %v979 = vpack.c.bf16 %v915, %v915
  %v980 = vpack.c.bf16 %v916, %v916
  %v981 = vpack.c.bf16 %v917, %v917
  %v982 = vpack.c.bf16 %v918, %v918
  %v983 = vpack.c.bf16 %v919, %v919
  %v984 = vpack.c.bf16 %v920, %v920
  %v985 = vpack.c.bf16 %v921, %v921
  %v986 = vpack.c.bf16 %v922, %v922
  %v987 = vpack.c.bf16 %v923, %v923
  %v988 = vpack.c.bf16 %v924, %v924
  %v989 = vpack.c.bf16 %v925, %v925
  %v990 = vpack.c.bf16 %v926, %v926
  %v991 = vpack.c.bf16 %v927, %v927
  %v992 = vpack.c.bf16 %v928, %v928
  %v993 = vpack.c.bf16 %v929, %v929
  %v994 = vpack.c.bf16 %v930, %v930
  %v995 = vpack.c.bf16 %v931, %v931
  %v996 = vpack.c.bf16 %v932, %v932
  %v997 = vpack.c.bf16 %v933, %v933
  %v998 = vpack.c.bf16 %v934, %v934
  %v999 = vpack.c.bf16 %v935, %v935
  %v1000 = vpack.c.bf16 %v936, %v936
  %v1001 = vpack.c.bf16 %v937, %v937
  %v1002 = vpack.c.bf16 %v938, %v938
  %v1003 = vpack.c.bf16 %v939, %v939
  %v1004 = vpack.c.bf16 %v940, %v940
  %v1005 = vpack.c.bf16 %v941, %v941
  %v1006 = vpack.c.bf16 %v942, %v942
  %v1007 = vpack.c.bf16 %v943, %v943
  %v1008 = vpack.c.bf16 %v944, %v944
  %v1009 = vpack.c.bf16 %v945, %v945
  %v1010 = vpack.c.bf16 %v946, %v946
  %v1011 = vpack.c.bf16 %v947, %v947
  %v1012 = vpack.c.bf16 %v948, %v948
  %v1013 = vpack.c.bf16 %v949, %v949
  %v1014 = vpack.c.bf16 %v950, %v950
  %v1015 = vpack.c.bf16 %v951, %v951
  %v1016 = vpack.c.bf16 %v952, %v952
  %v1017 = vpack.c.bf16 %v953, %v953
  %v1018 = vpack.c.bf16 %v954, %v954
  %v1019 = vpack.c.bf16 %v955, %v955
  %v1020 = vpack.c.bf16 %v956, %v956
  %v1021 = vpack.c.bf16 %v957, %v957
  %v1022 = vpack.c.bf16 %v958, %v958
  %v1023 = vpack.c.bf16 %v959, %v959
  %v1024 = vpack.c.bf16 %v960, %v960
  %v1025 = vpack.c.bf16 %v961, %v961
  %v1026 = vpack.c.bf16 %v962, %v962
  %v1027 = vpack.c.bf16 %v963, %v963
  %v1028 = vpack.c.bf16 %v964, %v964
  %v1029 = vpack.c.bf16 %v965, %v965
  %v1030 = vpack.c.bf16 %v966, %v966
  %v1031 = vpack.c.bf16 %v967, %v967
  %v1032 = vpack.c.bf16 %v968, %v968
  %v1033 = vpack.c.bf16 %v969, %v969
  %v1034 = vpack.c.bf16 %v970, %v970
  %s1035 = scalar_lea.vmem %s0, 1024
  %v1036 = vld [vmem:[%s1035] sm:$0xf]
  %v1037 = vld [vmem:[%s1035 + $0x4] sm:$0xf]
  %v1038 = vld [vmem:[%s1035 + $0x8] sm:$0xf]
  %v1039 = vld [vmem:[%s1035 + $0xc] sm:$0xf]
  %v1040 = vld [vmem:[%s1035 + $0x10] sm:$0xf]
  %v1041 = vld [vmem:[%s1035 + $0x14] sm:$0xf]
  %v1042 = vld [vmem:[%s1035 + $0x18] sm:$0xf]
  %v1043 = vld [vmem:[%s1035 + $0x1c] sm:$0xf]
  %v1044 = vld [vmem:[%s1035 + $0x20] sm:$0xf]
  %v1045 = vld [vmem:[%s1035 + $0x24] sm:$0xf]
  %v1046 = vld [vmem:[%s1035 + $0x28] sm:$0xf]
  %v1047 = vld [vmem:[%s1035 + $0x2c] sm:$0xf]
  %v1048 = vld [vmem:[%s1035 + $0x30] sm:$0xf]
  %v1049 = vld [vmem:[%s1035 + $0x34] sm:$0xf]
  %v1050 = vld [vmem:[%s1035 + $0x38] sm:$0xf]
  %v1051 = vld [vmem:[%s1035 + $0x3c] sm:$0xf]
  %v1052 = vld [vmem:[%s1035 + $0x40] sm:$0xf]
  %v1053 = vld [vmem:[%s1035 + $0x44] sm:$0xf]
  %v1054 = vld [vmem:[%s1035 + $0x48] sm:$0xf]
  %v1055 = vld [vmem:[%s1035 + $0x4c] sm:$0xf]
  %v1056 = vld [vmem:[%s1035 + $0x50] sm:$0xf]
  %v1057 = vld [vmem:[%s1035 + $0x54] sm:$0xf]
  %v1058 = vld [vmem:[%s1035 + $0x58] sm:$0xf]
  %v1059 = vld [vmem:[%s1035 + $0x5c] sm:$0xf]
  %v1060 = vld [vmem:[%s1035 + $0x60] sm:$0xf]
  %v1061 = vld [vmem:[%s1035 + $0x64] sm:$0xf]
  %v1062 = vld [vmem:[%s1035 + $0x68] sm:$0xf]
  %v1063 = vld [vmem:[%s1035 + $0x6c] sm:$0xf]
  %v1064 = vld [vmem:[%s1035 + $0x70] sm:$0xf]
  %v1065 = vld [vmem:[%s1035 + $0x74] sm:$0xf]
  %v1066 = vld [vmem:[%s1035 + $0x78] sm:$0xf]
  %v1067 = vld [vmem:[%s1035 + $0x7c] sm:$0xf]
  %v1068 = vld [vmem:[%s1035 + $0x80] sm:$0xf]
  %v1069 = vld [vmem:[%s1035 + $0x84] sm:$0xf]
  %v1070 = vld [vmem:[%s1035 + $0x88] sm:$0xf]
  %v1071 = vld [vmem:[%s1035 + $0x8c] sm:$0xf]
  %v1072 = vld [vmem:[%s1035 + $0x90] sm:$0xf]
  %v1073 = vld [vmem:[%s1035 + $0x94] sm:$0xf]
  %v1074 = vld [vmem:[%s1035 + $0x98] sm:$0xf]
  %v1075 = vld [vmem:[%s1035 + $0x9c] sm:$0xf]
  %v1076 = vld [vmem:[%s1035 + $0xa0] sm:$0xf]
  %v1077 = vld [vmem:[%s1035 + $0xa4] sm:$0xf]
  %v1078 = vld [vmem:[%s1035 + $0xa8] sm:$0xf]
  %v1079 = vld [vmem:[%s1035 + $0xac] sm:$0xf]
  %v1080 = vld [vmem:[%s1035 + $0xb0] sm:$0xf]
  %v1081 = vld [vmem:[%s1035 + $0xb4] sm:$0xf]
  %v1082 = vld [vmem:[%s1035 + $0xb8] sm:$0xf]
  %v1083 = vld [vmem:[%s1035 + $0xbc] sm:$0xf]
  %v1084 = vld [vmem:[%s1035 + $0xc0] sm:$0xf]
  %v1085 = vld [vmem:[%s1035 + $0xc4] sm:$0xf]
  %v1086 = vld [vmem:[%s1035 + $0xc8] sm:$0xf]
  %v1087 = vld [vmem:[%s1035 + $0xcc] sm:$0xf]
  %v1088 = vld [vmem:[%s1035 + $0xd0] sm:$0xf]
  %v1089 = vld [vmem:[%s1035 + $0xd4] sm:$0xf]
  %v1090 = vld [vmem:[%s1035 + $0xd8] sm:$0xf]
  %v1091 = vld [vmem:[%s1035 + $0xdc] sm:$0xf]
  %v1092 = vld [vmem:[%s1035 + $0xe0] sm:$0xf]
  %v1093 = vld [vmem:[%s1035 + $0xe4] sm:$0xf]
  %v1094 = vld [vmem:[%s1035 + $0xe8] sm:$0xf]
  %v1095 = vld [vmem:[%s1035 + $0xec] sm:$0xf]
  %v1096 = vld [vmem:[%s1035 + $0xf0] sm:$0xf]
  %v1097 = vld [vmem:[%s1035 + $0xf4] sm:$0xf]
  %v1098 = vld [vmem:[%s1035 + $0xf8] sm:$0xf]
  %v1099 = vld [vmem:[%s1035 + $0xfc] sm:$0xf]
  %v1100 = vunpack.c.l.bf16 %v971
  %v1101 = vunpack.c.l.bf16 %v972
  %v1102 = vunpack.c.l.bf16 %v973
  %v1103 = vunpack.c.l.bf16 %v974
  %v1104 = vunpack.c.l.bf16 %v975
  %v1105 = vunpack.c.l.bf16 %v976
  %v1106 = vunpack.c.l.bf16 %v977
  %v1107 = vunpack.c.l.bf16 %v978
  %v1108 = vunpack.c.l.bf16 %v979
  %v1109 = vunpack.c.l.bf16 %v980
  %v1110 = vunpack.c.l.bf16 %v981
  %v1111 = vunpack.c.l.bf16 %v982
  %v1112 = vunpack.c.l.bf16 %v983
  %v1113 = vunpack.c.l.bf16 %v984
  %v1114 = vunpack.c.l.bf16 %v985
  %v1115 = vunpack.c.l.bf16 %v986
  %v1116 = vunpack.c.l.bf16 %v987
  %v1117 = vunpack.c.l.bf16 %v988
  %v1118 = vunpack.c.l.bf16 %v989
  %v1119 = vunpack.c.l.bf16 %v990
  %v1120 = vunpack.c.l.bf16 %v991
  %v1121 = vunpack.c.l.bf16 %v992
  %v1122 = vunpack.c.l.bf16 %v993
  %v1123 = vunpack.c.l.bf16 %v994
  %v1124 = vunpack.c.l.bf16 %v995
  %v1125 = vunpack.c.l.bf16 %v996
  %v1126 = vunpack.c.l.bf16 %v997
  %v1127 = vunpack.c.l.bf16 %v998
  %v1128 = vunpack.c.l.bf16 %v999
  %v1129 = vunpack.c.l.bf16 %v1000
  %v1130 = vunpack.c.l.bf16 %v1001
  %v1131 = vunpack.c.l.bf16 %v1002
  %v1132 = vunpack.c.l.bf16 %v1003
  %v1133 = vunpack.c.l.bf16 %v1004
  %v1134 = vunpack.c.l.bf16 %v1005
  %v1135 = vunpack.c.l.bf16 %v1006
  %v1136 = vunpack.c.l.bf16 %v1007
  %v1137 = vunpack.c.l.bf16 %v1008
  %v1138 = vunpack.c.l.bf16 %v1009
  %v1139 = vunpack.c.l.bf16 %v1010
  %v1140 = vunpack.c.l.bf16 %v1011
  %v1141 = vunpack.c.l.bf16 %v1012
  %v1142 = vunpack.c.l.bf16 %v1013
  %v1143 = vunpack.c.l.bf16 %v1014
  %v1144 = vunpack.c.l.bf16 %v1015
  %v1145 = vunpack.c.l.bf16 %v1016
  %v1146 = vunpack.c.l.bf16 %v1017
  %v1147 = vunpack.c.l.bf16 %v1018
  %v1148 = vunpack.c.l.bf16 %v1019
  %v1149 = vunpack.c.l.bf16 %v1020
  %v1150 = vunpack.c.l.bf16 %v1021
  %v1151 = vunpack.c.l.bf16 %v1022
  %v1152 = vunpack.c.l.bf16 %v1023
  %v1153 = vunpack.c.l.bf16 %v1024
  %v1154 = vunpack.c.l.bf16 %v1025
  %v1155 = vunpack.c.l.bf16 %v1026
  %v1156 = vunpack.c.l.bf16 %v1027
  %v1157 = vunpack.c.l.bf16 %v1028
  %v1158 = vunpack.c.l.bf16 %v1029
  %v1159 = vunpack.c.l.bf16 %v1030
  %v1160 = vunpack.c.l.bf16 %v1031
  %v1161 = vunpack.c.l.bf16 %v1032
  %v1162 = vunpack.c.l.bf16 %v1033
  %v1163 = vunpack.c.l.bf16 %v1034
  %v1164 = vunpack.c.l.bf16 %v1036
  %v1165 = vunpack.c.l.bf16 %v1037
  %v1166 = vunpack.c.l.bf16 %v1038
  %v1167 = vunpack.c.l.bf16 %v1039
  %v1168 = vunpack.c.l.bf16 %v1040
  %v1169 = vunpack.c.l.bf16 %v1041
  %v1170 = vunpack.c.l.bf16 %v1042
  %v1171 = vunpack.c.l.bf16 %v1043
  %v1172 = vunpack.c.l.bf16 %v1044
  %v1173 = vunpack.c.l.bf16 %v1045
  %v1174 = vunpack.c.l.bf16 %v1046
  %v1175 = vunpack.c.l.bf16 %v1047
  %v1176 = vunpack.c.l.bf16 %v1048
  %v1177 = vunpack.c.l.bf16 %v1049
  %v1178 = vunpack.c.l.bf16 %v1050
  %v1179 = vunpack.c.l.bf16 %v1051
  %v1180 = vunpack.c.l.bf16 %v1052
  %v1181 = vunpack.c.l.bf16 %v1053
  %v1182 = vunpack.c.l.bf16 %v1054
  %v1183 = vunpack.c.l.bf16 %v1055
  %v1184 = vunpack.c.l.bf16 %v1056
  %v1185 = vunpack.c.l.bf16 %v1057
  %v1186 = vunpack.c.l.bf16 %v1058
  %v1187 = vunpack.c.l.bf16 %v1059
  %v1188 = vunpack.c.l.bf16 %v1060
  %v1189 = vunpack.c.l.bf16 %v1061
  %v1190 = vunpack.c.l.bf16 %v1062
  %v1191 = vunpack.c.l.bf16 %v1063
  %v1192 = vunpack.c.l.bf16 %v1064
  %v1193 = vunpack.c.l.bf16 %v1065
  %v1194 = vunpack.c.l.bf16 %v1066
  %v1195 = vunpack.c.l.bf16 %v1067
  %v1196 = vunpack.c.l.bf16 %v1068
  %v1197 = vunpack.c.l.bf16 %v1069
  %v1198 = vunpack.c.l.bf16 %v1070
  %v1199 = vunpack.c.l.bf16 %v1071
  %v1200 = vunpack.c.l.bf16 %v1072
  %v1201 = vunpack.c.l.bf16 %v1073
  %v1202 = vunpack.c.l.bf16 %v1074
  %v1203 = vunpack.c.l.bf16 %v1075
  %v1204 = vunpack.c.l.bf16 %v1076
  %v1205 = vunpack.c.l.bf16 %v1077
  %v1206 = vunpack.c.l.bf16 %v1078
  %v1207 = vunpack.c.l.bf16 %v1079
  %v1208 = vunpack.c.l.bf16 %v1080
  %v1209 = vunpack.c.l.bf16 %v1081
  %v1210 = vunpack.c.l.bf16 %v1082
  %v1211 = vunpack.c.l.bf16 %v1083
  %v1212 = vunpack.c.l.bf16 %v1084
  %v1213 = vunpack.c.l.bf16 %v1085
  %v1214 = vunpack.c.l.bf16 %v1086
  %v1215 = vunpack.c.l.bf16 %v1087
  %v1216 = vunpack.c.l.bf16 %v1088
  %v1217 = vunpack.c.l.bf16 %v1089
  %v1218 = vunpack.c.l.bf16 %v1090
  %v1219 = vunpack.c.l.bf16 %v1091
  %v1220 = vunpack.c.l.bf16 %v1092
  %v1221 = vunpack.c.l.bf16 %v1093
  %v1222 = vunpack.c.l.bf16 %v1094
  %v1223 = vunpack.c.l.bf16 %v1095
  %v1224 = vunpack.c.l.bf16 %v1096
  %v1225 = vunpack.c.l.bf16 %v1097
  %v1226 = vunpack.c.l.bf16 %v1098
  %v1227 = vunpack.c.l.bf16 %v1099
  %v1228 = vmax.f32 %v1100, %v1164
  %v1229 = vmax.f32 %v1101, %v1165
  %v1230 = vmax.f32 %v1102, %v1166
  %v1231 = vmax.f32 %v1103, %v1167
  %v1232 = vmax.f32 %v1104, %v1168
  %v1233 = vmax.f32 %v1105, %v1169
  %v1234 = vmax.f32 %v1106, %v1170
  %v1235 = vmax.f32 %v1107, %v1171
  %v1236 = vmax.f32 %v1108, %v1172
  %v1237 = vmax.f32 %v1109, %v1173
  %v1238 = vmax.f32 %v1110, %v1174
  %v1239 = vmax.f32 %v1111, %v1175
  %v1240 = vmax.f32 %v1112, %v1176
  %v1241 = vmax.f32 %v1113, %v1177
  %v1242 = vmax.f32 %v1114, %v1178
  %v1243 = vmax.f32 %v1115, %v1179
  %v1244 = vmax.f32 %v1116, %v1180
  %v1245 = vmax.f32 %v1117, %v1181
  %v1246 = vmax.f32 %v1118, %v1182
  %v1247 = vmax.f32 %v1119, %v1183
  %v1248 = vmax.f32 %v1120, %v1184
  %v1249 = vmax.f32 %v1121, %v1185
  %v1250 = vmax.f32 %v1122, %v1186
  %v1251 = vmax.f32 %v1123, %v1187
  %v1252 = vmax.f32 %v1124, %v1188
  %v1253 = vmax.f32 %v1125, %v1189
  %v1254 = vmax.f32 %v1126, %v1190
  %v1255 = vmax.f32 %v1127, %v1191
  %v1256 = vmax.f32 %v1128, %v1192
  %v1257 = vmax.f32 %v1129, %v1193
  %v1258 = vmax.f32 %v1130, %v1194
  %v1259 = vmax.f32 %v1131, %v1195
  %v1260 = vmax.f32 %v1132, %v1196
  %v1261 = vmax.f32 %v1133, %v1197
  %v1262 = vmax.f32 %v1134, %v1198
  %v1263 = vmax.f32 %v1135, %v1199
  %v1264 = vmax.f32 %v1136, %v1200
  %v1265 = vmax.f32 %v1137, %v1201
  %v1266 = vmax.f32 %v1138, %v1202
  %v1267 = vmax.f32 %v1139, %v1203
  %v1268 = vmax.f32 %v1140, %v1204
  %v1269 = vmax.f32 %v1141, %v1205
  %v1270 = vmax.f32 %v1142, %v1206
  %v1271 = vmax.f32 %v1143, %v1207
  %v1272 = vmax.f32 %v1144, %v1208
  %v1273 = vmax.f32 %v1145, %v1209
  %v1274 = vmax.f32 %v1146, %v1210
  %v1275 = vmax.f32 %v1147, %v1211
  %v1276 = vmax.f32 %v1148, %v1212
  %v1277 = vmax.f32 %v1149, %v1213
  %v1278 = vmax.f32 %v1150, %v1214
  %v1279 = vmax.f32 %v1151, %v1215
  %v1280 = vmax.f32 %v1152, %v1216
  %v1281 = vmax.f32 %v1153, %v1217
  %v1282 = vmax.f32 %v1154, %v1218
  %v1283 = vmax.f32 %v1155, %v1219
  %v1284 = vmax.f32 %v1156, %v1220
  %v1285 = vmax.f32 %v1157, %v1221
  %v1286 = vmax.f32 %v1158, %v1222
  %v1287 = vmax.f32 %v1159, %v1223
  %v1288 = vmax.f32 %v1160, %v1224
  %v1289 = vmax.f32 %v1161, %v1225
  %v1290 = vmax.f32 %v1162, %v1226
  %v1291 = vmax.f32 %v1163, %v1227
  %v1292 = vpack.c.bf16 %v1228, %v1228
  %v1293 = vpack.c.bf16 %v1229, %v1229
  %v1294 = vpack.c.bf16 %v1230, %v1230
  %v1295 = vpack.c.bf16 %v1231, %v1231
  %v1296 = vpack.c.bf16 %v1232, %v1232
  %v1297 = vpack.c.bf16 %v1233, %v1233
  %v1298 = vpack.c.bf16 %v1234, %v1234
  %v1299 = vpack.c.bf16 %v1235, %v1235
  %v1300 = vpack.c.bf16 %v1236, %v1236
  %v1301 = vpack.c.bf16 %v1237, %v1237
  %v1302 = vpack.c.bf16 %v1238, %v1238
  %v1303 = vpack.c.bf16 %v1239, %v1239
  %v1304 = vpack.c.bf16 %v1240, %v1240
  %v1305 = vpack.c.bf16 %v1241, %v1241
  %v1306 = vpack.c.bf16 %v1242, %v1242
  %v1307 = vpack.c.bf16 %v1243, %v1243
  %v1308 = vpack.c.bf16 %v1244, %v1244
  %v1309 = vpack.c.bf16 %v1245, %v1245
  %v1310 = vpack.c.bf16 %v1246, %v1246
  %v1311 = vpack.c.bf16 %v1247, %v1247
  %v1312 = vpack.c.bf16 %v1248, %v1248
  %v1313 = vpack.c.bf16 %v1249, %v1249
  %v1314 = vpack.c.bf16 %v1250, %v1250
  %v1315 = vpack.c.bf16 %v1251, %v1251
  %v1316 = vpack.c.bf16 %v1252, %v1252
  %v1317 = vpack.c.bf16 %v1253, %v1253
  %v1318 = vpack.c.bf16 %v1254, %v1254
  %v1319 = vpack.c.bf16 %v1255, %v1255
  %v1320 = vpack.c.bf16 %v1256, %v1256
  %v1321 = vpack.c.bf16 %v1257, %v1257
  %v1322 = vpack.c.bf16 %v1258, %v1258
  %v1323 = vpack.c.bf16 %v1259, %v1259
  %v1324 = vpack.c.bf16 %v1260, %v1260
  %v1325 = vpack.c.bf16 %v1261, %v1261
  %v1326 = vpack.c.bf16 %v1262, %v1262
  %v1327 = vpack.c.bf16 %v1263, %v1263
  %v1328 = vpack.c.bf16 %v1264, %v1264
  %v1329 = vpack.c.bf16 %v1265, %v1265
  %v1330 = vpack.c.bf16 %v1266, %v1266
  %v1331 = vpack.c.bf16 %v1267, %v1267
  %v1332 = vpack.c.bf16 %v1268, %v1268
  %v1333 = vpack.c.bf16 %v1269, %v1269
  %v1334 = vpack.c.bf16 %v1270, %v1270
  %v1335 = vpack.c.bf16 %v1271, %v1271
  %v1336 = vpack.c.bf16 %v1272, %v1272
  %v1337 = vpack.c.bf16 %v1273, %v1273
  %v1338 = vpack.c.bf16 %v1274, %v1274
  %v1339 = vpack.c.bf16 %v1275, %v1275
  %v1340 = vpack.c.bf16 %v1276, %v1276
  %v1341 = vpack.c.bf16 %v1277, %v1277
  %v1342 = vpack.c.bf16 %v1278, %v1278
  %v1343 = vpack.c.bf16 %v1279, %v1279
  %v1344 = vpack.c.bf16 %v1280, %v1280
  %v1345 = vpack.c.bf16 %v1281, %v1281
  %v1346 = vpack.c.bf16 %v1282, %v1282
  %v1347 = vpack.c.bf16 %v1283, %v1283
  %v1348 = vpack.c.bf16 %v1284, %v1284
  %v1349 = vpack.c.bf16 %v1285, %v1285
  %v1350 = vpack.c.bf16 %v1286, %v1286
  %v1351 = vpack.c.bf16 %v1287, %v1287
  %v1352 = vpack.c.bf16 %v1288, %v1288
  %v1353 = vpack.c.bf16 %v1289, %v1289
  %v1354 = vpack.c.bf16 %v1290, %v1290
  %v1355 = vpack.c.bf16 %v1291, %v1291
  %s1356 = scalar_lea.vmem %s0, 1280
  %v1357 = vld [vmem:[%s1356] sm:$0xf]
  %v1358 = vld [vmem:[%s1356 + $0x4] sm:$0xf]
  %v1359 = vld [vmem:[%s1356 + $0x8] sm:$0xf]
  %v1360 = vld [vmem:[%s1356 + $0xc] sm:$0xf]
  %v1361 = vld [vmem:[%s1356 + $0x10] sm:$0xf]
  %v1362 = vld [vmem:[%s1356 + $0x14] sm:$0xf]
  %v1363 = vld [vmem:[%s1356 + $0x18] sm:$0xf]
  %v1364 = vld [vmem:[%s1356 + $0x1c] sm:$0xf]
  %v1365 = vld [vmem:[%s1356 + $0x20] sm:$0xf]
  %v1366 = vld [vmem:[%s1356 + $0x24] sm:$0xf]
  %v1367 = vld [vmem:[%s1356 + $0x28] sm:$0xf]
  %v1368 = vld [vmem:[%s1356 + $0x2c] sm:$0xf]
  %v1369 = vld [vmem:[%s1356 + $0x30] sm:$0xf]
  %v1370 = vld [vmem:[%s1356 + $0x34] sm:$0xf]
  %v1371 = vld [vmem:[%s1356 + $0x38] sm:$0xf]
  %v1372 = vld [vmem:[%s1356 + $0x3c] sm:$0xf]
  %v1373 = vld [vmem:[%s1356 + $0x40] sm:$0xf]
  %v1374 = vld [vmem:[%s1356 + $0x44] sm:$0xf]
  %v1375 = vld [vmem:[%s1356 + $0x48] sm:$0xf]
  %v1376 = vld [vmem:[%s1356 + $0x4c] sm:$0xf]
  %v1377 = vld [vmem:[%s1356 + $0x50] sm:$0xf]
  %v1378 = vld [vmem:[%s1356 + $0x54] sm:$0xf]
  %v1379 = vld [vmem:[%s1356 + $0x58] sm:$0xf]
  %v1380 = vld [vmem:[%s1356 + $0x5c] sm:$0xf]
  %v1381 = vld [vmem:[%s1356 + $0x60] sm:$0xf]
  %v1382 = vld [vmem:[%s1356 + $0x64] sm:$0xf]
  %v1383 = vld [vmem:[%s1356 + $0x68] sm:$0xf]
  %v1384 = vld [vmem:[%s1356 + $0x6c] sm:$0xf]
  %v1385 = vld [vmem:[%s1356 + $0x70] sm:$0xf]
  %v1386 = vld [vmem:[%s1356 + $0x74] sm:$0xf]
  %v1387 = vld [vmem:[%s1356 + $0x78] sm:$0xf]
  %v1388 = vld [vmem:[%s1356 + $0x7c] sm:$0xf]
  %v1389 = vld [vmem:[%s1356 + $0x80] sm:$0xf]
  %v1390 = vld [vmem:[%s1356 + $0x84] sm:$0xf]
  %v1391 = vld [vmem:[%s1356 + $0x88] sm:$0xf]
  %v1392 = vld [vmem:[%s1356 + $0x8c] sm:$0xf]
  %v1393 = vld [vmem:[%s1356 + $0x90] sm:$0xf]
  %v1394 = vld [vmem:[%s1356 + $0x94] sm:$0xf]
  %v1395 = vld [vmem:[%s1356 + $0x98] sm:$0xf]
  %v1396 = vld [vmem:[%s1356 + $0x9c] sm:$0xf]
  %v1397 = vld [vmem:[%s1356 + $0xa0] sm:$0xf]
  %v1398 = vld [vmem:[%s1356 + $0xa4] sm:$0xf]
  %v1399 = vld [vmem:[%s1356 + $0xa8] sm:$0xf]
  %v1400 = vld [vmem:[%s1356 + $0xac] sm:$0xf]
  %v1401 = vld [vmem:[%s1356 + $0xb0] sm:$0xf]
  %v1402 = vld [vmem:[%s1356 + $0xb4] sm:$0xf]
  %v1403 = vld [vmem:[%s1356 + $0xb8] sm:$0xf]
  %v1404 = vld [vmem:[%s1356 + $0xbc] sm:$0xf]
  %v1405 = vld [vmem:[%s1356 + $0xc0] sm:$0xf]
  %v1406 = vld [vmem:[%s1356 + $0xc4] sm:$0xf]
  %v1407 = vld [vmem:[%s1356 + $0xc8] sm:$0xf]
  %v1408 = vld [vmem:[%s1356 + $0xcc] sm:$0xf]
  %v1409 = vld [vmem:[%s1356 + $0xd0] sm:$0xf]
  %v1410 = vld [vmem:[%s1356 + $0xd4] sm:$0xf]
  %v1411 = vld [vmem:[%s1356 + $0xd8] sm:$0xf]
  %v1412 = vld [vmem:[%s1356 + $0xdc] sm:$0xf]
  %v1413 = vld [vmem:[%s1356 + $0xe0] sm:$0xf]
  %v1414 = vld [vmem:[%s1356 + $0xe4] sm:$0xf]
  %v1415 = vld [vmem:[%s1356 + $0xe8] sm:$0xf]
  %v1416 = vld [vmem:[%s1356 + $0xec] sm:$0xf]
  %v1417 = vld [vmem:[%s1356 + $0xf0] sm:$0xf]
  %v1418 = vld [vmem:[%s1356 + $0xf4] sm:$0xf]
  %v1419 = vld [vmem:[%s1356 + $0xf8] sm:$0xf]
  %v1420 = vld [vmem:[%s1356 + $0xfc] sm:$0xf]
  %v1421 = vunpack.c.l.bf16 %v1292
  %v1422 = vunpack.c.l.bf16 %v1293
  %v1423 = vunpack.c.l.bf16 %v1294
  %v1424 = vunpack.c.l.bf16 %v1295
  %v1425 = vunpack.c.l.bf16 %v1296
  %v1426 = vunpack.c.l.bf16 %v1297
  %v1427 = vunpack.c.l.bf16 %v1298
  %v1428 = vunpack.c.l.bf16 %v1299
  %v1429 = vunpack.c.l.bf16 %v1300
  %v1430 = vunpack.c.l.bf16 %v1301
  %v1431 = vunpack.c.l.bf16 %v1302
  %v1432 = vunpack.c.l.bf16 %v1303
  %v1433 = vunpack.c.l.bf16 %v1304
  %v1434 = vunpack.c.l.bf16 %v1305
  %v1435 = vunpack.c.l.bf16 %v1306
  %v1436 = vunpack.c.l.bf16 %v1307
  %v1437 = vunpack.c.l.bf16 %v1308
  %v1438 = vunpack.c.l.bf16 %v1309
  %v1439 = vunpack.c.l.bf16 %v1310
  %v1440 = vunpack.c.l.bf16 %v1311
  %v1441 = vunpack.c.l.bf16 %v1312
  %v1442 = vunpack.c.l.bf16 %v1313
  %v1443 = vunpack.c.l.bf16 %v1314
  %v1444 = vunpack.c.l.bf16 %v1315
  %v1445 = vunpack.c.l.bf16 %v1316
  %v1446 = vunpack.c.l.bf16 %v1317
  %v1447 = vunpack.c.l.bf16 %v1318
  %v1448 = vunpack.c.l.bf16 %v1319
  %v1449 = vunpack.c.l.bf16 %v1320
  %v1450 = vunpack.c.l.bf16 %v1321
  %v1451 = vunpack.c.l.bf16 %v1322
  %v1452 = vunpack.c.l.bf16 %v1323
  %v1453 = vunpack.c.l.bf16 %v1324
  %v1454 = vunpack.c.l.bf16 %v1325
  %v1455 = vunpack.c.l.bf16 %v1326
  %v1456 = vunpack.c.l.bf16 %v1327
  %v1457 = vunpack.c.l.bf16 %v1328
  %v1458 = vunpack.c.l.bf16 %v1329
  %v1459 = vunpack.c.l.bf16 %v1330
  %v1460 = vunpack.c.l.bf16 %v1331
  %v1461 = vunpack.c.l.bf16 %v1332
  %v1462 = vunpack.c.l.bf16 %v1333
  %v1463 = vunpack.c.l.bf16 %v1334
  %v1464 = vunpack.c.l.bf16 %v1335
  %v1465 = vunpack.c.l.bf16 %v1336
  %v1466 = vunpack.c.l.bf16 %v1337
  %v1467 = vunpack.c.l.bf16 %v1338
  %v1468 = vunpack.c.l.bf16 %v1339
  %v1469 = vunpack.c.l.bf16 %v1340
  %v1470 = vunpack.c.l.bf16 %v1341
  %v1471 = vunpack.c.l.bf16 %v1342
  %v1472 = vunpack.c.l.bf16 %v1343
  %v1473 = vunpack.c.l.bf16 %v1344
  %v1474 = vunpack.c.l.bf16 %v1345
  %v1475 = vunpack.c.l.bf16 %v1346
  %v1476 = vunpack.c.l.bf16 %v1347
  %v1477 = vunpack.c.l.bf16 %v1348
  %v1478 = vunpack.c.l.bf16 %v1349
  %v1479 = vunpack.c.l.bf16 %v1350
  %v1480 = vunpack.c.l.bf16 %v1351
  %v1481 = vunpack.c.l.bf16 %v1352
  %v1482 = vunpack.c.l.bf16 %v1353
  %v1483 = vunpack.c.l.bf16 %v1354
  %v1484 = vunpack.c.l.bf16 %v1355
  %v1485 = vunpack.c.l.bf16 %v1357
  %v1486 = vunpack.c.l.bf16 %v1358
  %v1487 = vunpack.c.l.bf16 %v1359
  %v1488 = vunpack.c.l.bf16 %v1360
  %v1489 = vunpack.c.l.bf16 %v1361
  %v1490 = vunpack.c.l.bf16 %v1362
  %v1491 = vunpack.c.l.bf16 %v1363
  %v1492 = vunpack.c.l.bf16 %v1364
  %v1493 = vunpack.c.l.bf16 %v1365
  %v1494 = vunpack.c.l.bf16 %v1366
  %v1495 = vunpack.c.l.bf16 %v1367
  %v1496 = vunpack.c.l.bf16 %v1368
  %v1497 = vunpack.c.l.bf16 %v1369
  %v1498 = vunpack.c.l.bf16 %v1370
  %v1499 = vunpack.c.l.bf16 %v1371
  %v1500 = vunpack.c.l.bf16 %v1372
  %v1501 = vunpack.c.l.bf16 %v1373
  %v1502 = vunpack.c.l.bf16 %v1374
  %v1503 = vunpack.c.l.bf16 %v1375
  %v1504 = vunpack.c.l.bf16 %v1376
  %v1505 = vunpack.c.l.bf16 %v1377
  %v1506 = vunpack.c.l.bf16 %v1378
  %v1507 = vunpack.c.l.bf16 %v1379
  %v1508 = vunpack.c.l.bf16 %v1380
  %v1509 = vunpack.c.l.bf16 %v1381
  %v1510 = vunpack.c.l.bf16 %v1382
  %v1511 = vunpack.c.l.bf16 %v1383
  %v1512 = vunpack.c.l.bf16 %v1384
  %v1513 = vunpack.c.l.bf16 %v1385
  %v1514 = vunpack.c.l.bf16 %v1386
  %v1515 = vunpack.c.l.bf16 %v1387
  %v1516 = vunpack.c.l.bf16 %v1388
  %v1517 = vunpack.c.l.bf16 %v1389
  %v1518 = vunpack.c.l.bf16 %v1390
  %v1519 = vunpack.c.l.bf16 %v1391
  %v1520 = vunpack.c.l.bf16 %v1392
  %v1521 = vunpack.c.l.bf16 %v1393
  %v1522 = vunpack.c.l.bf16 %v1394
  %v1523 = vunpack.c.l.bf16 %v1395
  %v1524 = vunpack.c.l.bf16 %v1396
  %v1525 = vunpack.c.l.bf16 %v1397
  %v1526 = vunpack.c.l.bf16 %v1398
  %v1527 = vunpack.c.l.bf16 %v1399
  %v1528 = vunpack.c.l.bf16 %v1400
  %v1529 = vunpack.c.l.bf16 %v1401
  %v1530 = vunpack.c.l.bf16 %v1402
  %v1531 = vunpack.c.l.bf16 %v1403
  %v1532 = vunpack.c.l.bf16 %v1404
  %v1533 = vunpack.c.l.bf16 %v1405
  %v1534 = vunpack.c.l.bf16 %v1406
  %v1535 = vunpack.c.l.bf16 %v1407
  %v1536 = vunpack.c.l.bf16 %v1408
  %v1537 = vunpack.c.l.bf16 %v1409
  %v1538 = vunpack.c.l.bf16 %v1410
  %v1539 = vunpack.c.l.bf16 %v1411
  %v1540 = vunpack.c.l.bf16 %v1412
  %v1541 = vunpack.c.l.bf16 %v1413
  %v1542 = vunpack.c.l.bf16 %v1414
  %v1543 = vunpack.c.l.bf16 %v1415
  %v1544 = vunpack.c.l.bf16 %v1416
  %v1545 = vunpack.c.l.bf16 %v1417
  %v1546 = vunpack.c.l.bf16 %v1418
  %v1547 = vunpack.c.l.bf16 %v1419
  %v1548 = vunpack.c.l.bf16 %v1420
  %v1549 = vmax.f32 %v1421, %v1485
  %v1550 = vmax.f32 %v1422, %v1486
  %v1551 = vmax.f32 %v1423, %v1487
  %v1552 = vmax.f32 %v1424, %v1488
  %v1553 = vmax.f32 %v1425, %v1489
  %v1554 = vmax.f32 %v1426, %v1490
  %v1555 = vmax.f32 %v1427, %v1491
  %v1556 = vmax.f32 %v1428, %v1492
  %v1557 = vmax.f32 %v1429, %v1493
  %v1558 = vmax.f32 %v1430, %v1494
  %v1559 = vmax.f32 %v1431, %v1495
  %v1560 = vmax.f32 %v1432, %v1496
  %v1561 = vmax.f32 %v1433, %v1497
  %v1562 = vmax.f32 %v1434, %v1498
  %v1563 = vmax.f32 %v1435, %v1499
  %v1564 = vmax.f32 %v1436, %v1500
  %v1565 = vmax.f32 %v1437, %v1501
  %v1566 = vmax.f32 %v1438, %v1502
  %v1567 = vmax.f32 %v1439, %v1503
  %v1568 = vmax.f32 %v1440, %v1504
  %v1569 = vmax.f32 %v1441, %v1505
  %v1570 = vmax.f32 %v1442, %v1506
  %v1571 = vmax.f32 %v1443, %v1507
  %v1572 = vmax.f32 %v1444, %v1508
  %v1573 = vmax.f32 %v1445, %v1509
  %v1574 = vmax.f32 %v1446, %v1510
  %v1575 = vmax.f32 %v1447, %v1511
  %v1576 = vmax.f32 %v1448, %v1512
  %v1577 = vmax.f32 %v1449, %v1513
  %v1578 = vmax.f32 %v1450, %v1514
  %v1579 = vmax.f32 %v1451, %v1515
  %v1580 = vmax.f32 %v1452, %v1516
  %v1581 = vmax.f32 %v1453, %v1517
  %v1582 = vmax.f32 %v1454, %v1518
  %v1583 = vmax.f32 %v1455, %v1519
  %v1584 = vmax.f32 %v1456, %v1520
  %v1585 = vmax.f32 %v1457, %v1521
  %v1586 = vmax.f32 %v1458, %v1522
  %v1587 = vmax.f32 %v1459, %v1523
  %v1588 = vmax.f32 %v1460, %v1524
  %v1589 = vmax.f32 %v1461, %v1525
  %v1590 = vmax.f32 %v1462, %v1526
  %v1591 = vmax.f32 %v1463, %v1527
  %v1592 = vmax.f32 %v1464, %v1528
  %v1593 = vmax.f32 %v1465, %v1529
  %v1594 = vmax.f32 %v1466, %v1530
  %v1595 = vmax.f32 %v1467, %v1531
  %v1596 = vmax.f32 %v1468, %v1532
  %v1597 = vmax.f32 %v1469, %v1533
  %v1598 = vmax.f32 %v1470, %v1534
  %v1599 = vmax.f32 %v1471, %v1535
  %v1600 = vmax.f32 %v1472, %v1536
  %v1601 = vmax.f32 %v1473, %v1537
  %v1602 = vmax.f32 %v1474, %v1538
  %v1603 = vmax.f32 %v1475, %v1539
  %v1604 = vmax.f32 %v1476, %v1540
  %v1605 = vmax.f32 %v1477, %v1541
  %v1606 = vmax.f32 %v1478, %v1542
  %v1607 = vmax.f32 %v1479, %v1543
  %v1608 = vmax.f32 %v1480, %v1544
  %v1609 = vmax.f32 %v1481, %v1545
  %v1610 = vmax.f32 %v1482, %v1546
  %v1611 = vmax.f32 %v1483, %v1547
  %v1612 = vmax.f32 %v1484, %v1548
  %v1613 = vpack.c.bf16 %v1549, %v1549
  %v1614 = vpack.c.bf16 %v1550, %v1550
  %v1615 = vpack.c.bf16 %v1551, %v1551
  %v1616 = vpack.c.bf16 %v1552, %v1552
  %v1617 = vpack.c.bf16 %v1553, %v1553
  %v1618 = vpack.c.bf16 %v1554, %v1554
  %v1619 = vpack.c.bf16 %v1555, %v1555
  %v1620 = vpack.c.bf16 %v1556, %v1556
  %v1621 = vpack.c.bf16 %v1557, %v1557
  %v1622 = vpack.c.bf16 %v1558, %v1558
  %v1623 = vpack.c.bf16 %v1559, %v1559
  %v1624 = vpack.c.bf16 %v1560, %v1560
  %v1625 = vpack.c.bf16 %v1561, %v1561
  %v1626 = vpack.c.bf16 %v1562, %v1562
  %v1627 = vpack.c.bf16 %v1563, %v1563
  %v1628 = vpack.c.bf16 %v1564, %v1564
  %v1629 = vpack.c.bf16 %v1565, %v1565
  %v1630 = vpack.c.bf16 %v1566, %v1566
  %v1631 = vpack.c.bf16 %v1567, %v1567
  %v1632 = vpack.c.bf16 %v1568, %v1568
  %v1633 = vpack.c.bf16 %v1569, %v1569
  %v1634 = vpack.c.bf16 %v1570, %v1570
  %v1635 = vpack.c.bf16 %v1571, %v1571
  %v1636 = vpack.c.bf16 %v1572, %v1572
  %v1637 = vpack.c.bf16 %v1573, %v1573
  %v1638 = vpack.c.bf16 %v1574, %v1574
  %v1639 = vpack.c.bf16 %v1575, %v1575
  %v1640 = vpack.c.bf16 %v1576, %v1576
  %v1641 = vpack.c.bf16 %v1577, %v1577
  %v1642 = vpack.c.bf16 %v1578, %v1578
  %v1643 = vpack.c.bf16 %v1579, %v1579
  %v1644 = vpack.c.bf16 %v1580, %v1580
  %v1645 = vpack.c.bf16 %v1581, %v1581
  %v1646 = vpack.c.bf16 %v1582, %v1582
  %v1647 = vpack.c.bf16 %v1583, %v1583
  %v1648 = vpack.c.bf16 %v1584, %v1584
  %v1649 = vpack.c.bf16 %v1585, %v1585
  %v1650 = vpack.c.bf16 %v1586, %v1586
  %v1651 = vpack.c.bf16 %v1587, %v1587
  %v1652 = vpack.c.bf16 %v1588, %v1588
  %v1653 = vpack.c.bf16 %v1589, %v1589
  %v1654 = vpack.c.bf16 %v1590, %v1590
  %v1655 = vpack.c.bf16 %v1591, %v1591
  %v1656 = vpack.c.bf16 %v1592, %v1592
  %v1657 = vpack.c.bf16 %v1593, %v1593
  %v1658 = vpack.c.bf16 %v1594, %v1594
  %v1659 = vpack.c.bf16 %v1595, %v1595
  %v1660 = vpack.c.bf16 %v1596, %v1596
  %v1661 = vpack.c.bf16 %v1597, %v1597
  %v1662 = vpack.c.bf16 %v1598, %v1598
  %v1663 = vpack.c.bf16 %v1599, %v1599
  %v1664 = vpack.c.bf16 %v1600, %v1600
  %v1665 = vpack.c.bf16 %v1601, %v1601
  %v1666 = vpack.c.bf16 %v1602, %v1602
  %v1667 = vpack.c.bf16 %v1603, %v1603
  %v1668 = vpack.c.bf16 %v1604, %v1604
  %v1669 = vpack.c.bf16 %v1605, %v1605
  %v1670 = vpack.c.bf16 %v1606, %v1606
  %v1671 = vpack.c.bf16 %v1607, %v1607
  %v1672 = vpack.c.bf16 %v1608, %v1608
  %v1673 = vpack.c.bf16 %v1609, %v1609
  %v1674 = vpack.c.bf16 %v1610, %v1610
  %v1675 = vpack.c.bf16 %v1611, %v1611
  %v1676 = vpack.c.bf16 %v1612, %v1612
  %s1677 = scalar_lea.vmem %s0, 1536
  %v1678 = vld [vmem:[%s1677] sm:$0xf]
  %v1679 = vld [vmem:[%s1677 + $0x4] sm:$0xf]
  %v1680 = vld [vmem:[%s1677 + $0x8] sm:$0xf]
  %v1681 = vld [vmem:[%s1677 + $0xc] sm:$0xf]
  %v1682 = vld [vmem:[%s1677 + $0x10] sm:$0xf]
  %v1683 = vld [vmem:[%s1677 + $0x14] sm:$0xf]
  %v1684 = vld [vmem:[%s1677 + $0x18] sm:$0xf]
  %v1685 = vld [vmem:[%s1677 + $0x1c] sm:$0xf]
  %v1686 = vld [vmem:[%s1677 + $0x20] sm:$0xf]
  %v1687 = vld [vmem:[%s1677 + $0x24] sm:$0xf]
  %v1688 = vld [vmem:[%s1677 + $0x28] sm:$0xf]
  %v1689 = vld [vmem:[%s1677 + $0x2c] sm:$0xf]
  %v1690 = vld [vmem:[%s1677 + $0x30] sm:$0xf]
  %v1691 = vld [vmem:[%s1677 + $0x34] sm:$0xf]
  %v1692 = vld [vmem:[%s1677 + $0x38] sm:$0xf]
  %v1693 = vld [vmem:[%s1677 + $0x3c] sm:$0xf]
  %v1694 = vld [vmem:[%s1677 + $0x40] sm:$0xf]
  %v1695 = vld [vmem:[%s1677 + $0x44] sm:$0xf]
  %v1696 = vld [vmem:[%s1677 + $0x48] sm:$0xf]
  %v1697 = vld [vmem:[%s1677 + $0x4c] sm:$0xf]
  %v1698 = vld [vmem:[%s1677 + $0x50] sm:$0xf]
  %v1699 = vld [vmem:[%s1677 + $0x54] sm:$0xf]
  %v1700 = vld [vmem:[%s1677 + $0x58] sm:$0xf]
  %v1701 = vld [vmem:[%s1677 + $0x5c] sm:$0xf]
  %v1702 = vld [vmem:[%s1677 + $0x60] sm:$0xf]
  %v1703 = vld [vmem:[%s1677 + $0x64] sm:$0xf]
  %v1704 = vld [vmem:[%s1677 + $0x68] sm:$0xf]
  %v1705 = vld [vmem:[%s1677 + $0x6c] sm:$0xf]
  %v1706 = vld [vmem:[%s1677 + $0x70] sm:$0xf]
  %v1707 = vld [vmem:[%s1677 + $0x74] sm:$0xf]
  %v1708 = vld [vmem:[%s1677 + $0x78] sm:$0xf]
  %v1709 = vld [vmem:[%s1677 + $0x7c] sm:$0xf]
  %v1710 = vld [vmem:[%s1677 + $0x80] sm:$0xf]
  %v1711 = vld [vmem:[%s1677 + $0x84] sm:$0xf]
  %v1712 = vld [vmem:[%s1677 + $0x88] sm:$0xf]
  %v1713 = vld [vmem:[%s1677 + $0x8c] sm:$0xf]
  %v1714 = vld [vmem:[%s1677 + $0x90] sm:$0xf]
  %v1715 = vld [vmem:[%s1677 + $0x94] sm:$0xf]
  %v1716 = vld [vmem:[%s1677 + $0x98] sm:$0xf]
  %v1717 = vld [vmem:[%s1677 + $0x9c] sm:$0xf]
  %v1718 = vld [vmem:[%s1677 + $0xa0] sm:$0xf]
  %v1719 = vld [vmem:[%s1677 + $0xa4] sm:$0xf]
  %v1720 = vld [vmem:[%s1677 + $0xa8] sm:$0xf]
  %v1721 = vld [vmem:[%s1677 + $0xac] sm:$0xf]
  %v1722 = vld [vmem:[%s1677 + $0xb0] sm:$0xf]
  %v1723 = vld [vmem:[%s1677 + $0xb4] sm:$0xf]
  %v1724 = vld [vmem:[%s1677 + $0xb8] sm:$0xf]
  %v1725 = vld [vmem:[%s1677 + $0xbc] sm:$0xf]
  %v1726 = vld [vmem:[%s1677 + $0xc0] sm:$0xf]
  %v1727 = vld [vmem:[%s1677 + $0xc4] sm:$0xf]
  %v1728 = vld [vmem:[%s1677 + $0xc8] sm:$0xf]
  %v1729 = vld [vmem:[%s1677 + $0xcc] sm:$0xf]
  %v1730 = vld [vmem:[%s1677 + $0xd0] sm:$0xf]
  %v1731 = vld [vmem:[%s1677 + $0xd4] sm:$0xf]
  %v1732 = vld [vmem:[%s1677 + $0xd8] sm:$0xf]
  %v1733 = vld [vmem:[%s1677 + $0xdc] sm:$0xf]
  %v1734 = vld [vmem:[%s1677 + $0xe0] sm:$0xf]
  %v1735 = vld [vmem:[%s1677 + $0xe4] sm:$0xf]
  %v1736 = vld [vmem:[%s1677 + $0xe8] sm:$0xf]
  %v1737 = vld [vmem:[%s1677 + $0xec] sm:$0xf]
  %v1738 = vld [vmem:[%s1677 + $0xf0] sm:$0xf]
  %v1739 = vld [vmem:[%s1677 + $0xf4] sm:$0xf]
  %v1740 = vld [vmem:[%s1677 + $0xf8] sm:$0xf]
  %v1741 = vld [vmem:[%s1677 + $0xfc] sm:$0xf]
  %v1742 = vunpack.c.l.bf16 %v1613
  %v1743 = vunpack.c.l.bf16 %v1614
  %v1744 = vunpack.c.l.bf16 %v1615
  %v1745 = vunpack.c.l.bf16 %v1616
  %v1746 = vunpack.c.l.bf16 %v1617
  %v1747 = vunpack.c.l.bf16 %v1618
  %v1748 = vunpack.c.l.bf16 %v1619
  %v1749 = vunpack.c.l.bf16 %v1620
  %v1750 = vunpack.c.l.bf16 %v1621
  %v1751 = vunpack.c.l.bf16 %v1622
  %v1752 = vunpack.c.l.bf16 %v1623
  %v1753 = vunpack.c.l.bf16 %v1624
  %v1754 = vunpack.c.l.bf16 %v1625
  %v1755 = vunpack.c.l.bf16 %v1626
  %v1756 = vunpack.c.l.bf16 %v1627
  %v1757 = vunpack.c.l.bf16 %v1628
  %v1758 = vunpack.c.l.bf16 %v1629
  %v1759 = vunpack.c.l.bf16 %v1630
  %v1760 = vunpack.c.l.bf16 %v1631
  %v1761 = vunpack.c.l.bf16 %v1632
  %v1762 = vunpack.c.l.bf16 %v1633
  %v1763 = vunpack.c.l.bf16 %v1634
  %v1764 = vunpack.c.l.bf16 %v1635
  %v1765 = vunpack.c.l.bf16 %v1636
  %v1766 = vunpack.c.l.bf16 %v1637
  %v1767 = vunpack.c.l.bf16 %v1638
  %v1768 = vunpack.c.l.bf16 %v1639
  %v1769 = vunpack.c.l.bf16 %v1640
  %v1770 = vunpack.c.l.bf16 %v1641
  %v1771 = vunpack.c.l.bf16 %v1642
  %v1772 = vunpack.c.l.bf16 %v1643
  %v1773 = vunpack.c.l.bf16 %v1644
  %v1774 = vunpack.c.l.bf16 %v1645
  %v1775 = vunpack.c.l.bf16 %v1646
  %v1776 = vunpack.c.l.bf16 %v1647
  %v1777 = vunpack.c.l.bf16 %v1648
  %v1778 = vunpack.c.l.bf16 %v1649
  %v1779 = vunpack.c.l.bf16 %v1650
  %v1780 = vunpack.c.l.bf16 %v1651
  %v1781 = vunpack.c.l.bf16 %v1652
  %v1782 = vunpack.c.l.bf16 %v1653
  %v1783 = vunpack.c.l.bf16 %v1654
  %v1784 = vunpack.c.l.bf16 %v1655
  %v1785 = vunpack.c.l.bf16 %v1656
  %v1786 = vunpack.c.l.bf16 %v1657
  %v1787 = vunpack.c.l.bf16 %v1658
  %v1788 = vunpack.c.l.bf16 %v1659
  %v1789 = vunpack.c.l.bf16 %v1660
  %v1790 = vunpack.c.l.bf16 %v1661
  %v1791 = vunpack.c.l.bf16 %v1662
  %v1792 = vunpack.c.l.bf16 %v1663
  %v1793 = vunpack.c.l.bf16 %v1664
  %v1794 = vunpack.c.l.bf16 %v1665
  %v1795 = vunpack.c.l.bf16 %v1666
  %v1796 = vunpack.c.l.bf16 %v1667
  %v1797 = vunpack.c.l.bf16 %v1668
  %v1798 = vunpack.c.l.bf16 %v1669
  %v1799 = vunpack.c.l.bf16 %v1670
  %v1800 = vunpack.c.l.bf16 %v1671
  %v1801 = vunpack.c.l.bf16 %v1672
  %v1802 = vunpack.c.l.bf16 %v1673
  %v1803 = vunpack.c.l.bf16 %v1674
  %v1804 = vunpack.c.l.bf16 %v1675
  %v1805 = vunpack.c.l.bf16 %v1676
  %v1806 = vunpack.c.l.bf16 %v1678
  %v1807 = vunpack.c.l.bf16 %v1679
  %v1808 = vunpack.c.l.bf16 %v1680
  %v1809 = vunpack.c.l.bf16 %v1681
  %v1810 = vunpack.c.l.bf16 %v1682
  %v1811 = vunpack.c.l.bf16 %v1683
  %v1812 = vunpack.c.l.bf16 %v1684
  %v1813 = vunpack.c.l.bf16 %v1685
  %v1814 = vunpack.c.l.bf16 %v1686
  %v1815 = vunpack.c.l.bf16 %v1687
  %v1816 = vunpack.c.l.bf16 %v1688
  %v1817 = vunpack.c.l.bf16 %v1689
  %v1818 = vunpack.c.l.bf16 %v1690
  %v1819 = vunpack.c.l.bf16 %v1691
  %v1820 = vunpack.c.l.bf16 %v1692
  %v1821 = vunpack.c.l.bf16 %v1693
  %v1822 = vunpack.c.l.bf16 %v1694
  %v1823 = vunpack.c.l.bf16 %v1695
  %v1824 = vunpack.c.l.bf16 %v1696
  %v1825 = vunpack.c.l.bf16 %v1697
  %v1826 = vunpack.c.l.bf16 %v1698
  %v1827 = vunpack.c.l.bf16 %v1699
  %v1828 = vunpack.c.l.bf16 %v1700
  %v1829 = vunpack.c.l.bf16 %v1701
  %v1830 = vunpack.c.l.bf16 %v1702
  %v1831 = vunpack.c.l.bf16 %v1703
  %v1832 = vunpack.c.l.bf16 %v1704
  %v1833 = vunpack.c.l.bf16 %v1705
  %v1834 = vunpack.c.l.bf16 %v1706
  %v1835 = vunpack.c.l.bf16 %v1707
  %v1836 = vunpack.c.l.bf16 %v1708
  %v1837 = vunpack.c.l.bf16 %v1709
  %v1838 = vunpack.c.l.bf16 %v1710
  %v1839 = vunpack.c.l.bf16 %v1711
  %v1840 = vunpack.c.l.bf16 %v1712
  %v1841 = vunpack.c.l.bf16 %v1713
  %v1842 = vunpack.c.l.bf16 %v1714
  %v1843 = vunpack.c.l.bf16 %v1715
  %v1844 = vunpack.c.l.bf16 %v1716
  %v1845 = vunpack.c.l.bf16 %v1717
  %v1846 = vunpack.c.l.bf16 %v1718
  %v1847 = vunpack.c.l.bf16 %v1719
  %v1848 = vunpack.c.l.bf16 %v1720
  %v1849 = vunpack.c.l.bf16 %v1721
  %v1850 = vunpack.c.l.bf16 %v1722
  %v1851 = vunpack.c.l.bf16 %v1723
  %v1852 = vunpack.c.l.bf16 %v1724
  %v1853 = vunpack.c.l.bf16 %v1725
  %v1854 = vunpack.c.l.bf16 %v1726
  %v1855 = vunpack.c.l.bf16 %v1727
  %v1856 = vunpack.c.l.bf16 %v1728
  %v1857 = vunpack.c.l.bf16 %v1729
  %v1858 = vunpack.c.l.bf16 %v1730
  %v1859 = vunpack.c.l.bf16 %v1731
  %v1860 = vunpack.c.l.bf16 %v1732
  %v1861 = vunpack.c.l.bf16 %v1733
  %v1862 = vunpack.c.l.bf16 %v1734
  %v1863 = vunpack.c.l.bf16 %v1735
  %v1864 = vunpack.c.l.bf16 %v1736
  %v1865 = vunpack.c.l.bf16 %v1737
  %v1866 = vunpack.c.l.bf16 %v1738
  %v1867 = vunpack.c.l.bf16 %v1739
  %v1868 = vunpack.c.l.bf16 %v1740
  %v1869 = vunpack.c.l.bf16 %v1741
  %v1870 = vmax.f32 %v1742, %v1806
  %v1871 = vmax.f32 %v1743, %v1807
  %v1872 = vmax.f32 %v1744, %v1808
  %v1873 = vmax.f32 %v1745, %v1809
  %v1874 = vmax.f32 %v1746, %v1810
  %v1875 = vmax.f32 %v1747, %v1811
  %v1876 = vmax.f32 %v1748, %v1812
  %v1877 = vmax.f32 %v1749, %v1813
  %v1878 = vmax.f32 %v1750, %v1814
  %v1879 = vmax.f32 %v1751, %v1815
  %v1880 = vmax.f32 %v1752, %v1816
  %v1881 = vmax.f32 %v1753, %v1817
  %v1882 = vmax.f32 %v1754, %v1818
  %v1883 = vmax.f32 %v1755, %v1819
  %v1884 = vmax.f32 %v1756, %v1820
  %v1885 = vmax.f32 %v1757, %v1821
  %v1886 = vmax.f32 %v1758, %v1822
  %v1887 = vmax.f32 %v1759, %v1823
  %v1888 = vmax.f32 %v1760, %v1824
  %v1889 = vmax.f32 %v1761, %v1825
  %v1890 = vmax.f32 %v1762, %v1826
  %v1891 = vmax.f32 %v1763, %v1827
  %v1892 = vmax.f32 %v1764, %v1828
  %v1893 = vmax.f32 %v1765, %v1829
  %v1894 = vmax.f32 %v1766, %v1830
  %v1895 = vmax.f32 %v1767, %v1831
  %v1896 = vmax.f32 %v1768, %v1832
  %v1897 = vmax.f32 %v1769, %v1833
  %v1898 = vmax.f32 %v1770, %v1834
  %v1899 = vmax.f32 %v1771, %v1835
  %v1900 = vmax.f32 %v1772, %v1836
  %v1901 = vmax.f32 %v1773, %v1837
  %v1902 = vmax.f32 %v1774, %v1838
  %v1903 = vmax.f32 %v1775, %v1839
  %v1904 = vmax.f32 %v1776, %v1840
  %v1905 = vmax.f32 %v1777, %v1841
  %v1906 = vmax.f32 %v1778, %v1842
  %v1907 = vmax.f32 %v1779, %v1843
  %v1908 = vmax.f32 %v1780, %v1844
  %v1909 = vmax.f32 %v1781, %v1845
  %v1910 = vmax.f32 %v1782, %v1846
  %v1911 = vmax.f32 %v1783, %v1847
  %v1912 = vmax.f32 %v1784, %v1848
  %v1913 = vmax.f32 %v1785, %v1849
  %v1914 = vmax.f32 %v1786, %v1850
  %v1915 = vmax.f32 %v1787, %v1851
  %v1916 = vmax.f32 %v1788, %v1852
  %v1917 = vmax.f32 %v1789, %v1853
  %v1918 = vmax.f32 %v1790, %v1854
  %v1919 = vmax.f32 %v1791, %v1855
  %v1920 = vmax.f32 %v1792, %v1856
  %v1921 = vmax.f32 %v1793, %v1857
  %v1922 = vmax.f32 %v1794, %v1858
  %v1923 = vmax.f32 %v1795, %v1859
  %v1924 = vmax.f32 %v1796, %v1860
  %v1925 = vmax.f32 %v1797, %v1861
  %v1926 = vmax.f32 %v1798, %v1862
  %v1927 = vmax.f32 %v1799, %v1863
  %v1928 = vmax.f32 %v1800, %v1864
  %v1929 = vmax.f32 %v1801, %v1865
  %v1930 = vmax.f32 %v1802, %v1866
  %v1931 = vmax.f32 %v1803, %v1867
  %v1932 = vmax.f32 %v1804, %v1868
  %v1933 = vmax.f32 %v1805, %v1869
  %v1934 = vpack.c.bf16 %v1870, %v1870
  %v1935 = vpack.c.bf16 %v1871, %v1871
  %v1936 = vpack.c.bf16 %v1872, %v1872
  %v1937 = vpack.c.bf16 %v1873, %v1873
  %v1938 = vpack.c.bf16 %v1874, %v1874
  %v1939 = vpack.c.bf16 %v1875, %v1875
  %v1940 = vpack.c.bf16 %v1876, %v1876
  %v1941 = vpack.c.bf16 %v1877, %v1877
  %v1942 = vpack.c.bf16 %v1878, %v1878
  %v1943 = vpack.c.bf16 %v1879, %v1879
  %v1944 = vpack.c.bf16 %v1880, %v1880
  %v1945 = vpack.c.bf16 %v1881, %v1881
  %v1946 = vpack.c.bf16 %v1882, %v1882
  %v1947 = vpack.c.bf16 %v1883, %v1883
  %v1948 = vpack.c.bf16 %v1884, %v1884
  %v1949 = vpack.c.bf16 %v1885, %v1885
  %v1950 = vpack.c.bf16 %v1886, %v1886
  %v1951 = vpack.c.bf16 %v1887, %v1887
  %v1952 = vpack.c.bf16 %v1888, %v1888
  %v1953 = vpack.c.bf16 %v1889, %v1889
  %v1954 = vpack.c.bf16 %v1890, %v1890
  %v1955 = vpack.c.bf16 %v1891, %v1891
  %v1956 = vpack.c.bf16 %v1892, %v1892
  %v1957 = vpack.c.bf16 %v1893, %v1893
  %v1958 = vpack.c.bf16 %v1894, %v1894
  %v1959 = vpack.c.bf16 %v1895, %v1895
  %v1960 = vpack.c.bf16 %v1896, %v1896
  %v1961 = vpack.c.bf16 %v1897, %v1897
  %v1962 = vpack.c.bf16 %v1898, %v1898
  %v1963 = vpack.c.bf16 %v1899, %v1899
  %v1964 = vpack.c.bf16 %v1900, %v1900
  %v1965 = vpack.c.bf16 %v1901, %v1901
  %v1966 = vpack.c.bf16 %v1902, %v1902
  %v1967 = vpack.c.bf16 %v1903, %v1903
  %v1968 = vpack.c.bf16 %v1904, %v1904
  %v1969 = vpack.c.bf16 %v1905, %v1905
  %v1970 = vpack.c.bf16 %v1906, %v1906
  %v1971 = vpack.c.bf16 %v1907, %v1907
  %v1972 = vpack.c.bf16 %v1908, %v1908
  %v1973 = vpack.c.bf16 %v1909, %v1909
  %v1974 = vpack.c.bf16 %v1910, %v1910
  %v1975 = vpack.c.bf16 %v1911, %v1911
  %v1976 = vpack.c.bf16 %v1912, %v1912
  %v1977 = vpack.c.bf16 %v1913, %v1913
  %v1978 = vpack.c.bf16 %v1914, %v1914
  %v1979 = vpack.c.bf16 %v1915, %v1915
  %v1980 = vpack.c.bf16 %v1916, %v1916
  %v1981 = vpack.c.bf16 %v1917, %v1917
  %v1982 = vpack.c.bf16 %v1918, %v1918
  %v1983 = vpack.c.bf16 %v1919, %v1919
  %v1984 = vpack.c.bf16 %v1920, %v1920
  %v1985 = vpack.c.bf16 %v1921, %v1921
  %v1986 = vpack.c.bf16 %v1922, %v1922
  %v1987 = vpack.c.bf16 %v1923, %v1923
  %v1988 = vpack.c.bf16 %v1924, %v1924
  %v1989 = vpack.c.bf16 %v1925, %v1925
  %v1990 = vpack.c.bf16 %v1926, %v1926
  %v1991 = vpack.c.bf16 %v1927, %v1927
  %v1992 = vpack.c.bf16 %v1928, %v1928
  %v1993 = vpack.c.bf16 %v1929, %v1929
  %v1994 = vpack.c.bf16 %v1930, %v1930
  %v1995 = vpack.c.bf16 %v1931, %v1931
  %v1996 = vpack.c.bf16 %v1932, %v1932
  %v1997 = vpack.c.bf16 %v1933, %v1933
  %s1998 = scalar_lea.vmem %s0, 1792
  %v1999 = vld [vmem:[%s1998] sm:$0xf]
  %v2000 = vld [vmem:[%s1998 + $0x4] sm:$0xf]
  %v2001 = vld [vmem:[%s1998 + $0x8] sm:$0xf]
  %v2002 = vld [vmem:[%s1998 + $0xc] sm:$0xf]
  %v2003 = vld [vmem:[%s1998 + $0x10] sm:$0xf]
  %v2004 = vld [vmem:[%s1998 + $0x14] sm:$0xf]
  %v2005 = vld [vmem:[%s1998 + $0x18] sm:$0xf]
  %v2006 = vld [vmem:[%s1998 + $0x1c] sm:$0xf]
  %v2007 = vld [vmem:[%s1998 + $0x20] sm:$0xf]
  %v2008 = vld [vmem:[%s1998 + $0x24] sm:$0xf]
  %v2009 = vld [vmem:[%s1998 + $0x28] sm:$0xf]
  %v2010 = vld [vmem:[%s1998 + $0x2c] sm:$0xf]
  %v2011 = vld [vmem:[%s1998 + $0x30] sm:$0xf]
  %v2012 = vld [vmem:[%s1998 + $0x34] sm:$0xf]
  %v2013 = vld [vmem:[%s1998 + $0x38] sm:$0xf]
  %v2014 = vld [vmem:[%s1998 + $0x3c] sm:$0xf]
  %v2015 = vld [vmem:[%s1998 + $0x40] sm:$0xf]
  %v2016 = vld [vmem:[%s1998 + $0x44] sm:$0xf]
  %v2017 = vld [vmem:[%s1998 + $0x48] sm:$0xf]
  %v2018 = vld [vmem:[%s1998 + $0x4c] sm:$0xf]
  %v2019 = vld [vmem:[%s1998 + $0x50] sm:$0xf]
  %v2020 = vld [vmem:[%s1998 + $0x54] sm:$0xf]
  %v2021 = vld [vmem:[%s1998 + $0x58] sm:$0xf]
  %v2022 = vld [vmem:[%s1998 + $0x5c] sm:$0xf]
  %v2023 = vld [vmem:[%s1998 + $0x60] sm:$0xf]
  %v2024 = vld [vmem:[%s1998 + $0x64] sm:$0xf]
  %v2025 = vld [vmem:[%s1998 + $0x68] sm:$0xf]
  %v2026 = vld [vmem:[%s1998 + $0x6c] sm:$0xf]
  %v2027 = vld [vmem:[%s1998 + $0x70] sm:$0xf]
  %v2028 = vld [vmem:[%s1998 + $0x74] sm:$0xf]
  %v2029 = vld [vmem:[%s1998 + $0x78] sm:$0xf]
  %v2030 = vld [vmem:[%s1998 + $0x7c] sm:$0xf]
  %v2031 = vld [vmem:[%s1998 + $0x80] sm:$0xf]
  %v2032 = vld [vmem:[%s1998 + $0x84] sm:$0xf]
  %v2033 = vld [vmem:[%s1998 + $0x88] sm:$0xf]
  %v2034 = vld [vmem:[%s1998 + $0x8c] sm:$0xf]
  %v2035 = vld [vmem:[%s1998 + $0x90] sm:$0xf]
  %v2036 = vld [vmem:[%s1998 + $0x94] sm:$0xf]
  %v2037 = vld [vmem:[%s1998 + $0x98] sm:$0xf]
  %v2038 = vld [vmem:[%s1998 + $0x9c] sm:$0xf]
  %v2039 = vld [vmem:[%s1998 + $0xa0] sm:$0xf]
  %v2040 = vld [vmem:[%s1998 + $0xa4] sm:$0xf]
  %v2041 = vld [vmem:[%s1998 + $0xa8] sm:$0xf]
  %v2042 = vld [vmem:[%s1998 + $0xac] sm:$0xf]
  %v2043 = vld [vmem:[%s1998 + $0xb0] sm:$0xf]
  %v2044 = vld [vmem:[%s1998 + $0xb4] sm:$0xf]
  %v2045 = vld [vmem:[%s1998 + $0xb8] sm:$0xf]
  %v2046 = vld [vmem:[%s1998 + $0xbc] sm:$0xf]
  %v2047 = vld [vmem:[%s1998 + $0xc0] sm:$0xf]
  %v2048 = vld [vmem:[%s1998 + $0xc4] sm:$0xf]
  %v2049 = vld [vmem:[%s1998 + $0xc8] sm:$0xf]
  %v2050 = vld [vmem:[%s1998 + $0xcc] sm:$0xf]
  %v2051 = vld [vmem:[%s1998 + $0xd0] sm:$0xf]
  %v2052 = vld [vmem:[%s1998 + $0xd4] sm:$0xf]
  %v2053 = vld [vmem:[%s1998 + $0xd8] sm:$0xf]
  %v2054 = vld [vmem:[%s1998 + $0xdc] sm:$0xf]
  %v2055 = vld [vmem:[%s1998 + $0xe0] sm:$0xf]
  %v2056 = vld [vmem:[%s1998 + $0xe4] sm:$0xf]
  %v2057 = vld [vmem:[%s1998 + $0xe8] sm:$0xf]
  %v2058 = vld [vmem:[%s1998 + $0xec] sm:$0xf]
  %v2059 = vld [vmem:[%s1998 + $0xf0] sm:$0xf]
  %v2060 = vld [vmem:[%s1998 + $0xf4] sm:$0xf]
  %v2061 = vld [vmem:[%s1998 + $0xf8] sm:$0xf]
  %v2062 = vld [vmem:[%s1998 + $0xfc] sm:$0xf]
  %v2063 = vunpack.c.l.bf16 %v1934
  %v2064 = vunpack.c.l.bf16 %v1935
  %v2065 = vunpack.c.l.bf16 %v1936
  %v2066 = vunpack.c.l.bf16 %v1937
  %v2067 = vunpack.c.l.bf16 %v1938
  %v2068 = vunpack.c.l.bf16 %v1939
  %v2069 = vunpack.c.l.bf16 %v1940
  %v2070 = vunpack.c.l.bf16 %v1941
  %v2071 = vunpack.c.l.bf16 %v1942
  %v2072 = vunpack.c.l.bf16 %v1943
  %v2073 = vunpack.c.l.bf16 %v1944
  %v2074 = vunpack.c.l.bf16 %v1945
  %v2075 = vunpack.c.l.bf16 %v1946
  %v2076 = vunpack.c.l.bf16 %v1947
  %v2077 = vunpack.c.l.bf16 %v1948
  %v2078 = vunpack.c.l.bf16 %v1949
  %v2079 = vunpack.c.l.bf16 %v1950
  %v2080 = vunpack.c.l.bf16 %v1951
  %v2081 = vunpack.c.l.bf16 %v1952
  %v2082 = vunpack.c.l.bf16 %v1953
  %v2083 = vunpack.c.l.bf16 %v1954
  %v2084 = vunpack.c.l.bf16 %v1955
  %v2085 = vunpack.c.l.bf16 %v1956
  %v2086 = vunpack.c.l.bf16 %v1957
  %v2087 = vunpack.c.l.bf16 %v1958
  %v2088 = vunpack.c.l.bf16 %v1959
  %v2089 = vunpack.c.l.bf16 %v1960
  %v2090 = vunpack.c.l.bf16 %v1961
  %v2091 = vunpack.c.l.bf16 %v1962
  %v2092 = vunpack.c.l.bf16 %v1963
  %v2093 = vunpack.c.l.bf16 %v1964
  %v2094 = vunpack.c.l.bf16 %v1965
  %v2095 = vunpack.c.l.bf16 %v1966
  %v2096 = vunpack.c.l.bf16 %v1967
  %v2097 = vunpack.c.l.bf16 %v1968
  %v2098 = vunpack.c.l.bf16 %v1969
  %v2099 = vunpack.c.l.bf16 %v1970
  %v2100 = vunpack.c.l.bf16 %v1971
  %v2101 = vunpack.c.l.bf16 %v1972
  %v2102 = vunpack.c.l.bf16 %v1973
  %v2103 = vunpack.c.l.bf16 %v1974
  %v2104 = vunpack.c.l.bf16 %v1975
  %v2105 = vunpack.c.l.bf16 %v1976
  %v2106 = vunpack.c.l.bf16 %v1977
  %v2107 = vunpack.c.l.bf16 %v1978
  %v2108 = vunpack.c.l.bf16 %v1979
  %v2109 = vunpack.c.l.bf16 %v1980
  %v2110 = vunpack.c.l.bf16 %v1981
  %v2111 = vunpack.c.l.bf16 %v1982
  %v2112 = vunpack.c.l.bf16 %v1983
  %v2113 = vunpack.c.l.bf16 %v1984
  %v2114 = vunpack.c.l.bf16 %v1985
  %v2115 = vunpack.c.l.bf16 %v1986
  %v2116 = vunpack.c.l.bf16 %v1987
  %v2117 = vunpack.c.l.bf16 %v1988
  %v2118 = vunpack.c.l.bf16 %v1989
  %v2119 = vunpack.c.l.bf16 %v1990
  %v2120 = vunpack.c.l.bf16 %v1991
  %v2121 = vunpack.c.l.bf16 %v1992
  %v2122 = vunpack.c.l.bf16 %v1993
  %v2123 = vunpack.c.l.bf16 %v1994
  %v2124 = vunpack.c.l.bf16 %v1995
  %v2125 = vunpack.c.l.bf16 %v1996
  %v2126 = vunpack.c.l.bf16 %v1997
  %v2127 = vunpack.c.l.bf16 %v1999
  %v2128 = vunpack.c.l.bf16 %v2000
  %v2129 = vunpack.c.l.bf16 %v2001
  %v2130 = vunpack.c.l.bf16 %v2002
  %v2131 = vunpack.c.l.bf16 %v2003
  %v2132 = vunpack.c.l.bf16 %v2004
  %v2133 = vunpack.c.l.bf16 %v2005
  %v2134 = vunpack.c.l.bf16 %v2006
  %v2135 = vunpack.c.l.bf16 %v2007
  %v2136 = vunpack.c.l.bf16 %v2008
  %v2137 = vunpack.c.l.bf16 %v2009
  %v2138 = vunpack.c.l.bf16 %v2010
  %v2139 = vunpack.c.l.bf16 %v2011
  %v2140 = vunpack.c.l.bf16 %v2012
  %v2141 = vunpack.c.l.bf16 %v2013
  %v2142 = vunpack.c.l.bf16 %v2014
  %v2143 = vunpack.c.l.bf16 %v2015
  %v2144 = vunpack.c.l.bf16 %v2016
  %v2145 = vunpack.c.l.bf16 %v2017
  %v2146 = vunpack.c.l.bf16 %v2018
  %v2147 = vunpack.c.l.bf16 %v2019
  %v2148 = vunpack.c.l.bf16 %v2020
  %v2149 = vunpack.c.l.bf16 %v2021
  %v2150 = vunpack.c.l.bf16 %v2022
  %v2151 = vunpack.c.l.bf16 %v2023
  %v2152 = vunpack.c.l.bf16 %v2024
  %v2153 = vunpack.c.l.bf16 %v2025
  %v2154 = vunpack.c.l.bf16 %v2026
  %v2155 = vunpack.c.l.bf16 %v2027
  %v2156 = vunpack.c.l.bf16 %v2028
  %v2157 = vunpack.c.l.bf16 %v2029
  %v2158 = vunpack.c.l.bf16 %v2030
  %v2159 = vunpack.c.l.bf16 %v2031
  %v2160 = vunpack.c.l.bf16 %v2032
  %v2161 = vunpack.c.l.bf16 %v2033
  %v2162 = vunpack.c.l.bf16 %v2034
  %v2163 = vunpack.c.l.bf16 %v2035
  %v2164 = vunpack.c.l.bf16 %v2036
  %v2165 = vunpack.c.l.bf16 %v2037
  %v2166 = vunpack.c.l.bf16 %v2038
  %v2167 = vunpack.c.l.bf16 %v2039
  %v2168 = vunpack.c.l.bf16 %v2040
  %v2169 = vunpack.c.l.bf16 %v2041
  %v2170 = vunpack.c.l.bf16 %v2042
  %v2171 = vunpack.c.l.bf16 %v2043
  %v2172 = vunpack.c.l.bf16 %v2044
  %v2173 = vunpack.c.l.bf16 %v2045
  %v2174 = vunpack.c.l.bf16 %v2046
  %v2175 = vunpack.c.l.bf16 %v2047
  %v2176 = vunpack.c.l.bf16 %v2048
  %v2177 = vunpack.c.l.bf16 %v2049
  %v2178 = vunpack.c.l.bf16 %v2050
  %v2179 = vunpack.c.l.bf16 %v2051
  %v2180 = vunpack.c.l.bf16 %v2052
  %v2181 = vunpack.c.l.bf16 %v2053
  %v2182 = vunpack.c.l.bf16 %v2054
  %v2183 = vunpack.c.l.bf16 %v2055
  %v2184 = vunpack.c.l.bf16 %v2056
  %v2185 = vunpack.c.l.bf16 %v2057
  %v2186 = vunpack.c.l.bf16 %v2058
  %v2187 = vunpack.c.l.bf16 %v2059
  %v2188 = vunpack.c.l.bf16 %v2060
  %v2189 = vunpack.c.l.bf16 %v2061
  %v2190 = vunpack.c.l.bf16 %v2062
  %v2191 = vmax.f32 %v2063, %v2127
  %v2192 = vmax.f32 %v2064, %v2128
  %v2193 = vmax.f32 %v2065, %v2129
  %v2194 = vmax.f32 %v2066, %v2130
  %v2195 = vmax.f32 %v2067, %v2131
  %v2196 = vmax.f32 %v2068, %v2132
  %v2197 = vmax.f32 %v2069, %v2133
  %v2198 = vmax.f32 %v2070, %v2134
  %v2199 = vmax.f32 %v2071, %v2135
  %v2200 = vmax.f32 %v2072, %v2136
  %v2201 = vmax.f32 %v2073, %v2137
  %v2202 = vmax.f32 %v2074, %v2138
  %v2203 = vmax.f32 %v2075, %v2139
  %v2204 = vmax.f32 %v2076, %v2140
  %v2205 = vmax.f32 %v2077, %v2141
  %v2206 = vmax.f32 %v2078, %v2142
  %v2207 = vmax.f32 %v2079, %v2143
  %v2208 = vmax.f32 %v2080, %v2144
  %v2209 = vmax.f32 %v2081, %v2145
  %v2210 = vmax.f32 %v2082, %v2146
  %v2211 = vmax.f32 %v2083, %v2147
  %v2212 = vmax.f32 %v2084, %v2148
  %v2213 = vmax.f32 %v2085, %v2149
  %v2214 = vmax.f32 %v2086, %v2150
  %v2215 = vmax.f32 %v2087, %v2151
  %v2216 = vmax.f32 %v2088, %v2152
  %v2217 = vmax.f32 %v2089, %v2153
  %v2218 = vmax.f32 %v2090, %v2154
  %v2219 = vmax.f32 %v2091, %v2155
  %v2220 = vmax.f32 %v2092, %v2156
  %v2221 = vmax.f32 %v2093, %v2157
  %v2222 = vmax.f32 %v2094, %v2158
  %v2223 = vmax.f32 %v2095, %v2159
  %v2224 = vmax.f32 %v2096, %v2160
  %v2225 = vmax.f32 %v2097, %v2161
  %v2226 = vmax.f32 %v2098, %v2162
  %v2227 = vmax.f32 %v2099, %v2163
  %v2228 = vmax.f32 %v2100, %v2164
  %v2229 = vmax.f32 %v2101, %v2165
  %v2230 = vmax.f32 %v2102, %v2166
  %v2231 = vmax.f32 %v2103, %v2167
  %v2232 = vmax.f32 %v2104, %v2168
  %v2233 = vmax.f32 %v2105, %v2169
  %v2234 = vmax.f32 %v2106, %v2170
  %v2235 = vmax.f32 %v2107, %v2171
  %v2236 = vmax.f32 %v2108, %v2172
  %v2237 = vmax.f32 %v2109, %v2173
  %v2238 = vmax.f32 %v2110, %v2174
  %v2239 = vmax.f32 %v2111, %v2175
  %v2240 = vmax.f32 %v2112, %v2176
  %v2241 = vmax.f32 %v2113, %v2177
  %v2242 = vmax.f32 %v2114, %v2178
  %v2243 = vmax.f32 %v2115, %v2179
  %v2244 = vmax.f32 %v2116, %v2180
  %v2245 = vmax.f32 %v2117, %v2181
  %v2246 = vmax.f32 %v2118, %v2182
  %v2247 = vmax.f32 %v2119, %v2183
  %v2248 = vmax.f32 %v2120, %v2184
  %v2249 = vmax.f32 %v2121, %v2185
  %v2250 = vmax.f32 %v2122, %v2186
  %v2251 = vmax.f32 %v2123, %v2187
  %v2252 = vmax.f32 %v2124, %v2188
  %v2253 = vmax.f32 %v2125, %v2189
  %v2254 = vmax.f32 %v2126, %v2190
  %v2255 = vpack.c.bf16 %v2191, %v2191
  %v2256 = vpack.c.bf16 %v2192, %v2192
  %v2257 = vpack.c.bf16 %v2193, %v2193
  %v2258 = vpack.c.bf16 %v2194, %v2194
  %v2259 = vpack.c.bf16 %v2195, %v2195
  %v2260 = vpack.c.bf16 %v2196, %v2196
  %v2261 = vpack.c.bf16 %v2197, %v2197
  %v2262 = vpack.c.bf16 %v2198, %v2198
  %v2263 = vpack.c.bf16 %v2199, %v2199
  %v2264 = vpack.c.bf16 %v2200, %v2200
  %v2265 = vpack.c.bf16 %v2201, %v2201
  %v2266 = vpack.c.bf16 %v2202, %v2202
  %v2267 = vpack.c.bf16 %v2203, %v2203
  %v2268 = vpack.c.bf16 %v2204, %v2204
  %v2269 = vpack.c.bf16 %v2205, %v2205
  %v2270 = vpack.c.bf16 %v2206, %v2206
  %v2271 = vpack.c.bf16 %v2207, %v2207
  %v2272 = vpack.c.bf16 %v2208, %v2208
  %v2273 = vpack.c.bf16 %v2209, %v2209
  %v2274 = vpack.c.bf16 %v2210, %v2210
  %v2275 = vpack.c.bf16 %v2211, %v2211
  %v2276 = vpack.c.bf16 %v2212, %v2212
  %v2277 = vpack.c.bf16 %v2213, %v2213
  %v2278 = vpack.c.bf16 %v2214, %v2214
  %v2279 = vpack.c.bf16 %v2215, %v2215
  %v2280 = vpack.c.bf16 %v2216, %v2216
  %v2281 = vpack.c.bf16 %v2217, %v2217
  %v2282 = vpack.c.bf16 %v2218, %v2218
  %v2283 = vpack.c.bf16 %v2219, %v2219
  %v2284 = vpack.c.bf16 %v2220, %v2220
  %v2285 = vpack.c.bf16 %v2221, %v2221
  %v2286 = vpack.c.bf16 %v2222, %v2222
  %v2287 = vpack.c.bf16 %v2223, %v2223
  %v2288 = vpack.c.bf16 %v2224, %v2224
  %v2289 = vpack.c.bf16 %v2225, %v2225
  %v2290 = vpack.c.bf16 %v2226, %v2226
  %v2291 = vpack.c.bf16 %v2227, %v2227
  %v2292 = vpack.c.bf16 %v2228, %v2228
  %v2293 = vpack.c.bf16 %v2229, %v2229
  %v2294 = vpack.c.bf16 %v2230, %v2230
  %v2295 = vpack.c.bf16 %v2231, %v2231
  %v2296 = vpack.c.bf16 %v2232, %v2232
  %v2297 = vpack.c.bf16 %v2233, %v2233
  %v2298 = vpack.c.bf16 %v2234, %v2234
  %v2299 = vpack.c.bf16 %v2235, %v2235
  %v2300 = vpack.c.bf16 %v2236, %v2236
  %v2301 = vpack.c.bf16 %v2237, %v2237
  %v2302 = vpack.c.bf16 %v2238, %v2238
  %v2303 = vpack.c.bf16 %v2239, %v2239
  %v2304 = vpack.c.bf16 %v2240, %v2240
  %v2305 = vpack.c.bf16 %v2241, %v2241
  %v2306 = vpack.c.bf16 %v2242, %v2242
  %v2307 = vpack.c.bf16 %v2243, %v2243
  %v2308 = vpack.c.bf16 %v2244, %v2244
  %v2309 = vpack.c.bf16 %v2245, %v2245
  %v2310 = vpack.c.bf16 %v2246, %v2246
  %v2311 = vpack.c.bf16 %v2247, %v2247
  %v2312 = vpack.c.bf16 %v2248, %v2248
  %v2313 = vpack.c.bf16 %v2249, %v2249
  %v2314 = vpack.c.bf16 %v2250, %v2250
  %v2315 = vpack.c.bf16 %v2251, %v2251
  %v2316 = vpack.c.bf16 %v2252, %v2252
  %v2317 = vpack.c.bf16 %v2253, %v2253
  %v2318 = vpack.c.bf16 %v2254, %v2254
  %s2319 = scalar_lea.vmem %s0, 2048
  %v2320 = vld [vmem:[%s2319] sm:$0xf]
  %v2321 = vld [vmem:[%s2319 + $0x4] sm:$0xf]
  %v2322 = vld [vmem:[%s2319 + $0x8] sm:$0xf]
  %v2323 = vld [vmem:[%s2319 + $0xc] sm:$0xf]
  %v2324 = vld [vmem:[%s2319 + $0x10] sm:$0xf]
  %v2325 = vld [vmem:[%s2319 + $0x14] sm:$0xf]
  %v2326 = vld [vmem:[%s2319 + $0x18] sm:$0xf]
  %v2327 = vld [vmem:[%s2319 + $0x1c] sm:$0xf]
  %v2328 = vld [vmem:[%s2319 + $0x20] sm:$0xf]
  %v2329 = vld [vmem:[%s2319 + $0x24] sm:$0xf]
  %v2330 = vld [vmem:[%s2319 + $0x28] sm:$0xf]
  %v2331 = vld [vmem:[%s2319 + $0x2c] sm:$0xf]
  %v2332 = vld [vmem:[%s2319 + $0x30] sm:$0xf]
  %v2333 = vld [vmem:[%s2319 + $0x34] sm:$0xf]
  %v2334 = vld [vmem:[%s2319 + $0x38] sm:$0xf]
  %v2335 = vld [vmem:[%s2319 + $0x3c] sm:$0xf]
  %v2336 = vld [vmem:[%s2319 + $0x40] sm:$0xf]
  %v2337 = vld [vmem:[%s2319 + $0x44] sm:$0xf]
  %v2338 = vld [vmem:[%s2319 + $0x48] sm:$0xf]
  %v2339 = vld [vmem:[%s2319 + $0x4c] sm:$0xf]
  %v2340 = vld [vmem:[%s2319 + $0x50] sm:$0xf]
  %v2341 = vld [vmem:[%s2319 + $0x54] sm:$0xf]
  %v2342 = vld [vmem:[%s2319 + $0x58] sm:$0xf]
  %v2343 = vld [vmem:[%s2319 + $0x5c] sm:$0xf]
  %v2344 = vld [vmem:[%s2319 + $0x60] sm:$0xf]
  %v2345 = vld [vmem:[%s2319 + $0x64] sm:$0xf]
  %v2346 = vld [vmem:[%s2319 + $0x68] sm:$0xf]
  %v2347 = vld [vmem:[%s2319 + $0x6c] sm:$0xf]
  %v2348 = vld [vmem:[%s2319 + $0x70] sm:$0xf]
  %v2349 = vld [vmem:[%s2319 + $0x74] sm:$0xf]
  %v2350 = vld [vmem:[%s2319 + $0x78] sm:$0xf]
  %v2351 = vld [vmem:[%s2319 + $0x7c] sm:$0xf]
  %v2352 = vld [vmem:[%s2319 + $0x80] sm:$0xf]
  %v2353 = vld [vmem:[%s2319 + $0x84] sm:$0xf]
  %v2354 = vld [vmem:[%s2319 + $0x88] sm:$0xf]
  %v2355 = vld [vmem:[%s2319 + $0x8c] sm:$0xf]
  %v2356 = vld [vmem:[%s2319 + $0x90] sm:$0xf]
  %v2357 = vld [vmem:[%s2319 + $0x94] sm:$0xf]
  %v2358 = vld [vmem:[%s2319 + $0x98] sm:$0xf]
  %v2359 = vld [vmem:[%s2319 + $0x9c] sm:$0xf]
  %v2360 = vld [vmem:[%s2319 + $0xa0] sm:$0xf]
  %v2361 = vld [vmem:[%s2319 + $0xa4] sm:$0xf]
  %v2362 = vld [vmem:[%s2319 + $0xa8] sm:$0xf]
  %v2363 = vld [vmem:[%s2319 + $0xac] sm:$0xf]
  %v2364 = vld [vmem:[%s2319 + $0xb0] sm:$0xf]
  %v2365 = vld [vmem:[%s2319 + $0xb4] sm:$0xf]
  %v2366 = vld [vmem:[%s2319 + $0xb8] sm:$0xf]
  %v2367 = vld [vmem:[%s2319 + $0xbc] sm:$0xf]
  %v2368 = vld [vmem:[%s2319 + $0xc0] sm:$0xf]
  %v2369 = vld [vmem:[%s2319 + $0xc4] sm:$0xf]
  %v2370 = vld [vmem:[%s2319 + $0xc8] sm:$0xf]
  %v2371 = vld [vmem:[%s2319 + $0xcc] sm:$0xf]
  %v2372 = vld [vmem:[%s2319 + $0xd0] sm:$0xf]
  %v2373 = vld [vmem:[%s2319 + $0xd4] sm:$0xf]
  %v2374 = vld [vmem:[%s2319 + $0xd8] sm:$0xf]
  %v2375 = vld [vmem:[%s2319 + $0xdc] sm:$0xf]
  %v2376 = vld [vmem:[%s2319 + $0xe0] sm:$0xf]
  %v2377 = vld [vmem:[%s2319 + $0xe4] sm:$0xf]
  %v2378 = vld [vmem:[%s2319 + $0xe8] sm:$0xf]
  %v2379 = vld [vmem:[%s2319 + $0xec] sm:$0xf]
  %v2380 = vld [vmem:[%s2319 + $0xf0] sm:$0xf]
  %v2381 = vld [vmem:[%s2319 + $0xf4] sm:$0xf]
  %v2382 = vld [vmem:[%s2319 + $0xf8] sm:$0xf]
  %v2383 = vld [vmem:[%s2319 + $0xfc] sm:$0xf]
  %v2384 = vunpack.c.l.bf16 %v2255
  %v2385 = vunpack.c.l.bf16 %v2256
  %v2386 = vunpack.c.l.bf16 %v2257
  %v2387 = vunpack.c.l.bf16 %v2258
  %v2388 = vunpack.c.l.bf16 %v2259
  %v2389 = vunpack.c.l.bf16 %v2260
  %v2390 = vunpack.c.l.bf16 %v2261
  %v2391 = vunpack.c.l.bf16 %v2262
  %v2392 = vunpack.c.l.bf16 %v2263
  %v2393 = vunpack.c.l.bf16 %v2264
  %v2394 = vunpack.c.l.bf16 %v2265
  %v2395 = vunpack.c.l.bf16 %v2266
  %v2396 = vunpack.c.l.bf16 %v2267
  %v2397 = vunpack.c.l.bf16 %v2268
  %v2398 = vunpack.c.l.bf16 %v2269
  %v2399 = vunpack.c.l.bf16 %v2270
  %v2400 = vunpack.c.l.bf16 %v2271
  %v2401 = vunpack.c.l.bf16 %v2272
  %v2402 = vunpack.c.l.bf16 %v2273
  %v2403 = vunpack.c.l.bf16 %v2274
  %v2404 = vunpack.c.l.bf16 %v2275
  %v2405 = vunpack.c.l.bf16 %v2276
  %v2406 = vunpack.c.l.bf16 %v2277
  %v2407 = vunpack.c.l.bf16 %v2278
  %v2408 = vunpack.c.l.bf16 %v2279
  %v2409 = vunpack.c.l.bf16 %v2280
  %v2410 = vunpack.c.l.bf16 %v2281
  %v2411 = vunpack.c.l.bf16 %v2282
  %v2412 = vunpack.c.l.bf16 %v2283
  %v2413 = vunpack.c.l.bf16 %v2284
  %v2414 = vunpack.c.l.bf16 %v2285
  %v2415 = vunpack.c.l.bf16 %v2286
  %v2416 = vunpack.c.l.bf16 %v2287
  %v2417 = vunpack.c.l.bf16 %v2288
  %v2418 = vunpack.c.l.bf16 %v2289
  %v2419 = vunpack.c.l.bf16 %v2290
  %v2420 = vunpack.c.l.bf16 %v2291
  %v2421 = vunpack.c.l.bf16 %v2292
  %v2422 = vunpack.c.l.bf16 %v2293
  %v2423 = vunpack.c.l.bf16 %v2294
  %v2424 = vunpack.c.l.bf16 %v2295
  %v2425 = vunpack.c.l.bf16 %v2296
  %v2426 = vunpack.c.l.bf16 %v2297
  %v2427 = vunpack.c.l.bf16 %v2298
  %v2428 = vunpack.c.l.bf16 %v2299
  %v2429 = vunpack.c.l.bf16 %v2300
  %v2430 = vunpack.c.l.bf16 %v2301
  %v2431 = vunpack.c.l.bf16 %v2302
  %v2432 = vunpack.c.l.bf16 %v2303
  %v2433 = vunpack.c.l.bf16 %v2304
  %v2434 = vunpack.c.l.bf16 %v2305
  %v2435 = vunpack.c.l.bf16 %v2306
  %v2436 = vunpack.c.l.bf16 %v2307
  %v2437 = vunpack.c.l.bf16 %v2308
  %v2438 = vunpack.c.l.bf16 %v2309
  %v2439 = vunpack.c.l.bf16 %v2310
  %v2440 = vunpack.c.l.bf16 %v2311
  %v2441 = vunpack.c.l.bf16 %v2312
  %v2442 = vunpack.c.l.bf16 %v2313
  %v2443 = vunpack.c.l.bf16 %v2314
  %v2444 = vunpack.c.l.bf16 %v2315
  %v2445 = vunpack.c.l.bf16 %v2316
  %v2446 = vunpack.c.l.bf16 %v2317
  %v2447 = vunpack.c.l.bf16 %v2318
  %v2448 = vunpack.c.l.bf16 %v2320
  %v2449 = vunpack.c.l.bf16 %v2321
  %v2450 = vunpack.c.l.bf16 %v2322
  %v2451 = vunpack.c.l.bf16 %v2323
  %v2452 = vunpack.c.l.bf16 %v2324
  %v2453 = vunpack.c.l.bf16 %v2325
  %v2454 = vunpack.c.l.bf16 %v2326
  %v2455 = vunpack.c.l.bf16 %v2327
  %v2456 = vunpack.c.l.bf16 %v2328
  %v2457 = vunpack.c.l.bf16 %v2329
  %v2458 = vunpack.c.l.bf16 %v2330
  %v2459 = vunpack.c.l.bf16 %v2331
  %v2460 = vunpack.c.l.bf16 %v2332
  %v2461 = vunpack.c.l.bf16 %v2333
  %v2462 = vunpack.c.l.bf16 %v2334
  %v2463 = vunpack.c.l.bf16 %v2335
  %v2464 = vunpack.c.l.bf16 %v2336
  %v2465 = vunpack.c.l.bf16 %v2337
  %v2466 = vunpack.c.l.bf16 %v2338
  %v2467 = vunpack.c.l.bf16 %v2339
  %v2468 = vunpack.c.l.bf16 %v2340
  %v2469 = vunpack.c.l.bf16 %v2341
  %v2470 = vunpack.c.l.bf16 %v2342
  %v2471 = vunpack.c.l.bf16 %v2343
  %v2472 = vunpack.c.l.bf16 %v2344
  %v2473 = vunpack.c.l.bf16 %v2345
  %v2474 = vunpack.c.l.bf16 %v2346
  %v2475 = vunpack.c.l.bf16 %v2347
  %v2476 = vunpack.c.l.bf16 %v2348
  %v2477 = vunpack.c.l.bf16 %v2349
  %v2478 = vunpack.c.l.bf16 %v2350
  %v2479 = vunpack.c.l.bf16 %v2351
  %v2480 = vunpack.c.l.bf16 %v2352
  %v2481 = vunpack.c.l.bf16 %v2353
  %v2482 = vunpack.c.l.bf16 %v2354
  %v2483 = vunpack.c.l.bf16 %v2355
  %v2484 = vunpack.c.l.bf16 %v2356
  %v2485 = vunpack.c.l.bf16 %v2357
  %v2486 = vunpack.c.l.bf16 %v2358
  %v2487 = vunpack.c.l.bf16 %v2359
  %v2488 = vunpack.c.l.bf16 %v2360
  %v2489 = vunpack.c.l.bf16 %v2361
  %v2490 = vunpack.c.l.bf16 %v2362
  %v2491 = vunpack.c.l.bf16 %v2363
  %v2492 = vunpack.c.l.bf16 %v2364
  %v2493 = vunpack.c.l.bf16 %v2365
  %v2494 = vunpack.c.l.bf16 %v2366
  %v2495 = vunpack.c.l.bf16 %v2367
  %v2496 = vunpack.c.l.bf16 %v2368
  %v2497 = vunpack.c.l.bf16 %v2369
  %v2498 = vunpack.c.l.bf16 %v2370
  %v2499 = vunpack.c.l.bf16 %v2371
  %v2500 = vunpack.c.l.bf16 %v2372
  %v2501 = vunpack.c.l.bf16 %v2373
  %v2502 = vunpack.c.l.bf16 %v2374
  %v2503 = vunpack.c.l.bf16 %v2375
  %v2504 = vunpack.c.l.bf16 %v2376
  %v2505 = vunpack.c.l.bf16 %v2377
  %v2506 = vunpack.c.l.bf16 %v2378
  %v2507 = vunpack.c.l.bf16 %v2379
  %v2508 = vunpack.c.l.bf16 %v2380
  %v2509 = vunpack.c.l.bf16 %v2381
  %v2510 = vunpack.c.l.bf16 %v2382
  %v2511 = vunpack.c.l.bf16 %v2383
  %v2512 = vmax.f32 %v2384, %v2448
  %v2513 = vmax.f32 %v2385, %v2449
  %v2514 = vmax.f32 %v2386, %v2450
  %v2515 = vmax.f32 %v2387, %v2451
  %v2516 = vmax.f32 %v2388, %v2452
  %v2517 = vmax.f32 %v2389, %v2453
  %v2518 = vmax.f32 %v2390, %v2454
  %v2519 = vmax.f32 %v2391, %v2455
  %v2520 = vmax.f32 %v2392, %v2456
  %v2521 = vmax.f32 %v2393, %v2457
  %v2522 = vmax.f32 %v2394, %v2458
  %v2523 = vmax.f32 %v2395, %v2459
  %v2524 = vmax.f32 %v2396, %v2460
  %v2525 = vmax.f32 %v2397, %v2461
  %v2526 = vmax.f32 %v2398, %v2462
  %v2527 = vmax.f32 %v2399, %v2463
  %v2528 = vmax.f32 %v2400, %v2464
  %v2529 = vmax.f32 %v2401, %v2465
  %v2530 = vmax.f32 %v2402, %v2466
  %v2531 = vmax.f32 %v2403, %v2467
  %v2532 = vmax.f32 %v2404, %v2468
  %v2533 = vmax.f32 %v2405, %v2469
  %v2534 = vmax.f32 %v2406, %v2470
  %v2535 = vmax.f32 %v2407, %v2471
  %v2536 = vmax.f32 %v2408, %v2472
  %v2537 = vmax.f32 %v2409, %v2473
  %v2538 = vmax.f32 %v2410, %v2474
  %v2539 = vmax.f32 %v2411, %v2475
  %v2540 = vmax.f32 %v2412, %v2476
  %v2541 = vmax.f32 %v2413, %v2477
  %v2542 = vmax.f32 %v2414, %v2478
  %v2543 = vmax.f32 %v2415, %v2479
  %v2544 = vmax.f32 %v2416, %v2480
  %v2545 = vmax.f32 %v2417, %v2481
  %v2546 = vmax.f32 %v2418, %v2482
  %v2547 = vmax.f32 %v2419, %v2483
  %v2548 = vmax.f32 %v2420, %v2484
  %v2549 = vmax.f32 %v2421, %v2485
  %v2550 = vmax.f32 %v2422, %v2486
  %v2551 = vmax.f32 %v2423, %v2487
  %v2552 = vmax.f32 %v2424, %v2488
  %v2553 = vmax.f32 %v2425, %v2489
  %v2554 = vmax.f32 %v2426, %v2490
  %v2555 = vmax.f32 %v2427, %v2491
  %v2556 = vmax.f32 %v2428, %v2492
  %v2557 = vmax.f32 %v2429, %v2493
  %v2558 = vmax.f32 %v2430, %v2494
  %v2559 = vmax.f32 %v2431, %v2495
  %v2560 = vmax.f32 %v2432, %v2496
  %v2561 = vmax.f32 %v2433, %v2497
  %v2562 = vmax.f32 %v2434, %v2498
  %v2563 = vmax.f32 %v2435, %v2499
  %v2564 = vmax.f32 %v2436, %v2500
  %v2565 = vmax.f32 %v2437, %v2501
  %v2566 = vmax.f32 %v2438, %v2502
  %v2567 = vmax.f32 %v2439, %v2503
  %v2568 = vmax.f32 %v2440, %v2504
  %v2569 = vmax.f32 %v2441, %v2505
  %v2570 = vmax.f32 %v2442, %v2506
  %v2571 = vmax.f32 %v2443, %v2507
  %v2572 = vmax.f32 %v2444, %v2508
  %v2573 = vmax.f32 %v2445, %v2509
  %v2574 = vmax.f32 %v2446, %v2510
  %v2575 = vmax.f32 %v2447, %v2511
  %v2576 = vpack.c.bf16 %v2512, %v2512
  %v2577 = vpack.c.bf16 %v2513, %v2513
  %v2578 = vpack.c.bf16 %v2514, %v2514
  %v2579 = vpack.c.bf16 %v2515, %v2515
  %v2580 = vpack.c.bf16 %v2516, %v2516
  %v2581 = vpack.c.bf16 %v2517, %v2517
  %v2582 = vpack.c.bf16 %v2518, %v2518
  %v2583 = vpack.c.bf16 %v2519, %v2519
  %v2584 = vpack.c.bf16 %v2520, %v2520
  %v2585 = vpack.c.bf16 %v2521, %v2521
  %v2586 = vpack.c.bf16 %v2522, %v2522
  %v2587 = vpack.c.bf16 %v2523, %v2523
  %v2588 = vpack.c.bf16 %v2524, %v2524
  %v2589 = vpack.c.bf16 %v2525, %v2525
  %v2590 = vpack.c.bf16 %v2526, %v2526
  %v2591 = vpack.c.bf16 %v2527, %v2527
  %v2592 = vpack.c.bf16 %v2528, %v2528
  %v2593 = vpack.c.bf16 %v2529, %v2529
  %v2594 = vpack.c.bf16 %v2530, %v2530
  %v2595 = vpack.c.bf16 %v2531, %v2531
  %v2596 = vpack.c.bf16 %v2532, %v2532
  %v2597 = vpack.c.bf16 %v2533, %v2533
  %v2598 = vpack.c.bf16 %v2534, %v2534
  %v2599 = vpack.c.bf16 %v2535, %v2535
  %v2600 = vpack.c.bf16 %v2536, %v2536
  %v2601 = vpack.c.bf16 %v2537, %v2537
  %v2602 = vpack.c.bf16 %v2538, %v2538
  %v2603 = vpack.c.bf16 %v2539, %v2539
  %v2604 = vpack.c.bf16 %v2540, %v2540
  %v2605 = vpack.c.bf16 %v2541, %v2541
  %v2606 = vpack.c.bf16 %v2542, %v2542
  %v2607 = vpack.c.bf16 %v2543, %v2543
  %v2608 = vpack.c.bf16 %v2544, %v2544
  %v2609 = vpack.c.bf16 %v2545, %v2545
  %v2610 = vpack.c.bf16 %v2546, %v2546
  %v2611 = vpack.c.bf16 %v2547, %v2547
  %v2612 = vpack.c.bf16 %v2548, %v2548
  %v2613 = vpack.c.bf16 %v2549, %v2549
  %v2614 = vpack.c.bf16 %v2550, %v2550
  %v2615 = vpack.c.bf16 %v2551, %v2551
  %v2616 = vpack.c.bf16 %v2552, %v2552
  %v2617 = vpack.c.bf16 %v2553, %v2553
  %v2618 = vpack.c.bf16 %v2554, %v2554
  %v2619 = vpack.c.bf16 %v2555, %v2555
  %v2620 = vpack.c.bf16 %v2556, %v2556
  %v2621 = vpack.c.bf16 %v2557, %v2557
  %v2622 = vpack.c.bf16 %v2558, %v2558
  %v2623 = vpack.c.bf16 %v2559, %v2559
  %v2624 = vpack.c.bf16 %v2560, %v2560
  %v2625 = vpack.c.bf16 %v2561, %v2561
  %v2626 = vpack.c.bf16 %v2562, %v2562
  %v2627 = vpack.c.bf16 %v2563, %v2563
  %v2628 = vpack.c.bf16 %v2564, %v2564
  %v2629 = vpack.c.bf16 %v2565, %v2565
  %v2630 = vpack.c.bf16 %v2566, %v2566
  %v2631 = vpack.c.bf16 %v2567, %v2567
  %v2632 = vpack.c.bf16 %v2568, %v2568
  %v2633 = vpack.c.bf16 %v2569, %v2569
  %v2634 = vpack.c.bf16 %v2570, %v2570
  %v2635 = vpack.c.bf16 %v2571, %v2571
  %v2636 = vpack.c.bf16 %v2572, %v2572
  %v2637 = vpack.c.bf16 %v2573, %v2573
  %v2638 = vpack.c.bf16 %v2574, %v2574
  %v2639 = vpack.c.bf16 %v2575, %v2575
  %vm2640 = vcmask 519168
  %2641 = vst.msk [vmem:[%s1] sm:$0xf] %vm2640, %v2576
  %2642 = vst.msk [vmem:[%s1 + $0x4] sm:$0xf] %vm2640, %v2577
  %2643 = vst.msk [vmem:[%s1 + $0x8] sm:$0xf] %vm2640, %v2578
  %2644 = vst.msk [vmem:[%s1 + $0xc] sm:$0xf] %vm2640, %v2579
  %2645 = vst.msk [vmem:[%s1 + $0x10] sm:$0xf] %vm2640, %v2580
  %2646 = vst.msk [vmem:[%s1 + $0x14] sm:$0xf] %vm2640, %v2581
  %2647 = vst.msk [vmem:[%s1 + $0x18] sm:$0xf] %vm2640, %v2582
  %2648 = vst.msk [vmem:[%s1 + $0x1c] sm:$0xf] %vm2640, %v2583
  %2649 = vst.msk [vmem:[%s1 + $0x20] sm:$0xf] %vm2640, %v2584
  %2650 = vst.msk [vmem:[%s1 + $0x24] sm:$0xf] %vm2640, %v2585
  %2651 = vst.msk [vmem:[%s1 + $0x28] sm:$0xf] %vm2640, %v2586
  %2652 = vst.msk [vmem:[%s1 + $0x2c] sm:$0xf] %vm2640, %v2587
  %2653 = vst.msk [vmem:[%s1 + $0x30] sm:$0xf] %vm2640, %v2588
  %2654 = vst.msk [vmem:[%s1 + $0x34] sm:$0xf] %vm2640, %v2589
  %2655 = vst.msk [vmem:[%s1 + $0x38] sm:$0xf] %vm2640, %v2590
  %2656 = vst.msk [vmem:[%s1 + $0x3c] sm:$0xf] %vm2640, %v2591
  %2657 = vst.msk [vmem:[%s1 + $0x40] sm:$0xf] %vm2640, %v2592
  %2658 = vst.msk [vmem:[%s1 + $0x44] sm:$0xf] %vm2640, %v2593
  %2659 = vst.msk [vmem:[%s1 + $0x48] sm:$0xf] %vm2640, %v2594
  %2660 = vst.msk [vmem:[%s1 + $0x4c] sm:$0xf] %vm2640, %v2595
  %2661 = vst.msk [vmem:[%s1 + $0x50] sm:$0xf] %vm2640, %v2596
  %2662 = vst.msk [vmem:[%s1 + $0x54] sm:$0xf] %vm2640, %v2597
  %2663 = vst.msk [vmem:[%s1 + $0x58] sm:$0xf] %vm2640, %v2598
  %2664 = vst.msk [vmem:[%s1 + $0x5c] sm:$0xf] %vm2640, %v2599
  %2665 = vst.msk [vmem:[%s1 + $0x60] sm:$0xf] %vm2640, %v2600
  %2666 = vst.msk [vmem:[%s1 + $0x64] sm:$0xf] %vm2640, %v2601
  %2667 = vst.msk [vmem:[%s1 + $0x68] sm:$0xf] %vm2640, %v2602
  %2668 = vst.msk [vmem:[%s1 + $0x6c] sm:$0xf] %vm2640, %v2603
  %2669 = vst.msk [vmem:[%s1 + $0x70] sm:$0xf] %vm2640, %v2604
  %2670 = vst.msk [vmem:[%s1 + $0x74] sm:$0xf] %vm2640, %v2605
  %2671 = vst.msk [vmem:[%s1 + $0x78] sm:$0xf] %vm2640, %v2606
  %2672 = vst.msk [vmem:[%s1 + $0x7c] sm:$0xf] %vm2640, %v2607
  %2673 = vst.msk [vmem:[%s1 + $0x80] sm:$0xf] %vm2640, %v2608
  %2674 = vst.msk [vmem:[%s1 + $0x84] sm:$0xf] %vm2640, %v2609
  %2675 = vst.msk [vmem:[%s1 + $0x88] sm:$0xf] %vm2640, %v2610
  %2676 = vst.msk [vmem:[%s1 + $0x8c] sm:$0xf] %vm2640, %v2611
  %2677 = vst.msk [vmem:[%s1 + $0x90] sm:$0xf] %vm2640, %v2612
  %2678 = vst.msk [vmem:[%s1 + $0x94] sm:$0xf] %vm2640, %v2613
  %2679 = vst.msk [vmem:[%s1 + $0x98] sm:$0xf] %vm2640, %v2614
  %2680 = vst.msk [vmem:[%s1 + $0x9c] sm:$0xf] %vm2640, %v2615
  %2681 = vst.msk [vmem:[%s1 + $0xa0] sm:$0xf] %vm2640, %v2616
  %2682 = vst.msk [vmem:[%s1 + $0xa4] sm:$0xf] %vm2640, %v2617
  %2683 = vst.msk [vmem:[%s1 + $0xa8] sm:$0xf] %vm2640, %v2618
  %2684 = vst.msk [vmem:[%s1 + $0xac] sm:$0xf] %vm2640, %v2619
  %2685 = vst.msk [vmem:[%s1 + $0xb0] sm:$0xf] %vm2640, %v2620
  %2686 = vst.msk [vmem:[%s1 + $0xb4] sm:$0xf] %vm2640, %v2621
  %2687 = vst.msk [vmem:[%s1 + $0xb8] sm:$0xf] %vm2640, %v2622
  %2688 = vst.msk [vmem:[%s1 + $0xbc] sm:$0xf] %vm2640, %v2623
  %2689 = vst.msk [vmem:[%s1 + $0xc0] sm:$0xf] %vm2640, %v2624
  %2690 = vst.msk [vmem:[%s1 + $0xc4] sm:$0xf] %vm2640, %v2625
  %2691 = vst.msk [vmem:[%s1 + $0xc8] sm:$0xf] %vm2640, %v2626
  %2692 = vst.msk [vmem:[%s1 + $0xcc] sm:$0xf] %vm2640, %v2627
  %2693 = vst.msk [vmem:[%s1 + $0xd0] sm:$0xf] %vm2640, %v2628
  %2694 = vst.msk [vmem:[%s1 + $0xd4] sm:$0xf] %vm2640, %v2629
  %2695 = vst.msk [vmem:[%s1 + $0xd8] sm:$0xf] %vm2640, %v2630
  %2696 = vst.msk [vmem:[%s1 + $0xdc] sm:$0xf] %vm2640, %v2631
  %2697 = vst.msk [vmem:[%s1 + $0xe0] sm:$0xf] %vm2640, %v2632
  %2698 = vst.msk [vmem:[%s1 + $0xe4] sm:$0xf] %vm2640, %v2633
  %2699 = vst.msk [vmem:[%s1 + $0xe8] sm:$0xf] %vm2640, %v2634
  %2700 = vst.msk [vmem:[%s1 + $0xec] sm:$0xf] %vm2640, %v2635
  %2701 = vst.msk [vmem:[%s1 + $0xf0] sm:$0xf] %vm2640, %v2636
  %2702 = vst.msk [vmem:[%s1 + $0xf4] sm:$0xf] %vm2640, %v2637
  %2703 = vst.msk [vmem:[%s1 + $0xf8] sm:$0xf] %vm2640, %v2638
  %2704 = vst.msk [vmem:[%s1 + $0xfc] sm:$0xf] %vm2640, %v2639
  // Predicated region
  $region6: #{resnext_ida_forward.23} parent=0 // pred_check
    _
  $region7: #{resnext_ida_forward.23} parent=0 // pred_check_branch
    %2706 = sbr.rel (0) target = $region9
  $region8: #{resnext_ida_forward.23} parent=0 // pred_region
    _
  $region9: #{resnext_ida_forward.23} parent=0 // pred_fallthru
    _
  // Predicated region
  $region10: #{resnext_ida_forward.23} parent=0 // pred_check
    _
  $region11: #{resnext_ida_forward.23} parent=0 // pred_check_branch
    %2708 = sbr.rel (0) target = $region13
  $region12: #{resnext_ida_forward.23} parent=0 // pred_region
    _
  $region13: #{resnext_ida_forward.23} parent=0 // pred_fallthru
    _

// kernel: resnext_ida_forward.25
$region0: #{resnext_ida_forward.25}
  #allocation0 [shape = 'u32[]', space=smem, size = 0x4, offset = 0x4, fixed_abs, tag = 'smem constant byte address 0x4 - core index']
  #allocation1 [shape = 'u32[72,128]{1,0:T(1,128)}', space=vmem, size = 0x9000, scoped, tag = 'internal scratch']
  %s0 = inlined_call_operand.vmem [shape: bf16[128,288], index: 0, kind: input, shape index: {}]
  %s1 = inlined_call_operand.vmem [shape: bf16[128,64], index: 1, kind: input, shape index: {}]
  %s2 = inlined_call_operand.vmem [shape: bf16[288,32], index: 2, kind: input, shape index: {}]
  %s3 = inlined_call_operand.vmem [shape: bf16[32,64], index: 3, kind: input, shape index: {}]
  %s4 = inlined_call_operand.vmem [shape: bf16[64,64], index: 4, kind: input, shape index: {}]
  %s5 = inlined_call_operand.vmem [shape: f32[1,32], index: 5, kind: input, shape index: {}]
  %s6 = inlined_call_operand.vmem [shape: f32[1,32], index: 6, kind: input, shape index: {}]
  %s7 = inlined_call_operand.vmem [shape: f32[1,64], index: 7, kind: input, shape index: {}]
  %s8 = inlined_call_operand.vmem [shape: f32[1,64], index: 8, kind: input, shape index: {}]
  %s9 = inlined_call_operand.vmem [shape: f32[1,64], index: 9, kind: input, shape index: {}]
  %s10 = inlined_call_operand.vmem [shape: f32[1,64], index: 10, kind: input, shape index: {}]
  %s11 = inlined_call_operand.vmem [shape: bf16[128,64], index: 11, kind: output, shape index: {}]
  %s12 = sld [smem:[#allocation0]]
  $region54: #{resnext_ida_forward.25} parent=0
    _
  %s14 = ssub.s32 1, %s12
  %s15 = scalar_select 0, %s14, %s12
  // Predicated region
  $region2: #{resnext_ida_forward.25} parent=0 // pred_check
    _
  $region3: #{resnext_ida_forward.25} parent=0 // pred_check_branch
    %17 = sbr.rel (0) target = $region5
  $region4: #{resnext_ida_forward.25} parent=0 // pred_region
    _
  $region5: #{resnext_ida_forward.25} parent=0 // pred_fallthru
    _
  // Predicated region
  $region6: #{resnext_ida_forward.25} parent=0 // pred_check
    _
  $region7: #{resnext_ida_forward.25} parent=0 // pred_check_branch
    %19 = sbr.rel (0) target = $region9
  $region8: #{resnext_ida_forward.25} parent=0 // pred_region
    _
  $region9: #{resnext_ida_forward.25} parent=0 // pred_fallthru
    _
  // Predicated region
  $region10: #{resnext_ida_forward.25} parent=0 // pred_check
    _
  $region11: #{resnext_ida_forward.25} parent=0 // pred_check_branch
    %21 = sbr.rel (0) target = $region13
  $region12: #{resnext_ida_forward.25} parent=0 // pred_region
    _
  $region13: #{resnext_ida_forward.25} parent=0 // pred_fallthru
    _
  // Predicated region
  $region14: #{resnext_ida_forward.25} parent=0 // pred_check
    _
  $region15: #{resnext_ida_forward.25} parent=0 // pred_check_branch
    %23 = sbr.rel (0) target = $region17
  $region16: #{resnext_ida_forward.25} parent=0 // pred_region
    _
  $region17: #{resnext_ida_forward.25} parent=0 // pred_fallthru
    _
  // Predicated region
  $region18: #{resnext_ida_forward.25} parent=0 // pred_check
    _
  $region19: #{resnext_ida_forward.25} parent=0 // pred_check_branch
    %25 = sbr.rel (0) target = $region21
  $region20: #{resnext_ida_forward.25} parent=0 // pred_region
    _
  $region21: #{resnext_ida_forward.25} parent=0 // pred_fallthru
    _
  // Predicated region
  $region22: #{resnext_ida_forward.25} parent=0 // pred_check
    _
  $region23: #{resnext_ida_forward.25} parent=0 // pred_check_branch
    %27 = sbr.rel (0) target = $region25
  $region24: #{resnext_ida_forward.25} parent=0 // pred_region
    _
  $region25: #{resnext_ida_forward.25} parent=0 // pred_fallthru
    _
  // Predicated region
  $region26: #{resnext_ida_forward.25} parent=0 // pred_check
    _
  $region27: #{resnext_ida_forward.25} parent=0 // pred_check_branch
    %29 = sbr.rel (0) target = $region29
  $region28: #{resnext_ida_forward.25} parent=0 // pred_region
    _
  $region29: #{resnext_ida_forward.25} parent=0 // pred_fallthru
    _
  // Predicated region
  $region30: #{resnext_ida_forward.25} parent=0 // pred_check
    _
  $region31: #{resnext_ida_forward.25} parent=0 // pred_check_branch
    %31 = sbr.rel (0) target = $region33
  $region32: #{resnext_ida_forward.25} parent=0 // pred_region
    _
  $region33: #{resnext_ida_forward.25} parent=0 // pred_fallthru
    _
  // Predicated region
  $region34: #{resnext_ida_forward.25} parent=0 // pred_check
    _
  $region35: #{resnext_ida_forward.25} parent=0 // pred_check_branch
    %33 = sbr.rel (0) target = $region37
  $region36: #{resnext_ida_forward.25} parent=0 // pred_region
    _
  $region37: #{resnext_ida_forward.25} parent=0 // pred_fallthru
    _
  // Predicated region
  $region38: #{resnext_ida_forward.25} parent=0 // pred_check
    _
  $region39: #{resnext_ida_forward.25} parent=0 // pred_check_branch
    %35 = sbr.rel (0) target = $region41
  $region40: #{resnext_ida_forward.25} parent=0 // pred_region
    _
  $region41: #{resnext_ida_forward.25} parent=0 // pred_fallthru
    _
  // Predicated region
  $region42: #{resnext_ida_forward.25} parent=0 // pred_check
    _
  $region43: #{resnext_ida_forward.25} parent=0 // pred_check_branch
    %37 = sbr.rel (0) target = $region45
  $region44: #{resnext_ida_forward.25} parent=0 // pred_region
    _
  $region45: #{resnext_ida_forward.25} parent=0 // pred_fallthru
    _
  %v39 = vld [vmem:[%s0] sm:$0xff]
  %v40 = vld [vmem:[%s0 + $0x8] sm:$0xf]
  %v41 = vld [vmem:[%s0 + $0xc] sm:$0xff]
  %v42 = vld [vmem:[%s0 + $0x14] sm:$0xf]
  %v43 = vld [vmem:[%s0 + $0x18] sm:$0xff]
  %v44 = vld [vmem:[%s0 + $0x20] sm:$0xf]
  %v45 = vld [vmem:[%s0 + $0x24] sm:$0xff]
  %v46 = vld [vmem:[%s0 + $0x2c] sm:$0xf]
  %v47 = vld [vmem:[%s0 + $0x30] sm:$0xff]
  %v48 = vld [vmem:[%s0 + $0x38] sm:$0xf]
  %v49 = vld [vmem:[%s0 + $0x3c] sm:$0xff]
  %v50 = vld [vmem:[%s0 + $0x44] sm:$0xf]
  %v51 = vld [vmem:[%s0 + $0x48] sm:$0xff]
  %v52 = vld [vmem:[%s0 + $0x50] sm:$0xf]
  %v53 = vld [vmem:[%s0 + $0x54] sm:$0xff]
  %v54 = vld [vmem:[%s0 + $0x5c] sm:$0xf]
  %v55 = vld [vmem:[%s0 + $0x60] sm:$0xff]
  %v56 = vld [vmem:[%s0 + $0x68] sm:$0xf]
  %v57 = vld [vmem:[%s0 + $0x6c] sm:$0xff]
  %v58 = vld [vmem:[%s0 + $0x74] sm:$0xf]
  %v59 = vld [vmem:[%s0 + $0x78] sm:$0xff]
  %v60 = vld [vmem:[%s0 + $0x80] sm:$0xf]
  %v61 = vld [vmem:[%s0 + $0x84] sm:$0xff]
  %v62 = vld [vmem:[%s0 + $0x8c] sm:$0xf]
  %v63 = vld [vmem:[%s0 + $0x90] sm:$0xff]
  %v64 = vld [vmem:[%s0 + $0x98] sm:$0xf]
  %v65 = vld [vmem:[%s0 + $0x9c] sm:$0xff]
  %v66 = vld [vmem:[%s0 + $0xa4] sm:$0xf]
  %v67 = vld [vmem:[%s0 + $0xa8] sm:$0xff]
  %v68 = vld [vmem:[%s0 + $0xb0] sm:$0xf]
  %v69 = vld [vmem:[%s0 + $0xb4] sm:$0xff]
  %v70 = vld [vmem:[%s0 + $0xbc] sm:$0xf]
  %v71 = vld [vmem:[%s2] sm:$0xf]
  %v72 = vld [vmem:[%s2 + $0x4] sm:$0xf]
  %v73 = vld [vmem:[%s2 + $0x8] sm:$0xf]
  %v74 = vld [vmem:[%s2 + $0xc] sm:$0xf]
  %v75 = vld [vmem:[%s2 + $0x10] sm:$0xf]
  %v76 = vld [vmem:[%s2 + $0x14] sm:$0xf]
  %v77 = vld [vmem:[%s2 + $0x18] sm:$0xf]
  %v78 = vld [vmem:[%s2 + $0x1c] sm:$0xf]
  %v79 = vld [vmem:[%s2 + $0x20] sm:$0xf]
  %v80 = vld [vmem:[%s2 + $0x24] sm:$0xf]
  %v81 = vld [vmem:[%s2 + $0x28] sm:$0xf]
  %v82 = vld [vmem:[%s2 + $0x2c] sm:$0xf]
  %v83 = vld [vmem:[%s2 + $0x30] sm:$0xf]
  %v84 = vld [vmem:[%s2 + $0x34] sm:$0xf]
  %v85 = vld [vmem:[%s2 + $0x38] sm:$0xf]
  %v86 = vld [vmem:[%s2 + $0x3c] sm:$0xf]
  %v87 = vld [vmem:[%s2 + $0x40] sm:$0xf]
  %v88 = vld [vmem:[%s2 + $0x44] sm:$0xf]
  %v89 = vld [vmem:[%s2 + $0x48] sm:$0xf]
  %v90 = vld [vmem:[%s2 + $0x4c] sm:$0xf]
  %v91 = vld [vmem:[%s2 + $0x50] sm:$0xf]
  %v92 = vld [vmem:[%s2 + $0x54] sm:$0xf]
  %v93 = vld [vmem:[%s2 + $0x58] sm:$0xf]
  %v94 = vld [vmem:[%s2 + $0x5c] sm:$0xf]
  %v95 = vld [vmem:[%s2 + $0x60] sm:$0xf]
  %v96 = vld [vmem:[%s2 + $0x64] sm:$0xf]
  %v97 = vld [vmem:[%s2 + $0x68] sm:$0xf]
  %v98 = vld [vmem:[%s2 + $0x6c] sm:$0xf]
  %v99 = vld [vmem:[%s2 + $0x70] sm:$0xf]
  %v100 = vld [vmem:[%s2 + $0x74] sm:$0xf]
  %v101 = vld [vmem:[%s2 + $0x78] sm:$0xf]
  %v102 = vld [vmem:[%s2 + $0x7c] sm:$0xf]
  %v103 = vld [vmem:[%s2 + $0x80] sm:$0xf]
  %v104 = vld [vmem:[%s2 + $0x84] sm:$0xf]
  %v105 = vld [vmem:[%s2 + $0x88] sm:$0xf]
  %v106 = vld [vmem:[%s2 + $0x8c] sm:$0xf]
  %v139 = vunpack.c.l.b16 %v39
  %v140 = vunpack.c.h.b16 %v39
  %v141 = vunpack.c.l.b16 %v40
  %v142 = vunpack.c.l.b16 %v41
  %v143 = vunpack.c.h.b16 %v41
  %v144 = vunpack.c.l.b16 %v42
  %v145 = vunpack.c.l.b16 %v43
  %v146 = vunpack.c.h.b16 %v43
  %v147 = vunpack.c.l.b16 %v44
  %v148 = vunpack.c.l.b16 %v45
  %v149 = vunpack.c.h.b16 %v45
  %v150 = vunpack.c.l.b16 %v46
  %v151 = vunpack.c.l.b16 %v47
  %v152 = vunpack.c.h.b16 %v47
  %v153 = vunpack.c.l.b16 %v48
  %v154 = vunpack.c.l.b16 %v49
  %v155 = vunpack.c.h.b16 %v49
  %v156 = vunpack.c.l.b16 %v50
  %v157 = vunpack.c.l.b16 %v51
  %v158 = vunpack.c.h.b16 %v51
  %v159 = vunpack.c.l.b16 %v52
  %v160 = vunpack.c.l.b16 %v53
  %v161 = vunpack.c.h.b16 %v53
  %v162 = vunpack.c.l.b16 %v54
  %v163 = vunpack.c.l.b16 %v55
  %v164 = vunpack.c.h.b16 %v55
  %v165 = vunpack.c.l.b16 %v56
  %v166 = vunpack.c.l.b16 %v57
  %v167 = vunpack.c.h.b16 %v57
  %v168 = vunpack.c.l.b16 %v58
  %v169 = vunpack.c.l.b16 %v59
  %v170 = vunpack.c.h.b16 %v59
  %v171 = vunpack.c.l.b16 %v60
  %v172 = vunpack.c.l.b16 %v61
  %v173 = vunpack.c.h.b16 %v61
  %v174 = vunpack.c.l.b16 %v62
  %v175 = vunpack.c.l.b16 %v63
  %v176 = vunpack.c.h.b16 %v63
  %v177 = vunpack.c.l.b16 %v64
  %v178 = vunpack.c.l.b16 %v65
  %v179 = vunpack.c.h.b16 %v65
  %v180 = vunpack.c.l.b16 %v66
  %v181 = vunpack.c.l.b16 %v67
  %v182 = vunpack.c.h.b16 %v67
  %v183 = vunpack.c.l.b16 %v68
  %v184 = vunpack.c.l.b16 %v69
  %v185 = vunpack.c.h.b16 %v69
  %v186 = vunpack.c.l.b16 %v70
  %v187 = vpack.c.b16 %v142, %v139
  %v188 = vpack.c.b16 %v143, %v140
  %v189 = vpack.c.b16 %v144, %v141
  %v190 = vpack.c.b16 %v148, %v145
  %v191 = vpack.c.b16 %v149, %v146
  %v192 = vpack.c.b16 %v150, %v147
  %v193 = vpack.c.b16 %v154, %v151
  %v194 = vpack.c.b16 %v155, %v152
  %v195 = vpack.c.b16 %v156, %v153
  %v196 = vpack.c.b16 %v160, %v157
  %v197 = vpack.c.b16 %v161, %v158
  %v198 = vpack.c.b16 %v162, %v159
  %v199 = vpack.c.b16 %v166, %v163
  %v200 = vpack.c.b16 %v167, %v164
  %v201 = vpack.c.b16 %v168, %v165
  %v202 = vpack.c.b16 %v172, %v169
  %v203 = vpack.c.b16 %v173, %v170
  %v204 = vpack.c.b16 %v174, %v171
  %v205 = vpack.c.b16 %v178, %v175
  %v206 = vpack.c.b16 %v179, %v176
  %v207 = vpack.c.b16 %v180, %v177
  %v208 = vpack.c.b16 %v184, %v181
  %v209 = vpack.c.b16 %v185, %v182
  %v210 = vpack.c.b16 %v186, %v183
  %v263 = vunpack.c.l.b16 %v71
  %v264 = vunpack.c.l.b16 %v72
  %v265 = vunpack.c.l.b16 %v73
  %v266 = vunpack.c.l.b16 %v74
  %v267 = vunpack.c.l.b16 %v75
  %v268 = vunpack.c.l.b16 %v76
  %v269 = vunpack.c.l.b16 %v77
  %v270 = vunpack.c.l.b16 %v78
  %v271 = vunpack.c.l.b16 %v79
  %v272 = vunpack.c.l.b16 %v80
  %v273 = vunpack.c.l.b16 %v81
  %v274 = vunpack.c.l.b16 %v82
  %v275 = vunpack.c.l.b16 %v83
  %v276 = vunpack.c.l.b16 %v84
  %v277 = vunpack.c.l.b16 %v85
  %v278 = vunpack.c.l.b16 %v86
  %v279 = vunpack.c.l.b16 %v87
  %v280 = vunpack.c.l.b16 %v88
  %v281 = vunpack.c.l.b16 %v89
  %v282 = vunpack.c.l.b16 %v90
  %v283 = vunpack.c.l.b16 %v91
  %v284 = vunpack.c.l.b16 %v92
  %v285 = vunpack.c.l.b16 %v93
  %v286 = vunpack.c.l.b16 %v94
  %v287 = vunpack.c.l.b16 %v95
  %v288 = vunpack.c.l.b16 %v96
  %v289 = vunpack.c.l.b16 %v97
  %v290 = vunpack.c.l.b16 %v98
  %v291 = vunpack.c.l.b16 %v99
  %v292 = vunpack.c.l.b16 %v100
  %v293 = vunpack.c.l.b16 %v101
  %v294 = vunpack.c.l.b16 %v102
  %v295 = vunpack.c.l.b16 %v103
  %v296 = vunpack.c.l.b16 %v104
  %v297 = vunpack.c.l.b16 %v105
  %v298 = vunpack.c.l.b16 %v106
  %v299 = vpack.c.b16 %v264, %v263
  %v300 = vpack.c.b16 %v266, %v265
  %v301 = vpack.c.b16 %v268, %v267
  %v302 = vpack.c.b16 %v270, %v269
  %v303 = vpack.c.b16 %v272, %v271
  %v304 = vpack.c.b16 %v274, %v273
  %v305 = vpack.c.b16 %v276, %v275
  %v306 = vpack.c.b16 %v278, %v277
  %v307 = vpack.c.b16 %v280, %v279
  %v308 = vpack.c.b16 %v282, %v281
  %v309 = vpack.c.b16 %v284, %v283
  %v310 = vpack.c.b16 %v286, %v285
  %v311 = vpack.c.b16 %v288, %v287
  %v312 = vpack.c.b16 %v290, %v289
  %v313 = vpack.c.b16 %v292, %v291
  %v314 = vpack.c.b16 %v294, %v293
  %v315 = vpack.c.b16 %v296, %v295
  %v316 = vpack.c.b16 %v298, %v297
  %vm335 = vcmask 261120
  %v337 = vsel %vm335, %v189, 0
  %v340 = vsel %vm335, %v192, 0
  %v343 = vsel %vm335, %v195, 0
  %v346 = vsel %vm335, %v198, 0
  %v349 = vsel %vm335, %v201, 0
  %v352 = vsel %vm335, %v204, 0
  %v355 = vsel %vm335, %v207, 0
  %v358 = vsel %vm335, %v210, 0
  %360 = vmatpush.bf16.msra.mxu0 %v306
  %361 = vmatpush.bf16.msra.mxu0 %v305
  %362 = vmatpush.bf16.msra.mxu0 %v304
  %363 = vmatpush.bf16.msra.mxu0 %v303
  %364 = vmatpush.bf16.msra.mxu0 %v302
  %365 = vmatpush.bf16.msra.mxu0 %v301
  %366 = vmatpush.bf16.msra.mxu0 %v300
  %367 = vmatpush.bf16.msra.mxu0 %v299
  %368 = vmatmul.bf16.gmra.mxu0 %v187
  %v369 = vpop.f32.mrf.mxu0
  %v370 = vadd.f32 0.0, %v369
  %v371 = vpop.f32.mrf.mxu0
  %v372 = vadd.f32 0.0, %v371
  %373 = vmatmul.bf16.gmra.mxu0 %v190
  %v374 = vpop.f32.mrf.mxu0
  %v375 = vadd.f32 0.0, %v374
  %v376 = vpop.f32.mrf.mxu0
  %v377 = vadd.f32 0.0, %v376
  %378 = vmatmul.bf16.gmra.mxu0 %v193
  %v379 = vpop.f32.mrf.mxu0
  %v380 = vadd.f32 0.0, %v379
  %v381 = vpop.f32.mrf.mxu0
  %v382 = vadd.f32 0.0, %v381
  %383 = vmatmul.bf16.gmra.mxu0 %v196
  %v384 = vpop.f32.mrf.mxu0
  %v385 = vadd.f32 0.0, %v384
  %v386 = vpop.f32.mrf.mxu0
  %v387 = vadd.f32 0.0, %v386
  %388 = vmatmul.bf16.gmra.mxu0 %v199
  %v389 = vpop.f32.mrf.mxu0
  %v390 = vadd.f32 0.0, %v389
  %v391 = vpop.f32.mrf.mxu0
  %v392 = vadd.f32 0.0, %v391
  %393 = vmatmul.bf16.gmra.mxu0 %v202
  %v394 = vpop.f32.mrf.mxu0
  %v395 = vadd.f32 0.0, %v394
  %v396 = vpop.f32.mrf.mxu0
  %v397 = vadd.f32 0.0, %v396
  %398 = vmatmul.bf16.gmra.mxu0 %v205
  %v399 = vpop.f32.mrf.mxu0
  %v400 = vadd.f32 0.0, %v399
  %v401 = vpop.f32.mrf.mxu0
  %v402 = vadd.f32 0.0, %v401
  %403 = vmatmul.bf16.gmra.mxu0 %v208
  %v404 = vpop.f32.mrf.mxu0
  %v405 = vadd.f32 0.0, %v404
  %v406 = vpop.f32.mrf.mxu0
  %v407 = vadd.f32 0.0, %v406
  %408 = vdwg.mxu0
  %409 = vmatpush.bf16.msra.mxu0 %v314
  %410 = vmatpush.bf16.msra.mxu0 %v313
  %411 = vmatpush.bf16.msra.mxu0 %v312
  %412 = vmatpush.bf16.msra.mxu0 %v311
  %413 = vmatpush.bf16.msra.mxu0 %v310
  %414 = vmatpush.bf16.msra.mxu0 %v309
  %415 = vmatpush.bf16.msra.mxu0 %v308
  %416 = vmatpush.bf16.msra.mxu0 %v307
  %417 = vmatmul.bf16.gmra.mxu0 %v188
  %v418 = vpop.f32.mrf.mxu0
  %v419 = vadd.f32 %v370, %v418
  %v420 = vpop.f32.mrf.mxu0
  %v421 = vadd.f32 %v372, %v420
  %422 = vmatmul.bf16.gmra.mxu0 %v191
  %v423 = vpop.f32.mrf.mxu0
  %v424 = vadd.f32 %v375, %v423
  %v425 = vpop.f32.mrf.mxu0
  %v426 = vadd.f32 %v377, %v425
  %427 = vmatmul.bf16.gmra.mxu0 %v194
  %v428 = vpop.f32.mrf.mxu0
  %v429 = vadd.f32 %v380, %v428
  %v430 = vpop.f32.mrf.mxu0
  %v431 = vadd.f32 %v382, %v430
  %432 = vmatmul.bf16.gmra.mxu0 %v197
  %v433 = vpop.f32.mrf.mxu0
  %v434 = vadd.f32 %v385, %v433
  %v435 = vpop.f32.mrf.mxu0
  %v436 = vadd.f32 %v387, %v435
  %437 = vmatmul.bf16.gmra.mxu0 %v200
  %v438 = vpop.f32.mrf.mxu0
  %v439 = vadd.f32 %v390, %v438
  %v440 = vpop.f32.mrf.mxu0
  %v441 = vadd.f32 %v392, %v440
  %442 = vmatmul.bf16.gmra.mxu0 %v203
  %v443 = vpop.f32.mrf.mxu0
  %v444 = vadd.f32 %v395, %v443
  %v445 = vpop.f32.mrf.mxu0
  %v446 = vadd.f32 %v397, %v445
  %447 = vmatmul.bf16.gmra.mxu0 %v206
  %v448 = vpop.f32.mrf.mxu0
  %v449 = vadd.f32 %v400, %v448
  %v450 = vpop.f32.mrf.mxu0
  %v451 = vadd.f32 %v402, %v450
  %452 = vmatmul.bf16.gmra.mxu0 %v209
  %v453 = vpop.f32.mrf.mxu0
  %v454 = vadd.f32 %v405, %v453
  %v455 = vpop.f32.mrf.mxu0
  %v456 = vadd.f32 %v407, %v455
  %457 = vdwg.mxu0
  %458 = vmatpush.bf16.msra.mxu0 0
  %459 = vmatpush.bf16.msra.mxu0 0
  %460 = vmatpush.bf16.msra.mxu0 0
  %461 = vmatpush.bf16.msra.mxu0 0
  %462 = vmatpush.bf16.msra.mxu0 0
  %463 = vmatpush.bf16.msra.mxu0 0
  %464 = vmatpush.bf16.msra.mxu0 %v316
  %465 = vmatpush.bf16.msra.mxu0 %v315
  %466 = vmatmul.bf16.gmra.mxu0 %v337
  %v467 = vpop.f32.mrf.mxu0
  %v468 = vadd.f32 %v419, %v467
  %v469 = vpop.f32.mrf.mxu0
  %v470 = vadd.f32 %v421, %v469
  %471 = vmatmul.bf16.gmra.mxu0 %v340
  %v472 = vpop.f32.mrf.mxu0
  %v473 = vadd.f32 %v424, %v472
  %v474 = vpop.f32.mrf.mxu0
  %v475 = vadd.f32 %v426, %v474
  %476 = vmatmul.bf16.gmra.mxu0 %v343
  %v477 = vpop.f32.mrf.mxu0
  %v478 = vadd.f32 %v429, %v477
  %v479 = vpop.f32.mrf.mxu0
  %v480 = vadd.f32 %v431, %v479
  %481 = vmatmul.bf16.gmra.mxu0 %v346
  %v482 = vpop.f32.mrf.mxu0
  %v483 = vadd.f32 %v434, %v482
  %v484 = vpop.f32.mrf.mxu0
  %v485 = vadd.f32 %v436, %v484
  %486 = vmatmul.bf16.gmra.mxu0 %v349
  %v487 = vpop.f32.mrf.mxu0
  %v488 = vadd.f32 %v439, %v487
  %v489 = vpop.f32.mrf.mxu0
  %v490 = vadd.f32 %v441, %v489
  %491 = vmatmul.bf16.gmra.mxu0 %v352
  %v492 = vpop.f32.mrf.mxu0
  %v493 = vadd.f32 %v444, %v492
  %v494 = vpop.f32.mrf.mxu0
  %v495 = vadd.f32 %v446, %v494
  %496 = vmatmul.bf16.gmra.mxu0 %v355
  %v497 = vpop.f32.mrf.mxu0
  %v498 = vadd.f32 %v449, %v497
  %v499 = vpop.f32.mrf.mxu0
  %v500 = vadd.f32 %v451, %v499
  %501 = vmatmul.bf16.gmra.mxu0 %v358
  %v502 = vpop.f32.mrf.mxu0
  %v503 = vadd.f32 %v454, %v502
  %v504 = vpop.f32.mrf.mxu0
  %v505 = vadd.f32 %v456, %v504
  %506 = vdwg.mxu0
  %v507 = vld [vmem:[%s5] sm:$0x1]
  %v509 = vperm.slane %v507, 0
  %v511 = vmul.f32 %v468, %v509
  %v512 = vmul.f32 %v470, %v509
  %v513 = vmul.f32 %v473, %v509
  %v514 = vmul.f32 %v475, %v509
  %v515 = vmul.f32 %v478, %v509
  %v516 = vmul.f32 %v480, %v509
  %v517 = vmul.f32 %v483, %v509
  %v518 = vmul.f32 %v485, %v509
  %v519 = vmul.f32 %v488, %v509
  %v520 = vmul.f32 %v490, %v509
  %v521 = vmul.f32 %v493, %v509
  %v522 = vmul.f32 %v495, %v509
  %v523 = vmul.f32 %v498, %v509
  %v524 = vmul.f32 %v500, %v509
  %v525 = vmul.f32 %v503, %v509
  %v526 = vmul.f32 %v505, %v509
  %v527 = vld [vmem:[%s6] sm:$0x1]
  %v529 = vperm.slane %v527, 0
  %v531 = vadd.f32 %v511, %v529
  %v532 = vadd.f32 %v512, %v529
  %v533 = vadd.f32 %v513, %v529
  %v534 = vadd.f32 %v514, %v529
  %v535 = vadd.f32 %v515, %v529
  %v536 = vadd.f32 %v516, %v529
  %v537 = vadd.f32 %v517, %v529
  %v538 = vadd.f32 %v518, %v529
  %v539 = vadd.f32 %v519, %v529
  %v540 = vadd.f32 %v520, %v529
  %v541 = vadd.f32 %v521, %v529
  %v542 = vadd.f32 %v522, %v529
  %v543 = vadd.f32 %v523, %v529
  %v544 = vadd.f32 %v524, %v529
  %v545 = vadd.f32 %v525, %v529
  %v546 = vadd.f32 %v526, %v529
  %v547 = vmax.f32 %v531, 0.0
  %v548 = vmax.f32 %v532, 0.0
  %v549 = vmax.f32 %v533, 0.0
  %v550 = vmax.f32 %v534, 0.0
  %v551 = vmax.f32 %v535, 0.0
  %v552 = vmax.f32 %v536, 0.0
  %v553 = vmax.f32 %v537, 0.0
  %v554 = vmax.f32 %v538, 0.0
  %v555 = vmax.f32 %v539, 0.0
  %v556 = vmax.f32 %v540, 0.0
  %v557 = vmax.f32 %v541, 0.0
  %v558 = vmax.f32 %v542, 0.0
  %v559 = vmax.f32 %v543, 0.0
  %v560 = vmax.f32 %v544, 0.0
  %v561 = vmax.f32 %v545, 0.0
  %v562 = vmax.f32 %v546, 0.0
  %v563 = vpack.c.bf16 %v548, %v547
  %v564 = vpack.c.bf16 %v550, %v549
  %v565 = vpack.c.bf16 %v552, %v551
  %v566 = vpack.c.bf16 %v554, %v553
  %v567 = vpack.c.bf16 %v556, %v555
  %v568 = vpack.c.bf16 %v558, %v557
  %v569 = vpack.c.bf16 %v560, %v559
  %v570 = vpack.c.bf16 %v562, %v561
  %v571 = vld [vmem:[%s3] sm:$0xf]
  %v572 = vld [vmem:[%s3 + $0x4] sm:$0xf]
  %v573 = vld [vmem:[%s3 + $0x8] sm:$0xf]
  %v574 = vld [vmem:[%s3 + $0xc] sm:$0xf]
  %v579 = vunpack.c.l.b16 %v571
  %v580 = vunpack.c.l.b16 %v572
  %v581 = vunpack.c.l.b16 %v573
  %v582 = vunpack.c.l.b16 %v574
  %v583 = vpack.c.b16 %v580, %v579
  %v584 = vpack.c.b16 %v582, %v581
  %v588 = vsel %vm335, %v563, 0
  %v591 = vsel %vm335, %v564, 0
  %v594 = vsel %vm335, %v565, 0
  %v597 = vsel %vm335, %v566, 0
  %v600 = vsel %vm335, %v567, 0
  %v603 = vsel %vm335, %v568, 0
  %v606 = vsel %vm335, %v569, 0
  %v609 = vsel %vm335, %v570, 0
  %611 = vmatpush.bf16.msra.mxu0 0
  %612 = vmatpush.bf16.msra.mxu0 0
  %613 = vmatpush.bf16.msra.mxu0 0
  %614 = vmatpush.bf16.msra.mxu0 0
  %615 = vmatpush.bf16.msra.mxu0 0
  %616 = vmatpush.bf16.msra.mxu0 0
  %617 = vmatpush.bf16.msra.mxu0 %v584
  %618 = vmatpush.bf16.msra.mxu0 %v583
  %619 = vmatmul.bf16.gmra.mxu0 %v588
  %v620 = vpop.f32.mrf.mxu0
  %v621 = vadd.f32 0.0, %v620
  %v622 = vpop.f32.mrf.mxu0
  %v623 = vadd.f32 0.0, %v622
  %624 = vmatmul.bf16.gmra.mxu0 %v591
  %v625 = vpop.f32.mrf.mxu0
  %v626 = vadd.f32 0.0, %v625
  %v627 = vpop.f32.mrf.mxu0
  %v628 = vadd.f32 0.0, %v627
  %629 = vmatmul.bf16.gmra.mxu0 %v594
  %v630 = vpop.f32.mrf.mxu0
  %v631 = vadd.f32 0.0, %v630
  %v632 = vpop.f32.mrf.mxu0
  %v633 = vadd.f32 0.0, %v632
  %634 = vmatmul.bf16.gmra.mxu0 %v597
  %v635 = vpop.f32.mrf.mxu0
  %v636 = vadd.f32 0.0, %v635
  %v637 = vpop.f32.mrf.mxu0
  %v638 = vadd.f32 0.0, %v637
  %639 = vmatmul.bf16.gmra.mxu0 %v600
  %v640 = vpop.f32.mrf.mxu0
  %v641 = vadd.f32 0.0, %v640
  %v642 = vpop.f32.mrf.mxu0
  %v643 = vadd.f32 0.0, %v642
  %644 = vmatmul.bf16.gmra.mxu0 %v603
  %v645 = vpop.f32.mrf.mxu0
  %v646 = vadd.f32 0.0, %v645
  %v647 = vpop.f32.mrf.mxu0
  %v648 = vadd.f32 0.0, %v647
  %649 = vmatmul.bf16.gmra.mxu0 %v606
  %v650 = vpop.f32.mrf.mxu0
  %v651 = vadd.f32 0.0, %v650
  %v652 = vpop.f32.mrf.mxu0
  %v653 = vadd.f32 0.0, %v652
  %654 = vmatmul.bf16.gmra.mxu0 %v609
  %v655 = vpop.f32.mrf.mxu0
  %v656 = vadd.f32 0.0, %v655
  %v657 = vpop.f32.mrf.mxu0
  %v658 = vadd.f32 0.0, %v657
  %659 = vdwg.mxu0
  %v660 = vld [vmem:[%s7] sm:$0x1]
  %v662 = vperm.slane %v660, 0
  %v664 = vmul.f32 %v621, %v662
  %v665 = vmul.f32 %v623, %v662
  %v666 = vmul.f32 %v626, %v662
  %v667 = vmul.f32 %v628, %v662
  %v668 = vmul.f32 %v631, %v662
  %v669 = vmul.f32 %v633, %v662
  %v670 = vmul.f32 %v636, %v662
  %v671 = vmul.f32 %v638, %v662
  %v672 = vmul.f32 %v641, %v662
  %v673 = vmul.f32 %v643, %v662
  %v674 = vmul.f32 %v646, %v662
  %v675 = vmul.f32 %v648, %v662
  %v676 = vmul.f32 %v651, %v662
  %v677 = vmul.f32 %v653, %v662
  %v678 = vmul.f32 %v656, %v662
  %v679 = vmul.f32 %v658, %v662
  %v680 = vld [vmem:[%s8] sm:$0x1]
  %v682 = vperm.slane %v680, 0
  %v684 = vadd.f32 %v664, %v682
  %v685 = vadd.f32 %v665, %v682
  %v686 = vadd.f32 %v666, %v682
  %v687 = vadd.f32 %v667, %v682
  %v688 = vadd.f32 %v668, %v682
  %v689 = vadd.f32 %v669, %v682
  %v690 = vadd.f32 %v670, %v682
  %v691 = vadd.f32 %v671, %v682
  %v692 = vadd.f32 %v672, %v682
  %v693 = vadd.f32 %v673, %v682
  %v694 = vadd.f32 %v674, %v682
  %v695 = vadd.f32 %v675, %v682
  %v696 = vadd.f32 %v676, %v682
  %v697 = vadd.f32 %v677, %v682
  %v698 = vadd.f32 %v678, %v682
  %v699 = vadd.f32 %v679, %v682
  %v700 = vld [vmem:[%s1] sm:$0xf]
  %v701 = vld [vmem:[%s1 + $0x4] sm:$0xf]
  %v702 = vld [vmem:[%s1 + $0x8] sm:$0xf]
  %v703 = vld [vmem:[%s1 + $0xc] sm:$0xf]
  %v704 = vld [vmem:[%s1 + $0x10] sm:$0xf]
  %v705 = vld [vmem:[%s1 + $0x14] sm:$0xf]
  %v706 = vld [vmem:[%s1 + $0x18] sm:$0xf]
  %v707 = vld [vmem:[%s1 + $0x1c] sm:$0xf]
  %v708 = vld [vmem:[%s1 + $0x20] sm:$0xf]
  %v709 = vld [vmem:[%s1 + $0x24] sm:$0xf]
  %v710 = vld [vmem:[%s1 + $0x28] sm:$0xf]
  %v711 = vld [vmem:[%s1 + $0x2c] sm:$0xf]
  %v712 = vld [vmem:[%s1 + $0x30] sm:$0xf]
  %v713 = vld [vmem:[%s1 + $0x34] sm:$0xf]
  %v714 = vld [vmem:[%s1 + $0x38] sm:$0xf]
  %v715 = vld [vmem:[%s1 + $0x3c] sm:$0xf]
  %v716 = vld [vmem:[%s4] sm:$0xf]
  %v717 = vld [vmem:[%s4 + $0x4] sm:$0xf]
  %v718 = vld [vmem:[%s4 + $0x8] sm:$0xf]
  %v719 = vld [vmem:[%s4 + $0xc] sm:$0xf]
  %v720 = vld [vmem:[%s4 + $0x10] sm:$0xf]
  %v721 = vld [vmem:[%s4 + $0x14] sm:$0xf]
  %v722 = vld [vmem:[%s4 + $0x18] sm:$0xf]
  %v723 = vld [vmem:[%s4 + $0x1c] sm:$0xf]
  %v740 = vunpack.c.l.b16 %v700
  %v741 = vunpack.c.l.b16 %v701
  %v742 = vunpack.c.l.b16 %v702
  %v743 = vunpack.c.l.b16 %v703
  %v744 = vunpack.c.l.b16 %v704
  %v745 = vunpack.c.l.b16 %v705
  %v746 = vunpack.c.l.b16 %v706
  %v747 = vunpack.c.l.b16 %v707
  %v748 = vunpack.c.l.b16 %v708
  %v749 = vunpack.c.l.b16 %v709
  %v750 = vunpack.c.l.b16 %v710
  %v751 = vunpack.c.l.b16 %v711
  %v752 = vunpack.c.l.b16 %v712
  %v753 = vunpack.c.l.b16 %v713
  %v754 = vunpack.c.l.b16 %v714
  %v755 = vunpack.c.l.b16 %v715
  %v756 = vpack.c.b16 %v741, %v740
  %v757 = vpack.c.b16 %v743, %v742
  %v758 = vpack.c.b16 %v745, %v744
  %v759 = vpack.c.b16 %v747, %v746
  %v760 = vpack.c.b16 %v749, %v748
  %v761 = vpack.c.b16 %v751, %v750
  %v762 = vpack.c.b16 %v753, %v752
  %v763 = vpack.c.b16 %v755, %v754
  %v772 = vunpack.c.l.b16 %v716
  %v773 = vunpack.c.l.b16 %v717
  %v774 = vunpack.c.l.b16 %v718
  %v775 = vunpack.c.l.b16 %v719
  %v776 = vunpack.c.l.b16 %v720
  %v777 = vunpack.c.l.b16 %v721
  %v778 = vunpack.c.l.b16 %v722
  %v779 = vunpack.c.l.b16 %v723
  %v780 = vpack.c.b16 %v773, %v772
  %v781 = vpack.c.b16 %v775, %v774
  %v782 = vpack.c.b16 %v777, %v776
  %v783 = vpack.c.b16 %v779, %v778
  %vm788 = vcmask 523264
  %v790 = vsel %vm788, %v756, 0
  %v793 = vsel %vm788, %v757, 0
  %v796 = vsel %vm788, %v758, 0
  %v799 = vsel %vm788, %v759, 0
  %v802 = vsel %vm788, %v760, 0
  %v805 = vsel %vm788, %v761, 0
  %v808 = vsel %vm788, %v762, 0
  %v811 = vsel %vm788, %v763, 0
  %813 = vmatpush.bf16.msra.mxu0 0
  %814 = vmatpush.bf16.msra.mxu0 0
  %815 = vmatpush.bf16.msra.mxu0 0
  %816 = vmatpush.bf16.msra.mxu0 0
  %817 = vmatpush.bf16.msra.mxu0 %v783
  %818 = vmatpush.bf16.msra.mxu0 %v782
  %819 = vmatpush.bf16.msra.mxu0 %v781
  %820 = vmatpush.bf16.msra.mxu0 %v780
  %821 = vmatmul.bf16.gmra.mxu0 %v790
  %v822 = vpop.f32.mrf.mxu0
  %v823 = vadd.f32 0.0, %v822
  %v824 = vpop.f32.mrf.mxu0
  %v825 = vadd.f32 0.0, %v824
  %826 = vmatmul.bf16.gmra.mxu0 %v793
  %v827 = vpop.f32.mrf.mxu0
  %v828 = vadd.f32 0.0, %v827
  %v829 = vpop.f32.mrf.mxu0
  %v830 = vadd.f32 0.0, %v829
  %831 = vmatmul.bf16.gmra.mxu0 %v796
  %v832 = vpop.f32.mrf.mxu0
  %v833 = vadd.f32 0.0, %v832
  %v834 = vpop.f32.mrf.mxu0
  %v835 = vadd.f32 0.0, %v834
  %836 = vmatmul.bf16.gmra.mxu0 %v799
  %v837 = vpop.f32.mrf.mxu0
  %v838 = vadd.f32 0.0, %v837
  %v839 = vpop.f32.mrf.mxu0
  %v840 = vadd.f32 0.0, %v839
  %841 = vmatmul.bf16.gmra.mxu0 %v802
  %v842 = vpop.f32.mrf.mxu0
  %v843 = vadd.f32 0.0, %v842
  %v844 = vpop.f32.mrf.mxu0
  %v845 = vadd.f32 0.0, %v844
  %846 = vmatmul.bf16.gmra.mxu0 %v805
  %v847 = vpop.f32.mrf.mxu0
  %v848 = vadd.f32 0.0, %v847
  %v849 = vpop.f32.mrf.mxu0
  %v850 = vadd.f32 0.0, %v849
  %851 = vmatmul.bf16.gmra.mxu0 %v808
  %v852 = vpop.f32.mrf.mxu0
  %v853 = vadd.f32 0.0, %v852
  %v854 = vpop.f32.mrf.mxu0
  %v855 = vadd.f32 0.0, %v854
  %856 = vmatmul.bf16.gmra.mxu0 %v811
  %v857 = vpop.f32.mrf.mxu0
  %v858 = vadd.f32 0.0, %v857
  %v859 = vpop.f32.mrf.mxu0
  %v860 = vadd.f32 0.0, %v859
  %861 = vdwg.mxu0
  %v862 = vld [vmem:[%s9] sm:$0x1]
  %v864 = vperm.slane %v862, 0
  %v866 = vmul.f32 %v823, %v864
  %v867 = vmul.f32 %v825, %v864
  %v868 = vmul.f32 %v828, %v864
  %v869 = vmul.f32 %v830, %v864
  %v870 = vmul.f32 %v833, %v864
  %v871 = vmul.f32 %v835, %v864
  %v872 = vmul.f32 %v838, %v864
  %v873 = vmul.f32 %v840, %v864
  %v874 = vmul.f32 %v843, %v864
  %v875 = vmul.f32 %v845, %v864
  %v876 = vmul.f32 %v848, %v864
  %v877 = vmul.f32 %v850, %v864
  %v878 = vmul.f32 %v853, %v864
  %v879 = vmul.f32 %v855, %v864
  %v880 = vmul.f32 %v858, %v864
  %v881 = vmul.f32 %v860, %v864
  %v882 = vld [vmem:[%s10] sm:$0x1]
  %v884 = vperm.slane %v882, 0
  %v886 = vadd.f32 %v866, %v884
  %v887 = vadd.f32 %v867, %v884
  %v888 = vadd.f32 %v868, %v884
  %v889 = vadd.f32 %v869, %v884
  %v890 = vadd.f32 %v870, %v884
  %v891 = vadd.f32 %v871, %v884
  %v892 = vadd.f32 %v872, %v884
  %v893 = vadd.f32 %v873, %v884
  %v894 = vadd.f32 %v874, %v884
  %v895 = vadd.f32 %v875, %v884
  %v896 = vadd.f32 %v876, %v884
  %v897 = vadd.f32 %v877, %v884
  %v898 = vadd.f32 %v878, %v884
  %v899 = vadd.f32 %v879, %v884
  %v900 = vadd.f32 %v880, %v884
  %v901 = vadd.f32 %v881, %v884
  %v902 = vadd.f32 %v684, %v886
  %v903 = vadd.f32 %v685, %v887
  %v904 = vadd.f32 %v686, %v888
  %v905 = vadd.f32 %v687, %v889
  %v906 = vadd.f32 %v688, %v890
  %v907 = vadd.f32 %v689, %v891
  %v908 = vadd.f32 %v690, %v892
  %v909 = vadd.f32 %v691, %v893
  %v910 = vadd.f32 %v692, %v894
  %v911 = vadd.f32 %v693, %v895
  %v912 = vadd.f32 %v694, %v896
  %v913 = vadd.f32 %v695, %v897
  %v914 = vadd.f32 %v696, %v898
  %v915 = vadd.f32 %v697, %v899
  %v916 = vadd.f32 %v698, %v900
  %v917 = vadd.f32 %v699, %v901
  %v918 = vmax.f32 %v902, 0.0
  %v919 = vmax.f32 %v903, 0.0
  %v920 = vmax.f32 %v904, 0.0
  %v921 = vmax.f32 %v905, 0.0
  %v922 = vmax.f32 %v906, 0.0
  %v923 = vmax.f32 %v907, 0.0
  %v924 = vmax.f32 %v908, 0.0
  %v925 = vmax.f32 %v909, 0.0
  %v926 = vmax.f32 %v910, 0.0
  %v927 = vmax.f32 %v911, 0.0
  %v928 = vmax.f32 %v912, 0.0
  %v929 = vmax.f32 %v913, 0.0
  %v930 = vmax.f32 %v914, 0.0
  %v931 = vmax.f32 %v915, 0.0
  %v932 = vmax.f32 %v916, 0.0
  %v933 = vmax.f32 %v917, 0.0
  %v934 = vpack.c.bf16 %v918, %v918
  %v935 = vpack.c.bf16 %v919, %v919
  %v936 = vpack.c.bf16 %v920, %v920
  %v937 = vpack.c.bf16 %v921, %v921
  %v938 = vpack.c.bf16 %v922, %v922
  %v939 = vpack.c.bf16 %v923, %v923
  %v940 = vpack.c.bf16 %v924, %v924
  %v941 = vpack.c.bf16 %v925, %v925
  %v942 = vpack.c.bf16 %v926, %v926
  %v943 = vpack.c.bf16 %v927, %v927
  %v944 = vpack.c.bf16 %v928, %v928
  %v945 = vpack.c.bf16 %v929, %v929
  %v946 = vpack.c.bf16 %v930, %v930
  %v947 = vpack.c.bf16 %v931, %v931
  %v948 = vpack.c.bf16 %v932, %v932
  %v949 = vpack.c.bf16 %v933, %v933
  %vm950 = vcmask 519168
  %951 = vst.msk [vmem:[%s11] sm:$0xf] %vm950, %v934
  %952 = vst.msk [vmem:[%s11 + $0x4] sm:$0xf] %vm950, %v935
  %953 = vst.msk [vmem:[%s11 + $0x8] sm:$0xf] %vm950, %v936
  %954 = vst.msk [vmem:[%s11 + $0xc] sm:$0xf] %vm950, %v937
  %955 = vst.msk [vmem:[%s11 + $0x10] sm:$0xf] %vm950, %v938
  %956 = vst.msk [vmem:[%s11 + $0x14] sm:$0xf] %vm950, %v939
  %957 = vst.msk [vmem:[%s11 + $0x18] sm:$0xf] %vm950, %v940
  %958 = vst.msk [vmem:[%s11 + $0x1c] sm:$0xf] %vm950, %v941
  %959 = vst.msk [vmem:[%s11 + $0x20] sm:$0xf] %vm950, %v942
  %960 = vst.msk [vmem:[%s11 + $0x24] sm:$0xf] %vm950, %v943
  %961 = vst.msk [vmem:[%s11 + $0x28] sm:$0xf] %vm950, %v944
  %962 = vst.msk [vmem:[%s11 + $0x2c] sm:$0xf] %vm950, %v945
  %963 = vst.msk [vmem:[%s11 + $0x30] sm:$0xf] %vm950, %v946
  %964 = vst.msk [vmem:[%s11 + $0x34] sm:$0xf] %vm950, %v947
  %965 = vst.msk [vmem:[%s11 + $0x38] sm:$0xf] %vm950, %v948
  %966 = vst.msk [vmem:[%s11 + $0x3c] sm:$0xf] %vm950, %v949
  // Predicated region
  $region46: #{resnext_ida_forward.25} parent=0 // pred_check
    _
  $region47: #{resnext_ida_forward.25} parent=0 // pred_check_branch
    %968 = sbr.rel (0) target = $region49
  $region48: #{resnext_ida_forward.25} parent=0 // pred_region
    _
  $region49: #{resnext_ida_forward.25} parent=0 // pred_fallthru
    _
  // Predicated region
  $region50: #{resnext_ida_forward.25} parent=0 // pred_check
    _
  $region51: #{resnext_ida_forward.25} parent=0 // pred_check_branch
    %970 = sbr.rel (0) target = $region53
  $region52: #{resnext_ida_forward.25} parent=0 // pred_region
    _
  $region53: #{resnext_ida_forward.25} parent=0 // pred_fallthru
    _

// kernel: resnext_ida_forward.32
$region0: #{resnext_ida_forward.32}
  #allocation0 [shape = 'u32[]', space=smem, size = 0x4, offset = 0x4, fixed_abs, tag = 'smem constant byte address 0x4 - core index']
  #allocation1 [shape = 'u32[72,128]{1,0:T(1,128)}', space=vmem, size = 0x9000, scoped, tag = 'internal scratch']
  %s0 = inlined_call_operand.vmem [shape: bf16[32,64], index: 0, kind: input, shape index: {}]
  %s1 = inlined_call_operand.vmem [shape: bf16[64,256], index: 1, kind: input, shape index: {}]
  %s2 = inlined_call_operand.vmem [shape: f32[1,256], index: 2, kind: input, shape index: {}]
  %s3 = inlined_call_operand.vmem [shape: f32[1,256], index: 3, kind: input, shape index: {}]
  %s4 = inlined_call_operand.vmem [shape: bf16[32,256], index: 4, kind: output, shape index: {}]
  %s5 = sld [smem:[#allocation0]]
  $region26: #{resnext_ida_forward.32} parent=0
    _
  %s7 = ssub.s32 1, %s5
  %s8 = scalar_select 0, %s7, %s5
  // Predicated region
  $region2: #{resnext_ida_forward.32} parent=0 // pred_check
    _
  $region3: #{resnext_ida_forward.32} parent=0 // pred_check_branch
    %10 = sbr.rel (0) target = $region5
  $region4: #{resnext_ida_forward.32} parent=0 // pred_region
    _
  $region5: #{resnext_ida_forward.32} parent=0 // pred_fallthru
    _
  // Predicated region
  $region6: #{resnext_ida_forward.32} parent=0 // pred_check
    _
  $region7: #{resnext_ida_forward.32} parent=0 // pred_check_branch
    %12 = sbr.rel (0) target = $region9
  $region8: #{resnext_ida_forward.32} parent=0 // pred_region
    _
  $region9: #{resnext_ida_forward.32} parent=0 // pred_fallthru
    _
  // Predicated region
  $region10: #{resnext_ida_forward.32} parent=0 // pred_check
    _
  $region11: #{resnext_ida_forward.32} parent=0 // pred_check_branch
    %14 = sbr.rel (0) target = $region13
  $region12: #{resnext_ida_forward.32} parent=0 // pred_region
    _
  $region13: #{resnext_ida_forward.32} parent=0 // pred_fallthru
    _
  // Predicated region
  $region14: #{resnext_ida_forward.32} parent=0 // pred_check
    _
  $region15: #{resnext_ida_forward.32} parent=0 // pred_check_branch
    %16 = sbr.rel (0) target = $region17
  $region16: #{resnext_ida_forward.32} parent=0 // pred_region
    _
  $region17: #{resnext_ida_forward.32} parent=0 // pred_fallthru
    _
  %v18 = vld [vmem:[%s0] sm:$0xf]
  %v19 = vld [vmem:[%s0 + $0x4] sm:$0xf]
  %v20 = vld [vmem:[%s0 + $0x8] sm:$0xf]
  %v21 = vld [vmem:[%s0 + $0xc] sm:$0xf]
  %v22 = vld [vmem:[%s1] sm:$0xff]
  %v23 = vld [vmem:[%s1 + $0x8] sm:$0xff]
  %v24 = vld [vmem:[%s1 + $0x10] sm:$0xff]
  %v25 = vld [vmem:[%s1 + $0x18] sm:$0xff]
  %v26 = vld [vmem:[%s1 + $0x20] sm:$0xff]
  %v27 = vld [vmem:[%s1 + $0x28] sm:$0xff]
  %v28 = vld [vmem:[%s1 + $0x30] sm:$0xff]
  %v29 = vld [vmem:[%s1 + $0x38] sm:$0xff]
  %v34 = vunpack.c.l.b16 %v18
  %v35 = vunpack.c.l.b16 %v19
  %v36 = vunpack.c.l.b16 %v20
  %v37 = vunpack.c.l.b16 %v21
  %v38 = vpack.c.b16 %v35, %v34
  %v39 = vpack.c.b16 %v37, %v36
  %v48 = vunpack.c.l.b16 %v22
  %v49 = vunpack.c.h.b16 %v22
  %v50 = vunpack.c.l.b16 %v23
  %v51 = vunpack.c.h.b16 %v23
  %v52 = vunpack.c.l.b16 %v24
  %v53 = vunpack.c.h.b16 %v24
  %v54 = vunpack.c.l.b16 %v25
  %v55 = vunpack.c.h.b16 %v25
  %v56 = vunpack.c.l.b16 %v26
  %v57 = vunpack.c.h.b16 %v26
  %v58 = vunpack.c.l.b16 %v27
  %v59 = vunpack.c.h.b16 %v27
  %v60 = vunpack.c.l.b16 %v28
  %v61 = vunpack.c.h.b16 %v28
  %v62 = vunpack.c.l.b16 %v29
  %v63 = vunpack.c.h.b16 %v29
  %v64 = vpack.c.b16 %v50, %v48
  %v65 = vpack.c.b16 %v51, %v49
  %v66 = vpack.c.b16 %v54, %v52
  %v67 = vpack.c.b16 %v55, %v53
  %v68 = vpack.c.b16 %v58, %v56
  %v69 = vpack.c.b16 %v59, %v57
  %v70 = vpack.c.b16 %v62, %v60
  %v71 = vpack.c.b16 %v63, %v61
  %vm80 = vcmask 523264
  %v82 = vsel %vm80, %v38, 0
  %v85 = vsel %vm80, %v39, 0
  %87 = vmatpush.bf16.msra.mxu0 0
  %88 = vmatpush.bf16.msra.mxu0 0
  %89 = vmatpush.bf16.msra.mxu0 0
  %90 = vmatpush.bf16.msra.mxu0 0
  %91 = vmatpush.bf16.msra.mxu0 %v70
  %92 = vmatpush.bf16.msra.mxu0 %v68
  %93 = vmatpush.bf16.msra.mxu0 %v66
  %94 = vmatpush.bf16.msra.mxu0 %v64
  %95 = vmatmul.bf16.gmra.mxu0 %v82
  %v96 = vpop.f32.mrf.mxu0
  %v97 = vadd.f32 0.0, %v96
  %v98 = vpop.f32.mrf.mxu0
  %v99 = vadd.f32 0.0, %v98
  %100 = vmatmul.bf16.gmra.mxu0 %v85
  %v101 = vpop.f32.mrf.mxu0
  %v102 = vadd.f32 0.0, %v101
  %v103 = vpop.f32.mrf.mxu0
  %v104 = vadd.f32 0.0, %v103
  %105 = vdwg.mxu0
  %106 = vmatpush.bf16.msra.mxu0 0
  %107 = vmatpush.bf16.msra.mxu0 0
  %108 = vmatpush.bf16.msra.mxu0 0
  %109 = vmatpush.bf16.msra.mxu0 0
  %110 = vmatpush.bf16.msra.mxu0 %v71
  %111 = vmatpush.bf16.msra.mxu0 %v69
  %112 = vmatpush.bf16.msra.mxu0 %v67
  %113 = vmatpush.bf16.msra.mxu0 %v65
  %114 = vmatmul.bf16.gmra.mxu0 %v82
  %v115 = vpop.f32.mrf.mxu0
  %v116 = vadd.f32 0.0, %v115
  %v117 = vpop.f32.mrf.mxu0
  %v118 = vadd.f32 0.0, %v117
  %119 = vmatmul.bf16.gmra.mxu0 %v85
  %v120 = vpop.f32.mrf.mxu0
  %v121 = vadd.f32 0.0, %v120
  %v122 = vpop.f32.mrf.mxu0
  %v123 = vadd.f32 0.0, %v122
  %124 = vdwg.mxu0
  %v125 = vld [vmem:[%s2] sm:$0x3]
  %v127 = vperm.slane %v125, 0
  %v128 = vperm.slane %v125, 1
  %v131 = vmul.f32 %v97, %v127
  %v132 = vmul.f32 %v116, %v128
  %v133 = vmul.f32 %v99, %v127
  %v134 = vmul.f32 %v118, %v128
  %v135 = vmul.f32 %v102, %v127
  %v136 = vmul.f32 %v121, %v128
  %v137 = vmul.f32 %v104, %v127
  %v138 = vmul.f32 %v123, %v128
  %v139 = vld [vmem:[%s3] sm:$0x3]
  %v141 = vperm.slane %v139, 0
  %v142 = vperm.slane %v139, 1
  %v145 = vadd.f32 %v131, %v141
  %v146 = vadd.f32 %v132, %v142
  %v147 = vadd.f32 %v133, %v141
  %v148 = vadd.f32 %v134, %v142
  %v149 = vadd.f32 %v135, %v141
  %v150 = vadd.f32 %v136, %v142
  %v151 = vadd.f32 %v137, %v141
  %v152 = vadd.f32 %v138, %v142
  %v153 = vpack.c.bf16 %v146, %v145
  %v154 = vpack.c.bf16 %v148, %v147
  %v155 = vpack.c.bf16 %v150, %v149
  %v156 = vpack.c.bf16 %v152, %v151
  %157 = vst [vmem:[%s4] sm:$0xff] %v153
  %158 = vst [vmem:[%s4 + $0x8] sm:$0xff] %v154
  %159 = vst [vmem:[%s4 + $0x10] sm:$0xff] %v155
  %160 = vst [vmem:[%s4 + $0x18] sm:$0xff] %v156
  // Predicated region
  $region18: #{resnext_ida_forward.32} parent=0 // pred_check
    _
  $region19: #{resnext_ida_forward.32} parent=0 // pred_check_branch
    %162 = sbr.rel (0) target = $region21
  $region20: #{resnext_ida_forward.32} parent=0 // pred_region
    _
  $region21: #{resnext_ida_forward.32} parent=0 // pred_fallthru
    _
  // Predicated region
  $region22: #{resnext_ida_forward.32} parent=0 // pred_check
    _
  $region23: #{resnext_ida_forward.32} parent=0 // pred_check_branch
    %164 = sbr.rel (0) target = $region25
  $region24: #{resnext_ida_forward.32} parent=0 // pred_region
    _
  $region25: #{resnext_ida_forward.32} parent=0 // pred_fallthru
    _

// kernel: tile.53
$region0: #{tile.53}
  #allocation0 [shape = 's32[1]{0}', space=sflag, size = 0x4, scoped, tag = 'scoped memory for tile.53']
  %s0 = inlined_call_operand.vmem [shape: f32[64], index: 0, kind: input, shape index: {}]
  %s1 = inlined_call_operand.vmem [shape: f32[2,64], index: 1, kind: output, shape index: {}]
  // Predicated region
  $region2: #{tile.53} parent=0 // pred_check
    _
  $region3: #{tile.53} parent=0 // pred_check_branch
    %3 = sbr.rel (0) target = $region5
  $region4: #{tile.53} parent=0 // pred_region
    _
  $region5: #{tile.53} parent=0 // pred_fallthru
    _
  %v4 = vld [vmem:[%s0] ss:$0 sm:$0xff]
  %5 = vst [vmem:[%s1] sm:$0x3] %v4

// kernel: tile.54
$region0: #{tile.54}
  %s0 = inlined_call_operand.vmem [shape: f32[2,64], index: 0, kind: input, shape index: {}]
  %s1 = inlined_call_operand.vmem [shape: f32[1,128], index: 1, kind: output, shape index: {}]
  $region1: #{tile.54} parent=0
    #allocation0 [shape = 'u8[4096]{0}', space=vmem, size = 0x1000, scoped, tag = 'scoped mem for output reshape']
    #allocation1 [shape = 'u8[4096]{0}', space=vmem, size = 0x1000, scoped, tag = 'scoped mem for input reshape']
    %s3 = ssub.s32 4, 1
    %v4 = vld [vmem:[%s0] sm:%s3]
    %5 = vst [vmem:[#allocation1] sm:%s3] %v4
    %v6 = vld [vmem:[#allocation1] sm:$0x1]
    %vm7 = vcmask 523264
    %8 = vst.msk [vmem:[#allocation0] sm:$0x1] %vm7, %v6
    %s9 = scalar_lea.vmem [#allocation1], 1
    %v10 = vld [vmem:[%s9] sm:$0x1]
    %11 = vrot.lane.b32.xlu0 %v10, 64
    %v12 = vpop.permute.xlu0 %11
    %vm13 = vcmask 1048064
    %14 = vst.msk [vmem:[#allocation0] sm:$0x1] %vm13, %v12
    %s16 = ssub.s32 2, 1
    %v17 = vld [vmem:[#allocation0] sm:%s16]
    %s19 = ssub.s32 2, 1
    %20 = vst [vmem:[%s1] sm:%s19] %v17

// kernel: resnext_ida_forward.27
$region0: #{resnext_ida_forward.27}
  #allocation0 [shape = 'u32[]', space=smem, size = 0x4, offset = 0x4, fixed_abs, tag = 'smem constant byte address 0x4 - core index']
  #allocation1 [shape = 'u32[72,128]{1,0:T(1,128)}', space=vmem, size = 0x9000, scoped, tag = 'internal scratch']
  %s0 = inlined_call_operand.vmem [shape: bf16[32,288], index: 0, kind: input, shape index: {}]
  %s1 = inlined_call_operand.vmem [shape: bf16[32,64], index: 1, kind: input, shape index: {}]
  %s2 = inlined_call_operand.vmem [shape: bf16[288,32], index: 2, kind: input, shape index: {}]
  %s3 = inlined_call_operand.vmem [shape: bf16[32,64], index: 3, kind: input, shape index: {}]
  %s4 = inlined_call_operand.vmem [shape: bf16[64,64], index: 4, kind: input, shape index: {}]
  %s5 = inlined_call_operand.vmem [shape: f32[1,32], index: 5, kind: input, shape index: {}]
  %s6 = inlined_call_operand.vmem [shape: f32[1,32], index: 6, kind: input, shape index: {}]
  %s7 = inlined_call_operand.vmem [shape: f32[1,64], index: 7, kind: input, shape index: {}]
  %s8 = inlined_call_operand.vmem [shape: f32[1,64], index: 8, kind: input, shape index: {}]
  %s9 = inlined_call_operand.hbm [shape: f32[1,64], index: 9, kind: input, shape index: {}]
  %s10 = inlined_call_operand.hbm [shape: f32[1,64], index: 10, kind: input, shape index: {}]
  %s11 = inlined_call_operand.vmem [shape: bf16[32,64], index: 11, kind: output, shape index: {}]
  %s12 = sld [smem:[#allocation0]]
  $region62: #{resnext_ida_forward.27} parent=0
    _
  %s14 = ssub.s32 1, %s12
  %s15 = scalar_select 0, %s14, %s12
  $region1: #{resnext_ida_forward.27} parent=0
    #allocation2 [shape = 'u8[512]{0}', space=vmem, size = 0x400, scoped, tag = 'input window, operand 9, single buffered']
    #allocation3 [shape = 's32[1]{0}', space=sflag, size = 0x4, scoped, tag = 'scoped memory for resnext_ida_forward.27']
    #allocation4 [shape = 'u8[512]{0}', space=vmem, size = 0x400, scoped, tag = 'input window, operand 10, single buffered']
    #allocation5 [shape = 's32[1]{0}', space=sflag, size = 0x4, scoped, tag = 'scoped memory for resnext_ida_forward.27']
    %16 = vsyncpa [#allocation3], 0
    %17 = vsyncpa [#allocation5], 0
    // Predicated region
    $region2: #{resnext_ida_forward.27} parent=1 // pred_check
      _
    $region3: #{resnext_ida_forward.27} parent=1 // pred_check_branch
      %19 = sbr.rel (0) target = $region5
    $region4: #{resnext_ida_forward.27} parent=1 // pred_region
      _
    $region5: #{resnext_ida_forward.27} parent=1 // pred_fallthru
      _
    // Predicated region
    $region6: #{resnext_ida_forward.27} parent=1 // pred_check
      _
    $region7: #{resnext_ida_forward.27} parent=1 // pred_check_branch
      %21 = sbr.rel (0) target = $region9
    $region8: #{resnext_ida_forward.27} parent=1 // pred_region
      _
    $region9: #{resnext_ida_forward.27} parent=1 // pred_fallthru
      _
    // Predicated region
    $region10: #{resnext_ida_forward.27} parent=1 // pred_check
      _
    $region11: #{resnext_ida_forward.27} parent=1 // pred_check_branch
      %23 = sbr.rel (0) target = $region13
    $region12: #{resnext_ida_forward.27} parent=1 // pred_region
      _
    $region13: #{resnext_ida_forward.27} parent=1 // pred_fallthru
      _
    // Predicated region
    $region14: #{resnext_ida_forward.27} parent=1 // pred_check
      _
    $region15: #{resnext_ida_forward.27} parent=1 // pred_check_branch
      %25 = sbr.rel (0) target = $region17
    $region16: #{resnext_ida_forward.27} parent=1 // pred_region
      _
    $region17: #{resnext_ida_forward.27} parent=1 // pred_fallthru
      _
    // Predicated region
    $region18: #{resnext_ida_forward.27} parent=1 // pred_check
      _
    $region19: #{resnext_ida_forward.27} parent=1 // pred_check_branch
      %27 = sbr.rel (0) target = $region21
    $region20: #{resnext_ida_forward.27} parent=1 // pred_region
      _
    $region21: #{resnext_ida_forward.27} parent=1 // pred_fallthru
      _
    // Predicated region
    $region22: #{resnext_ida_forward.27} parent=1 // pred_check
      _
    $region23: #{resnext_ida_forward.27} parent=1 // pred_check_branch
      %29 = sbr.rel (0) target = $region25
    $region24: #{resnext_ida_forward.27} parent=1 // pred_region
      _
    $region25: #{resnext_ida_forward.27} parent=1 // pred_fallthru
      _
    // Predicated region
    $region26: #{resnext_ida_forward.27} parent=1 // pred_check
      _
    $region27: #{resnext_ida_forward.27} parent=1 // pred_check_branch
      %31 = sbr.rel (0) target = $region29
    $region28: #{resnext_ida_forward.27} parent=1 // pred_region
      _
    $region29: #{resnext_ida_forward.27} parent=1 // pred_fallthru
      _
    // Predicated region
    $region30: #{resnext_ida_forward.27} parent=1 // pred_check
      _
    $region31: #{resnext_ida_forward.27} parent=1 // pred_check_branch
      %33 = sbr.rel (0) target = $region33
    $region32: #{resnext_ida_forward.27} parent=1 // pred_region
      _
    $region33: #{resnext_ida_forward.27} parent=1 // pred_fallthru
      _
    // Predicated region
    $region34: #{resnext_ida_forward.27} parent=1 // pred_check
      _
    $region35: #{resnext_ida_forward.27} parent=1 // pred_check_branch
      %35 = sbr.rel (0) target = $region37
    $region36: #{resnext_ida_forward.27} parent=1 // pred_region
      _
    $region37: #{resnext_ida_forward.27} parent=1 // pred_fallthru
      _
    // Predicated region
    $region38: #{resnext_ida_forward.27} parent=1 // pred_check
      _
    $region39: #{resnext_ida_forward.27} parent=1 // pred_check_branch
      %37 = sbr.rel (0) target = $region41
    $region40: #{resnext_ida_forward.27} parent=1 // pred_region
      %39 = vsyncadd [#allocation3], 0
      %s41 = sshll.u32 %s9, 4
      %s42 = int_to_ptr.hbm [resolvable:$true] %s41
      %s43 = sshll.u32 [#allocation2], 4
      %s44 = int_to_ptr.vmem [resolvable:$true] %s43
      %46 = dma.hbm_to_vmem [thread:$0]  %s42, 16, %s44, [#allocation3]
    $region41: #{resnext_ida_forward.27} parent=1 // pred_fallthru
      _
    // Predicated region
    $region42: #{resnext_ida_forward.27} parent=1 // pred_check
      _
    $region43: #{resnext_ida_forward.27} parent=1 // pred_check_branch
      %48 = sbr.rel (0) target = $region45
    $region44: #{resnext_ida_forward.27} parent=1 // pred_region
      %50 = vsyncadd [#allocation5], 0
      %s52 = sshll.u32 %s10, 4
      %s53 = int_to_ptr.hbm [resolvable:$true] %s52
      %s54 = sshll.u32 [#allocation4], 4
      %s55 = int_to_ptr.vmem [resolvable:$true] %s54
      %57 = dma.hbm_to_vmem [thread:$0]  %s53, 16, %s55, [#allocation5]
    $region45: #{resnext_ida_forward.27} parent=1 // pred_fallthru
      _
    // Predicated region
    $region46: #{resnext_ida_forward.27} parent=1 // pred_check
      _
    $region47: #{resnext_ida_forward.27} parent=1 // pred_check_branch
      %59 = sbr.rel (0) target = $region49
    $region48: #{resnext_ida_forward.27} parent=1 // pred_region
      %61 = dma.done [#allocation3], 16
    $region49: #{resnext_ida_forward.27} parent=1 // pred_fallthru
      _
    // Predicated region
    $region50: #{resnext_ida_forward.27} parent=1 // pred_check
      _
    $region51: #{resnext_ida_forward.27} parent=1 // pred_check_branch
      %63 = sbr.rel (0) target = $region53
    $region52: #{resnext_ida_forward.27} parent=1 // pred_region
      %65 = dma.done [#allocation5], 16
    $region53: #{resnext_ida_forward.27} parent=1 // pred_fallthru
      _
    %v67 = vld [vmem:[%s0] sm:$0xff]
    %v68 = vld [vmem:[%s0 + $0x8] sm:$0xf]
    %v69 = vld [vmem:[%s0 + $0xc] sm:$0xff]
    %v70 = vld [vmem:[%s0 + $0x14] sm:$0xf]
    %v71 = vld [vmem:[%s0 + $0x18] sm:$0xff]
    %v72 = vld [vmem:[%s0 + $0x20] sm:$0xf]
    %v73 = vld [vmem:[%s0 + $0x24] sm:$0xff]
    %v74 = vld [vmem:[%s0 + $0x2c] sm:$0xf]
    %v75 = vld [vmem:[%s2] sm:$0xf]
    %v76 = vld [vmem:[%s2 + $0x4] sm:$0xf]
    %v77 = vld [vmem:[%s2 + $0x8] sm:$0xf]
    %v78 = vld [vmem:[%s2 + $0xc] sm:$0xf]
    %v79 = vld [vmem:[%s2 + $0x10] sm:$0xf]
    %v80 = vld [vmem:[%s2 + $0x14] sm:$0xf]
    %v81 = vld [vmem:[%s2 + $0x18] sm:$0xf]
    %v82 = vld [vmem:[%s2 + $0x1c] sm:$0xf]
    %v83 = vld [vmem:[%s2 + $0x20] sm:$0xf]
    %v84 = vld [vmem:[%s2 + $0x24] sm:$0xf]
    %v85 = vld [vmem:[%s2 + $0x28] sm:$0xf]
    %v86 = vld [vmem:[%s2 + $0x2c] sm:$0xf]
    %v87 = vld [vmem:[%s2 + $0x30] sm:$0xf]
    %v88 = vld [vmem:[%s2 + $0x34] sm:$0xf]
    %v89 = vld [vmem:[%s2 + $0x38] sm:$0xf]
    %v90 = vld [vmem:[%s2 + $0x3c] sm:$0xf]
    %v91 = vld [vmem:[%s2 + $0x40] sm:$0xf]
    %v92 = vld [vmem:[%s2 + $0x44] sm:$0xf]
    %v93 = vld [vmem:[%s2 + $0x48] sm:$0xf]
    %v94 = vld [vmem:[%s2 + $0x4c] sm:$0xf]
    %v95 = vld [vmem:[%s2 + $0x50] sm:$0xf]
    %v96 = vld [vmem:[%s2 + $0x54] sm:$0xf]
    %v97 = vld [vmem:[%s2 + $0x58] sm:$0xf]
    %v98 = vld [vmem:[%s2 + $0x5c] sm:$0xf]
    %v99 = vld [vmem:[%s2 + $0x60] sm:$0xf]
    %v100 = vld [vmem:[%s2 + $0x64] sm:$0xf]
    %v101 = vld [vmem:[%s2 + $0x68] sm:$0xf]
    %v102 = vld [vmem:[%s2 + $0x6c] sm:$0xf]
    %v103 = vld [vmem:[%s2 + $0x70] sm:$0xf]
    %v104 = vld [vmem:[%s2 + $0x74] sm:$0xf]
    %v105 = vld [vmem:[%s2 + $0x78] sm:$0xf]
    %v106 = vld [vmem:[%s2 + $0x7c] sm:$0xf]
    %v107 = vld [vmem:[%s2 + $0x80] sm:$0xf]
    %v108 = vld [vmem:[%s2 + $0x84] sm:$0xf]
    %v109 = vld [vmem:[%s2 + $0x88] sm:$0xf]
    %v110 = vld [vmem:[%s2 + $0x8c] sm:$0xf]
    %v119 = vunpack.c.l.b16 %v67
    %v120 = vunpack.c.h.b16 %v67
    %v121 = vunpack.c.l.b16 %v68
    %v122 = vunpack.c.l.b16 %v69
    %v123 = vunpack.c.h.b16 %v69
    %v124 = vunpack.c.l.b16 %v70
    %v125 = vunpack.c.l.b16 %v71
    %v126 = vunpack.c.h.b16 %v71
    %v127 = vunpack.c.l.b16 %v72
    %v128 = vunpack.c.l.b16 %v73
    %v129 = vunpack.c.h.b16 %v73
    %v130 = vunpack.c.l.b16 %v74
    %v131 = vpack.c.b16 %v122, %v119
    %v132 = vpack.c.b16 %v123, %v120
    %v133 = vpack.c.b16 %v124, %v121
    %v134 = vpack.c.b16 %v128, %v125
    %v135 = vpack.c.b16 %v129, %v126
    %v136 = vpack.c.b16 %v130, %v127
    %v177 = vunpack.c.l.b16 %v75
    %v178 = vunpack.c.l.b16 %v76
    %v179 = vunpack.c.l.b16 %v77
    %v180 = vunpack.c.l.b16 %v78
    %v181 = vunpack.c.l.b16 %v79
    %v182 = vunpack.c.l.b16 %v80
    %v183 = vunpack.c.l.b16 %v81
    %v184 = vunpack.c.l.b16 %v82
    %v185 = vunpack.c.l.b16 %v83
    %v186 = vunpack.c.l.b16 %v84
    %v187 = vunpack.c.l.b16 %v85
    %v188 = vunpack.c.l.b16 %v86
    %v189 = vunpack.c.l.b16 %v87
    %v190 = vunpack.c.l.b16 %v88
    %v191 = vunpack.c.l.b16 %v89
    %v192 = vunpack.c.l.b16 %v90
    %v193 = vunpack.c.l.b16 %v91
    %v194 = vunpack.c.l.b16 %v92
    %v195 = vunpack.c.l.b16 %v93
    %v196 = vunpack.c.l.b16 %v94
    %v197 = vunpack.c.l.b16 %v95
    %v198 = vunpack.c.l.b16 %v96
    %v199 = vunpack.c.l.b16 %v97
    %v200 = vunpack.c.l.b16 %v98
    %v201 = vunpack.c.l.b16 %v99
    %v202 = vunpack.c.l.b16 %v100
    %v203 = vunpack.c.l.b16 %v101
    %v204 = vunpack.c.l.b16 %v102
    %v205 = vunpack.c.l.b16 %v103
    %v206 = vunpack.c.l.b16 %v104
    %v207 = vunpack.c.l.b16 %v105
    %v208 = vunpack.c.l.b16 %v106
    %v209 = vunpack.c.l.b16 %v107
    %v210 = vunpack.c.l.b16 %v108
    %v211 = vunpack.c.l.b16 %v109
    %v212 = vunpack.c.l.b16 %v110
    %v213 = vpack.c.b16 %v178, %v177
    %v214 = vpack.c.b16 %v180, %v179
    %v215 = vpack.c.b16 %v182, %v181
    %v216 = vpack.c.b16 %v184, %v183
    %v217 = vpack.c.b16 %v186, %v185
    %v218 = vpack.c.b16 %v188, %v187
    %v219 = vpack.c.b16 %v190, %v189
    %v220 = vpack.c.b16 %v192, %v191
    %v221 = vpack.c.b16 %v194, %v193
    %v222 = vpack.c.b16 %v196, %v195
    %v223 = vpack.c.b16 %v198, %v197
    %v224 = vpack.c.b16 %v200, %v199
    %v225 = vpack.c.b16 %v202, %v201
    %v226 = vpack.c.b16 %v204, %v203
    %v227 = vpack.c.b16 %v206, %v205
    %v228 = vpack.c.b16 %v208, %v207
    %v229 = vpack.c.b16 %v210, %v209
    %v230 = vpack.c.b16 %v212, %v211
    %vm249 = vcmask 261120
    %v251 = vsel %vm249, %v133, 0
    %v254 = vsel %vm249, %v136, 0
    %256 = vmatpush.bf16.msra.mxu0 %v220
    %257 = vmatpush.bf16.msra.mxu0 %v219
    %258 = vmatpush.bf16.msra.mxu0 %v218
    %259 = vmatpush.bf16.msra.mxu0 %v217
    %260 = vmatpush.bf16.msra.mxu0 %v216
    %261 = vmatpush.bf16.msra.mxu0 %v215
    %262 = vmatpush.bf16.msra.mxu0 %v214
    %263 = vmatpush.bf16.msra.mxu0 %v213
    %264 = vmatmul.bf16.gmra.mxu0 %v131
    %v265 = vpop.f32.mrf.mxu0
    %v266 = vadd.f32 0.0, %v265
    %v267 = vpop.f32.mrf.mxu0
    %v268 = vadd.f32 0.0, %v267
    %269 = vmatmul.bf16.gmra.mxu0 %v134
    %v270 = vpop.f32.mrf.mxu0
    %v271 = vadd.f32 0.0, %v270
    %v272 = vpop.f32.mrf.mxu0
    %v273 = vadd.f32 0.0, %v272
    %274 = vdwg.mxu0
    %275 = vmatpush.bf16.msra.mxu0 %v228
    %276 = vmatpush.bf16.msra.mxu0 %v227
    %277 = vmatpush.bf16.msra.mxu0 %v226
    %278 = vmatpush.bf16.msra.mxu0 %v225
    %279 = vmatpush.bf16.msra.mxu0 %v224
    %280 = vmatpush.bf16.msra.mxu0 %v223
    %281 = vmatpush.bf16.msra.mxu0 %v222
    %282 = vmatpush.bf16.msra.mxu0 %v221
    %283 = vmatmul.bf16.gmra.mxu0 %v132
    %v284 = vpop.f32.mrf.mxu0
    %v285 = vadd.f32 %v266, %v284
    %v286 = vpop.f32.mrf.mxu0
    %v287 = vadd.f32 %v268, %v286
    %288 = vmatmul.bf16.gmra.mxu0 %v135
    %v289 = vpop.f32.mrf.mxu0
    %v290 = vadd.f32 %v271, %v289
    %v291 = vpop.f32.mrf.mxu0
    %v292 = vadd.f32 %v273, %v291
    %293 = vdwg.mxu0
    %294 = vmatpush.bf16.msra.mxu0 0
    %295 = vmatpush.bf16.msra.mxu0 0
    %296 = vmatpush.bf16.msra.mxu0 0
    %297 = vmatpush.bf16.msra.mxu0 0
    %298 = vmatpush.bf16.msra.mxu0 0
    %299 = vmatpush.bf16.msra.mxu0 0
    %300 = vmatpush.bf16.msra.mxu0 %v230
    %301 = vmatpush.bf16.msra.mxu0 %v229
    %302 = vmatmul.bf16.gmra.mxu0 %v251
    %v303 = vpop.f32.mrf.mxu0
    %v304 = vadd.f32 %v285, %v303
    %v305 = vpop.f32.mrf.mxu0
    %v306 = vadd.f32 %v287, %v305
    %307 = vmatmul.bf16.gmra.mxu0 %v254
    %v308 = vpop.f32.mrf.mxu0
    %v309 = vadd.f32 %v290, %v308
    %v310 = vpop.f32.mrf.mxu0
    %v311 = vadd.f32 %v292, %v310
    %312 = vdwg.mxu0
    %v313 = vld [vmem:[%s5] sm:$0x1]
    %v315 = vperm.slane %v313, 0
    %v317 = vmul.f32 %v304, %v315
    %v318 = vmul.f32 %v306, %v315
    %v319 = vmul.f32 %v309, %v315
    %v320 = vmul.f32 %v311, %v315
    %v321 = vld [vmem:[%s6] sm:$0x1]
    %v323 = vperm.slane %v321, 0
    %v325 = vadd.f32 %v317, %v323
    %v326 = vadd.f32 %v318, %v323
    %v327 = vadd.f32 %v319, %v323
    %v328 = vadd.f32 %v320, %v323
    %v329 = vmax.f32 %v325, 0.0
    %v330 = vmax.f32 %v326, 0.0
    %v331 = vmax.f32 %v327, 0.0
    %v332 = vmax.f32 %v328, 0.0
    %v333 = vpack.c.bf16 %v330, %v329
    %v334 = vpack.c.bf16 %v332, %v331
    %v335 = vld [vmem:[%s3] sm:$0xf]
    %v336 = vld [vmem:[%s3 + $0x4] sm:$0xf]
    %v337 = vld [vmem:[%s3 + $0x8] sm:$0xf]
    %v338 = vld [vmem:[%s3 + $0xc] sm:$0xf]
    %v343 = vunpack.c.l.b16 %v335
    %v344 = vunpack.c.l.b16 %v336
    %v345 = vunpack.c.l.b16 %v337
    %v346 = vunpack.c.l.b16 %v338
    %v347 = vpack.c.b16 %v344, %v343
    %v348 = vpack.c.b16 %v346, %v345
    %v352 = vsel %vm249, %v333, 0
    %v355 = vsel %vm249, %v334, 0
    %357 = vmatpush.bf16.msra.mxu0 0
    %358 = vmatpush.bf16.msra.mxu0 0
    %359 = vmatpush.bf16.msra.mxu0 0
    %360 = vmatpush.bf16.msra.mxu0 0
    %361 = vmatpush.bf16.msra.mxu0 0
    %362 = vmatpush.bf16.msra.mxu0 0
    %363 = vmatpush.bf16.msra.mxu0 %v348
    %364 = vmatpush.bf16.msra.mxu0 %v347
    %365 = vmatmul.bf16.gmra.mxu0 %v352
    %v366 = vpop.f32.mrf.mxu0
    %v367 = vadd.f32 0.0, %v366
    %v368 = vpop.f32.mrf.mxu0
    %v369 = vadd.f32 0.0, %v368
    %370 = vmatmul.bf16.gmra.mxu0 %v355
    %v371 = vpop.f32.mrf.mxu0
    %v372 = vadd.f32 0.0, %v371
    %v373 = vpop.f32.mrf.mxu0
    %v374 = vadd.f32 0.0, %v373
    %375 = vdwg.mxu0
    %v376 = vld [vmem:[%s7] sm:$0x1]
    %v378 = vperm.slane %v376, 0
    %v380 = vmul.f32 %v367, %v378
    %v381 = vmul.f32 %v369, %v378
    %v382 = vmul.f32 %v372, %v378
    %v383 = vmul.f32 %v374, %v378
    %v384 = vld [vmem:[%s8] sm:$0x1]
    %v386 = vperm.slane %v384, 0
    %v388 = vadd.f32 %v380, %v386
    %v389 = vadd.f32 %v381, %v386
    %v390 = vadd.f32 %v382, %v386
    %v391 = vadd.f32 %v383, %v386
    %v392 = vld [vmem:[%s1] sm:$0xf]
    %v393 = vld [vmem:[%s1 + $0x4] sm:$0xf]
    %v394 = vld [vmem:[%s1 + $0x8] sm:$0xf]
    %v395 = vld [vmem:[%s1 + $0xc] sm:$0xf]
    %v396 = vld [vmem:[%s4] sm:$0xf]
    %v397 = vld [vmem:[%s4 + $0x4] sm:$0xf]
    %v398 = vld [vmem:[%s4 + $0x8] sm:$0xf]
    %v399 = vld [vmem:[%s4 + $0xc] sm:$0xf]
    %v400 = vld [vmem:[%s4 + $0x10] sm:$0xf]
    %v401 = vld [vmem:[%s4 + $0x14] sm:$0xf]
    %v402 = vld [vmem:[%s4 + $0x18] sm:$0xf]
    %v403 = vld [vmem:[%s4 + $0x1c] sm:$0xf]
    %v408 = vunpack.c.l.b16 %v392
    %v409 = vunpack.c.l.b16 %v393
    %v410 = vunpack.c.l.b16 %v394
    %v411 = vunpack.c.l.b16 %v395
    %v412 = vpack.c.b16 %v409, %v408
    %v413 = vpack.c.b16 %v411, %v410
    %v422 = vunpack.c.l.b16 %v396
    %v423 = vunpack.c.l.b16 %v397
    %v424 = vunpack.c.l.b16 %v398
    %v425 = vunpack.c.l.b16 %v399
    %v426 = vunpack.c.l.b16 %v400
    %v427 = vunpack.c.l.b16 %v401
    %v428 = vunpack.c.l.b16 %v402
    %v429 = vunpack.c.l.b16 %v403
    %v430 = vpack.c.b16 %v423, %v422
    %v431 = vpack.c.b16 %v425, %v424
    %v432 = vpack.c.b16 %v427, %v426
    %v433 = vpack.c.b16 %v429, %v428
    %vm438 = vcmask 523264
    %v440 = vsel %vm438, %v412, 0
    %v443 = vsel %vm438, %v413, 0
    %445 = vmatpush.bf16.msra.mxu0 0
    %446 = vmatpush.bf16.msra.mxu0 0
    %447 = vmatpush.bf16.msra.mxu0 0
    %448 = vmatpush.bf16.msra.mxu0 0
    %449 = vmatpush.bf16.msra.mxu0 %v433
    %450 = vmatpush.bf16.msra.mxu0 %v432
    %451 = vmatpush.bf16.msra.mxu0 %v431
    %452 = vmatpush.bf16.msra.mxu0 %v430
    %453 = vmatmul.bf16.gmra.mxu0 %v440
    %v454 = vpop.f32.mrf.mxu0
    %v455 = vadd.f32 0.0, %v454
    %v456 = vpop.f32.mrf.mxu0
    %v457 = vadd.f32 0.0, %v456
    %458 = vmatmul.bf16.gmra.mxu0 %v443
    %v459 = vpop.f32.mrf.mxu0
    %v460 = vadd.f32 0.0, %v459
    %v461 = vpop.f32.mrf.mxu0
    %v462 = vadd.f32 0.0, %v461
    %463 = vdwg.mxu0
    %v464 = vld [vmem:[#allocation2] sm:$0x1]
    %v466 = vperm.slane %v464, 0
    %v468 = vmul.f32 %v455, %v466
    %v469 = vmul.f32 %v457, %v466
    %v470 = vmul.f32 %v460, %v466
    %v471 = vmul.f32 %v462, %v466
    %v472 = vld [vmem:[#allocation4] sm:$0x1]
    %v474 = vperm.slane %v472, 0
    %v476 = vadd.f32 %v468, %v474
    %v477 = vadd.f32 %v469, %v474
    %v478 = vadd.f32 %v470, %v474
    %v479 = vadd.f32 %v471, %v474
    %v480 = vadd.f32 %v388, %v476
    %v481 = vadd.f32 %v389, %v477
    %v482 = vadd.f32 %v390, %v478
    %v483 = vadd.f32 %v391, %v479
    %v484 = vmax.f32 %v480, 0.0
    %v485 = vmax.f32 %v481, 0.0
    %v486 = vmax.f32 %v482, 0.0
    %v487 = vmax.f32 %v483, 0.0
    %v488 = vpack.c.bf16 %v484, %v484
    %v489 = vpack.c.bf16 %v485, %v485
    %v490 = vpack.c.bf16 %v486, %v486
    %v491 = vpack.c.bf16 %v487, %v487
    %vm492 = vcmask 519168
    %493 = vst.msk [vmem:[%s11] sm:$0xf] %vm492, %v488
    %494 = vst.msk [vmem:[%s11 + $0x4] sm:$0xf] %vm492, %v489
    %495 = vst.msk [vmem:[%s11 + $0x8] sm:$0xf] %vm492, %v490
    %496 = vst.msk [vmem:[%s11 + $0xc] sm:$0xf] %vm492, %v491
    // Predicated region
    $region54: #{resnext_ida_forward.27} parent=1 // pred_check
      _
    $region55: #{resnext_ida_forward.27} parent=1 // pred_check_branch
      %498 = sbr.rel (0) target = $region57
    $region56: #{resnext_ida_forward.27} parent=1 // pred_region
      _
    $region57: #{resnext_ida_forward.27} parent=1 // pred_fallthru
      _
    // Predicated region
    $region58: #{resnext_ida_forward.27} parent=1 // pred_check
      _
    $region59: #{resnext_ida_forward.27} parent=1 // pred_check_branch
      %500 = sbr.rel (0) target = $region61
    $region60: #{resnext_ida_forward.27} parent=1 // pred_region
      _
    $region61: #{resnext_ida_forward.27} parent=1 // pred_fallthru
      _
    %501 = vsyncpa [#allocation3], 1
    %502 = vsyncpa [#allocation5], 1

// kernel: resnext_ida_forward.33
$region0: #{resnext_ida_forward.33}
  #allocation0 [shape = 'u32[]', space=smem, size = 0x4, offset = 0x4, fixed_abs, tag = 'smem constant byte address 0x4 - core index']
  #allocation1 [shape = 'u32[72,128]{1,0:T(1,128)}', space=vmem, size = 0x9000, scoped, tag = 'internal scratch']
  %s0 = inlined_call_operand.vmem [shape: bf16[64,128], index: 0, kind: input, shape index: {}]
  %s1 = inlined_call_operand.vmem [shape: bf16[64,128], index: 1, kind: input, shape index: {}]
  %s2 = inlined_call_operand.vmem [shape: f32[1,128], index: 2, kind: input, shape index: {}]
  %s3 = inlined_call_operand.vmem [shape: f32[1,128], index: 3, kind: input, shape index: {}]
  %s4 = inlined_call_operand.vmem [shape: bf16[64,128], index: 4, kind: output, shape index: {}]
  %s5 = sld [smem:[#allocation0]]
  $region26: #{resnext_ida_forward.33} parent=0
    _
  %s7 = ssub.s32 1, %s5
  %s8 = scalar_select 0, %s7, %s5
  // Predicated region
  $region2: #{resnext_ida_forward.33} parent=0 // pred_check
    _
  $region3: #{resnext_ida_forward.33} parent=0 // pred_check_branch
    %10 = sbr.rel (0) target = $region5
  $region4: #{resnext_ida_forward.33} parent=0 // pred_region
    _
  $region5: #{resnext_ida_forward.33} parent=0 // pred_fallthru
    _
  // Predicated region
  $region6: #{resnext_ida_forward.33} parent=0 // pred_check
    _
  $region7: #{resnext_ida_forward.33} parent=0 // pred_check_branch
    %12 = sbr.rel (0) target = $region9
  $region8: #{resnext_ida_forward.33} parent=0 // pred_region
    _
  $region9: #{resnext_ida_forward.33} parent=0 // pred_fallthru
    _
  // Predicated region
  $region10: #{resnext_ida_forward.33} parent=0 // pred_check
    _
  $region11: #{resnext_ida_forward.33} parent=0 // pred_check_branch
    %14 = sbr.rel (0) target = $region13
  $region12: #{resnext_ida_forward.33} parent=0 // pred_region
    _
  $region13: #{resnext_ida_forward.33} parent=0 // pred_fallthru
    _
  // Predicated region
  $region14: #{resnext_ida_forward.33} parent=0 // pred_check
    _
  $region15: #{resnext_ida_forward.33} parent=0 // pred_check_branch
    %16 = sbr.rel (0) target = $region17
  $region16: #{resnext_ida_forward.33} parent=0 // pred_region
    _
  $region17: #{resnext_ida_forward.33} parent=0 // pred_fallthru
    _
  %v17 = vld [vmem:[%s0] sm:$0xf]
  %v18 = vld [vmem:[%s0 + $0x4] sm:$0xf]
  %v19 = vld [vmem:[%s0 + $0x8] sm:$0xf]
  %v20 = vld [vmem:[%s0 + $0xc] sm:$0xf]
  %v21 = vld [vmem:[%s0 + $0x10] sm:$0xf]
  %v22 = vld [vmem:[%s0 + $0x14] sm:$0xf]
  %v23 = vld [vmem:[%s0 + $0x18] sm:$0xf]
  %v24 = vld [vmem:[%s0 + $0x1c] sm:$0xf]
  %v25 = vunpack.c.l.bf16 %v17
  %v26 = vunpack.c.l.bf16 %v18
  %v27 = vunpack.c.l.bf16 %v19
  %v28 = vunpack.c.l.bf16 %v20
  %v29 = vunpack.c.l.bf16 %v21
  %v30 = vunpack.c.l.bf16 %v22
  %v31 = vunpack.c.l.bf16 %v23
  %v32 = vunpack.c.l.bf16 %v24
  %v33 = vld [vmem:[%s1] sm:$0xf]
  %v34 = vld [vmem:[%s1 + $0x4] sm:$0xf]
  %v35 = vld [vmem:[%s1 + $0x8] sm:$0xf]
  %v36 = vld [vmem:[%s1 + $0xc] sm:$0xf]
  %v37 = vld [vmem:[%s1 + $0x10] sm:$0xf]
  %v38 = vld [vmem:[%s1 + $0x14] sm:$0xf]
  %v39 = vld [vmem:[%s1 + $0x18] sm:$0xf]
  %v40 = vld [vmem:[%s1 + $0x1c] sm:$0xf]
  %v41 = vunpack.c.l.bf16 %v33
  %v42 = vunpack.c.l.bf16 %v34
  %v43 = vunpack.c.l.bf16 %v35
  %v44 = vunpack.c.l.bf16 %v36
  %v45 = vunpack.c.l.bf16 %v37
  %v46 = vunpack.c.l.bf16 %v38
  %v47 = vunpack.c.l.bf16 %v39
  %v48 = vunpack.c.l.bf16 %v40
  %v49 = vadd.f32 %v25, %v41
  %v50 = vadd.f32 %v26, %v42
  %v51 = vadd.f32 %v27, %v43
  %v52 = vadd.f32 %v28, %v44
  %v53 = vadd.f32 %v29, %v45
  %v54 = vadd.f32 %v30, %v46
  %v55 = vadd.f32 %v31, %v47
  %v56 = vadd.f32 %v32, %v48
  %v57 = vld [vmem:[%s2] sm:$0x1]
  %v59 = vperm.slane %v57, 0
  %v61 = vmul.f32 %v49, %v59
  %v62 = vmul.f32 %v50, %v59
  %v63 = vmul.f32 %v51, %v59
  %v64 = vmul.f32 %v52, %v59
  %v65 = vmul.f32 %v53, %v59
  %v66 = vmul.f32 %v54, %v59
  %v67 = vmul.f32 %v55, %v59
  %v68 = vmul.f32 %v56, %v59
  %v69 = vld [vmem:[%s3] sm:$0x1]
  %v71 = vperm.slane %v69, 0
  %v73 = vadd.f32 %v61, %v71
  %v74 = vadd.f32 %v62, %v71
  %v75 = vadd.f32 %v63, %v71
  %v76 = vadd.f32 %v64, %v71
  %v77 = vadd.f32 %v65, %v71
  %v78 = vadd.f32 %v66, %v71
  %v79 = vadd.f32 %v67, %v71
  %v80 = vadd.f32 %v68, %v71
  %v81 = vmax.f32 %v73, 0.0
  %v82 = vmax.f32 %v74, 0.0
  %v83 = vmax.f32 %v75, 0.0
  %v84 = vmax.f32 %v76, 0.0
  %v85 = vmax.f32 %v77, 0.0
  %v86 = vmax.f32 %v78, 0.0
  %v87 = vmax.f32 %v79, 0.0
  %v88 = vmax.f32 %v80, 0.0
  %v89 = vpack.c.bf16 %v81, %v81
  %v90 = vpack.c.bf16 %v82, %v82
  %v91 = vpack.c.bf16 %v83, %v83
  %v92 = vpack.c.bf16 %v84, %v84
  %v93 = vpack.c.bf16 %v85, %v85
  %v94 = vpack.c.bf16 %v86, %v86
  %v95 = vpack.c.bf16 %v87, %v87
  %v96 = vpack.c.bf16 %v88, %v88
  %97 = vst [vmem:[%s4] sm:$0xf] %v89
  %98 = vst [vmem:[%s4 + $0x4] sm:$0xf] %v90
  %99 = vst [vmem:[%s4 + $0x8] sm:$0xf] %v91
  %100 = vst [vmem:[%s4 + $0xc] sm:$0xf] %v92
  %101 = vst [vmem:[%s4 + $0x10] sm:$0xf] %v93
  %102 = vst [vmem:[%s4 + $0x14] sm:$0xf] %v94
  %103 = vst [vmem:[%s4 + $0x18] sm:$0xf] %v95
  %104 = vst [vmem:[%s4 + $0x1c] sm:$0xf] %v96
  // Predicated region
  $region18: #{resnext_ida_forward.33} parent=0 // pred_check
    _
  $region19: #{resnext_ida_forward.33} parent=0 // pred_check_branch
    %106 = sbr.rel (0) target = $region21
  $region20: #{resnext_ida_forward.33} parent=0 // pred_region
    _
  $region21: #{resnext_ida_forward.33} parent=0 // pred_fallthru
    _
  // Predicated region
  $region22: #{resnext_ida_forward.33} parent=0 // pred_check
    _
  $region23: #{resnext_ida_forward.33} parent=0 // pred_check_branch
    %108 = sbr.rel (0) target = $region25
  $region24: #{resnext_ida_forward.33} parent=0 // pred_region
    _
  $region25: #{resnext_ida_forward.33} parent=0 // pred_fallthru
    _

// kernel: resnext_ida_forward.28
$region0: #{resnext_ida_forward.28}
  #allocation0 [shape = 'u32[]', space=smem, size = 0x4, offset = 0x4, fixed_abs, tag = 'smem constant byte address 0x4 - core index']
  #allocation1 [shape = 'u32[72,128]{1,0:T(1,128)}', space=vmem, size = 0x9000, scoped, tag = 'internal scratch']
  %s0 = inlined_call_operand.vmem [shape: bf16[32,64], index: 0, kind: input, shape index: {}]
  %s1 = inlined_call_operand.vmem [shape: bf16[64,32], index: 1, kind: input, shape index: {}]
  %s2 = inlined_call_operand.hbm [shape: f32[1,32], index: 2, kind: input, shape index: {}]
  %s3 = inlined_call_operand.hbm [shape: f32[1,32], index: 3, kind: input, shape index: {}]
  %s4 = inlined_call_operand.vmem [shape: bf16[32,32], index: 4, kind: output, shape index: {}]
  %s5 = sld [smem:[#allocation0]]
  $region34: #{resnext_ida_forward.28} parent=0
    _
  %s7 = ssub.s32 1, %s5
  %s8 = scalar_select 0, %s7, %s5
  $region1: #{resnext_ida_forward.28} parent=0
    #allocation2 [shape = 'u8[512]{0}', space=vmem, size = 0x400, scoped, tag = 'input window, operand 2, single buffered']
    #allocation3 [shape = 's32[1]{0}', space=sflag, size = 0x4, scoped, tag = 'scoped memory for resnext_ida_forward.28']
    #allocation4 [shape = 'u8[512]{0}', space=vmem, size = 0x400, scoped, tag = 'input window, operand 3, single buffered']
    #allocation5 [shape = 's32[1]{0}', space=sflag, size = 0x4, scoped, tag = 'scoped memory for resnext_ida_forward.28']
    %9 = vsyncpa [#allocation3], 0
    %10 = vsyncpa [#allocation5], 0
    // Predicated region
    $region2: #{resnext_ida_forward.28} parent=1 // pred_check
      _
    $region3: #{resnext_ida_forward.28} parent=1 // pred_check_branch
      %12 = sbr.rel (0) target = $region5
    $region4: #{resnext_ida_forward.28} parent=1 // pred_region
      _
    $region5: #{resnext_ida_forward.28} parent=1 // pred_fallthru
      _
    // Predicated region
    $region6: #{resnext_ida_forward.28} parent=1 // pred_check
      _
    $region7: #{resnext_ida_forward.28} parent=1 // pred_check_branch
      %14 = sbr.rel (0) target = $region9
    $region8: #{resnext_ida_forward.28} parent=1 // pred_region
      _
    $region9: #{resnext_ida_forward.28} parent=1 // pred_fallthru
      _
    // Predicated region
    $region10: #{resnext_ida_forward.28} parent=1 // pred_check
      _
    $region11: #{resnext_ida_forward.28} parent=1 // pred_check_branch
      %16 = sbr.rel (0) target = $region13
    $region12: #{resnext_ida_forward.28} parent=1 // pred_region
      %18 = vsyncadd [#allocation3], 0
      %s20 = sshll.u32 %s2, 4
      %s21 = int_to_ptr.hbm [resolvable:$true] %s20
      %s22 = sshll.u32 [#allocation2], 4
      %s23 = int_to_ptr.vmem [resolvable:$true] %s22
      %25 = dma.hbm_to_vmem [thread:$0]  %s21, 16, %s23, [#allocation3]
    $region13: #{resnext_ida_forward.28} parent=1 // pred_fallthru
      _
    // Predicated region
    $region14: #{resnext_ida_forward.28} parent=1 // pred_check
      _
    $region15: #{resnext_ida_forward.28} parent=1 // pred_check_branch
      %27 = sbr.rel (0) target = $region17
    $region16: #{resnext_ida_forward.28} parent=1 // pred_region
      %29 = vsyncadd [#allocation5], 0
      %s31 = sshll.u32 %s3, 4
      %s32 = int_to_ptr.hbm [resolvable:$true] %s31
      %s33 = sshll.u32 [#allocation4], 4
      %s34 = int_to_ptr.vmem [resolvable:$true] %s33
      %36 = dma.hbm_to_vmem [thread:$0]  %s32, 16, %s34, [#allocation5]
    $region17: #{resnext_ida_forward.28} parent=1 // pred_fallthru
      _
    // Predicated region
    $region18: #{resnext_ida_forward.28} parent=1 // pred_check
      _
    $region19: #{resnext_ida_forward.28} parent=1 // pred_check_branch
      %38 = sbr.rel (0) target = $region21
    $region20: #{resnext_ida_forward.28} parent=1 // pred_region
      %40 = dma.done [#allocation3], 16
    $region21: #{resnext_ida_forward.28} parent=1 // pred_fallthru
      _
    // Predicated region
    $region22: #{resnext_ida_forward.28} parent=1 // pred_check
      _
    $region23: #{resnext_ida_forward.28} parent=1 // pred_check_branch
      %42 = sbr.rel (0) target = $region25
    $region24: #{resnext_ida_forward.28} parent=1 // pred_region
      %44 = dma.done [#allocation5], 16
    $region25: #{resnext_ida_forward.28} parent=1 // pred_fallthru
      _
    %v46 = vld [vmem:[%s0] sm:$0xf]
    %v47 = vld [vmem:[%s0 + $0x4] sm:$0xf]
    %v48 = vld [vmem:[%s0 + $0x8] sm:$0xf]
    %v49 = vld [vmem:[%s0 + $0xc] sm:$0xf]
    %v50 = vld [vmem:[%s1] sm:$0xf]
    %v51 = vld [vmem:[%s1 + $0x4] sm:$0xf]
    %v52 = vld [vmem:[%s1 + $0x8] sm:$0xf]
    %v53 = vld [vmem:[%s1 + $0xc] sm:$0xf]
    %v54 = vld [vmem:[%s1 + $0x10] sm:$0xf]
    %v55 = vld [vmem:[%s1 + $0x14] sm:$0xf]
    %v56 = vld [vmem:[%s1 + $0x18] sm:$0xf]
    %v57 = vld [vmem:[%s1 + $0x1c] sm:$0xf]
    %v62 = vunpack.c.l.b16 %v46
    %v63 = vunpack.c.l.b16 %v47
    %v64 = vunpack.c.l.b16 %v48
    %v65 = vunpack.c.l.b16 %v49
    %v66 = vpack.c.b16 %v63, %v62
    %v67 = vpack.c.b16 %v65, %v64
    %v76 = vunpack.c.l.b16 %v50
    %v77 = vunpack.c.l.b16 %v51
    %v78 = vunpack.c.l.b16 %v52
    %v79 = vunpack.c.l.b16 %v53
    %v80 = vunpack.c.l.b16 %v54
    %v81 = vunpack.c.l.b16 %v55
    %v82 = vunpack.c.l.b16 %v56
    %v83 = vunpack.c.l.b16 %v57
    %v84 = vpack.c.b16 %v77, %v76
    %v85 = vpack.c.b16 %v79, %v78
    %v86 = vpack.c.b16 %v81, %v80
    %v87 = vpack.c.b16 %v83, %v82
    %vm92 = vcmask 523264
    %v94 = vsel %vm92, %v66, 0
    %v97 = vsel %vm92, %v67, 0
    %99 = vmatpush.bf16.msra.mxu0 0
    %100 = vmatpush.bf16.msra.mxu0 0
    %101 = vmatpush.bf16.msra.mxu0 0
    %102 = vmatpush.bf16.msra.mxu0 0
    %103 = vmatpush.bf16.msra.mxu0 %v87
    %104 = vmatpush.bf16.msra.mxu0 %v86
    %105 = vmatpush.bf16.msra.mxu0 %v85
    %106 = vmatpush.bf16.msra.mxu0 %v84
    %107 = vmatmul.bf16.gmra.mxu0 %v94
    %v108 = vpop.f32.mrf.mxu0
    %v109 = vadd.f32 0.0, %v108
    %v110 = vpop.f32.mrf.mxu0
    %v111 = vadd.f32 0.0, %v110
    %112 = vmatmul.bf16.gmra.mxu0 %v97
    %v113 = vpop.f32.mrf.mxu0
    %v114 = vadd.f32 0.0, %v113
    %v115 = vpop.f32.mrf.mxu0
    %v116 = vadd.f32 0.0, %v115
    %117 = vdwg.mxu0
    %v118 = vld [vmem:[#allocation2] sm:$0x1]
    %v120 = vperm.slane %v118, 0
    %v122 = vmul.f32 %v109, %v120
    %v123 = vmul.f32 %v111, %v120
    %v124 = vmul.f32 %v114, %v120
    %v125 = vmul.f32 %v116, %v120
    %v126 = vld [vmem:[#allocation4] sm:$0x1]
    %v128 = vperm.slane %v126, 0
    %v130 = vadd.f32 %v122, %v128
    %v131 = vadd.f32 %v123, %v128
    %v132 = vadd.f32 %v124, %v128
    %v133 = vadd.f32 %v125, %v128
    %v134 = vmax.f32 %v130, 0.0
    %v135 = vmax.f32 %v131, 0.0
    %v136 = vmax.f32 %v132, 0.0
    %v137 = vmax.f32 %v133, 0.0
    %v138 = vpack.c.bf16 %v134, %v134
    %v139 = vpack.c.bf16 %v135, %v135
    %v140 = vpack.c.bf16 %v136, %v136
    %v141 = vpack.c.bf16 %v137, %v137
    %vm142 = vcmask 257024
    %143 = vst.msk [vmem:[%s4] sm:$0xf] %vm142, %v138
    %144 = vst.msk [vmem:[%s4 + $0x4] sm:$0xf] %vm142, %v139
    %145 = vst.msk [vmem:[%s4 + $0x8] sm:$0xf] %vm142, %v140
    %146 = vst.msk [vmem:[%s4 + $0xc] sm:$0xf] %vm142, %v141
    // Predicated region
    $region26: #{resnext_ida_forward.28} parent=1 // pred_check
      _
    $region27: #{resnext_ida_forward.28} parent=1 // pred_check_branch
      %148 = sbr.rel (0) target = $region29
    $region28: #{resnext_ida_forward.28} parent=1 // pred_region
      _
    $region29: #{resnext_ida_forward.28} parent=1 // pred_fallthru
      _
    // Predicated region
    $region30: #{resnext_ida_forward.28} parent=1 // pred_check
      _
    $region31: #{resnext_ida_forward.28} parent=1 // pred_check_branch
      %150 = sbr.rel (0) target = $region33
    $region32: #{resnext_ida_forward.28} parent=1 // pred_region
      _
    $region33: #{resnext_ida_forward.28} parent=1 // pred_fallthru
      _
    %151 = vsyncpa [#allocation3], 1
    %152 = vsyncpa [#allocation5], 1

// kernel: resnext_ida_forward.34
$region0: #{resnext_ida_forward.34}
  #allocation0 [shape = 'u32[]', space=smem, size = 0x4, offset = 0x4, fixed_abs, tag = 'smem constant byte address 0x4 - core index']
  #allocation1 [shape = 'u32[72,128]{1,0:T(1,128)}', space=vmem, size = 0x9000, scoped, tag = 'internal scratch']
  %s0 = inlined_call_operand.vmem [shape: bf16[8,64], index: 0, kind: input, shape index: {}]
  %s1 = inlined_call_operand.vmem [shape: bf16[64,256], index: 1, kind: input, shape index: {}]
  %s2 = inlined_call_operand.vmem [shape: f32[1,256], index: 2, kind: input, shape index: {}]
  %s3 = inlined_call_operand.vmem [shape: f32[1,256], index: 3, kind: input, shape index: {}]
  %s4 = inlined_call_operand.vmem [shape: bf16[8,256], index: 4, kind: output, shape index: {}]
  %s5 = sld [smem:[#allocation0]]
  $region26: #{resnext_ida_forward.34} parent=0
    _
  %s7 = ssub.s32 1, %s5
  %s8 = scalar_select 0, %s7, %s5
  // Predicated region
  $region2: #{resnext_ida_forward.34} parent=0 // pred_check
    _
  $region3: #{resnext_ida_forward.34} parent=0 // pred_check_branch
    %10 = sbr.rel (0) target = $region5
  $region4: #{resnext_ida_forward.34} parent=0 // pred_region
    _
  $region5: #{resnext_ida_forward.34} parent=0 // pred_fallthru
    _
  // Predicated region
  $region6: #{resnext_ida_forward.34} parent=0 // pred_check
    _
  $region7: #{resnext_ida_forward.34} parent=0 // pred_check_branch
    %12 = sbr.rel (0) target = $region9
  $region8: #{resnext_ida_forward.34} parent=0 // pred_region
    _
  $region9: #{resnext_ida_forward.34} parent=0 // pred_fallthru
    _
  // Predicated region
  $region10: #{resnext_ida_forward.34} parent=0 // pred_check
    _
  $region11: #{resnext_ida_forward.34} parent=0 // pred_check_branch
    %14 = sbr.rel (0) target = $region13
  $region12: #{resnext_ida_forward.34} parent=0 // pred_region
    _
  $region13: #{resnext_ida_forward.34} parent=0 // pred_fallthru
    _
  // Predicated region
  $region14: #{resnext_ida_forward.34} parent=0 // pred_check
    _
  $region15: #{resnext_ida_forward.34} parent=0 // pred_check_branch
    %16 = sbr.rel (0) target = $region17
  $region16: #{resnext_ida_forward.34} parent=0 // pred_region
    _
  $region17: #{resnext_ida_forward.34} parent=0 // pred_fallthru
    _
  %v18 = vld [vmem:[%s0] sm:$0xf]
  %v19 = vld [vmem:[%s1] sm:$0xff]
  %v20 = vld [vmem:[%s1 + $0x8] sm:$0xff]
  %v21 = vld [vmem:[%s1 + $0x10] sm:$0xff]
  %v22 = vld [vmem:[%s1 + $0x18] sm:$0xff]
  %v23 = vld [vmem:[%s1 + $0x20] sm:$0xff]
  %v24 = vld [vmem:[%s1 + $0x28] sm:$0xff]
  %v25 = vld [vmem:[%s1 + $0x30] sm:$0xff]
  %v26 = vld [vmem:[%s1 + $0x38] sm:$0xff]
  %v35 = vunpack.c.l.b16 %v19
  %v36 = vunpack.c.h.b16 %v19
  %v37 = vunpack.c.l.b16 %v20
  %v38 = vunpack.c.h.b16 %v20
  %v39 = vunpack.c.l.b16 %v21
  %v40 = vunpack.c.h.b16 %v21
  %v41 = vunpack.c.l.b16 %v22
  %v42 = vunpack.c.h.b16 %v22
  %v43 = vunpack.c.l.b16 %v23
  %v44 = vunpack.c.h.b16 %v23
  %v45 = vunpack.c.l.b16 %v24
  %v46 = vunpack.c.h.b16 %v24
  %v47 = vunpack.c.l.b16 %v25
  %v48 = vunpack.c.h.b16 %v25
  %v49 = vunpack.c.l.b16 %v26
  %v50 = vunpack.c.h.b16 %v26
  %v51 = vpack.c.b16 %v37, %v35
  %v52 = vpack.c.b16 %v38, %v36
  %v53 = vpack.c.b16 %v41, %v39
  %v54 = vpack.c.b16 %v42, %v40
  %v55 = vpack.c.b16 %v45, %v43
  %v56 = vpack.c.b16 %v46, %v44
  %v57 = vpack.c.b16 %v49, %v47
  %v58 = vpack.c.b16 %v50, %v48
  %vm67 = vcmask 523264
  %v69 = vsel %vm67, %v18, 0
  %71 = vmatpush.bf16.msra.mxu0 0
  %72 = vmatpush.bf16.msra.mxu0 0
  %73 = vmatpush.bf16.msra.mxu0 0
  %74 = vmatpush.bf16.msra.mxu0 0
  %75 = vmatpush.bf16.msra.mxu0 %v57
  %76 = vmatpush.bf16.msra.mxu0 %v55
  %77 = vmatpush.bf16.msra.mxu0 %v53
  %78 = vmatpush.bf16.msra.mxu0 %v51
  %79 = vmatmul.bf16.gmra.mxu0 %v69
  %v80 = vpop.f32.mrf.mxu0
  %v81 = vadd.f32 0.0, %v80
  %v82 = vpop.f32.mrf.mxu0
  %83 = vdwg.mxu0
  %84 = vmatpush.bf16.msra.mxu0 0
  %85 = vmatpush.bf16.msra.mxu0 0
  %86 = vmatpush.bf16.msra.mxu0 0
  %87 = vmatpush.bf16.msra.mxu0 0
  %88 = vmatpush.bf16.msra.mxu0 %v58
  %89 = vmatpush.bf16.msra.mxu0 %v56
  %90 = vmatpush.bf16.msra.mxu0 %v54
  %91 = vmatpush.bf16.msra.mxu0 %v52
  %92 = vmatmul.bf16.gmra.mxu0 %v69
  %v93 = vpop.f32.mrf.mxu0
  %v94 = vadd.f32 0.0, %v93
  %v95 = vpop.f32.mrf.mxu0
  %96 = vdwg.mxu0
  %v97 = vld [vmem:[%s2] sm:$0x3]
  %v99 = vperm.slane %v97, 0
  %v100 = vperm.slane %v97, 1
  %v103 = vmul.f32 %v81, %v99
  %v104 = vmul.f32 %v94, %v100
  %v105 = vld [vmem:[%s3] sm:$0x3]
  %v107 = vperm.slane %v105, 0
  %v108 = vperm.slane %v105, 1
  %v111 = vadd.f32 %v103, %v107
  %v112 = vadd.f32 %v104, %v108
  %v113 = vpack.c.bf16 %v112, %v111
  %114 = vst [vmem:[%s4] sm:$0xff] %v113
  // Predicated region
  $region18: #{resnext_ida_forward.34} parent=0 // pred_check
    _
  $region19: #{resnext_ida_forward.34} parent=0 // pred_check_branch
    %116 = sbr.rel (0) target = $region21
  $region20: #{resnext_ida_forward.34} parent=0 // pred_region
    _
  $region21: #{resnext_ida_forward.34} parent=0 // pred_fallthru
    _
  // Predicated region
  $region22: #{resnext_ida_forward.34} parent=0 // pred_check
    _
  $region23: #{resnext_ida_forward.34} parent=0 // pred_check_branch
    %118 = sbr.rel (0) target = $region25
  $region24: #{resnext_ida_forward.34} parent=0 // pred_region
    _
  $region25: #{resnext_ida_forward.34} parent=0 // pred_fallthru
    _

// kernel: resnext_ida_forward.29
$region0: #{resnext_ida_forward.29}
  #allocation0 [shape = 'u32[]', space=smem, size = 0x4, offset = 0x4, fixed_abs, tag = 'smem constant byte address 0x4 - core index']
  #allocation1 [shape = 'u32[72,128]{1,0:T(1,128)}', space=vmem, size = 0x9000, scoped, tag = 'internal scratch']
  %s0 = inlined_call_operand.vmem [shape: bf16[8,288], index: 0, kind: input, shape index: {}]
  %s1 = inlined_call_operand.vmem [shape: bf16[8,64], index: 1, kind: input, shape index: {}]
  %s2 = inlined_call_operand.vmem [shape: bf16[288,32], index: 2, kind: input, shape index: {}]
  %s3 = inlined_call_operand.vmem [shape: bf16[32,64], index: 3, kind: input, shape index: {}]
  %s4 = inlined_call_operand.vmem [shape: bf16[64,64], index: 4, kind: input, shape index: {}]
  %s5 = inlined_call_operand.hbm [shape: f32[1,32], index: 5, kind: input, shape index: {}]
  %s6 = inlined_call_operand.hbm [shape: f32[1,32], index: 6, kind: input, shape index: {}]
  %s7 = inlined_call_operand.hbm [shape: f32[1,64], index: 7, kind: input, shape index: {}]
  %s8 = inlined_call_operand.hbm [shape: f32[1,64], index: 8, kind: input, shape index: {}]
  %s9 = inlined_call_operand.hbm [shape: f32[1,64], index: 9, kind: input, shape index: {}]
  %s10 = inlined_call_operand.hbm [shape: f32[1,64], index: 10, kind: input, shape index: {}]
  %s11 = inlined_call_operand.vmem [shape: bf16[8,64], index: 11, kind: output, shape index: {}]
  %s12 = sld [smem:[#allocation0]]
  $region78: #{resnext_ida_forward.29} parent=0
    _
  %s14 = ssub.s32 1, %s12
  %s15 = scalar_select 0, %s14, %s12
  $region1: #{resnext_ida_forward.29} parent=0
    #allocation2 [shape = 'u8[512]{0}', space=vmem, size = 0x400, scoped, tag = 'input window, operand 5, single buffered']
    #allocation3 [shape = 's32[1]{0}', space=sflag, size = 0x4, scoped, tag = 'scoped memory for resnext_ida_forward.29']
    #allocation4 [shape = 'u8[512]{0}', space=vmem, size = 0x400, scoped, tag = 'input window, operand 6, single buffered']
    #allocation5 [shape = 's32[1]{0}', space=sflag, size = 0x4, scoped, tag = 'scoped memory for resnext_ida_forward.29']
    #allocation6 [shape = 'u8[512]{0}', space=vmem, size = 0x400, scoped, tag = 'input window, operand 7, single buffered']
    #allocation7 [shape = 'u8[512]{0}', space=vmem, size = 0x400, scoped, tag = 'input window, operand 8, single buffered']
    #allocation8 [shape = 's32[1]{0}', space=sflag, size = 0x4, scoped, tag = 'scoped memory for resnext_ida_forward.29']
    #allocation9 [shape = 'u8[512]{0}', space=vmem, size = 0x400, scoped, tag = 'input window, operand 9, single buffered']
    #allocation10 [shape = 'u8[512]{0}', space=vmem, size = 0x400, scoped, tag = 'input window, operand 10, single buffered']
    #allocation11 [shape = 's32[1]{0}', space=sflag, size = 0x4, scoped, tag = 'scoped memory for resnext_ida_forward.29']
    %16 = vsyncpa [#allocation3], 0
    %17 = vsyncpa [#allocation5], 0
    %18 = vsyncpa [#allocation8], 0
    %19 = vsyncpa [#allocation11], 0
    // Predicated region
    $region2: #{resnext_ida_forward.29} parent=1 // pred_check
      _
    $region3: #{resnext_ida_forward.29} parent=1 // pred_check_branch
      %21 = sbr.rel (0) target = $region5
    $region4: #{resnext_ida_forward.29} parent=1 // pred_region
      _
    $region5: #{resnext_ida_forward.29} parent=1 // pred_fallthru
      _
    // Predicated region
    $region6: #{resnext_ida_forward.29} parent=1 // pred_check
      _
    $region7: #{resnext_ida_forward.29} parent=1 // pred_check_branch
      %23 = sbr.rel (0) target = $region9
    $region8: #{resnext_ida_forward.29} parent=1 // pred_region
      _
    $region9: #{resnext_ida_forward.29} parent=1 // pred_fallthru
      _
    // Predicated region
    $region10: #{resnext_ida_forward.29} parent=1 // pred_check
      _
    $region11: #{resnext_ida_forward.29} parent=1 // pred_check_branch
      %25 = sbr.rel (0) target = $region13
    $region12: #{resnext_ida_forward.29} parent=1 // pred_region
      _
    $region13: #{resnext_ida_forward.29} parent=1 // pred_fallthru
      _
    // Predicated region
    $region14: #{resnext_ida_forward.29} parent=1 // pred_check
      _
    $region15: #{resnext_ida_forward.29} parent=1 // pred_check_branch
      %27 = sbr.rel (0) target = $region17
    $region16: #{resnext_ida_forward.29} parent=1 // pred_region
      _
    $region17: #{resnext_ida_forward.29} parent=1 // pred_fallthru
      _
    // Predicated region
    $region18: #{resnext_ida_forward.29} parent=1 // pred_check
      _
    $region19: #{resnext_ida_forward.29} parent=1 // pred_check_branch
      %29 = sbr.rel (0) target = $region21
    $region20: #{resnext_ida_forward.29} parent=1 // pred_region
      _
    $region21: #{resnext_ida_forward.29} parent=1 // pred_fallthru
      _
    // Predicated region
    $region22: #{resnext_ida_forward.29} parent=1 // pred_check
      _
    $region23: #{resnext_ida_forward.29} parent=1 // pred_check_branch
      %31 = sbr.rel (0) target = $region25
    $region24: #{resnext_ida_forward.29} parent=1 // pred_region
      %33 = vsyncadd [#allocation3], 0
      %s35 = sshll.u32 %s5, 4
      %s36 = int_to_ptr.hbm [resolvable:$true] %s35
      %s37 = sshll.u32 [#allocation2], 4
      %s38 = int_to_ptr.vmem [resolvable:$true] %s37
      %40 = dma.hbm_to_vmem [thread:$0]  %s36, 16, %s38, [#allocation3]
    $region25: #{resnext_ida_forward.29} parent=1 // pred_fallthru
      _
    // Predicated region
    $region26: #{resnext_ida_forward.29} parent=1 // pred_check
      _
    $region27: #{resnext_ida_forward.29} parent=1 // pred_check_branch
      %42 = sbr.rel (0) target = $region29
    $region28: #{resnext_ida_forward.29} parent=1 // pred_region
      %44 = vsyncadd [#allocation5], 0
      %s46 = sshll.u32 %s6, 4
      %s47 = int_to_ptr.hbm [resolvable:$true] %s46
      %s48 = sshll.u32 [#allocation4], 4
      %s49 = int_to_ptr.vmem [resolvable:$true] %s48
      %51 = dma.hbm_to_vmem [thread:$0]  %s47, 16, %s49, [#allocation5]
    $region29: #{resnext_ida_forward.29} parent=1 // pred_fallthru
      _
    // Predicated region
    $region30: #{resnext_ida_forward.29} parent=1 // pred_check
      _
    $region31: #{resnext_ida_forward.29} parent=1 // pred_check_branch
      %53 = sbr.rel (0) target = $region33
    $region32: #{resnext_ida_forward.29} parent=1 // pred_region
      %55 = vsyncadd [#allocation5], 0
      %s57 = sshll.u32 %s7, 4
      %s58 = int_to_ptr.hbm [resolvable:$true] %s57
      %s59 = sshll.u32 [#allocation6], 4
      %s60 = int_to_ptr.vmem [resolvable:$true] %s59
      %62 = dma.hbm_to_vmem [thread:$0]  %s58, 16, %s60, [#allocation5]
    $region33: #{resnext_ida_forward.29} parent=1 // pred_fallthru
      _
    // Predicated region
    $region34: #{resnext_ida_forward.29} parent=1 // pred_check
      _
    $region35: #{resnext_ida_forward.29} parent=1 // pred_check_branch
      %64 = sbr.rel (0) target = $region37
    $region36: #{resnext_ida_forward.29} parent=1 // pred_region
      %66 = vsyncadd [#allocation8], 0
      %s68 = sshll.u32 %s8, 4
      %s69 = int_to_ptr.hbm [resolvable:$true] %s68
      %s70 = sshll.u32 [#allocation7], 4
      %s71 = int_to_ptr.vmem [resolvable:$true] %s70
      %73 = dma.hbm_to_vmem [thread:$0]  %s69, 16, %s71, [#allocation8]
    $region37: #{resnext_ida_forward.29} parent=1 // pred_fallthru
      _
    // Predicated region
    $region38: #{resnext_ida_forward.29} parent=1 // pred_check
      _
    $region39: #{resnext_ida_forward.29} parent=1 // pred_check_branch
      %75 = sbr.rel (0) target = $region41
    $region40: #{resnext_ida_forward.29} parent=1 // pred_region
      %77 = vsyncadd [#allocation8], 0
      %s79 = sshll.u32 %s9, 4
      %s80 = int_to_ptr.hbm [resolvable:$true] %s79
      %s81 = sshll.u32 [#allocation9], 4
      %s82 = int_to_ptr.vmem [resolvable:$true] %s81
      %84 = dma.hbm_to_vmem [thread:$0]  %s80, 16, %s82, [#allocation8]
    $region41: #{resnext_ida_forward.29} parent=1 // pred_fallthru
      _
    // Predicated region
    $region42: #{resnext_ida_forward.29} parent=1 // pred_check
      _
    $region43: #{resnext_ida_forward.29} parent=1 // pred_check_branch
      %86 = sbr.rel (0) target = $region45
    $region44: #{resnext_ida_forward.29} parent=1 // pred_region
      %88 = vsyncadd [#allocation11], 0
      %s90 = sshll.u32 %s10, 4
      %s91 = int_to_ptr.hbm [resolvable:$true] %s90
      %s92 = sshll.u32 [#allocation10], 4
      %s93 = int_to_ptr.vmem [resolvable:$true] %s92
      %95 = dma.hbm_to_vmem [thread:$0]  %s91, 16, %s93, [#allocation11]
    $region45: #{resnext_ida_forward.29} parent=1 // pred_fallthru
      _
    // Predicated region
    $region46: #{resnext_ida_forward.29} parent=1 // pred_check
      _
    $region47: #{resnext_ida_forward.29} parent=1 // pred_check_branch
      %97 = sbr.rel (0) target = $region49
    $region48: #{resnext_ida_forward.29} parent=1 // pred_region
      %99 = dma.done [#allocation3], 16
    $region49: #{resnext_ida_forward.29} parent=1 // pred_fallthru
      _
    // Predicated region
    $region50: #{resnext_ida_forward.29} parent=1 // pred_check
      _
    $region51: #{resnext_ida_forward.29} parent=1 // pred_check_branch
      %101 = sbr.rel (0) target = $region53
    $region52: #{resnext_ida_forward.29} parent=1 // pred_region
      %103 = dma.done [#allocation5], 16
    $region53: #{resnext_ida_forward.29} parent=1 // pred_fallthru
      _
    // Predicated region
    $region54: #{resnext_ida_forward.29} parent=1 // pred_check
      _
    $region55: #{resnext_ida_forward.29} parent=1 // pred_check_branch
      %105 = sbr.rel (0) target = $region57
    $region56: #{resnext_ida_forward.29} parent=1 // pred_region
      %107 = dma.done [#allocation5], 16
    $region57: #{resnext_ida_forward.29} parent=1 // pred_fallthru
      _
    // Predicated region
    $region58: #{resnext_ida_forward.29} parent=1 // pred_check
      _
    $region59: #{resnext_ida_forward.29} parent=1 // pred_check_branch
      %109 = sbr.rel (0) target = $region61
    $region60: #{resnext_ida_forward.29} parent=1 // pred_region
      %111 = dma.done [#allocation8], 16
    $region61: #{resnext_ida_forward.29} parent=1 // pred_fallthru
      _
    // Predicated region
    $region62: #{resnext_ida_forward.29} parent=1 // pred_check
      _
    $region63: #{resnext_ida_forward.29} parent=1 // pred_check_branch
      %113 = sbr.rel (0) target = $region65
    $region64: #{resnext_ida_forward.29} parent=1 // pred_region
      %115 = dma.done [#allocation8], 16
    $region65: #{resnext_ida_forward.29} parent=1 // pred_fallthru
      _
    // Predicated region
    $region66: #{resnext_ida_forward.29} parent=1 // pred_check
      _
    $region67: #{resnext_ida_forward.29} parent=1 // pred_check_branch
      %117 = sbr.rel (0) target = $region69
    $region68: #{resnext_ida_forward.29} parent=1 // pred_region
      %119 = dma.done [#allocation11], 16
    $region69: #{resnext_ida_forward.29} parent=1 // pred_fallthru
      _
    %v121 = vld [vmem:[%s0] sm:$0xff]
    %v122 = vld [vmem:[%s0 + $0x8] sm:$0xf]
    %v123 = vld [vmem:[%s2] sm:$0xf]
    %v124 = vld [vmem:[%s2 + $0x4] sm:$0xf]
    %v125 = vld [vmem:[%s2 + $0x8] sm:$0xf]
    %v126 = vld [vmem:[%s2 + $0xc] sm:$0xf]
    %v127 = vld [vmem:[%s2 + $0x10] sm:$0xf]
    %v128 = vld [vmem:[%s2 + $0x14] sm:$0xf]
    %v129 = vld [vmem:[%s2 + $0x18] sm:$0xf]
    %v130 = vld [vmem:[%s2 + $0x1c] sm:$0xf]
    %v131 = vld [vmem:[%s2 + $0x20] sm:$0xf]
    %v132 = vld [vmem:[%s2 + $0x24] sm:$0xf]
    %v133 = vld [vmem:[%s2 + $0x28] sm:$0xf]
    %v134 = vld [vmem:[%s2 + $0x2c] sm:$0xf]
    %v135 = vld [vmem:[%s2 + $0x30] sm:$0xf]
    %v136 = vld [vmem:[%s2 + $0x34] sm:$0xf]
    %v137 = vld [vmem:[%s2 + $0x38] sm:$0xf]
    %v138 = vld [vmem:[%s2 + $0x3c] sm:$0xf]
    %v139 = vld [vmem:[%s2 + $0x40] sm:$0xf]
    %v140 = vld [vmem:[%s2 + $0x44] sm:$0xf]
    %v141 = vld [vmem:[%s2 + $0x48] sm:$0xf]
    %v142 = vld [vmem:[%s2 + $0x4c] sm:$0xf]
    %v143 = vld [vmem:[%s2 + $0x50] sm:$0xf]
    %v144 = vld [vmem:[%s2 + $0x54] sm:$0xf]
    %v145 = vld [vmem:[%s2 + $0x58] sm:$0xf]
    %v146 = vld [vmem:[%s2 + $0x5c] sm:$0xf]
    %v147 = vld [vmem:[%s2 + $0x60] sm:$0xf]
    %v148 = vld [vmem:[%s2 + $0x64] sm:$0xf]
    %v149 = vld [vmem:[%s2 + $0x68] sm:$0xf]
    %v150 = vld [vmem:[%s2 + $0x6c] sm:$0xf]
    %v151 = vld [vmem:[%s2 + $0x70] sm:$0xf]
    %v152 = vld [vmem:[%s2 + $0x74] sm:$0xf]
    %v153 = vld [vmem:[%s2 + $0x78] sm:$0xf]
    %v154 = vld [vmem:[%s2 + $0x7c] sm:$0xf]
    %v155 = vld [vmem:[%s2 + $0x80] sm:$0xf]
    %v156 = vld [vmem:[%s2 + $0x84] sm:$0xf]
    %v157 = vld [vmem:[%s2 + $0x88] sm:$0xf]
    %v158 = vld [vmem:[%s2 + $0x8c] sm:$0xf]
    %v161 = vunpack.c.l.b16 %v121
    %v162 = vunpack.c.h.b16 %v121
    %v163 = vunpack.c.l.b16 %v122
    %v164 = vpack.c.b16 %v161, %v161
    %v165 = vpack.c.b16 %v162, %v162
    %v166 = vpack.c.b16 %v163, %v163
    %v205 = vunpack.c.l.b16 %v123
    %v206 = vunpack.c.l.b16 %v124
    %v207 = vunpack.c.l.b16 %v125
    %v208 = vunpack.c.l.b16 %v126
    %v209 = vunpack.c.l.b16 %v127
    %v210 = vunpack.c.l.b16 %v128
    %v211 = vunpack.c.l.b16 %v129
    %v212 = vunpack.c.l.b16 %v130
    %v213 = vunpack.c.l.b16 %v131
    %v214 = vunpack.c.l.b16 %v132
    %v215 = vunpack.c.l.b16 %v133
    %v216 = vunpack.c.l.b16 %v134
    %v217 = vunpack.c.l.b16 %v135
    %v218 = vunpack.c.l.b16 %v136
    %v219 = vunpack.c.l.b16 %v137
    %v220 = vunpack.c.l.b16 %v138
    %v221 = vunpack.c.l.b16 %v139
    %v222 = vunpack.c.l.b16 %v140
    %v223 = vunpack.c.l.b16 %v141
    %v224 = vunpack.c.l.b16 %v142
    %v225 = vunpack.c.l.b16 %v143
    %v226 = vunpack.c.l.b16 %v144
    %v227 = vunpack.c.l.b16 %v145
    %v228 = vunpack.c.l.b16 %v146
    %v229 = vunpack.c.l.b16 %v147
    %v230 = vunpack.c.l.b16 %v148
    %v231 = vunpack.c.l.b16 %v149
    %v232 = vunpack.c.l.b16 %v150
    %v233 = vunpack.c.l.b16 %v151
    %v234 = vunpack.c.l.b16 %v152
    %v235 = vunpack.c.l.b16 %v153
    %v236 = vunpack.c.l.b16 %v154
    %v237 = vunpack.c.l.b16 %v155
    %v238 = vunpack.c.l.b16 %v156
    %v239 = vunpack.c.l.b16 %v157
    %v240 = vunpack.c.l.b16 %v158
    %v241 = vpack.c.b16 %v206, %v205
    %v242 = vpack.c.b16 %v208, %v207
    %v243 = vpack.c.b16 %v210, %v209
    %v244 = vpack.c.b16 %v212, %v211
    %v245 = vpack.c.b16 %v214, %v213
    %v246 = vpack.c.b16 %v216, %v215
    %v247 = vpack.c.b16 %v218, %v217
    %v248 = vpack.c.b16 %v220, %v219
    %v249 = vpack.c.b16 %v222, %v221
    %v250 = vpack.c.b16 %v224, %v223
    %v251 = vpack.c.b16 %v226, %v225
    %v252 = vpack.c.b16 %v228, %v227
    %v253 = vpack.c.b16 %v230, %v229
    %v254 = vpack.c.b16 %v232, %v231
    %v255 = vpack.c.b16 %v234, %v233
    %v256 = vpack.c.b16 %v236, %v235
    %v257 = vpack.c.b16 %v238, %v237
    %v258 = vpack.c.b16 %v240, %v239
    %vm277 = vcmask 261120
    %v279 = vsel %vm277, %v166, 0
    %281 = vmatpush.bf16.msra.mxu0 %v248
    %282 = vmatpush.bf16.msra.mxu0 %v247
    %283 = vmatpush.bf16.msra.mxu0 %v246
    %284 = vmatpush.bf16.msra.mxu0 %v245
    %285 = vmatpush.bf16.msra.mxu0 %v244
    %286 = vmatpush.bf16.msra.mxu0 %v243
    %287 = vmatpush.bf16.msra.mxu0 %v242
    %288 = vmatpush.bf16.msra.mxu0 %v241
    %289 = vmatmul.bf16.gmra.mxu0 %v164
    %v290 = vpop.f32.mrf.mxu0
    %v291 = vadd.f32 0.0, %v290
    %v292 = vpop.f32.mrf.mxu0
    %293 = vdwg.mxu0
    %294 = vmatpush.bf16.msra.mxu0 %v256
    %295 = vmatpush.bf16.msra.mxu0 %v255
    %296 = vmatpush.bf16.msra.mxu0 %v254
    %297 = vmatpush.bf16.msra.mxu0 %v253
    %298 = vmatpush.bf16.msra.mxu0 %v252
    %299 = vmatpush.bf16.msra.mxu0 %v251
    %300 = vmatpush.bf16.msra.mxu0 %v250
    %301 = vmatpush.bf16.msra.mxu0 %v249
    %302 = vmatmul.bf16.gmra.mxu0 %v165
    %v303 = vpop.f32.mrf.mxu0
    %v304 = vadd.f32 %v291, %v303
    %v305 = vpop.f32.mrf.mxu0
    %306 = vdwg.mxu0
    %307 = vmatpush.bf16.msra.mxu0 0
    %308 = vmatpush.bf16.msra.mxu0 0
    %309 = vmatpush.bf16.msra.mxu0 0
    %310 = vmatpush.bf16.msra.mxu0 0
    %311 = vmatpush.bf16.msra.mxu0 0
    %312 = vmatpush.bf16.msra.mxu0 0
    %313 = vmatpush.bf16.msra.mxu0 %v258
    %314 = vmatpush.bf16.msra.mxu0 %v257
    %315 = vmatmul.bf16.gmra.mxu0 %v279
    %v316 = vpop.f32.mrf.mxu0
    %v317 = vadd.f32 %v304, %v316
    %v318 = vpop.f32.mrf.mxu0
    %319 = vdwg.mxu0
    %v320 = vld [vmem:[#allocation2] sm:$0x1]
    %v322 = vperm.slane %v320, 0
    %v324 = vmul.f32 %v317, %v322
    %v325 = vld [vmem:[#allocation4] sm:$0x1]
    %v327 = vperm.slane %v325, 0
    %v329 = vadd.f32 %v324, %v327
    %v330 = vmax.f32 %v329, 0.0
    %v331 = vpack.c.bf16 %v330, %v330
    %v332 = vld [vmem:[%s3] sm:$0xf]
    %v333 = vld [vmem:[%s3 + $0x4] sm:$0xf]
    %v334 = vld [vmem:[%s3 + $0x8] sm:$0xf]
    %v335 = vld [vmem:[%s3 + $0xc] sm:$0xf]
    %v340 = vunpack.c.l.b16 %v332
    %v341 = vunpack.c.l.b16 %v333
    %v342 = vunpack.c.l.b16 %v334
    %v343 = vunpack.c.l.b16 %v335
    %v344 = vpack.c.b16 %v341, %v340
    %v345 = vpack.c.b16 %v343, %v342
    %v349 = vsel %vm277, %v331, 0
    %351 = vmatpush.bf16.msra.mxu0 0
    %352 = vmatpush.bf16.msra.mxu0 0
    %353 = vmatpush.bf16.msra.mxu0 0
    %354 = vmatpush.bf16.msra.mxu0 0
    %355 = vmatpush.bf16.msra.mxu0 0
    %356 = vmatpush.bf16.msra.mxu0 0
    %357 = vmatpush.bf16.msra.mxu0 %v345
    %358 = vmatpush.bf16.msra.mxu0 %v344
    %359 = vmatmul.bf16.gmra.mxu0 %v349
    %v360 = vpop.f32.mrf.mxu0
    %v361 = vadd.f32 0.0, %v360
    %v362 = vpop.f32.mrf.mxu0
    %363 = vdwg.mxu0
    %v364 = vld [vmem:[#allocation6] sm:$0x1]
    %v366 = vperm.slane %v364, 0
    %v368 = vmul.f32 %v361, %v366
    %v369 = vld [vmem:[#allocation7] sm:$0x1]
    %v371 = vperm.slane %v369, 0
    %v373 = vadd.f32 %v368, %v371
    %v374 = vld [vmem:[%s1] sm:$0xf]
    %v375 = vld [vmem:[%s4] sm:$0xf]
    %v376 = vld [vmem:[%s4 + $0x4] sm:$0xf]
    %v377 = vld [vmem:[%s4 + $0x8] sm:$0xf]
    %v378 = vld [vmem:[%s4 + $0xc] sm:$0xf]
    %v379 = vld [vmem:[%s4 + $0x10] sm:$0xf]
    %v380 = vld [vmem:[%s4 + $0x14] sm:$0xf]
    %v381 = vld [vmem:[%s4 + $0x18] sm:$0xf]
    %v382 = vld [vmem:[%s4 + $0x1c] sm:$0xf]
    %v391 = vunpack.c.l.b16 %v375
    %v392 = vunpack.c.l.b16 %v376
    %v393 = vunpack.c.l.b16 %v377
    %v394 = vunpack.c.l.b16 %v378
    %v395 = vunpack.c.l.b16 %v379
    %v396 = vunpack.c.l.b16 %v380
    %v397 = vunpack.c.l.b16 %v381
    %v398 = vunpack.c.l.b16 %v382
    %v399 = vpack.c.b16 %v392, %v391
    %v400 = vpack.c.b16 %v394, %v393
    %v401 = vpack.c.b16 %v396, %v395
    %v402 = vpack.c.b16 %v398, %v397
    %vm407 = vcmask 523264
    %v409 = vsel %vm407, %v374, 0
    %411 = vmatpush.bf16.msra.mxu0 0
    %412 = vmatpush.bf16.msra.mxu0 0
    %413 = vmatpush.bf16.msra.mxu0 0
    %414 = vmatpush.bf16.msra.mxu0 0
    %415 = vmatpush.bf16.msra.mxu0 %v402
    %416 = vmatpush.bf16.msra.mxu0 %v401
    %417 = vmatpush.bf16.msra.mxu0 %v400
    %418 = vmatpush.bf16.msra.mxu0 %v399
    %419 = vmatmul.bf16.gmra.mxu0 %v409
    %v420 = vpop.f32.mrf.mxu0
    %v421 = vadd.f32 0.0, %v420
    %v422 = vpop.f32.mrf.mxu0
    %423 = vdwg.mxu0
    %v424 = vld [vmem:[#allocation9] sm:$0x1]
    %v426 = vperm.slane %v424, 0
    %v428 = vmul.f32 %v421, %v426
    %v429 = vld [vmem:[#allocation10] sm:$0x1]
    %v431 = vperm.slane %v429, 0
    %v433 = vadd.f32 %v428, %v431
    %v434 = vadd.f32 %v373, %v433
    %v435 = vmax.f32 %v434, 0.0
    %v436 = vpack.c.bf16 %v435, %v435
    %vm437 = vcmask 519168
    %438 = vst.msk [vmem:[%s11] sm:$0xf] %vm437, %v436
    // Predicated region
    $region70: #{resnext_ida_forward.29} parent=1 // pred_check
      _
    $region71: #{resnext_ida_forward.29} parent=1 // pred_check_branch
      %440 = sbr.rel (0) target = $region73
    $region72: #{resnext_ida_forward.29} parent=1 // pred_region
      _
    $region73: #{resnext_ida_forward.29} parent=1 // pred_fallthru
      _
    // Predicated region
    $region74: #{resnext_ida_forward.29} parent=1 // pred_check
      _
    $region75: #{resnext_ida_forward.29} parent=1 // pred_check_branch
      %442 = sbr.rel (0) target = $region77
    $region76: #{resnext_ida_forward.29} parent=1 // pred_region
      _
    $region77: #{resnext_ida_forward.29} parent=1 // pred_fallthru
      _
    %443 = vsyncpa [#allocation3], 1
    %444 = vsyncpa [#allocation5], 1
    %445 = vsyncpa [#allocation8], 1
    %446 = vsyncpa [#allocation11], 1

// kernel: resnext_ida_forward.35
$region0: #{resnext_ida_forward.35}
  #allocation0 [shape = 'u32[]', space=smem, size = 0x4, offset = 0x4, fixed_abs, tag = 'smem constant byte address 0x4 - core index']
  #allocation1 [shape = 'u32[72,128]{1,0:T(1,128)}', space=vmem, size = 0x9000, scoped, tag = 'internal scratch']
  %s0 = inlined_call_operand.vmem [shape: bf16[16,128], index: 0, kind: input, shape index: {}]
  %s1 = inlined_call_operand.vmem [shape: bf16[16,128], index: 1, kind: input, shape index: {}]
  %s2 = inlined_call_operand.vmem [shape: f32[1,128], index: 2, kind: input, shape index: {}]
  %s3 = inlined_call_operand.vmem [shape: f32[1,128], index: 3, kind: input, shape index: {}]
  %s4 = inlined_call_operand.vmem [shape: bf16[16,128], index: 4, kind: output, shape index: {}]
  %s5 = sld [smem:[#allocation0]]
  $region26: #{resnext_ida_forward.35} parent=0
    _
  %s7 = ssub.s32 1, %s5
  %s8 = scalar_select 0, %s7, %s5
  // Predicated region
  $region2: #{resnext_ida_forward.35} parent=0 // pred_check
    _
  $region3: #{resnext_ida_forward.35} parent=0 // pred_check_branch
    %10 = sbr.rel (0) target = $region5
  $region4: #{resnext_ida_forward.35} parent=0 // pred_region
    _
  $region5: #{resnext_ida_forward.35} parent=0 // pred_fallthru
    _
  // Predicated region
  $region6: #{resnext_ida_forward.35} parent=0 // pred_check
    _
  $region7: #{resnext_ida_forward.35} parent=0 // pred_check_branch
    %12 = sbr.rel (0) target = $region9
  $region8: #{resnext_ida_forward.35} parent=0 // pred_region
    _
  $region9: #{resnext_ida_forward.35} parent=0 // pred_fallthru
    _
  // Predicated region
  $region10: #{resnext_ida_forward.35} parent=0 // pred_check
    _
  $region11: #{resnext_ida_forward.35} parent=0 // pred_check_branch
    %14 = sbr.rel (0) target = $region13
  $region12: #{resnext_ida_forward.35} parent=0 // pred_region
    _
  $region13: #{resnext_ida_forward.35} parent=0 // pred_fallthru
    _
  // Predicated region
  $region14: #{resnext_ida_forward.35} parent=0 // pred_check
    _
  $region15: #{resnext_ida_forward.35} parent=0 // pred_check_branch
    %16 = sbr.rel (0) target = $region17
  $region16: #{resnext_ida_forward.35} parent=0 // pred_region
    _
  $region17: #{resnext_ida_forward.35} parent=0 // pred_fallthru
    _
  %v17 = vld [vmem:[%s0] sm:$0xf]
  %v18 = vld [vmem:[%s0 + $0x4] sm:$0xf]
  %v19 = vunpack.c.l.bf16 %v17
  %v20 = vunpack.c.l.bf16 %v18
  %v21 = vld [vmem:[%s1] sm:$0xf]
  %v22 = vld [vmem:[%s1 + $0x4] sm:$0xf]
  %v23 = vunpack.c.l.bf16 %v21
  %v24 = vunpack.c.l.bf16 %v22
  %v25 = vadd.f32 %v19, %v23
  %v26 = vadd.f32 %v20, %v24
  %v27 = vld [vmem:[%s2] sm:$0x1]
  %v29 = vperm.slane %v27, 0
  %v31 = vmul.f32 %v25, %v29
  %v32 = vmul.f32 %v26, %v29
  %v33 = vld [vmem:[%s3] sm:$0x1]
  %v35 = vperm.slane %v33, 0
  %v37 = vadd.f32 %v31, %v35
  %v38 = vadd.f32 %v32, %v35
  %v39 = vmax.f32 %v37, 0.0
  %v40 = vmax.f32 %v38, 0.0
  %v41 = vpack.c.bf16 %v39, %v39
  %v42 = vpack.c.bf16 %v40, %v40
  %43 = vst [vmem:[%s4] sm:$0xf] %v41
  %44 = vst [vmem:[%s4 + $0x4] sm:$0xf] %v42
  // Predicated region
  $region18: #{resnext_ida_forward.35} parent=0 // pred_check
    _
  $region19: #{resnext_ida_forward.35} parent=0 // pred_check_branch
    %46 = sbr.rel (0) target = $region21
  $region20: #{resnext_ida_forward.35} parent=0 // pred_region
    _
  $region21: #{resnext_ida_forward.35} parent=0 // pred_fallthru
    _
  // Predicated region
  $region22: #{resnext_ida_forward.35} parent=0 // pred_check
    _
  $region23: #{resnext_ida_forward.35} parent=0 // pred_check_branch
    %48 = sbr.rel (0) target = $region25
  $region24: #{resnext_ida_forward.35} parent=0 // pred_region
    _
  $region25: #{resnext_ida_forward.35} parent=0 // pred_fallthru
    _

// kernel: resnext_ida_forward.30
$region0: #{resnext_ida_forward.30}
  #allocation0 [shape = 'u32[]', space=smem, size = 0x4, offset = 0x4, fixed_abs, tag = 'smem constant byte address 0x4 - core index']
  #allocation1 [shape = 'u32[72,128]{1,0:T(1,128)}', space=vmem, size = 0x9000, scoped, tag = 'internal scratch']
  %s0 = inlined_call_operand.vmem [shape: bf16[8,64], index: 0, kind: input, shape index: {}]
  %s1 = inlined_call_operand.vmem [shape: bf16[64,32], index: 1, kind: input, shape index: {}]
  %s2 = inlined_call_operand.vmem [shape: f32[1,32], index: 2, kind: input, shape index: {}]
  %s3 = inlined_call_operand.vmem [shape: f32[1,32], index: 3, kind: input, shape index: {}]
  %s4 = inlined_call_operand.vmem [shape: bf16[8,32], index: 4, kind: output, shape index: {}]
  %s5 = sld [smem:[#allocation0]]
  $region26: #{resnext_ida_forward.30} parent=0
    _
  %s7 = ssub.s32 1, %s5
  %s8 = scalar_select 0, %s7, %s5
  // Predicated region
  $region2: #{resnext_ida_forward.30} parent=0 // pred_check
    _
  $region3: #{resnext_ida_forward.30} parent=0 // pred_check_branch
    %10 = sbr.rel (0) target = $region5
  $region4: #{resnext_ida_forward.30} parent=0 // pred_region
    _
  $region5: #{resnext_ida_forward.30} parent=0 // pred_fallthru
    _
  // Predicated region
  $region6: #{resnext_ida_forward.30} parent=0 // pred_check
    _
  $region7: #{resnext_ida_forward.30} parent=0 // pred_check_branch
    %12 = sbr.rel (0) target = $region9
  $region8: #{resnext_ida_forward.30} parent=0 // pred_region
    _
  $region9: #{resnext_ida_forward.30} parent=0 // pred_fallthru
    _
  // Predicated region
  $region10: #{resnext_ida_forward.30} parent=0 // pred_check
    _
  $region11: #{resnext_ida_forward.30} parent=0 // pred_check_branch
    %14 = sbr.rel (0) target = $region13
  $region12: #{resnext_ida_forward.30} parent=0 // pred_region
    _
  $region13: #{resnext_ida_forward.30} parent=0 // pred_fallthru
    _
  // Predicated region
  $region14: #{resnext_ida_forward.30} parent=0 // pred_check
    _
  $region15: #{resnext_ida_forward.30} parent=0 // pred_check_branch
    %16 = sbr.rel (0) target = $region17
  $region16: #{resnext_ida_forward.30} parent=0 // pred_region
    _
  $region17: #{resnext_ida_forward.30} parent=0 // pred_fallthru
    _
  %v18 = vld [vmem:[%s0] sm:$0xf]
  %v19 = vld [vmem:[%s1] sm:$0xf]
  %v20 = vld [vmem:[%s1 + $0x4] sm:$0xf]
  %v21 = vld [vmem:[%s1 + $0x8] sm:$0xf]
  %v22 = vld [vmem:[%s1 + $0xc] sm:$0xf]
  %v23 = vld [vmem:[%s1 + $0x10] sm:$0xf]
  %v24 = vld [vmem:[%s1 + $0x14] sm:$0xf]
  %v25 = vld [vmem:[%s1 + $0x18] sm:$0xf]
  %v26 = vld [vmem:[%s1 + $0x1c] sm:$0xf]
  %v35 = vunpack.c.l.b16 %v19
  %v36 = vunpack.c.l.b16 %v20
  %v37 = vunpack.c.l.b16 %v21
  %v38 = vunpack.c.l.b16 %v22
  %v39 = vunpack.c.l.b16 %v23
  %v40 = vunpack.c.l.b16 %v24
  %v41 = vunpack.c.l.b16 %v25
  %v42 = vunpack.c.l.b16 %v26
  %v43 = vpack.c.b16 %v36, %v35
  %v44 = vpack.c.b16 %v38, %v37
  %v45 = vpack.c.b16 %v40, %v39
  %v46 = vpack.c.b16 %v42, %v41
  %vm51 = vcmask 523264
  %v53 = vsel %vm51, %v18, 0
  %55 = vmatpush.bf16.msra.mxu0 0
  %56 = vmatpush.bf16.msra.mxu0 0
  %57 = vmatpush.bf16.msra.mxu0 0
  %58 = vmatpush.bf16.msra.mxu0 0
  %59 = vmatpush.bf16.msra.mxu0 %v46
  %60 = vmatpush.bf16.msra.mxu0 %v45
  %61 = vmatpush.bf16.msra.mxu0 %v44
  %62 = vmatpush.bf16.msra.mxu0 %v43
  %63 = vmatmul.bf16.gmra.mxu0 %v53
  %v64 = vpop.f32.mrf.mxu0
  %v65 = vadd.f32 0.0, %v64
  %v66 = vpop.f32.mrf.mxu0
  %67 = vdwg.mxu0
  %v68 = vld [vmem:[%s2] sm:$0x1]
  %v70 = vperm.slane %v68, 0
  %v72 = vmul.f32 %v65, %v70
  %v73 = vld [vmem:[%s3] sm:$0x1]
  %v75 = vperm.slane %v73, 0
  %v77 = vadd.f32 %v72, %v75
  %v78 = vmax.f32 %v77, 0.0
  %v79 = vpack.c.bf16 %v78, %v78
  %vm80 = vcmask 257024
  %81 = vst.msk [vmem:[%s4] sm:$0xf] %vm80, %v79
  // Predicated region
  $region18: #{resnext_ida_forward.30} parent=0 // pred_check
    _
  $region19: #{resnext_ida_forward.30} parent=0 // pred_check_branch
    %83 = sbr.rel (0) target = $region21
  $region20: #{resnext_ida_forward.30} parent=0 // pred_region
    _
  $region21: #{resnext_ida_forward.30} parent=0 // pred_fallthru
    _
  // Predicated region
  $region22: #{resnext_ida_forward.30} parent=0 // pred_check
    _
  $region23: #{resnext_ida_forward.30} parent=0 // pred_check_branch
    %85 = sbr.rel (0) target = $region25
  $region24: #{resnext_ida_forward.30} parent=0 // pred_region
    _
  $region25: #{resnext_ida_forward.30} parent=0 // pred_fallthru
    _

// kernel: resnext_ida_forward.36
$region0: #{resnext_ida_forward.36}
  #allocation0 [shape = 'u32[]', space=smem, size = 0x4, offset = 0x4, fixed_abs, tag = 'smem constant byte address 0x4 - core index']
  #allocation1 [shape = 'u32[72,128]{1,0:T(1,128)}', space=vmem, size = 0x9000, scoped, tag = 'internal scratch']
  %s0 = inlined_call_operand.vmem [shape: bf16[2,64], index: 0, kind: input, shape index: {}]
  %s1 = inlined_call_operand.vmem [shape: bf16[64,256], index: 1, kind: input, shape index: {}]
  %s2 = inlined_call_operand.vmem [shape: f32[1,256], index: 2, kind: input, shape index: {}]
  %s3 = inlined_call_operand.vmem [shape: f32[1,256], index: 3, kind: input, shape index: {}]
  %s4 = inlined_call_operand.vmem [shape: bf16[2,256], index: 4, kind: output, shape index: {}]
  %s5 = sld [smem:[#allocation0]]
  $region26: #{resnext_ida_forward.36} parent=0
    _
  %s7 = ssub.s32 1, %s5
  %s8 = scalar_select 0, %s7, %s5
  // Predicated region
  $region2: #{resnext_ida_forward.36} parent=0 // pred_check
    _
  $region3: #{resnext_ida_forward.36} parent=0 // pred_check_branch
    %10 = sbr.rel (0) target = $region5
  $region4: #{resnext_ida_forward.36} parent=0 // pred_region
    _
  $region5: #{resnext_ida_forward.36} parent=0 // pred_fallthru
    _
  // Predicated region
  $region6: #{resnext_ida_forward.36} parent=0 // pred_check
    _
  $region7: #{resnext_ida_forward.36} parent=0 // pred_check_branch
    %12 = sbr.rel (0) target = $region9
  $region8: #{resnext_ida_forward.36} parent=0 // pred_region
    _
  $region9: #{resnext_ida_forward.36} parent=0 // pred_fallthru
    _
  // Predicated region
  $region10: #{resnext_ida_forward.36} parent=0 // pred_check
    _
  $region11: #{resnext_ida_forward.36} parent=0 // pred_check_branch
    %14 = sbr.rel (0) target = $region13
  $region12: #{resnext_ida_forward.36} parent=0 // pred_region
    _
  $region13: #{resnext_ida_forward.36} parent=0 // pred_fallthru
    _
  // Predicated region
  $region14: #{resnext_ida_forward.36} parent=0 // pred_check
    _
  $region15: #{resnext_ida_forward.36} parent=0 // pred_check_branch
    %16 = sbr.rel (0) target = $region17
  $region16: #{resnext_ida_forward.36} parent=0 // pred_region
    _
  $region17: #{resnext_ida_forward.36} parent=0 // pred_fallthru
    _
  %v18 = vld [vmem:[%s0] sm:$0x1]
  %v19 = vld [vmem:[%s1] sm:$0xff]
  %v20 = vld [vmem:[%s1 + $0x8] sm:$0xff]
  %v21 = vld [vmem:[%s1 + $0x10] sm:$0xff]
  %v22 = vld [vmem:[%s1 + $0x18] sm:$0xff]
  %v23 = vld [vmem:[%s1 + $0x20] sm:$0xff]
  %v24 = vld [vmem:[%s1 + $0x28] sm:$0xff]
  %v25 = vld [vmem:[%s1 + $0x30] sm:$0xff]
  %v26 = vld [vmem:[%s1 + $0x38] sm:$0xff]
  %v35 = vunpack.c.l.b16 %v19
  %v36 = vunpack.c.h.b16 %v19
  %v37 = vunpack.c.l.b16 %v20
  %v38 = vunpack.c.h.b16 %v20
  %v39 = vunpack.c.l.b16 %v21
  %v40 = vunpack.c.h.b16 %v21
  %v41 = vunpack.c.l.b16 %v22
  %v42 = vunpack.c.h.b16 %v22
  %v43 = vunpack.c.l.b16 %v23
  %v44 = vunpack.c.h.b16 %v23
  %v45 = vunpack.c.l.b16 %v24
  %v46 = vunpack.c.h.b16 %v24
  %v47 = vunpack.c.l.b16 %v25
  %v48 = vunpack.c.h.b16 %v25
  %v49 = vunpack.c.l.b16 %v26
  %v50 = vunpack.c.h.b16 %v26
  %v51 = vpack.c.b16 %v37, %v35
  %v52 = vpack.c.b16 %v38, %v36
  %v53 = vpack.c.b16 %v41, %v39
  %v54 = vpack.c.b16 %v42, %v40
  %v55 = vpack.c.b16 %v45, %v43
  %v56 = vpack.c.b16 %v46, %v44
  %v57 = vpack.c.b16 %v49, %v47
  %v58 = vpack.c.b16 %v50, %v48
  %vm67 = vcmask 523264
  %v69 = vsel %vm67, %v18, 0
  %71 = vmatpush.bf16.msra.mxu0 0
  %72 = vmatpush.bf16.msra.mxu0 0
  %73 = vmatpush.bf16.msra.mxu0 0
  %74 = vmatpush.bf16.msra.mxu0 0
  %75 = vmatpush.bf16.msra.mxu0 %v57
  %76 = vmatpush.bf16.msra.mxu0 %v55
  %77 = vmatpush.bf16.msra.mxu0 %v53
  %78 = vmatpush.bf16.msra.mxu0 %v51
  %79 = vmatmul.bf16.gmra.mxu0 %v69
  %v80 = vpop.f32.mrf.mxu0
  %v81 = vadd.f32 0.0, %v80
  %v82 = vpop.f32.mrf.mxu0
  %83 = vdwg.mxu0
  %84 = vmatpush.bf16.msra.mxu0 0
  %85 = vmatpush.bf16.msra.mxu0 0
  %86 = vmatpush.bf16.msra.mxu0 0
  %87 = vmatpush.bf16.msra.mxu0 0
  %88 = vmatpush.bf16.msra.mxu0 %v58
  %89 = vmatpush.bf16.msra.mxu0 %v56
  %90 = vmatpush.bf16.msra.mxu0 %v54
  %91 = vmatpush.bf16.msra.mxu0 %v52
  %92 = vmatmul.bf16.gmra.mxu0 %v69
  %v93 = vpop.f32.mrf.mxu0
  %v94 = vadd.f32 0.0, %v93
  %v95 = vpop.f32.mrf.mxu0
  %96 = vdwg.mxu0
  %v97 = vld [vmem:[%s2] sm:$0x3]
  %v99 = vperm.slane %v97, 0
  %v100 = vperm.slane %v97, 1
  %v103 = vmul.f32 %v81, %v99
  %v104 = vmul.f32 %v94, %v100
  %v105 = vld [vmem:[%s3] sm:$0x3]
  %v107 = vperm.slane %v105, 0
  %v108 = vperm.slane %v105, 1
  %v111 = vadd.f32 %v103, %v107
  %v112 = vadd.f32 %v104, %v108
  %v113 = vpack.c.bf16 %v112, %v111
  %v115 = vrot.slane %v113, 3
  %vm116 = vcmask 1040384
  %v119 = vsel %vm116, %v113, %v115
  %121 = vst [vmem:[%s4] sm:$0x3] %v119
  // Predicated region
  $region18: #{resnext_ida_forward.36} parent=0 // pred_check
    _
  $region19: #{resnext_ida_forward.36} parent=0 // pred_check_branch
    %123 = sbr.rel (0) target = $region21
  $region20: #{resnext_ida_forward.36} parent=0 // pred_region
    _
  $region21: #{resnext_ida_forward.36} parent=0 // pred_fallthru
    _
  // Predicated region
  $region22: #{resnext_ida_forward.36} parent=0 // pred_check
    _
  $region23: #{resnext_ida_forward.36} parent=0 // pred_check_branch
    %125 = sbr.rel (0) target = $region25
  $region24: #{resnext_ida_forward.36} parent=0 // pred_region
    _
  $region25: #{resnext_ida_forward.36} parent=0 // pred_fallthru
    _

// kernel: resnext_ida_forward.37
$region0: #{resnext_ida_forward.37}
  #allocation0 [shape = 'u32[]', space=smem, size = 0x4, offset = 0x4, fixed_abs, tag = 'smem constant byte address 0x4 - core index']
  #allocation1 [shape = 'u32[72,128]{1,0:T(1,128)}', space=vmem, size = 0x9000, scoped, tag = 'internal scratch']
  %s0 = inlined_call_operand.vmem [shape: bf16[4,128], index: 0, kind: input, shape index: {}]
  %s1 = inlined_call_operand.vmem [shape: bf16[4,128], index: 1, kind: input, shape index: {}]
  %s2 = inlined_call_operand.vmem [shape: f32[1,128], index: 2, kind: input, shape index: {}]
  %s3 = inlined_call_operand.vmem [shape: f32[1,128], index: 3, kind: input, shape index: {}]
  %s4 = inlined_call_operand.vmem [shape: bf16[4,128], index: 4, kind: output, shape index: {}]
  %s5 = sld [smem:[#allocation0]]
  $region26: #{resnext_ida_forward.37} parent=0
    _
  %s7 = ssub.s32 1, %s5
  %s8 = scalar_select 0, %s7, %s5
  // Predicated region
  $region2: #{resnext_ida_forward.37} parent=0 // pred_check
    _
  $region3: #{resnext_ida_forward.37} parent=0 // pred_check_branch
    %10 = sbr.rel (0) target = $region5
  $region4: #{resnext_ida_forward.37} parent=0 // pred_region
    _
  $region5: #{resnext_ida_forward.37} parent=0 // pred_fallthru
    _
  // Predicated region
  $region6: #{resnext_ida_forward.37} parent=0 // pred_check
    _
  $region7: #{resnext_ida_forward.37} parent=0 // pred_check_branch
    %12 = sbr.rel (0) target = $region9
  $region8: #{resnext_ida_forward.37} parent=0 // pred_region
    _
  $region9: #{resnext_ida_forward.37} parent=0 // pred_fallthru
    _
  // Predicated region
  $region10: #{resnext_ida_forward.37} parent=0 // pred_check
    _
  $region11: #{resnext_ida_forward.37} parent=0 // pred_check_branch
    %14 = sbr.rel (0) target = $region13
  $region12: #{resnext_ida_forward.37} parent=0 // pred_region
    _
  $region13: #{resnext_ida_forward.37} parent=0 // pred_fallthru
    _
  // Predicated region
  $region14: #{resnext_ida_forward.37} parent=0 // pred_check
    _
  $region15: #{resnext_ida_forward.37} parent=0 // pred_check_branch
    %16 = sbr.rel (0) target = $region17
  $region16: #{resnext_ida_forward.37} parent=0 // pred_region
    _
  $region17: #{resnext_ida_forward.37} parent=0 // pred_fallthru
    _
  %v17 = vld [vmem:[%s0] sm:$0x3]
  %v18 = vunpack.c.l.bf16 %v17
  %v19 = vld [vmem:[%s1] sm:$0x3]
  %v20 = vunpack.c.l.bf16 %v19
  %v21 = vadd.f32 %v18, %v20
  %v22 = vld [vmem:[%s2] sm:$0x1]
  %v24 = vperm.slane %v22, 0
  %v26 = vmul.f32 %v21, %v24
  %v27 = vld [vmem:[%s3] sm:$0x1]
  %v29 = vperm.slane %v27, 0
  %v31 = vadd.f32 %v26, %v29
  %v32 = vmax.f32 %v31, 0.0
  %v33 = vpack.c.bf16 %v32, %v32
  %34 = vst [vmem:[%s4] sm:$0x3] %v33
  // Predicated region
  $region18: #{resnext_ida_forward.37} parent=0 // pred_check
    _
  $region19: #{resnext_ida_forward.37} parent=0 // pred_check_branch
    %36 = sbr.rel (0) target = $region21
  $region20: #{resnext_ida_forward.37} parent=0 // pred_region
    _
  $region21: #{resnext_ida_forward.37} parent=0 // pred_fallthru
    _
  // Predicated region
  $region22: #{resnext_ida_forward.37} parent=0 // pred_check
    _
  $region23: #{resnext_ida_forward.37} parent=0 // pred_check_branch
    %38 = sbr.rel (0) target = $region25
  $region24: #{resnext_ida_forward.37} parent=0 // pred_region
    _
  $region25: #{resnext_ida_forward.37} parent=0 // pred_fallthru
    _

// kernel: resnext_ida_forward.31
$region0: #{resnext_ida_forward.31}
  #allocation0 [shape = 'u32[]', space=smem, size = 0x4, offset = 0x4, fixed_abs, tag = 'smem constant byte address 0x4 - core index']
  #allocation1 [shape = 'u32[72,128]{1,0:T(1,128)}', space=vmem, size = 0x9000, scoped, tag = 'internal scratch']
  %s0 = inlined_call_operand.vmem [shape: bf16[2,288], index: 0, kind: input, shape index: {}]
  %s1 = inlined_call_operand.vmem [shape: bf16[2,64], index: 1, kind: input, shape index: {}]
  %s2 = inlined_call_operand.vmem [shape: bf16[288,32], index: 2, kind: input, shape index: {}]
  %s3 = inlined_call_operand.vmem [shape: bf16[32,64], index: 3, kind: input, shape index: {}]
  %s4 = inlined_call_operand.vmem [shape: bf16[64,64], index: 4, kind: input, shape index: {}]
  %s5 = inlined_call_operand.vmem [shape: f32[1,32], index: 5, kind: input, shape index: {}]
  %s6 = inlined_call_operand.vmem [shape: f32[1,32], index: 6, kind: input, shape index: {}]
  %s7 = inlined_call_operand.vmem [shape: f32[1,64], index: 7, kind: input, shape index: {}]
  %s8 = inlined_call_operand.vmem [shape: f32[1,64], index: 8, kind: input, shape index: {}]
  %s9 = inlined_call_operand.vmem [shape: f32[1,64], index: 9, kind: input, shape index: {}]
  %s10 = inlined_call_operand.vmem [shape: f32[1,64], index: 10, kind: input, shape index: {}]
  %s11 = inlined_call_operand.vmem [shape: bf16[2,64], index: 11, kind: output, shape index: {}]
  %s12 = sld [smem:[#allocation0]]
  $region54: #{resnext_ida_forward.31} parent=0
    _
  %s14 = ssub.s32 1, %s12
  %s15 = scalar_select 0, %s14, %s12
  // Predicated region
  $region2: #{resnext_ida_forward.31} parent=0 // pred_check
    _
  $region3: #{resnext_ida_forward.31} parent=0 // pred_check_branch
    %17 = sbr.rel (0) target = $region5
  $region4: #{resnext_ida_forward.31} parent=0 // pred_region
    _
  $region5: #{resnext_ida_forward.31} parent=0 // pred_fallthru
    _
  // Predicated region
  $region6: #{resnext_ida_forward.31} parent=0 // pred_check
    _
  $region7: #{resnext_ida_forward.31} parent=0 // pred_check_branch
    %19 = sbr.rel (0) target = $region9
  $region8: #{resnext_ida_forward.31} parent=0 // pred_region
    _
  $region9: #{resnext_ida_forward.31} parent=0 // pred_fallthru
    _
  // Predicated region
  $region10: #{resnext_ida_forward.31} parent=0 // pred_check
    _
  $region11: #{resnext_ida_forward.31} parent=0 // pred_check_branch
    %21 = sbr.rel (0) target = $region13
  $region12: #{resnext_ida_forward.31} parent=0 // pred_region
    _
  $region13: #{resnext_ida_forward.31} parent=0 // pred_fallthru
    _
  // Predicated region
  $region14: #{resnext_ida_forward.31} parent=0 // pred_check
    _
  $region15: #{resnext_ida_forward.31} parent=0 // pred_check_branch
    %23 = sbr.rel (0) target = $region17
  $region16: #{resnext_ida_forward.31} parent=0 // pred_region
    _
  $region17: #{resnext_ida_forward.31} parent=0 // pred_fallthru
    _
  // Predicated region
  $region18: #{resnext_ida_forward.31} parent=0 // pred_check
    _
  $region19: #{resnext_ida_forward.31} parent=0 // pred_check_branch
    %25 = sbr.rel (0) target = $region21
  $region20: #{resnext_ida_forward.31} parent=0 // pred_region
    _
  $region21: #{resnext_ida_forward.31} parent=0 // pred_fallthru
    _
  // Predicated region
  $region22: #{resnext_ida_forward.31} parent=0 // pred_check
    _
  $region23: #{resnext_ida_forward.31} parent=0 // pred_check_branch
    %27 = sbr.rel (0) target = $region25
  $region24: #{resnext_ida_forward.31} parent=0 // pred_region
    _
  $region25: #{resnext_ida_forward.31} parent=0 // pred_fallthru
    _
  // Predicated region
  $region26: #{resnext_ida_forward.31} parent=0 // pred_check
    _
  $region27: #{resnext_ida_forward.31} parent=0 // pred_check_branch
    %29 = sbr.rel (0) target = $region29
  $region28: #{resnext_ida_forward.31} parent=0 // pred_region
    _
  $region29: #{resnext_ida_forward.31} parent=0 // pred_fallthru
    _
  // Predicated region
  $region30: #{resnext_ida_forward.31} parent=0 // pred_check
    _
  $region31: #{resnext_ida_forward.31} parent=0 // pred_check_branch
    %31 = sbr.rel (0) target = $region33
  $region32: #{resnext_ida_forward.31} parent=0 // pred_region
    _
  $region33: #{resnext_ida_forward.31} parent=0 // pred_fallthru
    _
  // Predicated region
  $region34: #{resnext_ida_forward.31} parent=0 // pred_check
    _
  $region35: #{resnext_ida_forward.31} parent=0 // pred_check_branch
    %33 = sbr.rel (0) target = $region37
  $region36: #{resnext_ida_forward.31} parent=0 // pred_region
    _
  $region37: #{resnext_ida_forward.31} parent=0 // pred_fallthru
    _
  // Predicated region
  $region38: #{resnext_ida_forward.31} parent=0 // pred_check
    _
  $region39: #{resnext_ida_forward.31} parent=0 // pred_check_branch
    %35 = sbr.rel (0) target = $region41
  $region40: #{resnext_ida_forward.31} parent=0 // pred_region
    _
  $region41: #{resnext_ida_forward.31} parent=0 // pred_fallthru
    _
  // Predicated region
  $region42: #{resnext_ida_forward.31} parent=0 // pred_check
    _
  $region43: #{resnext_ida_forward.31} parent=0 // pred_check_branch
    %37 = sbr.rel (0) target = $region45
  $region44: #{resnext_ida_forward.31} parent=0 // pred_region
    _
  $region45: #{resnext_ida_forward.31} parent=0 // pred_fallthru
    _
  %v39 = vld [vmem:[%s0] sm:$0x7]
  %v40 = vld [vmem:[%s2] sm:$0xf]
  %v41 = vld [vmem:[%s2 + $0x4] sm:$0xf]
  %v42 = vld [vmem:[%s2 + $0x8] sm:$0xf]
  %v43 = vld [vmem:[%s2 + $0xc] sm:$0xf]
  %v44 = vld [vmem:[%s2 + $0x10] sm:$0xf]
  %v45 = vld [vmem:[%s2 + $0x14] sm:$0xf]
  %v46 = vld [vmem:[%s2 + $0x18] sm:$0xf]
  %v47 = vld [vmem:[%s2 + $0x1c] sm:$0xf]
  %v48 = vld [vmem:[%s2 + $0x20] sm:$0xf]
  %v49 = vld [vmem:[%s2 + $0x24] sm:$0xf]
  %v50 = vld [vmem:[%s2 + $0x28] sm:$0xf]
  %v51 = vld [vmem:[%s2 + $0x2c] sm:$0xf]
  %v52 = vld [vmem:[%s2 + $0x30] sm:$0xf]
  %v53 = vld [vmem:[%s2 + $0x34] sm:$0xf]
  %v54 = vld [vmem:[%s2 + $0x38] sm:$0xf]
  %v55 = vld [vmem:[%s2 + $0x3c] sm:$0xf]
  %v56 = vld [vmem:[%s2 + $0x40] sm:$0xf]
  %v57 = vld [vmem:[%s2 + $0x44] sm:$0xf]
  %v58 = vld [vmem:[%s2 + $0x48] sm:$0xf]
  %v59 = vld [vmem:[%s2 + $0x4c] sm:$0xf]
  %v60 = vld [vmem:[%s2 + $0x50] sm:$0xf]
  %v61 = vld [vmem:[%s2 + $0x54] sm:$0xf]
  %v62 = vld [vmem:[%s2 + $0x58] sm:$0xf]
  %v63 = vld [vmem:[%s2 + $0x5c] sm:$0xf]
  %v64 = vld [vmem:[%s2 + $0x60] sm:$0xf]
  %v65 = vld [vmem:[%s2 + $0x64] sm:$0xf]
  %v66 = vld [vmem:[%s2 + $0x68] sm:$0xf]
  %v67 = vld [vmem:[%s2 + $0x6c] sm:$0xf]
  %v68 = vld [vmem:[%s2 + $0x70] sm:$0xf]
  %v69 = vld [vmem:[%s2 + $0x74] sm:$0xf]
  %v70 = vld [vmem:[%s2 + $0x78] sm:$0xf]
  %v71 = vld [vmem:[%s2 + $0x7c] sm:$0xf]
  %v72 = vld [vmem:[%s2 + $0x80] sm:$0xf]
  %v73 = vld [vmem:[%s2 + $0x84] sm:$0xf]
  %v74 = vld [vmem:[%s2 + $0x88] sm:$0xf]
  %v75 = vld [vmem:[%s2 + $0x8c] sm:$0xf]
  %77 = vst [vmem:[#allocation1] ss:$9 sm:$0xff] %v39
  %v78 = vld [vmem:[#allocation1] sm:$0xff]
  %v79 = vld [vmem:[#allocation1 + $0x9] sm:$0xff]
  %v80 = vld [vmem:[#allocation1 + $0x12] sm:$0xff]
  %v119 = vunpack.c.l.b16 %v40
  %v120 = vunpack.c.l.b16 %v41
  %v121 = vunpack.c.l.b16 %v42
  %v122 = vunpack.c.l.b16 %v43
  %v123 = vunpack.c.l.b16 %v44
  %v124 = vunpack.c.l.b16 %v45
  %v125 = vunpack.c.l.b16 %v46
  %v126 = vunpack.c.l.b16 %v47
  %v127 = vunpack.c.l.b16 %v48
  %v128 = vunpack.c.l.b16 %v49
  %v129 = vunpack.c.l.b16 %v50
  %v130 = vunpack.c.l.b16 %v51
  %v131 = vunpack.c.l.b16 %v52
  %v132 = vunpack.c.l.b16 %v53
  %v133 = vunpack.c.l.b16 %v54
  %v134 = vunpack.c.l.b16 %v55
  %v135 = vunpack.c.l.b16 %v56
  %v136 = vunpack.c.l.b16 %v57
  %v137 = vunpack.c.l.b16 %v58
  %v138 = vunpack.c.l.b16 %v59
  %v139 = vunpack.c.l.b16 %v60
  %v140 = vunpack.c.l.b16 %v61
  %v141 = vunpack.c.l.b16 %v62
  %v142 = vunpack.c.l.b16 %v63
  %v143 = vunpack.c.l.b16 %v64
  %v144 = vunpack.c.l.b16 %v65
  %v145 = vunpack.c.l.b16 %v66
  %v146 = vunpack.c.l.b16 %v67
  %v147 = vunpack.c.l.b16 %v68
  %v148 = vunpack.c.l.b16 %v69
  %v149 = vunpack.c.l.b16 %v70
  %v150 = vunpack.c.l.b16 %v71
  %v151 = vunpack.c.l.b16 %v72
  %v152 = vunpack.c.l.b16 %v73
  %v153 = vunpack.c.l.b16 %v74
  %v154 = vunpack.c.l.b16 %v75
  %v155 = vpack.c.b16 %v120, %v119
  %v156 = vpack.c.b16 %v122, %v121
  %v157 = vpack.c.b16 %v124, %v123
  %v158 = vpack.c.b16 %v126, %v125
  %v159 = vpack.c.b16 %v128, %v127
  %v160 = vpack.c.b16 %v130, %v129
  %v161 = vpack.c.b16 %v132, %v131
  %v162 = vpack.c.b16 %v134, %v133
  %v163 = vpack.c.b16 %v136, %v135
  %v164 = vpack.c.b16 %v138, %v137
  %v165 = vpack.c.b16 %v140, %v139
  %v166 = vpack.c.b16 %v142, %v141
  %v167 = vpack.c.b16 %v144, %v143
  %v168 = vpack.c.b16 %v146, %v145
  %v169 = vpack.c.b16 %v148, %v147
  %v170 = vpack.c.b16 %v150, %v149
  %v171 = vpack.c.b16 %v152, %v151
  %v172 = vpack.c.b16 %v154, %v153
  %vm191 = vcmask 261120
  %v192 = vsel %vm191, %v80, 0
  %194 = vmatpush.bf16.msra.mxu0 %v162
  %195 = vmatpush.bf16.msra.mxu0 %v161
  %196 = vmatpush.bf16.msra.mxu0 %v160
  %197 = vmatpush.bf16.msra.mxu0 %v159
  %198 = vmatpush.bf16.msra.mxu0 %v158
  %199 = vmatpush.bf16.msra.mxu0 %v157
  %200 = vmatpush.bf16.msra.mxu0 %v156
  %201 = vmatpush.bf16.msra.mxu0 %v155
  %202 = vmatmul.bf16.gmra.mxu0 %v78
  %v203 = vpop.f32.mrf.mxu0
  %v204 = vadd.f32 0.0, %v203
  %v205 = vpop.f32.mrf.mxu0
  %206 = vdwg.mxu0
  %207 = vmatpush.bf16.msra.mxu0 %v170
  %208 = vmatpush.bf16.msra.mxu0 %v169
  %209 = vmatpush.bf16.msra.mxu0 %v168
  %210 = vmatpush.bf16.msra.mxu0 %v167
  %211 = vmatpush.bf16.msra.mxu0 %v166
  %212 = vmatpush.bf16.msra.mxu0 %v165
  %213 = vmatpush.bf16.msra.mxu0 %v164
  %214 = vmatpush.bf16.msra.mxu0 %v163
  %215 = vmatmul.bf16.gmra.mxu0 %v79
  %v216 = vpop.f32.mrf.mxu0
  %v217 = vadd.f32 %v204, %v216
  %v218 = vpop.f32.mrf.mxu0
  %219 = vdwg.mxu0
  %220 = vmatpush.bf16.msra.mxu0 0
  %221 = vmatpush.bf16.msra.mxu0 0
  %222 = vmatpush.bf16.msra.mxu0 0
  %223 = vmatpush.bf16.msra.mxu0 0
  %224 = vmatpush.bf16.msra.mxu0 0
  %225 = vmatpush.bf16.msra.mxu0 0
  %226 = vmatpush.bf16.msra.mxu0 %v172
  %227 = vmatpush.bf16.msra.mxu0 %v171
  %228 = vmatmul.bf16.gmra.mxu0 %v192
  %v229 = vpop.f32.mrf.mxu0
  %v230 = vadd.f32 %v217, %v229
  %v231 = vpop.f32.mrf.mxu0
  %232 = vdwg.mxu0
  %v233 = vld [vmem:[%s5] sm:$0x1]
  %v235 = vperm.slane %v233, 0
  %v237 = vmul.f32 %v230, %v235
  %v238 = vld [vmem:[%s6] sm:$0x1]
  %v240 = vperm.slane %v238, 0
  %v242 = vadd.f32 %v237, %v240
  %v243 = vmax.f32 %v242, 0.0
  %v244 = vpack.c.bf16 %v243, %v243
  %v245 = vld [vmem:[%s3] sm:$0xf]
  %v246 = vld [vmem:[%s3 + $0x4] sm:$0xf]
  %v247 = vld [vmem:[%s3 + $0x8] sm:$0xf]
  %v248 = vld [vmem:[%s3 + $0xc] sm:$0xf]
  %v253 = vunpack.c.l.b16 %v245
  %v254 = vunpack.c.l.b16 %v246
  %v255 = vunpack.c.l.b16 %v247
  %v256 = vunpack.c.l.b16 %v248
  %v257 = vpack.c.b16 %v254, %v253
  %v258 = vpack.c.b16 %v256, %v255
  %v262 = vsel %vm191, %v244, 0
  %264 = vmatpush.bf16.msra.mxu0 0
  %265 = vmatpush.bf16.msra.mxu0 0
  %266 = vmatpush.bf16.msra.mxu0 0
  %267 = vmatpush.bf16.msra.mxu0 0
  %268 = vmatpush.bf16.msra.mxu0 0
  %269 = vmatpush.bf16.msra.mxu0 0
  %270 = vmatpush.bf16.msra.mxu0 %v258
  %271 = vmatpush.bf16.msra.mxu0 %v257
  %272 = vmatmul.bf16.gmra.mxu0 %v262
  %v273 = vpop.f32.mrf.mxu0
  %v274 = vadd.f32 0.0, %v273
  %v275 = vpop.f32.mrf.mxu0
  %276 = vdwg.mxu0
  %v277 = vld [vmem:[%s7] sm:$0x1]
  %v279 = vperm.slane %v277, 0
  %v281 = vmul.f32 %v274, %v279
  %v282 = vld [vmem:[%s8] sm:$0x1]
  %v284 = vperm.slane %v282, 0
  %v286 = vadd.f32 %v281, %v284
  %v287 = vld [vmem:[%s1] sm:$0x1]
  %v288 = vld [vmem:[%s4] sm:$0xf]
  %v289 = vld [vmem:[%s4 + $0x4] sm:$0xf]
  %v290 = vld [vmem:[%s4 + $0x8] sm:$0xf]
  %v291 = vld [vmem:[%s4 + $0xc] sm:$0xf]
  %v292 = vld [vmem:[%s4 + $0x10] sm:$0xf]
  %v293 = vld [vmem:[%s4 + $0x14] sm:$0xf]
  %v294 = vld [vmem:[%s4 + $0x18] sm:$0xf]
  %v295 = vld [vmem:[%s4 + $0x1c] sm:$0xf]
  %v304 = vunpack.c.l.b16 %v288
  %v305 = vunpack.c.l.b16 %v289
  %v306 = vunpack.c.l.b16 %v290
  %v307 = vunpack.c.l.b16 %v291
  %v308 = vunpack.c.l.b16 %v292
  %v309 = vunpack.c.l.b16 %v293
  %v310 = vunpack.c.l.b16 %v294
  %v311 = vunpack.c.l.b16 %v295
  %v312 = vpack.c.b16 %v305, %v304
  %v313 = vpack.c.b16 %v307, %v306
  %v314 = vpack.c.b16 %v309, %v308
  %v315 = vpack.c.b16 %v311, %v310
  %vm320 = vcmask 523264
  %v322 = vsel %vm320, %v287, 0
  %324 = vmatpush.bf16.msra.mxu0 0
  %325 = vmatpush.bf16.msra.mxu0 0
  %326 = vmatpush.bf16.msra.mxu0 0
  %327 = vmatpush.bf16.msra.mxu0 0
  %328 = vmatpush.bf16.msra.mxu0 %v315
  %329 = vmatpush.bf16.msra.mxu0 %v314
  %330 = vmatpush.bf16.msra.mxu0 %v313
  %331 = vmatpush.bf16.msra.mxu0 %v312
  %332 = vmatmul.bf16.gmra.mxu0 %v322
  %v333 = vpop.f32.mrf.mxu0
  %v334 = vadd.f32 0.0, %v333
  %v335 = vpop.f32.mrf.mxu0
  %336 = vdwg.mxu0
  %v337 = vld [vmem:[%s9] sm:$0x1]
  %v339 = vperm.slane %v337, 0
  %v341 = vmul.f32 %v334, %v339
  %v342 = vld [vmem:[%s10] sm:$0x1]
  %v344 = vperm.slane %v342, 0
  %v346 = vadd.f32 %v341, %v344
  %v347 = vadd.f32 %v286, %v346
  %v348 = vmax.f32 %v347, 0.0
  %v349 = vpack.c.bf16 %v348, %v348
  %vm350 = vcmask 516096
  %351 = vst.msk [vmem:[%s11] sm:$0x1] %vm350, %v349
  // Predicated region
  $region46: #{resnext_ida_forward.31} parent=0 // pred_check
    _
  $region47: #{resnext_ida_forward.31} parent=0 // pred_check_branch
    %353 = sbr.rel (0) target = $region49
  $region48: #{resnext_ida_forward.31} parent=0 // pred_region
    _
  $region49: #{resnext_ida_forward.31} parent=0 // pred_fallthru
    _
  // Predicated region
  $region50: #{resnext_ida_forward.31} parent=0 // pred_check
    _
  $region51: #{resnext_ida_forward.31} parent=0 // pred_check_branch
    %355 = sbr.rel (0) target = $region53
  $region52: #{resnext_ida_forward.31} parent=0 // pred_region
    _
  $region53: #{resnext_ida_forward.31} parent=0 // pred_fallthru
    _

// kernel: resnext_ida_forward.43
$region0: #{resnext_ida_forward.43}
  #allocation0 [shape = 'u32[]', space=smem, size = 0x4, offset = 0x4, fixed_abs, tag = 'smem constant byte address 0x4 - core index']
  #allocation1 [shape = 'u32[72,128]{1,0:T(1,128)}', space=vmem, size = 0x9000, scoped, tag = 'internal scratch']
  %s0 = inlined_call_operand.vmem [shape: bf16[128,64], index: 0, kind: input, shape index: {}]
  %s1 = inlined_call_operand.vmem [shape: bf16[128,64], index: 1, kind: input, shape index: {}]
  %s2 = inlined_call_operand.vmem [shape: f32[1,64], index: 2, kind: input, shape index: {}]
  %s3 = inlined_call_operand.vmem [shape: f32[1,64], index: 3, kind: input, shape index: {}]
  %s4 = inlined_call_operand.vmem [shape: bf16[64,128], index: 4, kind: input, shape index: {}]
  %s5 = inlined_call_operand.vmem [shape: f32[1,128], index: 5, kind: input, shape index: {}]
  %s6 = inlined_call_operand.vmem [shape: f32[128,128], index: 6, kind: output, shape index: {}]
  %s7 = sld [smem:[#allocation0]]
  $region34: #{resnext_ida_forward.43} parent=0
    _
  %s9 = ssub.s32 1, %s7
  %s10 = scalar_select 0, %s9, %s7
  // Predicated region
  $region2: #{resnext_ida_forward.43} parent=0 // pred_check
    _
  $region3: #{resnext_ida_forward.43} parent=0 // pred_check_branch
    %12 = sbr.rel (0) target = $region5
  $region4: #{resnext_ida_forward.43} parent=0 // pred_region
    _
  $region5: #{resnext_ida_forward.43} parent=0 // pred_fallthru
    _
  // Predicated region
  $region6: #{resnext_ida_forward.43} parent=0 // pred_check
    _
  $region7: #{resnext_ida_forward.43} parent=0 // pred_check_branch
    %14 = sbr.rel (0) target = $region9
  $region8: #{resnext_ida_forward.43} parent=0 // pred_region
    _
  $region9: #{resnext_ida_forward.43} parent=0 // pred_fallthru
    _
  // Predicated region
  $region10: #{resnext_ida_forward.43} parent=0 // pred_check
    _
  $region11: #{resnext_ida_forward.43} parent=0 // pred_check_branch
    %16 = sbr.rel (0) target = $region13
  $region12: #{resnext_ida_forward.43} parent=0 // pred_region
    _
  $region13: #{resnext_ida_forward.43} parent=0 // pred_fallthru
    _
  // Predicated region
  $region14: #{resnext_ida_forward.43} parent=0 // pred_check
    _
  $region15: #{resnext_ida_forward.43} parent=0 // pred_check_branch
    %18 = sbr.rel (0) target = $region17
  $region16: #{resnext_ida_forward.43} parent=0 // pred_region
    _
  $region17: #{resnext_ida_forward.43} parent=0 // pred_fallthru
    _
  // Predicated region
  $region18: #{resnext_ida_forward.43} parent=0 // pred_check
    _
  $region19: #{resnext_ida_forward.43} parent=0 // pred_check_branch
    %20 = sbr.rel (0) target = $region21
  $region20: #{resnext_ida_forward.43} parent=0 // pred_region
    _
  $region21: #{resnext_ida_forward.43} parent=0 // pred_fallthru
    _
  // Predicated region
  $region22: #{resnext_ida_forward.43} parent=0 // pred_check
    _
  $region23: #{resnext_ida_forward.43} parent=0 // pred_check_branch
    %22 = sbr.rel (0) target = $region25
  $region24: #{resnext_ida_forward.43} parent=0 // pred_region
    _
  $region25: #{resnext_ida_forward.43} parent=0 // pred_fallthru
    _
  %v24 = vld [vmem:[%s0] sm:$0xf]
  %v25 = vld [vmem:[%s0 + $0x4] sm:$0xf]
  %v26 = vld [vmem:[%s0 + $0x8] sm:$0xf]
  %v27 = vld [vmem:[%s0 + $0xc] sm:$0xf]
  %v28 = vld [vmem:[%s0 + $0x10] sm:$0xf]
  %v29 = vld [vmem:[%s0 + $0x14] sm:$0xf]
  %v30 = vld [vmem:[%s0 + $0x18] sm:$0xf]
  %v31 = vld [vmem:[%s0 + $0x1c] sm:$0xf]
  %v32 = vld [vmem:[%s0 + $0x20] sm:$0xf]
  %v33 = vld [vmem:[%s0 + $0x24] sm:$0xf]
  %v34 = vld [vmem:[%s0 + $0x28] sm:$0xf]
  %v35 = vld [vmem:[%s0 + $0x2c] sm:$0xf]
  %v36 = vld [vmem:[%s0 + $0x30] sm:$0xf]
  %v37 = vld [vmem:[%s0 + $0x34] sm:$0xf]
  %v38 = vld [vmem:[%s0 + $0x38] sm:$0xf]
  %v39 = vld [vmem:[%s0 + $0x3c] sm:$0xf]
  %v40 = vunpack.c.l.bf16 %v24
  %v41 = vunpack.c.l.bf16 %v25
  %v42 = vunpack.c.l.bf16 %v26
  %v43 = vunpack.c.l.bf16 %v27
  %v44 = vunpack.c.l.bf16 %v28
  %v45 = vunpack.c.l.bf16 %v29
  %v46 = vunpack.c.l.bf16 %v30
  %v47 = vunpack.c.l.bf16 %v31
  %v48 = vunpack.c.l.bf16 %v32
  %v49 = vunpack.c.l.bf16 %v33
  %v50 = vunpack.c.l.bf16 %v34
  %v51 = vunpack.c.l.bf16 %v35
  %v52 = vunpack.c.l.bf16 %v36
  %v53 = vunpack.c.l.bf16 %v37
  %v54 = vunpack.c.l.bf16 %v38
  %v55 = vunpack.c.l.bf16 %v39
  %v56 = vld [vmem:[%s1] sm:$0xf]
  %v57 = vld [vmem:[%s1 + $0x4] sm:$0xf]
  %v58 = vld [vmem:[%s1 + $0x8] sm:$0xf]
  %v59 = vld [vmem:[%s1 + $0xc] sm:$0xf]
  %v60 = vld [vmem:[%s1 + $0x10] sm:$0xf]
  %v61 = vld [vmem:[%s1 + $0x14] sm:$0xf]
  %v62 = vld [vmem:[%s1 + $0x18] sm:$0xf]
  %v63 = vld [vmem:[%s1 + $0x1c] sm:$0xf]
  %v64 = vld [vmem:[%s1 + $0x20] sm:$0xf]
  %v65 = vld [vmem:[%s1 + $0x24] sm:$0xf]
  %v66 = vld [vmem:[%s1 + $0x28] sm:$0xf]
  %v67 = vld [vmem:[%s1 + $0x2c] sm:$0xf]
  %v68 = vld [vmem:[%s1 + $0x30] sm:$0xf]
  %v69 = vld [vmem:[%s1 + $0x34] sm:$0xf]
  %v70 = vld [vmem:[%s1 + $0x38] sm:$0xf]
  %v71 = vld [vmem:[%s1 + $0x3c] sm:$0xf]
  %v72 = vunpack.c.l.bf16 %v56
  %v73 = vunpack.c.l.bf16 %v57
  %v74 = vunpack.c.l.bf16 %v58
  %v75 = vunpack.c.l.bf16 %v59
  %v76 = vunpack.c.l.bf16 %v60
  %v77 = vunpack.c.l.bf16 %v61
  %v78 = vunpack.c.l.bf16 %v62
  %v79 = vunpack.c.l.bf16 %v63
  %v80 = vunpack.c.l.bf16 %v64
  %v81 = vunpack.c.l.bf16 %v65
  %v82 = vunpack.c.l.bf16 %v66
  %v83 = vunpack.c.l.bf16 %v67
  %v84 = vunpack.c.l.bf16 %v68
  %v85 = vunpack.c.l.bf16 %v69
  %v86 = vunpack.c.l.bf16 %v70
  %v87 = vunpack.c.l.bf16 %v71
  %v88 = vadd.f32 %v40, %v72
  %v89 = vadd.f32 %v41, %v73
  %v90 = vadd.f32 %v42, %v74
  %v91 = vadd.f32 %v43, %v75
  %v92 = vadd.f32 %v44, %v76
  %v93 = vadd.f32 %v45, %v77
  %v94 = vadd.f32 %v46, %v78
  %v95 = vadd.f32 %v47, %v79
  %v96 = vadd.f32 %v48, %v80
  %v97 = vadd.f32 %v49, %v81
  %v98 = vadd.f32 %v50, %v82
  %v99 = vadd.f32 %v51, %v83
  %v100 = vadd.f32 %v52, %v84
  %v101 = vadd.f32 %v53, %v85
  %v102 = vadd.f32 %v54, %v86
  %v103 = vadd.f32 %v55, %v87
  %v104 = vld [vmem:[%s2] sm:$0x1]
  %v106 = vperm.slane %v104, 0
  %v108 = vmul.f32 %v88, %v106
  %v109 = vmul.f32 %v89, %v106
  %v110 = vmul.f32 %v90, %v106
  %v111 = vmul.f32 %v91, %v106
  %v112 = vmul.f32 %v92, %v106
  %v113 = vmul.f32 %v93, %v106
  %v114 = vmul.f32 %v94, %v106
  %v115 = vmul.f32 %v95, %v106
  %v116 = vmul.f32 %v96, %v106
  %v117 = vmul.f32 %v97, %v106
  %v118 = vmul.f32 %v98, %v106
  %v119 = vmul.f32 %v99, %v106
  %v120 = vmul.f32 %v100, %v106
  %v121 = vmul.f32 %v101, %v106
  %v122 = vmul.f32 %v102, %v106
  %v123 = vmul.f32 %v103, %v106
  %v124 = vld [vmem:[%s3] sm:$0x1]
  %v126 = vperm.slane %v124, 0
  %v128 = vadd.f32 %v108, %v126
  %v129 = vadd.f32 %v109, %v126
  %v130 = vadd.f32 %v110, %v126
  %v131 = vadd.f32 %v111, %v126
  %v132 = vadd.f32 %v112, %v126
  %v133 = vadd.f32 %v113, %v126
  %v134 = vadd.f32 %v114, %v126
  %v135 = vadd.f32 %v115, %v126
  %v136 = vadd.f32 %v116, %v126
  %v137 = vadd.f32 %v117, %v126
  %v138 = vadd.f32 %v118, %v126
  %v139 = vadd.f32 %v119, %v126
  %v140 = vadd.f32 %v120, %v126
  %v141 = vadd.f32 %v121, %v126
  %v142 = vadd.f32 %v122, %v126
  %v143 = vadd.f32 %v123, %v126
  %v144 = vpack.c.bf16 %v129, %v128
  %v145 = vpack.c.bf16 %v131, %v130
  %v146 = vpack.c.bf16 %v133, %v132
  %v147 = vpack.c.bf16 %v135, %v134
  %v148 = vpack.c.bf16 %v137, %v136
  %v149 = vpack.c.bf16 %v139, %v138
  %v150 = vpack.c.bf16 %v141, %v140
  %v151 = vpack.c.bf16 %v143, %v142
  %v152 = vld [vmem:[%s4] sm:$0xf]
  %v153 = vld [vmem:[%s4 + $0x4] sm:$0xf]
  %v154 = vld [vmem:[%s4 + $0x8] sm:$0xf]
  %v155 = vld [vmem:[%s4 + $0xc] sm:$0xf]
  %v156 = vld [vmem:[%s4 + $0x10] sm:$0xf]
  %v157 = vld [vmem:[%s4 + $0x14] sm:$0xf]
  %v158 = vld [vmem:[%s4 + $0x18] sm:$0xf]
  %v159 = vld [vmem:[%s4 + $0x1c] sm:$0xf]
  %v160 = vld [vmem:[%s5] sm:$0x1]
  %v162 = vperm.slane %v160, 0
  %v172 = vunpack.c.l.b16 %v152
  %v173 = vunpack.c.l.b16 %v153
  %v174 = vunpack.c.l.b16 %v154
  %v175 = vunpack.c.l.b16 %v155
  %v176 = vunpack.c.l.b16 %v156
  %v177 = vunpack.c.l.b16 %v157
  %v178 = vunpack.c.l.b16 %v158
  %v179 = vunpack.c.l.b16 %v159
  %v180 = vpack.c.b16 %v173, %v172
  %v181 = vpack.c.b16 %v175, %v174
  %v182 = vpack.c.b16 %v177, %v176
  %v183 = vpack.c.b16 %v179, %v178
  %vm188 = vcmask 523264
  %v190 = vsel %vm188, %v144, 0
  %v193 = vsel %vm188, %v145, 0
  %v196 = vsel %vm188, %v146, 0
  %v199 = vsel %vm188, %v147, 0
  %v202 = vsel %vm188, %v148, 0
  %v205 = vsel %vm188, %v149, 0
  %v208 = vsel %vm188, %v150, 0
  %v211 = vsel %vm188, %v151, 0
  %213 = vmatpush.bf16.msra.mxu0 0
  %214 = vmatpush.bf16.msra.mxu0 0
  %215 = vmatpush.bf16.msra.mxu0 0
  %216 = vmatpush.bf16.msra.mxu0 0
  %217 = vmatpush.bf16.msra.mxu0 %v183
  %218 = vmatpush.bf16.msra.mxu0 %v182
  %219 = vmatpush.bf16.msra.mxu0 %v181
  %220 = vmatpush.bf16.msra.mxu0 %v180
  %221 = vmatmul.bf16.gmra.mxu0 %v190
  %v222 = vpop.f32.mrf.mxu0
  %v223 = vadd.f32 %v162, %v222
  %v224 = vpop.f32.mrf.mxu0
  %v225 = vadd.f32 %v162, %v224
  %226 = vmatmul.bf16.gmra.mxu0 %v193
  %v227 = vpop.f32.mrf.mxu0
  %v228 = vadd.f32 %v162, %v227
  %v229 = vpop.f32.mrf.mxu0
  %v230 = vadd.f32 %v162, %v229
  %231 = vmatmul.bf16.gmra.mxu0 %v196
  %v232 = vpop.f32.mrf.mxu0
  %v233 = vadd.f32 %v162, %v232
  %v234 = vpop.f32.mrf.mxu0
  %v235 = vadd.f32 %v162, %v234
  %236 = vmatmul.bf16.gmra.mxu0 %v199
  %v237 = vpop.f32.mrf.mxu0
  %v238 = vadd.f32 %v162, %v237
  %v239 = vpop.f32.mrf.mxu0
  %v240 = vadd.f32 %v162, %v239
  %241 = vmatmul.bf16.gmra.mxu0 %v202
  %v242 = vpop.f32.mrf.mxu0
  %v243 = vadd.f32 %v162, %v242
  %v244 = vpop.f32.mrf.mxu0
  %v245 = vadd.f32 %v162, %v244
  %246 = vmatmul.bf16.gmra.mxu0 %v205
  %v247 = vpop.f32.mrf.mxu0
  %v248 = vadd.f32 %v162, %v247
  %v249 = vpop.f32.mrf.mxu0
  %v250 = vadd.f32 %v162, %v249
  %251 = vmatmul.bf16.gmra.mxu0 %v208
  %v252 = vpop.f32.mrf.mxu0
  %v253 = vadd.f32 %v162, %v252
  %v254 = vpop.f32.mrf.mxu0
  %v255 = vadd.f32 %v162, %v254
  %256 = vmatmul.bf16.gmra.mxu0 %v211
  %v257 = vpop.f32.mrf.mxu0
  %v258 = vadd.f32 %v162, %v257
  %v259 = vpop.f32.mrf.mxu0
  %v260 = vadd.f32 %v162, %v259
  %261 = vdwg.mxu0
  %262 = vst [vmem:[%s6] sm:$0xff] %v223
  %263 = vst [vmem:[%s6 + $0x8] sm:$0xff] %v225
  %264 = vst [vmem:[%s6 + $0x10] sm:$0xff] %v228
  %265 = vst [vmem:[%s6 + $0x18] sm:$0xff] %v230
  %266 = vst [vmem:[%s6 + $0x20] sm:$0xff] %v233
  %267 = vst [vmem:[%s6 + $0x28] sm:$0xff] %v235
  %268 = vst [vmem:[%s6 + $0x30] sm:$0xff] %v238
  %269 = vst [vmem:[%s6 + $0x38] sm:$0xff] %v240
  %270 = vst [vmem:[%s6 + $0x40] sm:$0xff] %v243
  %271 = vst [vmem:[%s6 + $0x48] sm:$0xff] %v245
  %272 = vst [vmem:[%s6 + $0x50] sm:$0xff] %v248
  %273 = vst [vmem:[%s6 + $0x58] sm:$0xff] %v250
  %274 = vst [vmem:[%s6 + $0x60] sm:$0xff] %v253
  %275 = vst [vmem:[%s6 + $0x68] sm:$0xff] %v255
  %276 = vst [vmem:[%s6 + $0x70] sm:$0xff] %v258
  %277 = vst [vmem:[%s6 + $0x78] sm:$0xff] %v260
  // Predicated region
  $region26: #{resnext_ida_forward.43} parent=0 // pred_check
    _
  $region27: #{resnext_ida_forward.43} parent=0 // pred_check_branch
    %279 = sbr.rel (0) target = $region29
  $region28: #{resnext_ida_forward.43} parent=0 // pred_region
    _
  $region29: #{resnext_ida_forward.43} parent=0 // pred_fallthru
    _
  // Predicated region
  $region30: #{resnext_ida_forward.43} parent=0 // pred_check
    _
  $region31: #{resnext_ida_forward.43} parent=0 // pred_check_branch
    %281 = sbr.rel (0) target = $region33
  $region32: #{resnext_ida_forward.43} parent=0 // pred_region
    _
  $region33: #{resnext_ida_forward.43} parent=0 // pred_fallthru
    _

</llo_original>
